<compile_context>
chip_gen: v7x
topology: tpu7x:2x2x1
jax: 0.10.0
libtpu: 0.0.40
codegen_flags: <defaults>
</compile_context>

<pallas_src>
import functools

import jax
import jax.numpy as jnp
import numpy as np
from jax.experimental import pallas as pl
from jax.experimental.pallas import tpu as pltpu


def _mha_kernel(*refs, n_heads, d_k, compute_dtype, kv_first):
    """One grid step: all heads for a (Bt, Sp, Dp) tile of the batch.

    refs = (x_q[, x_k, x_v], wq_t, fc_t, out)
      wq_t : (Dp, H*d_k)  pre-transposed W_Q (compute_dtype)
      fc_t : (H*d_k, Dp)  pre-transposed fc with 1/sqrt(d_k) folded in
    """
    n_x = len(refs) - 3
    x_refs = refs[:n_x]
    wq_ref, fc_ref, o_ref = refs[n_x], refs[n_x + 1], refs[n_x + 2]

    Bt, Sp, Dp = o_ref.shape
    Hdk = n_heads * d_k

    wq = wq_ref[...]          # (Dp, Hdk), resident across the grid
    fc = fc_ref[...]          # (Hdk, Dp), resident across the grid

    def project(x_ref):
        # Fused all-head projection: (Bt*Sp, Dp) @ (Dp, H*d_k).  Sp is padded
        # to the sublane grain on the host so this reshape is a free view.
        x = x_ref[...].astype(compute_dtype).reshape(Bt * Sp, Dp)
        y = jnp.dot(x, wq, preferred_element_type=jnp.float32)
        return y.astype(compute_dtype).reshape(Bt, Sp, Hdk)

    if n_x == 1:
        # Self-attention fast path: same input AND same W_Q => q == k == v.
        q = k = v = project(x_refs[0])
    else:
        # TODO(synk): on very VMEM-tight chips (v5e) the projections could be
        # streamed per head to cap live state at O(Bt*Sp*d_k).
        q, k, v = (project(r) for r in x_refs)

    # Per-head attention (NO softmax -- the reference forward omits it).
    head_outs = []
    for h in range(n_heads):                      # static unroll, H is small
        lo, hi = h * d_k, (h + 1) * d_k
        qh = q[:, :, lo:hi]                       # (Bt, Sp, d_k)
        kh = k[:, :, lo:hi]
        vh = v[:, :, lo:hi]
        if kv_first:
            # Associativity (exact, everything is linear): q @ (k^T @ v).
            # For small S the MXU sees (Sp x d_k)@(d_k x d_k) lane-dense tiles
            # instead of a starved (Sp x Sp) score matrix.
            kv = jnp.einsum("bkd,bke->bde", kh, vh,
                            preferred_element_type=jnp.float32)   # (Bt,d_k,d_k)
            ah = jnp.einsum("bqd,bde->bqe", qh, kv.astype(compute_dtype),
                            preferred_element_type=jnp.float32)   # (Bt,Sp,d_k)
        else:
            s = jnp.einsum("bqd,bkd->bqk", qh, kh,
                           preferred_element_type=jnp.float32)    # (Bt,Sp,Sp)
            ah = jnp.einsum("bqk,bkd->bqd", s.astype(compute_dtype), vh,
                            preferred_element_type=jnp.float32)   # (Bt,Sp,d_k)
        head_outs.append(ah.astype(compute_dtype))

    # Single long-K output projection: (Bt*Sp, H*d_k) @ (H*d_k, Dp).  The MXU
    # f32 accumulator performs the cross-head reduction.
    a = jnp.concatenate(head_outs, axis=-1).reshape(Bt * Sp, Hdk)
    out = jnp.dot(a, fc, preferred_element_type=jnp.float32)
    o_ref[...] = out.reshape(Bt, Sp, Dp).astype(o_ref.dtype)


def _round_up(x, m):
    return ((x + m - 1) // m) * m


def _tpu_vmem_bytes():
    try:
        return int(pltpu.get_tpu_info().vmem_capacity_bytes)
    except Exception:
        return 64 * 1024 * 1024            # conservative: v7x per-TensorCore


def _prefer_even_grid_steps():
    # Only the 2-TensorCore v7x benefits from an even number of grid steps
    # under dimension_semantics=("parallel",); on v5e/v6e a single big step
    # minimises the ~0.35us/step pipeline overhead.
    try:
        kind = jax.devices()[0].device_kind.lower()
    except Exception:
        return False
    return ("v7" in kind) or ("7x" in kind)


def _pick_block_batch(B, per_item_bytes, fixed_bytes, budget_bytes, prefer_even):
    divisors = sorted((d for d in range(1, B + 1) if B % d == 0), reverse=True)
    feasible = [bt for bt in divisors
                if fixed_bytes + bt * per_item_bytes <= budget_bytes]
    if not feasible:
        feasible = [1]
    if prefer_even:
        even = [bt for bt in feasible if (B // bt) % 2 == 0]
        if even:
            return even[0]
    return feasible[0]


def multi_head_attention(input_q, input_k, input_v, wq_weight, fc_weight, *,
                         n_heads, d_k, compute_dtype=jnp.bfloat16,
                         score_order="auto", trim_output=True):
    """input_*: (B, S, d_model); wq_weight: (n_heads*d_k, d_model);
    fc_weight: (d_model, n_heads*d_k). Returns (B, S, d_model)."""
    B, S, d_model = input_q.shape
    Hdk = n_heads * d_k
    c_isz = jnp.dtype(compute_dtype).itemsize
    in_isz = jnp.dtype(input_q.dtype).itemsize
    out_isz = in_isz

    # ---- host-side (free) plumbing: lane-dense d_model, sublane-aligned S.
    # Zero padding is exact because there is no softmax: padded k/v rows
    # contribute 0 and padded q rows only produce output rows we slice off.
    Dp = max(128, _round_up(d_model, 128))
    grain = 16 if c_isz < 4 else 8
    Sp = _round_up(S, grain)

    def pad_x(a):
        return jnp.pad(a, ((0, 0), (0, Sp - S), (0, Dp - d_model)))

    # Pre-transposed weights, 1/sqrt(d_k) folded into fc (exact: no softmax).
    wq_t = jnp.pad(wq_weight.T, ((0, Dp - d_model), (0, 0))).astype(compute_dtype)
    fc_t = jnp.pad(fc_weight.T * float(1.0 / np.sqrt(d_k)),
                   ((0, 0), (0, Dp - d_model))).astype(compute_dtype)

    # Self-attention dedupe: one x DMA / one projection when q is k is v.
    shared = (input_k is input_q) and (input_v is input_q)
    xs = ([pad_x(input_q)] if shared
          else [pad_x(input_q), pad_x(input_k), pad_x(input_v)])
    n_x = len(xs)

    if score_order == "auto":
        kv_first = Sp <= max(d_k, 128)
    else:
        kv_first = (score_order == "kv_first")

    # ---- VMEM-budgeted batch-tile size --------------------------------------
    per_item = (
        n_x * Sp * Dp * in_isz * 2             # double-buffered x tiles
        + Sp * Dp * out_isz * 2                # double-buffered out tile
        + n_x * Sp * Hdk * c_isz               # q/k/v live values
        + Sp * Hdk * c_isz                     # concatenated per-head outputs
        + Sp * Dp * 4                          # f32 accumulator of final dot
        + (2 * d_k * d_k * 4 if kv_first else 2 * Sp * Sp * 4)
    )
    fixed = 2 * Dp * Hdk * c_isz * 2           # both weight blocks (buffer allowance)
    vmem_phys = _tpu_vmem_bytes()
    vmem_limit = int(vmem_phys * 0.85)
    budget = int(vmem_limit * 0.7)
    Bt = _pick_block_batch(B, per_item, fixed, budget, _prefer_even_grid_steps())
    grid = (B // Bt,)

    kernel = functools.partial(_mha_kernel, n_heads=n_heads, d_k=d_k,
                               compute_dtype=compute_dtype, kv_first=kv_first)

    def build(single_buffer_weights):
        if single_buffer_weights:
            wq_spec = pl.BlockSpec((Dp, Hdk), lambda b: (0, 0),
                                   pipeline_mode=pl.Buffered(1))
            fc_spec = pl.BlockSpec((Hdk, Dp), lambda b: (0, 0),
                                   pipeline_mode=pl.Buffered(1))
        else:
            wq_spec = pl.BlockSpec((Dp, Hdk), lambda b: (0, 0))
            fc_spec = pl.BlockSpec((Hdk, Dp), lambda b: (0, 0))
        x_spec = pl.BlockSpec((Bt, Sp, Dp), lambda b: (b, 0, 0))
        o_spec = pl.BlockSpec((Bt, Sp, Dp), lambda b: (b, 0, 0))
        return pl.pallas_call(
            kernel,
            out_shape=jax.ShapeDtypeStruct((B, Sp, Dp), input_q.dtype),
            grid=grid,
            in_specs=[x_spec] * n_x + [wq_spec, fc_spec],
            out_specs=o_spec,
            compiler_params=pltpu.CompilerParams(
                dimension_semantics=("parallel",),
                vmem_limit_bytes=vmem_limit),
        )

    try:
        out = build(True)(*xs, wq_t, fc_t)
    except Exception:
        # Fall back to default double-buffered weight blocks if Buffered(1)
        # is rejected by this Pallas/Mosaic version.
        out = build(False)(*xs, wq_t, fc_t)

    # TODO(synk): if the consumer can take the padded (B, Sp, Dp) tensor,
    # pass trim_output=False to avoid an extra HBM read+write for the slice.
    if trim_output and (Sp != S or Dp != d_model):
        out = out[:, :S, :d_model]
    return out


def _reference(input_q, input_k, input_v, wq_weight, fc_weight, *, n_heads, d_k):
    """Pure-JAX reference matching the PyTorch forward exactly (W_Q for q/k/v,
    no softmax; W_K / W_V are dead parameters in the original module)."""
    B, S, d_model = input_q.shape

    def proj(x):
        y = x @ wq_weight.T                                  # (B, S, H*d_k)
        return y.reshape(B, S, n_heads, d_k).transpose(0, 2, 1, 3)

    q, k, v = proj(input_q), proj(input_k), proj(input_v)
    scores = jnp.einsum("bhqd,bhkd->bhqk", q, k) / np.sqrt(d_k)
    attn = jnp.einsum("bhqk,bhkd->bhqd", scores, v)
    attn = attn.transpose(0, 2, 1, 3).reshape(B, S, n_heads * d_k)
    return attn @ fc_weight.T


if __name__ == "__main__":
    # Small shapes consistent with the module (original: d_model=300, H=8,
    # d_k=256, B=128, S=10 -- scaled down but S=10 is kept so the sublane
    # padding path is exercised).
    batch, seq, d_model, n_heads, d_k = 8, 10, 48, 2, 32

    key = jax.random.PRNGKey(0)
    kx, kk, kv, kwq, kfc = jax.random.split(key, 5)

    x = jax.random.normal(kx, (batch, seq, d_model), dtype=jnp.float32)
    wq_weight = jax.random.uniform(
        kwq, (n_heads * d_k, d_model), dtype=jnp.float32,
        minval=-1.0 / np.sqrt(d_model), maxval=1.0 / np.sqrt(d_model))
    fc_weight = jax.random.uniform(
        kfc, (d_model, n_heads * d_k), dtype=jnp.float32,
        minval=-1.0 / np.sqrt(n_heads * d_k), maxval=1.0 / np.sqrt(n_heads * d_k))

    ref = _reference(x, x, x, wq_weight, fc_weight, n_heads=n_heads, d_k=d_k)

    # 1) f32 compute, self-attention fast path, kv-first score order.
    out = multi_head_attention(x, x, x, wq_weight, fc_weight,
                               n_heads=n_heads, d_k=d_k,
                               compute_dtype=jnp.float32)
    out = jax.block_until_ready(out)
    np.testing.assert_allclose(np.asarray(out), np.asarray(ref),
                               rtol=1e-4, atol=1e-4)

    # 2) bf16 compute (the new default; MXU-native on v5e/v6e/v7x), f32 accum.
    out_bf16 = multi_head_attention(x, x, x, wq_weight, fc_weight,
                                    n_heads=n_heads, d_k=d_k)
    out_bf16 = jax.block_until_ready(out_bf16)
    np.testing.assert_allclose(np.asarray(out_bf16), np.asarray(ref),
                               rtol=5e-2, atol=5e-2)

    # 3) Distinct q/k/v inputs with the classic score order (still projected
    #    with W_Q for all three, exactly as the reference forward does).
    xk_in = jax.random.normal(kk, (batch, seq, d_model), dtype=jnp.float32)
    xv_in = jax.random.normal(kv, (batch, seq, d_model), dtype=jnp.float32)
    out_g = multi_head_attention(x, xk_in, xv_in, wq_weight, fc_weight,
                                 n_heads=n_heads, d_k=d_k,
                                 compute_dtype=jnp.float32,
                                 score_order="scores")
    out_g = jax.block_until_ready(out_g)
    ref_g = _reference(x, xk_in, xv_in, wq_weight, fc_weight,
                       n_heads=n_heads, d_k=d_k)
    np.testing.assert_allclose(np.asarray(out_g), np.asarray(ref_g),
                               rtol=1e-4, atol=1e-4)

    # TODO(synk): the reference forward has NO softmax and uses W_Q for Q, K
    # and V (W_K / W_V are dead parameters) -- reproduced exactly on purpose.
    print("KERNEL_OK")
</pallas_src>

<mosaic_0001>
module attributes {stable_mosaic.version = 11 : i64} {
  func.func @_mha_kernel(%arg0: i32, %arg1: memref<8x16x128xf32, #tpu.memory_space<vmem>>, %arg2: memref<128x64xf32, #tpu.memory_space<vmem>>, %arg3: memref<64x128xf32, #tpu.memory_space<vmem>>, %arg4: memref<8x16x128xf32, #tpu.memory_space<vmem>>) attributes {dimension_semantics = [#tpu.dimension_semantics<parallel>], iteration_bounds = array<i64: 1>, scalar_prefetch = 0 : i64, scratch_operands = 0 : i64, tpu.core_type = #tpu.core_type<tc>, window_params = [{transform_indices = @transform_0, window_bounds = array<i64: 8, 16, 128>}, {pipeline_mode = #tpu.pipeline_mode<synchronous>, transform_indices = @transform_1, window_bounds = array<i64: 128, 64>}, {pipeline_mode = #tpu.pipeline_mode<synchronous>, transform_indices = @transform_2, window_bounds = array<i64: 64, 128>}, {transform_indices = @transform_3, window_bounds = array<i64: 8, 16, 128>}]} {
    %c0 = arith.constant 0 : index
    %c0_0 = arith.constant 0 : index
    %0 = vector.load %arg2[%c0, %c0_0] : memref<128x64xf32, #tpu.memory_space<vmem>>, vector<128x64xf32>
    %c0_1 = arith.constant 0 : index
    %c0_2 = arith.constant 0 : index
    %1 = vector.load %arg3[%c0_1, %c0_2] : memref<64x128xf32, #tpu.memory_space<vmem>>, vector<64x128xf32>
    %c0_3 = arith.constant 0 : index
    %c0_4 = arith.constant 0 : index
    %c0_5 = arith.constant 0 : index
    %2 = vector.load %arg1[%c0_3, %c0_4, %c0_5] : memref<8x16x128xf32, #tpu.memory_space<vmem>>, vector<8x16x128xf32>
    %3 = vector.shape_cast %2 : vector<8x16x128xf32> to vector<128x128xf32>
    %cst = arith.constant dense<0.000000e+00> : vector<128x64xf32>
    %4 = tpu.matmul %3, %0, %cst {dimension_numbers = #tpu.dot_dimension_numbers<[1], [0], [0], [1], [0, 0, 1, 1], [], []>} : vector<128x128xf32>, vector<128x64xf32>, vector<128x64xf32> -> vector<128x64xf32>
    %5 = vector.shape_cast %4 : vector<128x64xf32> to vector<8x16x64xf32>
    %6 = vector.extract_strided_slice %5 {offsets = [0, 0, 0], sizes = [8, 16, 32], strides = [1, 1, 1]} : vector<8x16x64xf32> to vector<8x16x32xf32>
    %7 = vector.extract_strided_slice %5 {offsets = [0, 0, 0], sizes = [8, 16, 32], strides = [1, 1, 1]} : vector<8x16x64xf32> to vector<8x16x32xf32>
    %8 = vector.extract_strided_slice %5 {offsets = [0, 0, 0], sizes = [8, 16, 32], strides = [1, 1, 1]} : vector<8x16x64xf32> to vector<8x16x32xf32>
    "tpu.trace_start"() <{level = 10 : i32, message = "bkd,bke->bde"}> : () -> ()
    %cst_6 = arith.constant dense<0.000000e+00> : vector<8x32x32xf32>
    %9 = tpu.matmul %7, %8, %cst_6 {dimension_numbers = #tpu.dot_dimension_numbers<[1], [1], [2], [2], [0, 0, 0, 2, 1, 2], [0], [0]>} : vector<8x16x32xf32>, vector<8x16x32xf32>, vector<8x32x32xf32> -> vector<8x32x32xf32>
    "tpu.trace_stop"() : () -> ()
    "tpu.trace_start"() <{level = 10 : i32, message = "bqd,bde->bqe"}> : () -> ()
    %cst_7 = arith.constant dense<0.000000e+00> : vector<8x16x32xf32>
    %10 = tpu.matmul %6, %9, %cst_7 {dimension_numbers = #tpu.dot_dimension_numbers<[2], [1], [1], [2], [0, 0, 0, 1, 1, 2], [0], [0]>} : vector<8x16x32xf32>, vector<8x32x32xf32>, vector<8x16x32xf32> -> vector<8x16x32xf32>
    "tpu.trace_stop"() : () -> ()
    %11 = vector.extract_strided_slice %5 {offsets = [0, 0, 32], sizes = [8, 16, 32], strides = [1, 1, 1]} : vector<8x16x64xf32> to vector<8x16x32xf32>
    %12 = vector.extract_strided_slice %5 {offsets = [0, 0, 32], sizes = [8, 16, 32], strides = [1, 1, 1]} : vector<8x16x64xf32> to vector<8x16x32xf32>
    %13 = vector.extract_strided_slice %5 {offsets = [0, 0, 32], sizes = [8, 16, 32], strides = [1, 1, 1]} : vector<8x16x64xf32> to vector<8x16x32xf32>
    "tpu.trace_start"() <{level = 10 : i32, message = "bkd,bke->bde"}> : () -> ()
    %cst_8 = arith.constant dense<0.000000e+00> : vector<8x32x32xf32>
    %14 = tpu.matmul %12, %13, %cst_8 {dimension_numbers = #tpu.dot_dimension_numbers<[1], [1], [2], [2], [0, 0, 0, 2, 1, 2], [0], [0]>} : vector<8x16x32xf32>, vector<8x16x32xf32>, vector<8x32x32xf32> -> vector<8x32x32xf32>
    "tpu.trace_stop"() : () -> ()
    "tpu.trace_start"() <{level = 10 : i32, message = "bqd,bde->bqe"}> : () -> ()
    %cst_9 = arith.constant dense<0.000000e+00> : vector<8x16x32xf32>
    %15 = tpu.matmul %11, %14, %cst_9 {dimension_numbers = #tpu.dot_dimension_numbers<[2], [1], [1], [2], [0, 0, 0, 1, 1, 2], [0], [0]>} : vector<8x16x32xf32>, vector<8x32x32xf32>, vector<8x16x32xf32> -> vector<8x16x32xf32>
    "tpu.trace_stop"() : () -> ()
    %16 = tpu.concatenate %10, %15 in 2 : vector<8x16x32xf32>, vector<8x16x32xf32> -> vector<8x16x64xf32>
    %17 = vector.shape_cast %16 : vector<8x16x64xf32> to vector<128x64xf32>
    %cst_10 = arith.constant dense<0.000000e+00> : vector<128x128xf32>
    %18 = tpu.matmul %17, %1, %cst_10 {dimension_numbers = #tpu.dot_dimension_numbers<[1], [0], [0], [1], [0, 0, 1, 1], [], []>} : vector<128x64xf32>, vector<64x128xf32>, vector<128x128xf32> -> vector<128x128xf32>
    %19 = vector.shape_cast %18 : vector<128x128xf32> to vector<8x16x128xf32>
    %c0_11 = arith.constant 0 : index
    %c0_12 = arith.constant 0 : index
    %c0_13 = arith.constant 0 : index
    %20 = vector.load %arg4[%c0_11, %c0_12, %c0_13] : memref<8x16x128xf32, #tpu.memory_space<vmem>>, vector<8x16x128xf32>
    tpu.vector_store %arg4[%c0_11, %c0_12, %c0_13], %19 {strides = array<i32>} : memref<8x16x128xf32, #tpu.memory_space<vmem>>, vector<8x16x128xf32>,
    return
  }
  func.func @transform_0(%arg0: i32) -> (i32, i32, i32) {
    %c0_i32 = arith.constant 0 : i32
    %c0_i32_0 = arith.constant 0 : i32
    %c0_i32_1 = arith.constant 0 : i32
    return %arg0, %c0_i32, %c0_i32_0 : i32, i32, i32
  }
  func.func @transform_1(%arg0: i32) -> (i32, i32) {
    %c0_i32 = arith.constant 0 : i32
    %c0_i32_0 = arith.constant 0 : i32
    %c0_i32_1 = arith.constant 0 : i32
    return %c0_i32, %c0_i32_0 : i32, i32
  }
  func.func @transform_2(%arg0: i32) -> (i32, i32) {
    %c0_i32 = arith.constant 0 : i32
    %c0_i32_0 = arith.constant 0 : i32
    %c0_i32_1 = arith.constant 0 : i32
    return %c0_i32, %c0_i32_0 : i32, i32
  }
  func.func @transform_3(%arg0: i32) -> (i32, i32, i32) {
    %c0_i32 = arith.constant 0 : i32
    %c0_i32_0 = arith.constant 0 : i32
    %c0_i32_1 = arith.constant 0 : i32
    return %arg0, %c0_i32, %c0_i32_0 : i32, i32, i32
  }
}

module attributes {stable_mosaic.version = 11 : i64} {
  func.func @_mha_kernel(%arg0: i32, %arg1: memref<8x16x128xf32, #tpu.memory_space<vmem>>, %arg2: memref<128x64xf32, #tpu.memory_space<vmem>>, %arg3: memref<64x128xf32, #tpu.memory_space<vmem>>, %arg4: memref<8x16x128xf32, #tpu.memory_space<vmem>>) attributes {dimension_semantics = [#tpu.dimension_semantics<parallel>], iteration_bounds = array<i64: 1>, scalar_prefetch = 0 : i64, scratch_operands = 0 : i64, tpu.core_type = #tpu.core_type<tc>, window_params = [{transform_indices = @transform_0, window_bounds = array<i64: 8, 16, 128>}, {pipeline_mode = #tpu.pipeline_mode<synchronous>, transform_indices = @transform_1, window_bounds = array<i64: 128, 64>}, {pipeline_mode = #tpu.pipeline_mode<synchronous>, transform_indices = @transform_2, window_bounds = array<i64: 64, 128>}, {transform_indices = @transform_3, window_bounds = array<i64: 8, 16, 128>}]} {
    %c0 = arith.constant 0 : index
    %c0_0 = arith.constant 0 : index
    %0 = vector.load %arg2[%c0, %c0_0] : memref<128x64xf32, #tpu.memory_space<vmem>>, vector<128x64xf32>
    %c0_1 = arith.constant 0 : index
    %c0_2 = arith.constant 0 : index
    %1 = vector.load %arg3[%c0_1, %c0_2] : memref<64x128xf32, #tpu.memory_space<vmem>>, vector<64x128xf32>
    %c0_3 = arith.constant 0 : index
    %c0_4 = arith.constant 0 : index
    %c0_5 = arith.constant 0 : index
    %2 = vector.load %arg1[%c0_3, %c0_4, %c0_5] : memref<8x16x128xf32, #tpu.memory_space<vmem>>, vector<8x16x128xf32>
    %3 = vector.shape_cast %2 : vector<8x16x128xf32> to vector<128x128xf32>
    %cst = arith.constant dense<0.000000e+00> : vector<128x64xf32>
    %4 = tpu.matmul %3, %0, %cst {dimension_numbers = #tpu.dot_dimension_numbers<[1], [0], [0], [1], [0, 0, 1, 1], [], []>} : vector<128x128xf32>, vector<128x64xf32>, vector<128x64xf32> -> vector<128x64xf32>
    %5 = vector.shape_cast %4 : vector<128x64xf32> to vector<8x16x64xf32>
    %6 = vector.extract_strided_slice %5 {offsets = [0, 0, 0], sizes = [8, 16, 32], strides = [1, 1, 1]} : vector<8x16x64xf32> to vector<8x16x32xf32>
    %7 = vector.extract_strided_slice %5 {offsets = [0, 0, 0], sizes = [8, 16, 32], strides = [1, 1, 1]} : vector<8x16x64xf32> to vector<8x16x32xf32>
    %8 = vector.extract_strided_slice %5 {offsets = [0, 0, 0], sizes = [8, 16, 32], strides = [1, 1, 1]} : vector<8x16x64xf32> to vector<8x16x32xf32>
    "tpu.trace_start"() <{level = 10 : i32, message = "bkd,bke->bde"}> : () -> ()
    %cst_6 = arith.constant dense<0.000000e+00> : vector<8x32x32xf32>
    %9 = tpu.matmul %7, %8, %cst_6 {dimension_numbers = #tpu.dot_dimension_numbers<[1], [1], [2], [2], [0, 0, 0, 2, 1, 2], [0], [0]>} : vector<8x16x32xf32>, vector<8x16x32xf32>, vector<8x32x32xf32> -> vector<8x32x32xf32>
    "tpu.trace_stop"() : () -> ()
    "tpu.trace_start"() <{level = 10 : i32, message = "bqd,bde->bqe"}> : () -> ()
    %cst_7 = arith.constant dense<0.000000e+00> : vector<8x16x32xf32>
    %10 = tpu.matmul %6, %9, %cst_7 {dimension_numbers = #tpu.dot_dimension_numbers<[2], [1], [1], [2], [0, 0, 0, 1, 1, 2], [0], [0]>} : vector<8x16x32xf32>, vector<8x32x32xf32>, vector<8x16x32xf32> -> vector<8x16x32xf32>
    "tpu.trace_stop"() : () -> ()
    %11 = vector.extract_strided_slice %5 {offsets = [0, 0, 32], sizes = [8, 16, 32], strides = [1, 1, 1]} : vector<8x16x64xf32> to vector<8x16x32xf32>
    %12 = vector.extract_strided_slice %5 {offsets = [0, 0, 32], sizes = [8, 16, 32], strides = [1, 1, 1]} : vector<8x16x64xf32> to vector<8x16x32xf32>
    %13 = vector.extract_strided_slice %5 {offsets = [0, 0, 32], sizes = [8, 16, 32], strides = [1, 1, 1]} : vector<8x16x64xf32> to vector<8x16x32xf32>
    "tpu.trace_start"() <{level = 10 : i32, message = "bkd,bke->bde"}> : () -> ()
    %cst_8 = arith.constant dense<0.000000e+00> : vector<8x32x32xf32>
    %14 = tpu.matmul %12, %13, %cst_8 {dimension_numbers = #tpu.dot_dimension_numbers<[1], [1], [2], [2], [0, 0, 0, 2, 1, 2], [0], [0]>} : vector<8x16x32xf32>, vector<8x16x32xf32>, vector<8x32x32xf32> -> vector<8x32x32xf32>
    "tpu.trace_stop"() : () -> ()
    "tpu.trace_start"() <{level = 10 : i32, message = "bqd,bde->bqe"}> : () -> ()
    %cst_9 = arith.constant dense<0.000000e+00> : vector<8x16x32xf32>
    %15 = tpu.matmul %11, %14, %cst_9 {dimension_numbers = #tpu.dot_dimension_numbers<[2], [1], [1], [2], [0, 0, 0, 1, 1, 2], [0], [0]>} : vector<8x16x32xf32>, vector<8x32x32xf32>, vector<8x16x32xf32> -> vector<8x16x32xf32>
    "tpu.trace_stop"() : () -> ()
    %16 = tpu.concatenate %10, %15 in 2 : vector<8x16x32xf32>, vector<8x16x32xf32> -> vector<8x16x64xf32>
    %17 = vector.shape_cast %16 : vector<8x16x64xf32> to vector<128x64xf32>
    %cst_10 = arith.constant dense<0.000000e+00> : vector<128x128xf32>
    %18 = tpu.matmul %17, %1, %cst_10 {dimension_numbers = #tpu.dot_dimension_numbers<[1], [0], [0], [1], [0, 0, 1, 1], [], []>} : vector<128x64xf32>, vector<64x128xf32>, vector<128x128xf32> -> vector<128x128xf32>
    %19 = vector.shape_cast %18 : vector<128x128xf32> to vector<8x16x128xf32>
    %c0_11 = arith.constant 0 : index
    %c0_12 = arith.constant 0 : index
    %c0_13 = arith.constant 0 : index
    %20 = vector.load %arg4[%c0_11, %c0_12, %c0_13] : memref<8x16x128xf32, #tpu.memory_space<vmem>>, vector<8x16x128xf32>
    tpu.vector_store %arg4[%c0_11, %c0_12, %c0_13], %19 {strides = array<i32>} : memref<8x16x128xf32, #tpu.memory_space<vmem>>, vector<8x16x128xf32>,
    return
  }
  func.func @transform_0(%arg0: i32) -> (i32, i32, i32) {
    %c0_i32 = arith.constant 0 : i32
    %c0_i32_0 = arith.constant 0 : i32
    %c0_i32_1 = arith.constant 0 : i32
    return %arg0, %c0_i32, %c0_i32_0 : i32, i32, i32
  }
  func.func @transform_1(%arg0: i32) -> (i32, i32) {
    %c0_i32 = arith.constant 0 : i32
    %c0_i32_0 = arith.constant 0 : i32
    %c0_i32_1 = arith.constant 0 : i32
    return %c0_i32, %c0_i32_0 : i32, i32
  }
  func.func @transform_2(%arg0: i32) -> (i32, i32) {
    %c0_i32 = arith.constant 0 : i32
    %c0_i32_0 = arith.constant 0 : i32
    %c0_i32_1 = arith.constant 0 : i32
    return %c0_i32, %c0_i32_0 : i32, i32
  }
  func.func @transform_3(%arg0: i32) -> (i32, i32, i32) {
    %c0_i32 = arith.constant 0 : i32
    %c0_i32_0 = arith.constant 0 : i32
    %c0_i32_1 = arith.constant 0 : i32
    return %arg0, %c0_i32, %c0_i32_0 : i32, i32, i32
  }
}

</mosaic_0001>

<llo_original>
// kernel: tpu_custom_call.1
$region0: #{tpu_custom_call.1}
  #allocation0 [shape = 'u32[]', space=smem, size = 0x4, offset = 0x4, fixed_abs, tag = 'smem constant byte address 0x4 - core index']
  #allocation1 [shape = 'u32[144,128]{1,0:T(1,128)}', space=vmem, size = 0x12000, scoped, tag = 'internal scratch']
  %s0 = inlined_call_operand.vmem [shape: f32[8,16,128], index: 0, kind: input, shape index: {}]
  %s1 = inlined_call_operand.vmem [shape: f32[128,64], index: 1, kind: input, shape index: {}]
  %s2 = inlined_call_operand.vmem [shape: f32[64,128], index: 2, kind: input, shape index: {}]
  %s3 = inlined_call_operand.hbm [shape: f32[8,16,128], index: 3, kind: output, shape index: {}]
  %s4 = sld [smem:[#allocation0]]
  $region22: #{tpu_custom_call.1} parent=0
    _
  %s6 = ssub.s32 1, %s4
  %s7 = scalar_select 0, %s6, %s4
  $region1: #{tpu_custom_call.1} parent=0
    #allocation2 [shape = 'u8[65536]{0}', space=vmem, size = 0x10000, scoped, tag = 'output window, operand 0, single buffered']
    #allocation3 [shape = 's32[1]{0}', space=sflag, size = 0x4, scoped, tag = 'scoped memory for tpu_custom_call.1']
    %8 = vsyncpa [#allocation3], 0
    // Predicated region
    $region2: #{tpu_custom_call.1} parent=1 // pred_check
      _
    $region3: #{tpu_custom_call.1} parent=1 // pred_check_branch
      %10 = sbr.rel (0) target = $region5
    $region4: #{tpu_custom_call.1} parent=1 // pred_region
      _
    $region5: #{tpu_custom_call.1} parent=1 // pred_fallthru
      _
    // Predicated region
    $region6: #{tpu_custom_call.1} parent=1 // pred_check
      _
    $region7: #{tpu_custom_call.1} parent=1 // pred_check_branch
      %12 = sbr.rel (0) target = $region9
    $region8: #{tpu_custom_call.1} parent=1 // pred_region
      _
    $region9: #{tpu_custom_call.1} parent=1 // pred_fallthru
      _
    // Predicated region
    $region10: #{tpu_custom_call.1} parent=1 // pred_check
      _
    $region11: #{tpu_custom_call.1} parent=1 // pred_check_branch
      %14 = sbr.rel (0) target = $region13
    $region12: #{tpu_custom_call.1} parent=1 // pred_region
      _
    $region13: #{tpu_custom_call.1} parent=1 // pred_fallthru
      _
    %v15 = vld [vmem:[%s1] sm:$0xff]
    %v16 = vld [vmem:[%s1 + $0x8] sm:$0xff]
    %v17 = vld [vmem:[%s1 + $0x10] sm:$0xff]
    %v18 = vld [vmem:[%s1 + $0x18] sm:$0xff]
    %v19 = vld [vmem:[%s1 + $0x20] sm:$0xff]
    %v20 = vld [vmem:[%s1 + $0x28] sm:$0xff]
    %v21 = vld [vmem:[%s1 + $0x30] sm:$0xff]
    %v22 = vld [vmem:[%s1 + $0x38] sm:$0xff]
    %v23 = vld [vmem:[%s1 + $0x40] sm:$0xff]
    %v24 = vld [vmem:[%s1 + $0x48] sm:$0xff]
    %v25 = vld [vmem:[%s1 + $0x50] sm:$0xff]
    %v26 = vld [vmem:[%s1 + $0x58] sm:$0xff]
    %v27 = vld [vmem:[%s1 + $0x60] sm:$0xff]
    %v28 = vld [vmem:[%s1 + $0x68] sm:$0xff]
    %v29 = vld [vmem:[%s1 + $0x70] sm:$0xff]
    %v30 = vld [vmem:[%s1 + $0x78] sm:$0xff]
    %v31 = vld [vmem:[%s2] sm:$0xff]
    %v32 = vld [vmem:[%s2 + $0x8] sm:$0xff]
    %v33 = vld [vmem:[%s2 + $0x10] sm:$0xff]
    %v34 = vld [vmem:[%s2 + $0x18] sm:$0xff]
    %v35 = vld [vmem:[%s2 + $0x20] sm:$0xff]
    %v36 = vld [vmem:[%s2 + $0x28] sm:$0xff]
    %v37 = vld [vmem:[%s2 + $0x30] sm:$0xff]
    %v38 = vld [vmem:[%s2 + $0x38] sm:$0xff]
    %v39 = vld [vmem:[%s0] sm:$0xff]
    %v40 = vld [vmem:[%s0 + $0x8] sm:$0xff]
    %v41 = vld [vmem:[%s0 + $0x10] sm:$0xff]
    %v42 = vld [vmem:[%s0 + $0x18] sm:$0xff]
    %v43 = vld [vmem:[%s0 + $0x20] sm:$0xff]
    %v44 = vld [vmem:[%s0 + $0x28] sm:$0xff]
    %v45 = vld [vmem:[%s0 + $0x30] sm:$0xff]
    %v46 = vld [vmem:[%s0 + $0x38] sm:$0xff]
    %v47 = vld [vmem:[%s0 + $0x40] sm:$0xff]
    %v48 = vld [vmem:[%s0 + $0x48] sm:$0xff]
    %v49 = vld [vmem:[%s0 + $0x50] sm:$0xff]
    %v50 = vld [vmem:[%s0 + $0x58] sm:$0xff]
    %v51 = vld [vmem:[%s0 + $0x60] sm:$0xff]
    %v52 = vld [vmem:[%s0 + $0x68] sm:$0xff]
    %v53 = vld [vmem:[%s0 + $0x70] sm:$0xff]
    %v54 = vld [vmem:[%s0 + $0x78] sm:$0xff]
    %55 = vmatprep.subr.mxu0 0.0
    %56 = vmatpush1.msra.mxu0 %v15
    %57 = vmatprep.subr.mxu0 0.0
    %58 = vmatpush1.msra.mxu0 %v16
    %59 = vmatprep.subr.mxu0 0.0
    %60 = vmatpush1.msra.mxu0 %v17
    %61 = vmatprep.subr.mxu0 0.0
    %62 = vmatpush1.msra.mxu0 %v18
    %63 = vmatprep.subr.mxu0 0.0
    %64 = vmatpush1.msra.mxu0 %v19
    %65 = vmatprep.subr.mxu0 0.0
    %66 = vmatpush1.msra.mxu0 %v20
    %67 = vmatprep.subr.mxu0 0.0
    %68 = vmatpush1.msra.mxu0 %v21
    %69 = vmatprep.subr.mxu0 0.0
    %70 = vmatpush1.msra.mxu0 %v22
    %71 = vmatprep.subr.mxu0 0.0
    %72 = vmatpush1.msra.mxu0 %v23
    %73 = vmatprep.subr.mxu0 0.0
    %74 = vmatpush1.msra.mxu0 %v24
    %75 = vmatprep.subr.mxu0 0.0
    %76 = vmatpush1.msra.mxu0 %v25
    %77 = vmatprep.subr.mxu0 0.0
    %78 = vmatpush1.msra.mxu0 %v26
    %79 = vmatprep.subr.mxu0 0.0
    %80 = vmatpush1.msra.mxu0 %v27
    %81 = vmatprep.subr.mxu0 0.0
    %82 = vmatpush1.msra.mxu0 %v28
    %83 = vmatprep.subr.mxu0 0.0
    %84 = vmatpush1.msra.mxu0 %v29
    %85 = vmatprep.subr.mxu0 0.0
    %86 = vmatpush1.msra.mxu0 %v30
    %87 = vmatprep.subr.mxu0 0.0
    %88 = vmatpush1.msra.mxu0 0.0
    %89 = vmatprep.subr.mxu0 0.0
    %90 = vmatpush1.msra.mxu0 0.0
    %91 = vmatprep.subr.mxu0 0.0
    %92 = vmatpush1.msra.mxu0 0.0
    %93 = vmatprep.subr.mxu0 0.0
    %94 = vmatpush1.msra.mxu0 0.0
    %95 = vmatprep.subr.mxu0 0.0
    %96 = vmatpush1.msra.mxu0 0.0
    %97 = vmatprep.subr.mxu0 0.0
    %98 = vmatpush1.msra.mxu0 0.0
    %99 = vmatprep.subr.mxu0 0.0
    %100 = vmatpush1.msra.mxu0 0.0
    %101 = vmatprep.subr.mxu0 0.0
    %102 = vmatpush1.msra.mxu0 0.0
    %103 = vmatprep.subr.mxu0 0.0
    %104 = vmatpush1.msra.mxu0 0.0
    %105 = vmatprep.subr.mxu0 0.0
    %106 = vmatpush1.msra.mxu0 0.0
    %107 = vmatprep.subr.mxu0 0.0
    %108 = vmatpush1.msra.mxu0 0.0
    %109 = vmatprep.subr.mxu0 0.0
    %110 = vmatpush1.msra.mxu0 0.0
    %111 = vmatprep.subr.mxu0 0.0
    %112 = vmatpush1.msra.mxu0 0.0
    %113 = vmatprep.subr.mxu0 0.0
    %114 = vmatpush1.msra.mxu0 0.0
    %115 = vmatprep.subr.mxu0 0.0
    %116 = vmatpush1.msra.mxu0 0.0
    %117 = vmatprep.subr.mxu0 0.0
    %118 = vmatpush1.msra.mxu0 0.0
    %119 = vmatprep.mubr.f32.mxu0 0.0
    %120 = vmatmul.mubr.f32.gmra.mrb[0].mxu0 %v39
    %v121 = vpop.f32.mrb[0].mxu0
    %v122 = vadd.f32 0.0, %v121
    %v123 = vpop.f32.mrb[0].mxu0
    %124 = vmatprep.mubr.f32.mxu0 0.0
    %125 = vmatmul.mubr.f32.gmra.mrb[0].mxu0 %v40
    %v126 = vpop.f32.mrb[0].mxu0
    %v127 = vadd.f32 0.0, %v126
    %v128 = vpop.f32.mrb[0].mxu0
    %129 = vmatprep.mubr.f32.mxu0 0.0
    %130 = vmatmul.mubr.f32.gmra.mrb[0].mxu0 %v41
    %v131 = vpop.f32.mrb[0].mxu0
    %v132 = vadd.f32 0.0, %v131
    %v133 = vpop.f32.mrb[0].mxu0
    %134 = vmatprep.mubr.f32.mxu0 0.0
    %135 = vmatmul.mubr.f32.gmra.mrb[0].mxu0 %v42
    %v136 = vpop.f32.mrb[0].mxu0
    %v137 = vadd.f32 0.0, %v136
    %v138 = vpop.f32.mrb[0].mxu0
    %139 = vmatprep.mubr.f32.mxu0 0.0
    %140 = vmatmul.mubr.f32.gmra.mrb[0].mxu0 %v43
    %v141 = vpop.f32.mrb[0].mxu0
    %v142 = vadd.f32 0.0, %v141
    %v143 = vpop.f32.mrb[0].mxu0
    %144 = vmatprep.mubr.f32.mxu0 0.0
    %145 = vmatmul.mubr.f32.gmra.mrb[0].mxu0 %v44
    %v146 = vpop.f32.mrb[0].mxu0
    %v147 = vadd.f32 0.0, %v146
    %v148 = vpop.f32.mrb[0].mxu0
    %149 = vmatprep.mubr.f32.mxu0 0.0
    %150 = vmatmul.mubr.f32.gmra.mrb[0].mxu0 %v45
    %v151 = vpop.f32.mrb[0].mxu0
    %v152 = vadd.f32 0.0, %v151
    %v153 = vpop.f32.mrb[0].mxu0
    %154 = vmatprep.mubr.f32.mxu0 0.0
    %155 = vmatmul.mubr.f32.gmra.mrb[0].mxu0 %v46
    %v156 = vpop.f32.mrb[0].mxu0
    %v157 = vadd.f32 0.0, %v156
    %v158 = vpop.f32.mrb[0].mxu0
    %159 = vmatprep.mubr.f32.mxu0 0.0
    %160 = vmatmul.mubr.f32.gmra.mrb[0].mxu0 %v47
    %v161 = vpop.f32.mrb[0].mxu0
    %v162 = vadd.f32 0.0, %v161
    %v163 = vpop.f32.mrb[0].mxu0
    %164 = vmatprep.mubr.f32.mxu0 0.0
    %165 = vmatmul.mubr.f32.gmra.mrb[0].mxu0 %v48
    %v166 = vpop.f32.mrb[0].mxu0
    %v167 = vadd.f32 0.0, %v166
    %v168 = vpop.f32.mrb[0].mxu0
    %169 = vmatprep.mubr.f32.mxu0 0.0
    %170 = vmatmul.mubr.f32.gmra.mrb[0].mxu0 %v49
    %v171 = vpop.f32.mrb[0].mxu0
    %v172 = vadd.f32 0.0, %v171
    %v173 = vpop.f32.mrb[0].mxu0
    %174 = vmatprep.mubr.f32.mxu0 0.0
    %175 = vmatmul.mubr.f32.gmra.mrb[0].mxu0 %v50
    %v176 = vpop.f32.mrb[0].mxu0
    %v177 = vadd.f32 0.0, %v176
    %v178 = vpop.f32.mrb[0].mxu0
    %179 = vmatprep.mubr.f32.mxu0 0.0
    %180 = vmatmul.mubr.f32.gmra.mrb[0].mxu0 %v51
    %v181 = vpop.f32.mrb[0].mxu0
    %v182 = vadd.f32 0.0, %v181
    %v183 = vpop.f32.mrb[0].mxu0
    %184 = vmatprep.mubr.f32.mxu0 0.0
    %185 = vmatmul.mubr.f32.gmra.mrb[0].mxu0 %v52
    %v186 = vpop.f32.mrb[0].mxu0
    %v187 = vadd.f32 0.0, %v186
    %v188 = vpop.f32.mrb[0].mxu0
    %189 = vmatprep.mubr.f32.mxu0 0.0
    %190 = vmatmul.mubr.f32.gmra.mrb[0].mxu0 %v53
    %v191 = vpop.f32.mrb[0].mxu0
    %v192 = vadd.f32 0.0, %v191
    %v193 = vpop.f32.mrb[0].mxu0
    %194 = vmatprep.mubr.f32.mxu0 0.0
    %195 = vmatmul.mubr.f32.gmra.mrb[0].mxu0 %v54
    %v196 = vpop.f32.mrb[0].mxu0
    %v197 = vadd.f32 0.0, %v196
    %v198 = vpop.f32.mrb[0].mxu0
    %199 = vdwg.mxu0
    %200 = vxpose.xlu0.b32.start [1/16] %v122, 128
    %201 = vxpose.xlu0.b32.cont [2/16] %v127, 128
    %202 = vxpose.xlu0.b32.cont [3/16] 0.0, 128
    %203 = vxpose.xlu0.b32.cont [4/16] 0.0, 128
    %204 = vxpose.xlu0.b32.cont [5/16] 0.0, 128
    %205 = vxpose.xlu0.b32.cont [6/16] 0.0, 128
    %206 = vxpose.xlu0.b32.cont [7/16] 0.0, 128
    %207 = vxpose.xlu0.b32.cont [8/16] 0.0, 128
    %208 = vxpose.xlu0.b32.cont [9/16] 0.0, 128
    %209 = vxpose.xlu0.b32.cont [10/16] 0.0, 128
    %210 = vxpose.xlu0.b32.cont [11/16] 0.0, 128
    %211 = vxpose.xlu0.b32.cont [12/16] 0.0, 128
    %212 = vxpose.xlu0.b32.cont [13/16] 0.0, 128
    %213 = vxpose.xlu0.b32.cont [14/16] 0.0, 128
    %214 = vxpose.xlu0.b32.cont [15/16] 0.0, 128
    %215 = vxpose.xlu0.b32.end [16/16] 0.0, 128
    %v216 = vpop.trf.xlu0
    %v217 = vpop.trf.xlu0
    %v218 = vpop.trf.xlu0
    %v219 = vpop.trf.xlu0
    %v220 = vpop.trf.xlu0
    %v221 = vpop.trf.xlu0
    %v222 = vpop.trf.xlu0
    %v223 = vpop.trf.xlu0
    %v224 = vpop.trf.xlu0
    %v225 = vpop.trf.xlu0
    %v226 = vpop.trf.xlu0
    %v227 = vpop.trf.xlu0
    %v228 = vpop.trf.xlu0
    %v229 = vpop.trf.xlu0
    %v230 = vpop.trf.xlu0
    %v231 = vpop.trf.xlu0
    %vm232 = vcmask 130048
    %v234 = vsel %vm232, %v216, 0
    %v237 = vsel %vm232, %v217, 0
    %v240 = vsel %vm232, %v218, 0
    %v243 = vsel %vm232, %v219, 0
    %245 = vmatprep.subr.mxu0 0.0
    %246 = vmatpush1.msra.mxu0 %v122
    %247 = vmatprep.subr.mxu0 0.0
    %248 = vmatpush1.msra.mxu0 %v127
    %249 = vmatprep.subr.mxu0 0.0
    %250 = vmatpush1.msra.mxu0 0.0
    %251 = vmatprep.subr.mxu0 0.0
    %252 = vmatpush1.msra.mxu0 0.0
    %253 = vmatprep.subr.mxu0 0.0
    %254 = vmatpush1.msra.mxu0 0.0
    %255 = vmatprep.subr.mxu0 0.0
    %256 = vmatpush1.msra.mxu0 0.0
    %257 = vmatprep.subr.mxu0 0.0
    %258 = vmatpush1.msra.mxu0 0.0
    %259 = vmatprep.subr.mxu0 0.0
    %260 = vmatpush1.msra.mxu0 0.0
    %261 = vmatprep.subr.mxu0 0.0
    %262 = vmatpush1.msra.mxu0 0.0
    %263 = vmatprep.subr.mxu0 0.0
    %264 = vmatpush1.msra.mxu0 0.0
    %265 = vmatprep.subr.mxu0 0.0
    %266 = vmatpush1.msra.mxu0 0.0
    %267 = vmatprep.subr.mxu0 0.0
    %268 = vmatpush1.msra.mxu0 0.0
    %269 = vmatprep.subr.mxu0 0.0
    %270 = vmatpush1.msra.mxu0 0.0
    %271 = vmatprep.subr.mxu0 0.0
    %272 = vmatpush1.msra.mxu0 0.0
    %273 = vmatprep.subr.mxu0 0.0
    %274 = vmatpush1.msra.mxu0 0.0
    %275 = vmatprep.subr.mxu0 0.0
    %276 = vmatpush1.msra.mxu0 0.0
    %277 = vmatprep.subr.mxu0 0.0
    %278 = vmatpush1.msra.mxu0 0.0
    %279 = vmatprep.subr.mxu0 0.0
    %280 = vmatpush1.msra.mxu0 0.0
    %281 = vmatprep.subr.mxu0 0.0
    %282 = vmatpush1.msra.mxu0 0.0
    %283 = vmatprep.subr.mxu0 0.0
    %284 = vmatpush1.msra.mxu0 0.0
    %285 = vmatprep.subr.mxu0 0.0
    %286 = vmatpush1.msra.mxu0 0.0
    %287 = vmatprep.subr.mxu0 0.0
    %288 = vmatpush1.msra.mxu0 0.0
    %289 = vmatprep.subr.mxu0 0.0
    %290 = vmatpush1.msra.mxu0 0.0
    %291 = vmatprep.subr.mxu0 0.0
    %292 = vmatpush1.msra.mxu0 0.0
    %293 = vmatprep.subr.mxu0 0.0
    %294 = vmatpush1.msra.mxu0 0.0
    %295 = vmatprep.subr.mxu0 0.0
    %296 = vmatpush1.msra.mxu0 0.0
    %297 = vmatprep.subr.mxu0 0.0
    %298 = vmatpush1.msra.mxu0 0.0
    %299 = vmatprep.subr.mxu0 0.0
    %300 = vmatpush1.msra.mxu0 0.0
    %301 = vmatprep.subr.mxu0 0.0
    %302 = vmatpush1.msra.mxu0 0.0
    %303 = vmatprep.subr.mxu0 0.0
    %304 = vmatpush1.msra.mxu0 0.0
    %305 = vmatprep.subr.mxu0 0.0
    %306 = vmatpush1.msra.mxu0 0.0
    %307 = vmatprep.subr.mxu0 0.0
    %308 = vmatpush1.msra.mxu0 0.0
    %309 = vmatprep.mubr.f32.mxu0 0.0
    %310 = vmatmul.mubr.f32.gmra.mrb[0].mxu0 %v234
    %v311 = vpop.f32.mrb[0].mxu0
    %v312 = vadd.f32 0.0, %v311
    %v313 = vpop.f32.mrb[0].mxu0
    %314 = vmatprep.mubr.f32.mxu0 0.0
    %315 = vmatmul.mubr.f32.gmra.mrb[0].mxu0 %v237
    %v316 = vpop.f32.mrb[0].mxu0
    %v317 = vadd.f32 0.0, %v316
    %v318 = vpop.f32.mrb[0].mxu0
    %319 = vmatprep.mubr.f32.mxu0 0.0
    %320 = vmatmul.mubr.f32.gmra.mrb[0].mxu0 %v240
    %v321 = vpop.f32.mrb[0].mxu0
    %v322 = vadd.f32 0.0, %v321
    %v323 = vpop.f32.mrb[0].mxu0
    %324 = vmatprep.mubr.f32.mxu0 0.0
    %325 = vmatmul.mubr.f32.gmra.mrb[0].mxu0 %v243
    %v326 = vpop.f32.mrb[0].mxu0
    %v327 = vadd.f32 0.0, %v326
    %v328 = vpop.f32.mrb[0].mxu0
    %329 = vdwg.mxu0
    %330 = vxpose.xlu0.b32.start [1/16] %v132, 128
    %331 = vxpose.xlu0.b32.cont [2/16] %v137, 128
    %332 = vxpose.xlu0.b32.cont [3/16] 0.0, 128
    %333 = vxpose.xlu0.b32.cont [4/16] 0.0, 128
    %334 = vxpose.xlu0.b32.cont [5/16] 0.0, 128
    %335 = vxpose.xlu0.b32.cont [6/16] 0.0, 128
    %336 = vxpose.xlu0.b32.cont [7/16] 0.0, 128
    %337 = vxpose.xlu0.b32.cont [8/16] 0.0, 128
    %338 = vxpose.xlu0.b32.cont [9/16] 0.0, 128
    %339 = vxpose.xlu0.b32.cont [10/16] 0.0, 128
    %340 = vxpose.xlu0.b32.cont [11/16] 0.0, 128
    %341 = vxpose.xlu0.b32.cont [12/16] 0.0, 128
    %342 = vxpose.xlu0.b32.cont [13/16] 0.0, 128
    %343 = vxpose.xlu0.b32.cont [14/16] 0.0, 128
    %344 = vxpose.xlu0.b32.cont [15/16] 0.0, 128
    %345 = vxpose.xlu0.b32.end [16/16] 0.0, 128
    %v346 = vpop.trf.xlu0
    %v347 = vpop.trf.xlu0
    %v348 = vpop.trf.xlu0
    %v349 = vpop.trf.xlu0
    %v350 = vpop.trf.xlu0
    %v351 = vpop.trf.xlu0
    %v352 = vpop.trf.xlu0
    %v353 = vpop.trf.xlu0
    %v354 = vpop.trf.xlu0
    %v355 = vpop.trf.xlu0
    %v356 = vpop.trf.xlu0
    %v357 = vpop.trf.xlu0
    %v358 = vpop.trf.xlu0
    %v359 = vpop.trf.xlu0
    %v360 = vpop.trf.xlu0
    %v361 = vpop.trf.xlu0
    %v363 = vsel %vm232, %v346, 0
    %v366 = vsel %vm232, %v347, 0
    %v369 = vsel %vm232, %v348, 0
    %v372 = vsel %vm232, %v349, 0
    %374 = vmatprep.subr.mxu0 0.0
    %375 = vmatpush1.msra.mxu0 %v132
    %376 = vmatprep.subr.mxu0 0.0
    %377 = vmatpush1.msra.mxu0 %v137
    %378 = vmatprep.subr.mxu0 0.0
    %379 = vmatpush1.msra.mxu0 0.0
    %380 = vmatprep.subr.mxu0 0.0
    %381 = vmatpush1.msra.mxu0 0.0
    %382 = vmatprep.subr.mxu0 0.0
    %383 = vmatpush1.msra.mxu0 0.0
    %384 = vmatprep.subr.mxu0 0.0
    %385 = vmatpush1.msra.mxu0 0.0
    %386 = vmatprep.subr.mxu0 0.0
    %387 = vmatpush1.msra.mxu0 0.0
    %388 = vmatprep.subr.mxu0 0.0
    %389 = vmatpush1.msra.mxu0 0.0
    %390 = vmatprep.subr.mxu0 0.0
    %391 = vmatpush1.msra.mxu0 0.0
    %392 = vmatprep.subr.mxu0 0.0
    %393 = vmatpush1.msra.mxu0 0.0
    %394 = vmatprep.subr.mxu0 0.0
    %395 = vmatpush1.msra.mxu0 0.0
    %396 = vmatprep.subr.mxu0 0.0
    %397 = vmatpush1.msra.mxu0 0.0
    %398 = vmatprep.subr.mxu0 0.0
    %399 = vmatpush1.msra.mxu0 0.0
    %400 = vmatprep.subr.mxu0 0.0
    %401 = vmatpush1.msra.mxu0 0.0
    %402 = vmatprep.subr.mxu0 0.0
    %403 = vmatpush1.msra.mxu0 0.0
    %404 = vmatprep.subr.mxu0 0.0
    %405 = vmatpush1.msra.mxu0 0.0
    %406 = vmatprep.subr.mxu0 0.0
    %407 = vmatpush1.msra.mxu0 0.0
    %408 = vmatprep.subr.mxu0 0.0
    %409 = vmatpush1.msra.mxu0 0.0
    %410 = vmatprep.subr.mxu0 0.0
    %411 = vmatpush1.msra.mxu0 0.0
    %412 = vmatprep.subr.mxu0 0.0
    %413 = vmatpush1.msra.mxu0 0.0
    %414 = vmatprep.subr.mxu0 0.0
    %415 = vmatpush1.msra.mxu0 0.0
    %416 = vmatprep.subr.mxu0 0.0
    %417 = vmatpush1.msra.mxu0 0.0
    %418 = vmatprep.subr.mxu0 0.0
    %419 = vmatpush1.msra.mxu0 0.0
    %420 = vmatprep.subr.mxu0 0.0
    %421 = vmatpush1.msra.mxu0 0.0
    %422 = vmatprep.subr.mxu0 0.0
    %423 = vmatpush1.msra.mxu0 0.0
    %424 = vmatprep.subr.mxu0 0.0
    %425 = vmatpush1.msra.mxu0 0.0
    %426 = vmatprep.subr.mxu0 0.0
    %427 = vmatpush1.msra.mxu0 0.0
    %428 = vmatprep.subr.mxu0 0.0
    %429 = vmatpush1.msra.mxu0 0.0
    %430 = vmatprep.subr.mxu0 0.0
    %431 = vmatpush1.msra.mxu0 0.0
    %432 = vmatprep.subr.mxu0 0.0
    %433 = vmatpush1.msra.mxu0 0.0
    %434 = vmatprep.subr.mxu0 0.0
    %435 = vmatpush1.msra.mxu0 0.0
    %436 = vmatprep.subr.mxu0 0.0
    %437 = vmatpush1.msra.mxu0 0.0
    %438 = vmatprep.mubr.f32.mxu0 0.0
    %439 = vmatmul.mubr.f32.gmra.mrb[0].mxu0 %v363
    %v440 = vpop.f32.mrb[0].mxu0
    %v441 = vadd.f32 0.0, %v440
    %v442 = vpop.f32.mrb[0].mxu0
    %443 = vmatprep.mubr.f32.mxu0 0.0
    %444 = vmatmul.mubr.f32.gmra.mrb[0].mxu0 %v366
    %v445 = vpop.f32.mrb[0].mxu0
    %v446 = vadd.f32 0.0, %v445
    %v447 = vpop.f32.mrb[0].mxu0
    %448 = vmatprep.mubr.f32.mxu0 0.0
    %449 = vmatmul.mubr.f32.gmra.mrb[0].mxu0 %v369
    %v450 = vpop.f32.mrb[0].mxu0
    %v451 = vadd.f32 0.0, %v450
    %v452 = vpop.f32.mrb[0].mxu0
    %453 = vmatprep.mubr.f32.mxu0 0.0
    %454 = vmatmul.mubr.f32.gmra.mrb[0].mxu0 %v372
    %v455 = vpop.f32.mrb[0].mxu0
    %v456 = vadd.f32 0.0, %v455
    %v457 = vpop.f32.mrb[0].mxu0
    %458 = vdwg.mxu0
    %459 = vxpose.xlu0.b32.start [1/16] %v142, 128
    %460 = vxpose.xlu0.b32.cont [2/16] %v147, 128
    %461 = vxpose.xlu0.b32.cont [3/16] 0.0, 128
    %462 = vxpose.xlu0.b32.cont [4/16] 0.0, 128
    %463 = vxpose.xlu0.b32.cont [5/16] 0.0, 128
    %464 = vxpose.xlu0.b32.cont [6/16] 0.0, 128
    %465 = vxpose.xlu0.b32.cont [7/16] 0.0, 128
    %466 = vxpose.xlu0.b32.cont [8/16] 0.0, 128
    %467 = vxpose.xlu0.b32.cont [9/16] 0.0, 128
    %468 = vxpose.xlu0.b32.cont [10/16] 0.0, 128
    %469 = vxpose.xlu0.b32.cont [11/16] 0.0, 128
    %470 = vxpose.xlu0.b32.cont [12/16] 0.0, 128
    %471 = vxpose.xlu0.b32.cont [13/16] 0.0, 128
    %472 = vxpose.xlu0.b32.cont [14/16] 0.0, 128
    %473 = vxpose.xlu0.b32.cont [15/16] 0.0, 128
    %474 = vxpose.xlu0.b32.end [16/16] 0.0, 128
    %v475 = vpop.trf.xlu0
    %v476 = vpop.trf.xlu0
    %v477 = vpop.trf.xlu0
    %v478 = vpop.trf.xlu0
    %v479 = vpop.trf.xlu0
    %v480 = vpop.trf.xlu0
    %v481 = vpop.trf.xlu0
    %v482 = vpop.trf.xlu0
    %v483 = vpop.trf.xlu0
    %v484 = vpop.trf.xlu0
    %v485 = vpop.trf.xlu0
    %v486 = vpop.trf.xlu0
    %v487 = vpop.trf.xlu0
    %v488 = vpop.trf.xlu0
    %v489 = vpop.trf.xlu0
    %v490 = vpop.trf.xlu0
    %v492 = vsel %vm232, %v475, 0
    %v495 = vsel %vm232, %v476, 0
    %v498 = vsel %vm232, %v477, 0
    %v501 = vsel %vm232, %v478, 0
    %503 = vmatprep.subr.mxu0 0.0
    %504 = vmatpush1.msra.mxu0 %v142
    %505 = vmatprep.subr.mxu0 0.0
    %506 = vmatpush1.msra.mxu0 %v147
    %507 = vmatprep.subr.mxu0 0.0
    %508 = vmatpush1.msra.mxu0 0.0
    %509 = vmatprep.subr.mxu0 0.0
    %510 = vmatpush1.msra.mxu0 0.0
    %511 = vmatprep.subr.mxu0 0.0
    %512 = vmatpush1.msra.mxu0 0.0
    %513 = vmatprep.subr.mxu0 0.0
    %514 = vmatpush1.msra.mxu0 0.0
    %515 = vmatprep.subr.mxu0 0.0
    %516 = vmatpush1.msra.mxu0 0.0
    %517 = vmatprep.subr.mxu0 0.0
    %518 = vmatpush1.msra.mxu0 0.0
    %519 = vmatprep.subr.mxu0 0.0
    %520 = vmatpush1.msra.mxu0 0.0
    %521 = vmatprep.subr.mxu0 0.0
    %522 = vmatpush1.msra.mxu0 0.0
    %523 = vmatprep.subr.mxu0 0.0
    %524 = vmatpush1.msra.mxu0 0.0
    %525 = vmatprep.subr.mxu0 0.0
    %526 = vmatpush1.msra.mxu0 0.0
    %527 = vmatprep.subr.mxu0 0.0
    %528 = vmatpush1.msra.mxu0 0.0
    %529 = vmatprep.subr.mxu0 0.0
    %530 = vmatpush1.msra.mxu0 0.0
    %531 = vmatprep.subr.mxu0 0.0
    %532 = vmatpush1.msra.mxu0 0.0
    %533 = vmatprep.subr.mxu0 0.0
    %534 = vmatpush1.msra.mxu0 0.0
    %535 = vmatprep.subr.mxu0 0.0
    %536 = vmatpush1.msra.mxu0 0.0
    %537 = vmatprep.subr.mxu0 0.0
    %538 = vmatpush1.msra.mxu0 0.0
    %539 = vmatprep.subr.mxu0 0.0
    %540 = vmatpush1.msra.mxu0 0.0
    %541 = vmatprep.subr.mxu0 0.0
    %542 = vmatpush1.msra.mxu0 0.0
    %543 = vmatprep.subr.mxu0 0.0
    %544 = vmatpush1.msra.mxu0 0.0
    %545 = vmatprep.subr.mxu0 0.0
    %546 = vmatpush1.msra.mxu0 0.0
    %547 = vmatprep.subr.mxu0 0.0
    %548 = vmatpush1.msra.mxu0 0.0
    %549 = vmatprep.subr.mxu0 0.0
    %550 = vmatpush1.msra.mxu0 0.0
    %551 = vmatprep.subr.mxu0 0.0
    %552 = vmatpush1.msra.mxu0 0.0
    %553 = vmatprep.subr.mxu0 0.0
    %554 = vmatpush1.msra.mxu0 0.0
    %555 = vmatprep.subr.mxu0 0.0
    %556 = vmatpush1.msra.mxu0 0.0
    %557 = vmatprep.subr.mxu0 0.0
    %558 = vmatpush1.msra.mxu0 0.0
    %559 = vmatprep.subr.mxu0 0.0
    %560 = vmatpush1.msra.mxu0 0.0
    %561 = vmatprep.subr.mxu0 0.0
    %562 = vmatpush1.msra.mxu0 0.0
    %563 = vmatprep.subr.mxu0 0.0
    %564 = vmatpush1.msra.mxu0 0.0
    %565 = vmatprep.subr.mxu0 0.0
    %566 = vmatpush1.msra.mxu0 0.0
    %567 = vmatprep.mubr.f32.mxu0 0.0
    %568 = vmatmul.mubr.f32.gmra.mrb[0].mxu0 %v492
    %v569 = vpop.f32.mrb[0].mxu0
    %v570 = vadd.f32 0.0, %v569
    %v571 = vpop.f32.mrb[0].mxu0
    %572 = vmatprep.mubr.f32.mxu0 0.0
    %573 = vmatmul.mubr.f32.gmra.mrb[0].mxu0 %v495
    %v574 = vpop.f32.mrb[0].mxu0
    %v575 = vadd.f32 0.0, %v574
    %v576 = vpop.f32.mrb[0].mxu0
    %577 = vmatprep.mubr.f32.mxu0 0.0
    %578 = vmatmul.mubr.f32.gmra.mrb[0].mxu0 %v498
    %v579 = vpop.f32.mrb[0].mxu0
    %v580 = vadd.f32 0.0, %v579
    %v581 = vpop.f32.mrb[0].mxu0
    %582 = vmatprep.mubr.f32.mxu0 0.0
    %583 = vmatmul.mubr.f32.gmra.mrb[0].mxu0 %v501
    %v584 = vpop.f32.mrb[0].mxu0
    %v585 = vadd.f32 0.0, %v584
    %v586 = vpop.f32.mrb[0].mxu0
    %587 = vdwg.mxu0
    %588 = vxpose.xlu0.b32.start [1/16] %v152, 128
    %589 = vxpose.xlu0.b32.cont [2/16] %v157, 128
    %590 = vxpose.xlu0.b32.cont [3/16] 0.0, 128
    %591 = vxpose.xlu0.b32.cont [4/16] 0.0, 128
    %592 = vxpose.xlu0.b32.cont [5/16] 0.0, 128
    %593 = vxpose.xlu0.b32.cont [6/16] 0.0, 128
    %594 = vxpose.xlu0.b32.cont [7/16] 0.0, 128
    %595 = vxpose.xlu0.b32.cont [8/16] 0.0, 128
    %596 = vxpose.xlu0.b32.cont [9/16] 0.0, 128
    %597 = vxpose.xlu0.b32.cont [10/16] 0.0, 128
    %598 = vxpose.xlu0.b32.cont [11/16] 0.0, 128
    %599 = vxpose.xlu0.b32.cont [12/16] 0.0, 128
    %600 = vxpose.xlu0.b32.cont [13/16] 0.0, 128
    %601 = vxpose.xlu0.b32.cont [14/16] 0.0, 128
    %602 = vxpose.xlu0.b32.cont [15/16] 0.0, 128
    %603 = vxpose.xlu0.b32.end [16/16] 0.0, 128
    %v604 = vpop.trf.xlu0
    %v605 = vpop.trf.xlu0
    %v606 = vpop.trf.xlu0
    %v607 = vpop.trf.xlu0
    %v608 = vpop.trf.xlu0
    %v609 = vpop.trf.xlu0
    %v610 = vpop.trf.xlu0
    %v611 = vpop.trf.xlu0
    %v612 = vpop.trf.xlu0
    %v613 = vpop.trf.xlu0
    %v614 = vpop.trf.xlu0
    %v615 = vpop.trf.xlu0
    %v616 = vpop.trf.xlu0
    %v617 = vpop.trf.xlu0
    %v618 = vpop.trf.xlu0
    %v619 = vpop.trf.xlu0
    %v621 = vsel %vm232, %v604, 0
    %v624 = vsel %vm232, %v605, 0
    %v627 = vsel %vm232, %v606, 0
    %v630 = vsel %vm232, %v607, 0
    %632 = vmatprep.subr.mxu0 0.0
    %633 = vmatpush1.msra.mxu0 %v152
    %634 = vmatprep.subr.mxu0 0.0
    %635 = vmatpush1.msra.mxu0 %v157
    %636 = vmatprep.subr.mxu0 0.0
    %637 = vmatpush1.msra.mxu0 0.0
    %638 = vmatprep.subr.mxu0 0.0
    %639 = vmatpush1.msra.mxu0 0.0
    %640 = vmatprep.subr.mxu0 0.0
    %641 = vmatpush1.msra.mxu0 0.0
    %642 = vmatprep.subr.mxu0 0.0
    %643 = vmatpush1.msra.mxu0 0.0
    %644 = vmatprep.subr.mxu0 0.0
    %645 = vmatpush1.msra.mxu0 0.0
    %646 = vmatprep.subr.mxu0 0.0
    %647 = vmatpush1.msra.mxu0 0.0
    %648 = vmatprep.subr.mxu0 0.0
    %649 = vmatpush1.msra.mxu0 0.0
    %650 = vmatprep.subr.mxu0 0.0
    %651 = vmatpush1.msra.mxu0 0.0
    %652 = vmatprep.subr.mxu0 0.0
    %653 = vmatpush1.msra.mxu0 0.0
    %654 = vmatprep.subr.mxu0 0.0
    %655 = vmatpush1.msra.mxu0 0.0
    %656 = vmatprep.subr.mxu0 0.0
    %657 = vmatpush1.msra.mxu0 0.0
    %658 = vmatprep.subr.mxu0 0.0
    %659 = vmatpush1.msra.mxu0 0.0
    %660 = vmatprep.subr.mxu0 0.0
    %661 = vmatpush1.msra.mxu0 0.0
    %662 = vmatprep.subr.mxu0 0.0
    %663 = vmatpush1.msra.mxu0 0.0
    %664 = vmatprep.subr.mxu0 0.0
    %665 = vmatpush1.msra.mxu0 0.0
    %666 = vmatprep.subr.mxu0 0.0
    %667 = vmatpush1.msra.mxu0 0.0
    %668 = vmatprep.subr.mxu0 0.0
    %669 = vmatpush1.msra.mxu0 0.0
    %670 = vmatprep.subr.mxu0 0.0
    %671 = vmatpush1.msra.mxu0 0.0
    %672 = vmatprep.subr.mxu0 0.0
    %673 = vmatpush1.msra.mxu0 0.0
    %674 = vmatprep.subr.mxu0 0.0
    %675 = vmatpush1.msra.mxu0 0.0
    %676 = vmatprep.subr.mxu0 0.0
    %677 = vmatpush1.msra.mxu0 0.0
    %678 = vmatprep.subr.mxu0 0.0
    %679 = vmatpush1.msra.mxu0 0.0
    %680 = vmatprep.subr.mxu0 0.0
    %681 = vmatpush1.msra.mxu0 0.0
    %682 = vmatprep.subr.mxu0 0.0
    %683 = vmatpush1.msra.mxu0 0.0
    %684 = vmatprep.subr.mxu0 0.0
    %685 = vmatpush1.msra.mxu0 0.0
    %686 = vmatprep.subr.mxu0 0.0
    %687 = vmatpush1.msra.mxu0 0.0
    %688 = vmatprep.subr.mxu0 0.0
    %689 = vmatpush1.msra.mxu0 0.0
    %690 = vmatprep.subr.mxu0 0.0
    %691 = vmatpush1.msra.mxu0 0.0
    %692 = vmatprep.subr.mxu0 0.0
    %693 = vmatpush1.msra.mxu0 0.0
    %694 = vmatprep.subr.mxu0 0.0
    %695 = vmatpush1.msra.mxu0 0.0
    %696 = vmatprep.mubr.f32.mxu0 0.0
    %697 = vmatmul.mubr.f32.gmra.mrb[0].mxu0 %v621
    %v698 = vpop.f32.mrb[0].mxu0
    %v699 = vadd.f32 0.0, %v698
    %v700 = vpop.f32.mrb[0].mxu0
    %701 = vmatprep.mubr.f32.mxu0 0.0
    %702 = vmatmul.mubr.f32.gmra.mrb[0].mxu0 %v624
    %v703 = vpop.f32.mrb[0].mxu0
    %v704 = vadd.f32 0.0, %v703
    %v705 = vpop.f32.mrb[0].mxu0
    %706 = vmatprep.mubr.f32.mxu0 0.0
    %707 = vmatmul.mubr.f32.gmra.mrb[0].mxu0 %v627
    %v708 = vpop.f32.mrb[0].mxu0
    %v709 = vadd.f32 0.0, %v708
    %v710 = vpop.f32.mrb[0].mxu0
    %711 = vmatprep.mubr.f32.mxu0 0.0
    %712 = vmatmul.mubr.f32.gmra.mrb[0].mxu0 %v630
    %v713 = vpop.f32.mrb[0].mxu0
    %v714 = vadd.f32 0.0, %v713
    %v715 = vpop.f32.mrb[0].mxu0
    %716 = vdwg.mxu0
    %717 = vxpose.xlu0.b32.start [1/16] %v162, 128
    %718 = vxpose.xlu0.b32.cont [2/16] %v167, 128
    %719 = vxpose.xlu0.b32.cont [3/16] 0.0, 128
    %720 = vxpose.xlu0.b32.cont [4/16] 0.0, 128
    %721 = vxpose.xlu0.b32.cont [5/16] 0.0, 128
    %722 = vxpose.xlu0.b32.cont [6/16] 0.0, 128
    %723 = vxpose.xlu0.b32.cont [7/16] 0.0, 128
    %724 = vxpose.xlu0.b32.cont [8/16] 0.0, 128
    %725 = vxpose.xlu0.b32.cont [9/16] 0.0, 128
    %726 = vxpose.xlu0.b32.cont [10/16] 0.0, 128
    %727 = vxpose.xlu0.b32.cont [11/16] 0.0, 128
    %728 = vxpose.xlu0.b32.cont [12/16] 0.0, 128
    %729 = vxpose.xlu0.b32.cont [13/16] 0.0, 128
    %730 = vxpose.xlu0.b32.cont [14/16] 0.0, 128
    %731 = vxpose.xlu0.b32.cont [15/16] 0.0, 128
    %732 = vxpose.xlu0.b32.end [16/16] 0.0, 128
    %v733 = vpop.trf.xlu0
    %v734 = vpop.trf.xlu0
    %v735 = vpop.trf.xlu0
    %v736 = vpop.trf.xlu0
    %v737 = vpop.trf.xlu0
    %v738 = vpop.trf.xlu0
    %v739 = vpop.trf.xlu0
    %v740 = vpop.trf.xlu0
    %v741 = vpop.trf.xlu0
    %v742 = vpop.trf.xlu0
    %v743 = vpop.trf.xlu0
    %v744 = vpop.trf.xlu0
    %v745 = vpop.trf.xlu0
    %v746 = vpop.trf.xlu0
    %v747 = vpop.trf.xlu0
    %v748 = vpop.trf.xlu0
    %v750 = vsel %vm232, %v733, 0
    %v753 = vsel %vm232, %v734, 0
    %v756 = vsel %vm232, %v735, 0
    %v759 = vsel %vm232, %v736, 0
    %761 = vmatprep.subr.mxu0 0.0
    %762 = vmatpush1.msra.mxu0 %v162
    %763 = vmatprep.subr.mxu0 0.0
    %764 = vmatpush1.msra.mxu0 %v167
    %765 = vmatprep.subr.mxu0 0.0
    %766 = vmatpush1.msra.mxu0 0.0
    %767 = vmatprep.subr.mxu0 0.0
    %768 = vmatpush1.msra.mxu0 0.0
    %769 = vmatprep.subr.mxu0 0.0
    %770 = vmatpush1.msra.mxu0 0.0
    %771 = vmatprep.subr.mxu0 0.0
    %772 = vmatpush1.msra.mxu0 0.0
    %773 = vmatprep.subr.mxu0 0.0
    %774 = vmatpush1.msra.mxu0 0.0
    %775 = vmatprep.subr.mxu0 0.0
    %776 = vmatpush1.msra.mxu0 0.0
    %777 = vmatprep.subr.mxu0 0.0
    %778 = vmatpush1.msra.mxu0 0.0
    %779 = vmatprep.subr.mxu0 0.0
    %780 = vmatpush1.msra.mxu0 0.0
    %781 = vmatprep.subr.mxu0 0.0
    %782 = vmatpush1.msra.mxu0 0.0
    %783 = vmatprep.subr.mxu0 0.0
    %784 = vmatpush1.msra.mxu0 0.0
    %785 = vmatprep.subr.mxu0 0.0
    %786 = vmatpush1.msra.mxu0 0.0
    %787 = vmatprep.subr.mxu0 0.0
    %788 = vmatpush1.msra.mxu0 0.0
    %789 = vmatprep.subr.mxu0 0.0
    %790 = vmatpush1.msra.mxu0 0.0
    %791 = vmatprep.subr.mxu0 0.0
    %792 = vmatpush1.msra.mxu0 0.0
    %793 = vmatprep.subr.mxu0 0.0
    %794 = vmatpush1.msra.mxu0 0.0
    %795 = vmatprep.subr.mxu0 0.0
    %796 = vmatpush1.msra.mxu0 0.0
    %797 = vmatprep.subr.mxu0 0.0
    %798 = vmatpush1.msra.mxu0 0.0
    %799 = vmatprep.subr.mxu0 0.0
    %800 = vmatpush1.msra.mxu0 0.0
    %801 = vmatprep.subr.mxu0 0.0
    %802 = vmatpush1.msra.mxu0 0.0
    %803 = vmatprep.subr.mxu0 0.0
    %804 = vmatpush1.msra.mxu0 0.0
    %805 = vmatprep.subr.mxu0 0.0
    %806 = vmatpush1.msra.mxu0 0.0
    %807 = vmatprep.subr.mxu0 0.0
    %808 = vmatpush1.msra.mxu0 0.0
    %809 = vmatprep.subr.mxu0 0.0
    %810 = vmatpush1.msra.mxu0 0.0
    %811 = vmatprep.subr.mxu0 0.0
    %812 = vmatpush1.msra.mxu0 0.0
    %813 = vmatprep.subr.mxu0 0.0
    %814 = vmatpush1.msra.mxu0 0.0
    %815 = vmatprep.subr.mxu0 0.0
    %816 = vmatpush1.msra.mxu0 0.0
    %817 = vmatprep.subr.mxu0 0.0
    %818 = vmatpush1.msra.mxu0 0.0
    %819 = vmatprep.subr.mxu0 0.0
    %820 = vmatpush1.msra.mxu0 0.0
    %821 = vmatprep.subr.mxu0 0.0
    %822 = vmatpush1.msra.mxu0 0.0
    %823 = vmatprep.subr.mxu0 0.0
    %824 = vmatpush1.msra.mxu0 0.0
    %825 = vmatprep.mubr.f32.mxu0 0.0
    %826 = vmatmul.mubr.f32.gmra.mrb[0].mxu0 %v750
    %v827 = vpop.f32.mrb[0].mxu0
    %v828 = vadd.f32 0.0, %v827
    %v829 = vpop.f32.mrb[0].mxu0
    %830 = vmatprep.mubr.f32.mxu0 0.0
    %831 = vmatmul.mubr.f32.gmra.mrb[0].mxu0 %v753
    %v832 = vpop.f32.mrb[0].mxu0
    %v833 = vadd.f32 0.0, %v832
    %v834 = vpop.f32.mrb[0].mxu0
    %835 = vmatprep.mubr.f32.mxu0 0.0
    %836 = vmatmul.mubr.f32.gmra.mrb[0].mxu0 %v756
    %v837 = vpop.f32.mrb[0].mxu0
    %v838 = vadd.f32 0.0, %v837
    %v839 = vpop.f32.mrb[0].mxu0
    %840 = vmatprep.mubr.f32.mxu0 0.0
    %841 = vmatmul.mubr.f32.gmra.mrb[0].mxu0 %v759
    %v842 = vpop.f32.mrb[0].mxu0
    %v843 = vadd.f32 0.0, %v842
    %v844 = vpop.f32.mrb[0].mxu0
    %845 = vdwg.mxu0
    %846 = vxpose.xlu0.b32.start [1/16] %v172, 128
    %847 = vxpose.xlu0.b32.cont [2/16] %v177, 128
    %848 = vxpose.xlu0.b32.cont [3/16] 0.0, 128
    %849 = vxpose.xlu0.b32.cont [4/16] 0.0, 128
    %850 = vxpose.xlu0.b32.cont [5/16] 0.0, 128
    %851 = vxpose.xlu0.b32.cont [6/16] 0.0, 128
    %852 = vxpose.xlu0.b32.cont [7/16] 0.0, 128
    %853 = vxpose.xlu0.b32.cont [8/16] 0.0, 128
    %854 = vxpose.xlu0.b32.cont [9/16] 0.0, 128
    %855 = vxpose.xlu0.b32.cont [10/16] 0.0, 128
    %856 = vxpose.xlu0.b32.cont [11/16] 0.0, 128
    %857 = vxpose.xlu0.b32.cont [12/16] 0.0, 128
    %858 = vxpose.xlu0.b32.cont [13/16] 0.0, 128
    %859 = vxpose.xlu0.b32.cont [14/16] 0.0, 128
    %860 = vxpose.xlu0.b32.cont [15/16] 0.0, 128
    %861 = vxpose.xlu0.b32.end [16/16] 0.0, 128
    %v862 = vpop.trf.xlu0
    %v863 = vpop.trf.xlu0
    %v864 = vpop.trf.xlu0
    %v865 = vpop.trf.xlu0
    %v866 = vpop.trf.xlu0
    %v867 = vpop.trf.xlu0
    %v868 = vpop.trf.xlu0
    %v869 = vpop.trf.xlu0
    %v870 = vpop.trf.xlu0
    %v871 = vpop.trf.xlu0
    %v872 = vpop.trf.xlu0
    %v873 = vpop.trf.xlu0
    %v874 = vpop.trf.xlu0
    %v875 = vpop.trf.xlu0
    %v876 = vpop.trf.xlu0
    %v877 = vpop.trf.xlu0
    %v879 = vsel %vm232, %v862, 0
    %v882 = vsel %vm232, %v863, 0
    %v885 = vsel %vm232, %v864, 0
    %v888 = vsel %vm232, %v865, 0
    %890 = vmatprep.subr.mxu0 0.0
    %891 = vmatpush1.msra.mxu0 %v172
    %892 = vmatprep.subr.mxu0 0.0
    %893 = vmatpush1.msra.mxu0 %v177
    %894 = vmatprep.subr.mxu0 0.0
    %895 = vmatpush1.msra.mxu0 0.0
    %896 = vmatprep.subr.mxu0 0.0
    %897 = vmatpush1.msra.mxu0 0.0
    %898 = vmatprep.subr.mxu0 0.0
    %899 = vmatpush1.msra.mxu0 0.0
    %900 = vmatprep.subr.mxu0 0.0
    %901 = vmatpush1.msra.mxu0 0.0
    %902 = vmatprep.subr.mxu0 0.0
    %903 = vmatpush1.msra.mxu0 0.0
    %904 = vmatprep.subr.mxu0 0.0
    %905 = vmatpush1.msra.mxu0 0.0
    %906 = vmatprep.subr.mxu0 0.0
    %907 = vmatpush1.msra.mxu0 0.0
    %908 = vmatprep.subr.mxu0 0.0
    %909 = vmatpush1.msra.mxu0 0.0
    %910 = vmatprep.subr.mxu0 0.0
    %911 = vmatpush1.msra.mxu0 0.0
    %912 = vmatprep.subr.mxu0 0.0
    %913 = vmatpush1.msra.mxu0 0.0
    %914 = vmatprep.subr.mxu0 0.0
    %915 = vmatpush1.msra.mxu0 0.0
    %916 = vmatprep.subr.mxu0 0.0
    %917 = vmatpush1.msra.mxu0 0.0
    %918 = vmatprep.subr.mxu0 0.0
    %919 = vmatpush1.msra.mxu0 0.0
    %920 = vmatprep.subr.mxu0 0.0
    %921 = vmatpush1.msra.mxu0 0.0
    %922 = vmatprep.subr.mxu0 0.0
    %923 = vmatpush1.msra.mxu0 0.0
    %924 = vmatprep.subr.mxu0 0.0
    %925 = vmatpush1.msra.mxu0 0.0
    %926 = vmatprep.subr.mxu0 0.0
    %927 = vmatpush1.msra.mxu0 0.0
    %928 = vmatprep.subr.mxu0 0.0
    %929 = vmatpush1.msra.mxu0 0.0
    %930 = vmatprep.subr.mxu0 0.0
    %931 = vmatpush1.msra.mxu0 0.0
    %932 = vmatprep.subr.mxu0 0.0
    %933 = vmatpush1.msra.mxu0 0.0
    %934 = vmatprep.subr.mxu0 0.0
    %935 = vmatpush1.msra.mxu0 0.0
    %936 = vmatprep.subr.mxu0 0.0
    %937 = vmatpush1.msra.mxu0 0.0
    %938 = vmatprep.subr.mxu0 0.0
    %939 = vmatpush1.msra.mxu0 0.0
    %940 = vmatprep.subr.mxu0 0.0
    %941 = vmatpush1.msra.mxu0 0.0
    %942 = vmatprep.subr.mxu0 0.0
    %943 = vmatpush1.msra.mxu0 0.0
    %944 = vmatprep.subr.mxu0 0.0
    %945 = vmatpush1.msra.mxu0 0.0
    %946 = vmatprep.subr.mxu0 0.0
    %947 = vmatpush1.msra.mxu0 0.0
    %948 = vmatprep.subr.mxu0 0.0
    %949 = vmatpush1.msra.mxu0 0.0
    %950 = vmatprep.subr.mxu0 0.0
    %951 = vmatpush1.msra.mxu0 0.0
    %952 = vmatprep.subr.mxu0 0.0
    %953 = vmatpush1.msra.mxu0 0.0
    %954 = vmatprep.mubr.f32.mxu0 0.0
    %955 = vmatmul.mubr.f32.gmra.mrb[0].mxu0 %v879
    %v956 = vpop.f32.mrb[0].mxu0
    %v957 = vadd.f32 0.0, %v956
    %v958 = vpop.f32.mrb[0].mxu0
    %959 = vmatprep.mubr.f32.mxu0 0.0
    %960 = vmatmul.mubr.f32.gmra.mrb[0].mxu0 %v882
    %v961 = vpop.f32.mrb[0].mxu0
    %v962 = vadd.f32 0.0, %v961
    %v963 = vpop.f32.mrb[0].mxu0
    %964 = vmatprep.mubr.f32.mxu0 0.0
    %965 = vmatmul.mubr.f32.gmra.mrb[0].mxu0 %v885
    %v966 = vpop.f32.mrb[0].mxu0
    %v967 = vadd.f32 0.0, %v966
    %v968 = vpop.f32.mrb[0].mxu0
    %969 = vmatprep.mubr.f32.mxu0 0.0
    %970 = vmatmul.mubr.f32.gmra.mrb[0].mxu0 %v888
    %v971 = vpop.f32.mrb[0].mxu0
    %v972 = vadd.f32 0.0, %v971
    %v973 = vpop.f32.mrb[0].mxu0
    %974 = vdwg.mxu0
    %975 = vxpose.xlu0.b32.start [1/16] %v182, 128
    %976 = vxpose.xlu0.b32.cont [2/16] %v187, 128
    %977 = vxpose.xlu0.b32.cont [3/16] 0.0, 128
    %978 = vxpose.xlu0.b32.cont [4/16] 0.0, 128
    %979 = vxpose.xlu0.b32.cont [5/16] 0.0, 128
    %980 = vxpose.xlu0.b32.cont [6/16] 0.0, 128
    %981 = vxpose.xlu0.b32.cont [7/16] 0.0, 128
    %982 = vxpose.xlu0.b32.cont [8/16] 0.0, 128
    %983 = vxpose.xlu0.b32.cont [9/16] 0.0, 128
    %984 = vxpose.xlu0.b32.cont [10/16] 0.0, 128
    %985 = vxpose.xlu0.b32.cont [11/16] 0.0, 128
    %986 = vxpose.xlu0.b32.cont [12/16] 0.0, 128
    %987 = vxpose.xlu0.b32.cont [13/16] 0.0, 128
    %988 = vxpose.xlu0.b32.cont [14/16] 0.0, 128
    %989 = vxpose.xlu0.b32.cont [15/16] 0.0, 128
    %990 = vxpose.xlu0.b32.end [16/16] 0.0, 128
    %v991 = vpop.trf.xlu0
    %v992 = vpop.trf.xlu0
    %v993 = vpop.trf.xlu0
    %v994 = vpop.trf.xlu0
    %v995 = vpop.trf.xlu0
    %v996 = vpop.trf.xlu0
    %v997 = vpop.trf.xlu0
    %v998 = vpop.trf.xlu0
    %v999 = vpop.trf.xlu0
    %v1000 = vpop.trf.xlu0
    %v1001 = vpop.trf.xlu0
    %v1002 = vpop.trf.xlu0
    %v1003 = vpop.trf.xlu0
    %v1004 = vpop.trf.xlu0
    %v1005 = vpop.trf.xlu0
    %v1006 = vpop.trf.xlu0
    %v1008 = vsel %vm232, %v991, 0
    %v1011 = vsel %vm232, %v992, 0
    %v1014 = vsel %vm232, %v993, 0
    %v1017 = vsel %vm232, %v994, 0
    %1019 = vmatprep.subr.mxu0 0.0
    %1020 = vmatpush1.msra.mxu0 %v182
    %1021 = vmatprep.subr.mxu0 0.0
    %1022 = vmatpush1.msra.mxu0 %v187
    %1023 = vmatprep.subr.mxu0 0.0
    %1024 = vmatpush1.msra.mxu0 0.0
    %1025 = vmatprep.subr.mxu0 0.0
    %1026 = vmatpush1.msra.mxu0 0.0
    %1027 = vmatprep.subr.mxu0 0.0
    %1028 = vmatpush1.msra.mxu0 0.0
    %1029 = vmatprep.subr.mxu0 0.0
    %1030 = vmatpush1.msra.mxu0 0.0
    %1031 = vmatprep.subr.mxu0 0.0
    %1032 = vmatpush1.msra.mxu0 0.0
    %1033 = vmatprep.subr.mxu0 0.0
    %1034 = vmatpush1.msra.mxu0 0.0
    %1035 = vmatprep.subr.mxu0 0.0
    %1036 = vmatpush1.msra.mxu0 0.0
    %1037 = vmatprep.subr.mxu0 0.0
    %1038 = vmatpush1.msra.mxu0 0.0
    %1039 = vmatprep.subr.mxu0 0.0
    %1040 = vmatpush1.msra.mxu0 0.0
    %1041 = vmatprep.subr.mxu0 0.0
    %1042 = vmatpush1.msra.mxu0 0.0
    %1043 = vmatprep.subr.mxu0 0.0
    %1044 = vmatpush1.msra.mxu0 0.0
    %1045 = vmatprep.subr.mxu0 0.0
    %1046 = vmatpush1.msra.mxu0 0.0
    %1047 = vmatprep.subr.mxu0 0.0
    %1048 = vmatpush1.msra.mxu0 0.0
    %1049 = vmatprep.subr.mxu0 0.0
    %1050 = vmatpush1.msra.mxu0 0.0
    %1051 = vmatprep.subr.mxu0 0.0
    %1052 = vmatpush1.msra.mxu0 0.0
    %1053 = vmatprep.subr.mxu0 0.0
    %1054 = vmatpush1.msra.mxu0 0.0
    %1055 = vmatprep.subr.mxu0 0.0
    %1056 = vmatpush1.msra.mxu0 0.0
    %1057 = vmatprep.subr.mxu0 0.0
    %1058 = vmatpush1.msra.mxu0 0.0
    %1059 = vmatprep.subr.mxu0 0.0
    %1060 = vmatpush1.msra.mxu0 0.0
    %1061 = vmatprep.subr.mxu0 0.0
    %1062 = vmatpush1.msra.mxu0 0.0
    %1063 = vmatprep.subr.mxu0 0.0
    %1064 = vmatpush1.msra.mxu0 0.0
    %1065 = vmatprep.subr.mxu0 0.0
    %1066 = vmatpush1.msra.mxu0 0.0
    %1067 = vmatprep.subr.mxu0 0.0
    %1068 = vmatpush1.msra.mxu0 0.0
    %1069 = vmatprep.subr.mxu0 0.0
    %1070 = vmatpush1.msra.mxu0 0.0
    %1071 = vmatprep.subr.mxu0 0.0
    %1072 = vmatpush1.msra.mxu0 0.0
    %1073 = vmatprep.subr.mxu0 0.0
    %1074 = vmatpush1.msra.mxu0 0.0
    %1075 = vmatprep.subr.mxu0 0.0
    %1076 = vmatpush1.msra.mxu0 0.0
    %1077 = vmatprep.subr.mxu0 0.0
    %1078 = vmatpush1.msra.mxu0 0.0
    %1079 = vmatprep.subr.mxu0 0.0
    %1080 = vmatpush1.msra.mxu0 0.0
    %1081 = vmatprep.subr.mxu0 0.0
    %1082 = vmatpush1.msra.mxu0 0.0
    %1083 = vmatprep.mubr.f32.mxu0 0.0
    %1084 = vmatmul.mubr.f32.gmra.mrb[0].mxu0 %v1008
    %v1085 = vpop.f32.mrb[0].mxu0
    %v1086 = vadd.f32 0.0, %v1085
    %v1087 = vpop.f32.mrb[0].mxu0
    %1088 = vmatprep.mubr.f32.mxu0 0.0
    %1089 = vmatmul.mubr.f32.gmra.mrb[0].mxu0 %v1011
    %v1090 = vpop.f32.mrb[0].mxu0
    %v1091 = vadd.f32 0.0, %v1090
    %v1092 = vpop.f32.mrb[0].mxu0
    %1093 = vmatprep.mubr.f32.mxu0 0.0
    %1094 = vmatmul.mubr.f32.gmra.mrb[0].mxu0 %v1014
    %v1095 = vpop.f32.mrb[0].mxu0
    %v1096 = vadd.f32 0.0, %v1095
    %v1097 = vpop.f32.mrb[0].mxu0
    %1098 = vmatprep.mubr.f32.mxu0 0.0
    %1099 = vmatmul.mubr.f32.gmra.mrb[0].mxu0 %v1017
    %v1100 = vpop.f32.mrb[0].mxu0
    %v1101 = vadd.f32 0.0, %v1100
    %v1102 = vpop.f32.mrb[0].mxu0
    %1103 = vdwg.mxu0
    %1104 = vxpose.xlu0.b32.start [1/16] %v192, 128
    %1105 = vxpose.xlu0.b32.cont [2/16] %v197, 128
    %1106 = vxpose.xlu0.b32.cont [3/16] 0.0, 128
    %1107 = vxpose.xlu0.b32.cont [4/16] 0.0, 128
    %1108 = vxpose.xlu0.b32.cont [5/16] 0.0, 128
    %1109 = vxpose.xlu0.b32.cont [6/16] 0.0, 128
    %1110 = vxpose.xlu0.b32.cont [7/16] 0.0, 128
    %1111 = vxpose.xlu0.b32.cont [8/16] 0.0, 128
    %1112 = vxpose.xlu0.b32.cont [9/16] 0.0, 128
    %1113 = vxpose.xlu0.b32.cont [10/16] 0.0, 128
    %1114 = vxpose.xlu0.b32.cont [11/16] 0.0, 128
    %1115 = vxpose.xlu0.b32.cont [12/16] 0.0, 128
    %1116 = vxpose.xlu0.b32.cont [13/16] 0.0, 128
    %1117 = vxpose.xlu0.b32.cont [14/16] 0.0, 128
    %1118 = vxpose.xlu0.b32.cont [15/16] 0.0, 128
    %1119 = vxpose.xlu0.b32.end [16/16] 0.0, 128
    %v1120 = vpop.trf.xlu0
    %v1121 = vpop.trf.xlu0
    %v1122 = vpop.trf.xlu0
    %v1123 = vpop.trf.xlu0
    %v1124 = vpop.trf.xlu0
    %v1125 = vpop.trf.xlu0
    %v1126 = vpop.trf.xlu0
    %v1127 = vpop.trf.xlu0
    %v1128 = vpop.trf.xlu0
    %v1129 = vpop.trf.xlu0
    %v1130 = vpop.trf.xlu0
    %v1131 = vpop.trf.xlu0
    %v1132 = vpop.trf.xlu0
    %v1133 = vpop.trf.xlu0
    %v1134 = vpop.trf.xlu0
    %v1135 = vpop.trf.xlu0
    %v1137 = vsel %vm232, %v1120, 0
    %v1140 = vsel %vm232, %v1121, 0
    %v1143 = vsel %vm232, %v1122, 0
    %v1146 = vsel %vm232, %v1123, 0
    %1148 = vmatprep.subr.mxu0 0.0
    %1149 = vmatpush1.msra.mxu0 %v192
    %1150 = vmatprep.subr.mxu0 0.0
    %1151 = vmatpush1.msra.mxu0 %v197
    %1152 = vmatprep.subr.mxu0 0.0
    %1153 = vmatpush1.msra.mxu0 0.0
    %1154 = vmatprep.subr.mxu0 0.0
    %1155 = vmatpush1.msra.mxu0 0.0
    %1156 = vmatprep.subr.mxu0 0.0
    %1157 = vmatpush1.msra.mxu0 0.0
    %1158 = vmatprep.subr.mxu0 0.0
    %1159 = vmatpush1.msra.mxu0 0.0
    %1160 = vmatprep.subr.mxu0 0.0
    %1161 = vmatpush1.msra.mxu0 0.0
    %1162 = vmatprep.subr.mxu0 0.0
    %1163 = vmatpush1.msra.mxu0 0.0
    %1164 = vmatprep.subr.mxu0 0.0
    %1165 = vmatpush1.msra.mxu0 0.0
    %1166 = vmatprep.subr.mxu0 0.0
    %1167 = vmatpush1.msra.mxu0 0.0
    %1168 = vmatprep.subr.mxu0 0.0
    %1169 = vmatpush1.msra.mxu0 0.0
    %1170 = vmatprep.subr.mxu0 0.0
    %1171 = vmatpush1.msra.mxu0 0.0
    %1172 = vmatprep.subr.mxu0 0.0
    %1173 = vmatpush1.msra.mxu0 0.0
    %1174 = vmatprep.subr.mxu0 0.0
    %1175 = vmatpush1.msra.mxu0 0.0
    %1176 = vmatprep.subr.mxu0 0.0
    %1177 = vmatpush1.msra.mxu0 0.0
    %1178 = vmatprep.subr.mxu0 0.0
    %1179 = vmatpush1.msra.mxu0 0.0
    %1180 = vmatprep.subr.mxu0 0.0
    %1181 = vmatpush1.msra.mxu0 0.0
    %1182 = vmatprep.subr.mxu0 0.0
    %1183 = vmatpush1.msra.mxu0 0.0
    %1184 = vmatprep.subr.mxu0 0.0
    %1185 = vmatpush1.msra.mxu0 0.0
    %1186 = vmatprep.subr.mxu0 0.0
    %1187 = vmatpush1.msra.mxu0 0.0
    %1188 = vmatprep.subr.mxu0 0.0
    %1189 = vmatpush1.msra.mxu0 0.0
    %1190 = vmatprep.subr.mxu0 0.0
    %1191 = vmatpush1.msra.mxu0 0.0
    %1192 = vmatprep.subr.mxu0 0.0
    %1193 = vmatpush1.msra.mxu0 0.0
    %1194 = vmatprep.subr.mxu0 0.0
    %1195 = vmatpush1.msra.mxu0 0.0
    %1196 = vmatprep.subr.mxu0 0.0
    %1197 = vmatpush1.msra.mxu0 0.0
    %1198 = vmatprep.subr.mxu0 0.0
    %1199 = vmatpush1.msra.mxu0 0.0
    %1200 = vmatprep.subr.mxu0 0.0
    %1201 = vmatpush1.msra.mxu0 0.0
    %1202 = vmatprep.subr.mxu0 0.0
    %1203 = vmatpush1.msra.mxu0 0.0
    %1204 = vmatprep.subr.mxu0 0.0
    %1205 = vmatpush1.msra.mxu0 0.0
    %1206 = vmatprep.subr.mxu0 0.0
    %1207 = vmatpush1.msra.mxu0 0.0
    %1208 = vmatprep.subr.mxu0 0.0
    %1209 = vmatpush1.msra.mxu0 0.0
    %1210 = vmatprep.subr.mxu0 0.0
    %1211 = vmatpush1.msra.mxu0 0.0
    %1212 = vmatprep.mubr.f32.mxu0 0.0
    %1213 = vmatmul.mubr.f32.gmra.mrb[0].mxu0 %v1137
    %v1214 = vpop.f32.mrb[0].mxu0
    %v1215 = vadd.f32 0.0, %v1214
    %v1216 = vpop.f32.mrb[0].mxu0
    %1217 = vmatprep.mubr.f32.mxu0 0.0
    %1218 = vmatmul.mubr.f32.gmra.mrb[0].mxu0 %v1140
    %v1219 = vpop.f32.mrb[0].mxu0
    %v1220 = vadd.f32 0.0, %v1219
    %v1221 = vpop.f32.mrb[0].mxu0
    %1222 = vmatprep.mubr.f32.mxu0 0.0
    %1223 = vmatmul.mubr.f32.gmra.mrb[0].mxu0 %v1143
    %v1224 = vpop.f32.mrb[0].mxu0
    %v1225 = vadd.f32 0.0, %v1224
    %v1226 = vpop.f32.mrb[0].mxu0
    %1227 = vmatprep.mubr.f32.mxu0 0.0
    %1228 = vmatmul.mubr.f32.gmra.mrb[0].mxu0 %v1146
    %v1229 = vpop.f32.mrb[0].mxu0
    %v1230 = vadd.f32 0.0, %v1229
    %v1231 = vpop.f32.mrb[0].mxu0
    %1232 = vdwg.mxu0
    %vm1233 = vcmask 261120
    %v1235 = vsel %vm1233, %v122, 0
    %v1238 = vsel %vm1233, %v127, 0
    %1240 = vmatprep.subr.mxu0 0.0
    %1241 = vmatpush1.msra.mxu0 %v312
    %1242 = vmatprep.subr.mxu0 0.0
    %1243 = vmatpush1.msra.mxu0 %v317
    %1244 = vmatprep.subr.mxu0 0.0
    %1245 = vmatpush1.msra.mxu0 %v322
    %1246 = vmatprep.subr.mxu0 0.0
    %1247 = vmatpush1.msra.mxu0 %v327
    %1248 = vmatprep.subr.mxu0 0.0
    %1249 = vmatpush1.msra.mxu0 0.0
    %1250 = vmatprep.subr.mxu0 0.0
    %1251 = vmatpush1.msra.mxu0 0.0
    %1252 = vmatprep.subr.mxu0 0.0
    %1253 = vmatpush1.msra.mxu0 0.0
    %1254 = vmatprep.subr.mxu0 0.0
    %1255 = vmatpush1.msra.mxu0 0.0
    %1256 = vmatprep.subr.mxu0 0.0
    %1257 = vmatpush1.msra.mxu0 0.0
    %1258 = vmatprep.subr.mxu0 0.0
    %1259 = vmatpush1.msra.mxu0 0.0
    %1260 = vmatprep.subr.mxu0 0.0
    %1261 = vmatpush1.msra.mxu0 0.0
    %1262 = vmatprep.subr.mxu0 0.0
    %1263 = vmatpush1.msra.mxu0 0.0
    %1264 = vmatprep.subr.mxu0 0.0
    %1265 = vmatpush1.msra.mxu0 0.0
    %1266 = vmatprep.subr.mxu0 0.0
    %1267 = vmatpush1.msra.mxu0 0.0
    %1268 = vmatprep.subr.mxu0 0.0
    %1269 = vmatpush1.msra.mxu0 0.0
    %1270 = vmatprep.subr.mxu0 0.0
    %1271 = vmatpush1.msra.mxu0 0.0
    %1272 = vmatprep.subr.mxu0 0.0
    %1273 = vmatpush1.msra.mxu0 0.0
    %1274 = vmatprep.subr.mxu0 0.0
    %1275 = vmatpush1.msra.mxu0 0.0
    %1276 = vmatprep.subr.mxu0 0.0
    %1277 = vmatpush1.msra.mxu0 0.0
    %1278 = vmatprep.subr.mxu0 0.0
    %1279 = vmatpush1.msra.mxu0 0.0
    %1280 = vmatprep.subr.mxu0 0.0
    %1281 = vmatpush1.msra.mxu0 0.0
    %1282 = vmatprep.subr.mxu0 0.0
    %1283 = vmatpush1.msra.mxu0 0.0
    %1284 = vmatprep.subr.mxu0 0.0
    %1285 = vmatpush1.msra.mxu0 0.0
    %1286 = vmatprep.subr.mxu0 0.0
    %1287 = vmatpush1.msra.mxu0 0.0
    %1288 = vmatprep.subr.mxu0 0.0
    %1289 = vmatpush1.msra.mxu0 0.0
    %1290 = vmatprep.subr.mxu0 0.0
    %1291 = vmatpush1.msra.mxu0 0.0
    %1292 = vmatprep.subr.mxu0 0.0
    %1293 = vmatpush1.msra.mxu0 0.0
    %1294 = vmatprep.subr.mxu0 0.0
    %1295 = vmatpush1.msra.mxu0 0.0
    %1296 = vmatprep.subr.mxu0 0.0
    %1297 = vmatpush1.msra.mxu0 0.0
    %1298 = vmatprep.subr.mxu0 0.0
    %1299 = vmatpush1.msra.mxu0 0.0
    %1300 = vmatprep.subr.mxu0 0.0
    %1301 = vmatpush1.msra.mxu0 0.0
    %1302 = vmatprep.subr.mxu0 0.0
    %1303 = vmatpush1.msra.mxu0 0.0
    %1304 = vmatprep.mubr.f32.mxu0 0.0
    %1305 = vmatmul.mubr.f32.gmra.mrb[0].mxu0 %v1235
    %v1306 = vpop.f32.mrb[0].mxu0
    %v1307 = vadd.f32 0.0, %v1306
    %v1308 = vpop.f32.mrb[0].mxu0
    %1309 = vmatprep.mubr.f32.mxu0 0.0
    %1310 = vmatmul.mubr.f32.gmra.mrb[0].mxu0 %v1238
    %v1311 = vpop.f32.mrb[0].mxu0
    %v1312 = vadd.f32 0.0, %v1311
    %v1313 = vpop.f32.mrb[0].mxu0
    %1314 = vdwg.mxu0
    %v1316 = vsel %vm1233, %v132, 0
    %v1319 = vsel %vm1233, %v137, 0
    %1321 = vmatprep.subr.mxu0 0.0
    %1322 = vmatpush1.msra.mxu0 %v441
    %1323 = vmatprep.subr.mxu0 0.0
    %1324 = vmatpush1.msra.mxu0 %v446
    %1325 = vmatprep.subr.mxu0 0.0
    %1326 = vmatpush1.msra.mxu0 %v451
    %1327 = vmatprep.subr.mxu0 0.0
    %1328 = vmatpush1.msra.mxu0 %v456
    %1329 = vmatprep.subr.mxu0 0.0
    %1330 = vmatpush1.msra.mxu0 0.0
    %1331 = vmatprep.subr.mxu0 0.0
    %1332 = vmatpush1.msra.mxu0 0.0
    %1333 = vmatprep.subr.mxu0 0.0
    %1334 = vmatpush1.msra.mxu0 0.0
    %1335 = vmatprep.subr.mxu0 0.0
    %1336 = vmatpush1.msra.mxu0 0.0
    %1337 = vmatprep.subr.mxu0 0.0
    %1338 = vmatpush1.msra.mxu0 0.0
    %1339 = vmatprep.subr.mxu0 0.0
    %1340 = vmatpush1.msra.mxu0 0.0
    %1341 = vmatprep.subr.mxu0 0.0
    %1342 = vmatpush1.msra.mxu0 0.0
    %1343 = vmatprep.subr.mxu0 0.0
    %1344 = vmatpush1.msra.mxu0 0.0
    %1345 = vmatprep.subr.mxu0 0.0
    %1346 = vmatpush1.msra.mxu0 0.0
    %1347 = vmatprep.subr.mxu0 0.0
    %1348 = vmatpush1.msra.mxu0 0.0
    %1349 = vmatprep.subr.mxu0 0.0
    %1350 = vmatpush1.msra.mxu0 0.0
    %1351 = vmatprep.subr.mxu0 0.0
    %1352 = vmatpush1.msra.mxu0 0.0
    %1353 = vmatprep.subr.mxu0 0.0
    %1354 = vmatpush1.msra.mxu0 0.0
    %1355 = vmatprep.subr.mxu0 0.0
    %1356 = vmatpush1.msra.mxu0 0.0
    %1357 = vmatprep.subr.mxu0 0.0
    %1358 = vmatpush1.msra.mxu0 0.0
    %1359 = vmatprep.subr.mxu0 0.0
    %1360 = vmatpush1.msra.mxu0 0.0
    %1361 = vmatprep.subr.mxu0 0.0
    %1362 = vmatpush1.msra.mxu0 0.0
    %1363 = vmatprep.subr.mxu0 0.0
    %1364 = vmatpush1.msra.mxu0 0.0
    %1365 = vmatprep.subr.mxu0 0.0
    %1366 = vmatpush1.msra.mxu0 0.0
    %1367 = vmatprep.subr.mxu0 0.0
    %1368 = vmatpush1.msra.mxu0 0.0
    %1369 = vmatprep.subr.mxu0 0.0
    %1370 = vmatpush1.msra.mxu0 0.0
    %1371 = vmatprep.subr.mxu0 0.0
    %1372 = vmatpush1.msra.mxu0 0.0
    %1373 = vmatprep.subr.mxu0 0.0
    %1374 = vmatpush1.msra.mxu0 0.0
    %1375 = vmatprep.subr.mxu0 0.0
    %1376 = vmatpush1.msra.mxu0 0.0
    %1377 = vmatprep.subr.mxu0 0.0
    %1378 = vmatpush1.msra.mxu0 0.0
    %1379 = vmatprep.subr.mxu0 0.0
    %1380 = vmatpush1.msra.mxu0 0.0
    %1381 = vmatprep.subr.mxu0 0.0
    %1382 = vmatpush1.msra.mxu0 0.0
    %1383 = vmatprep.subr.mxu0 0.0
    %1384 = vmatpush1.msra.mxu0 0.0
    %1385 = vmatprep.mubr.f32.mxu0 0.0
    %1386 = vmatmul.mubr.f32.gmra.mrb[0].mxu0 %v1316
    %v1387 = vpop.f32.mrb[0].mxu0
    %v1388 = vadd.f32 0.0, %v1387
    %v1389 = vpop.f32.mrb[0].mxu0
    %1390 = vmatprep.mubr.f32.mxu0 0.0
    %1391 = vmatmul.mubr.f32.gmra.mrb[0].mxu0 %v1319
    %v1392 = vpop.f32.mrb[0].mxu0
    %v1393 = vadd.f32 0.0, %v1392
    %v1394 = vpop.f32.mrb[0].mxu0
    %1395 = vdwg.mxu0
    %v1397 = vsel %vm1233, %v142, 0
    %v1400 = vsel %vm1233, %v147, 0
    %1402 = vmatprep.subr.mxu0 0.0
    %1403 = vmatpush1.msra.mxu0 %v570
    %1404 = vmatprep.subr.mxu0 0.0
    %1405 = vmatpush1.msra.mxu0 %v575
    %1406 = vmatprep.subr.mxu0 0.0
    %1407 = vmatpush1.msra.mxu0 %v580
    %1408 = vmatprep.subr.mxu0 0.0
    %1409 = vmatpush1.msra.mxu0 %v585
    %1410 = vmatprep.subr.mxu0 0.0
    %1411 = vmatpush1.msra.mxu0 0.0
    %1412 = vmatprep.subr.mxu0 0.0
    %1413 = vmatpush1.msra.mxu0 0.0
    %1414 = vmatprep.subr.mxu0 0.0
    %1415 = vmatpush1.msra.mxu0 0.0
    %1416 = vmatprep.subr.mxu0 0.0
    %1417 = vmatpush1.msra.mxu0 0.0
    %1418 = vmatprep.subr.mxu0 0.0
    %1419 = vmatpush1.msra.mxu0 0.0
    %1420 = vmatprep.subr.mxu0 0.0
    %1421 = vmatpush1.msra.mxu0 0.0
    %1422 = vmatprep.subr.mxu0 0.0
    %1423 = vmatpush1.msra.mxu0 0.0
    %1424 = vmatprep.subr.mxu0 0.0
    %1425 = vmatpush1.msra.mxu0 0.0
    %1426 = vmatprep.subr.mxu0 0.0
    %1427 = vmatpush1.msra.mxu0 0.0
    %1428 = vmatprep.subr.mxu0 0.0
    %1429 = vmatpush1.msra.mxu0 0.0
    %1430 = vmatprep.subr.mxu0 0.0
    %1431 = vmatpush1.msra.mxu0 0.0
    %1432 = vmatprep.subr.mxu0 0.0
    %1433 = vmatpush1.msra.mxu0 0.0
    %1434 = vmatprep.subr.mxu0 0.0
    %1435 = vmatpush1.msra.mxu0 0.0
    %1436 = vmatprep.subr.mxu0 0.0
    %1437 = vmatpush1.msra.mxu0 0.0
    %1438 = vmatprep.subr.mxu0 0.0
    %1439 = vmatpush1.msra.mxu0 0.0
    %1440 = vmatprep.subr.mxu0 0.0
    %1441 = vmatpush1.msra.mxu0 0.0
    %1442 = vmatprep.subr.mxu0 0.0
    %1443 = vmatpush1.msra.mxu0 0.0
    %1444 = vmatprep.subr.mxu0 0.0
    %1445 = vmatpush1.msra.mxu0 0.0
    %1446 = vmatprep.subr.mxu0 0.0
    %1447 = vmatpush1.msra.mxu0 0.0
    %1448 = vmatprep.subr.mxu0 0.0
    %1449 = vmatpush1.msra.mxu0 0.0
    %1450 = vmatprep.subr.mxu0 0.0
    %1451 = vmatpush1.msra.mxu0 0.0
    %1452 = vmatprep.subr.mxu0 0.0
    %1453 = vmatpush1.msra.mxu0 0.0
    %1454 = vmatprep.subr.mxu0 0.0
    %1455 = vmatpush1.msra.mxu0 0.0
    %1456 = vmatprep.subr.mxu0 0.0
    %1457 = vmatpush1.msra.mxu0 0.0
    %1458 = vmatprep.subr.mxu0 0.0
    %1459 = vmatpush1.msra.mxu0 0.0
    %1460 = vmatprep.subr.mxu0 0.0
    %1461 = vmatpush1.msra.mxu0 0.0
    %1462 = vmatprep.subr.mxu0 0.0
    %1463 = vmatpush1.msra.mxu0 0.0
    %1464 = vmatprep.subr.mxu0 0.0
    %1465 = vmatpush1.msra.mxu0 0.0
    %1466 = vmatprep.mubr.f32.mxu0 0.0
    %1467 = vmatmul.mubr.f32.gmra.mrb[0].mxu0 %v1397
    %v1468 = vpop.f32.mrb[0].mxu0
    %v1469 = vadd.f32 0.0, %v1468
    %v1470 = vpop.f32.mrb[0].mxu0
    %1471 = vmatprep.mubr.f32.mxu0 0.0
    %1472 = vmatmul.mubr.f32.gmra.mrb[0].mxu0 %v1400
    %v1473 = vpop.f32.mrb[0].mxu0
    %v1474 = vadd.f32 0.0, %v1473
    %v1475 = vpop.f32.mrb[0].mxu0
    %1476 = vdwg.mxu0
    %v1478 = vsel %vm1233, %v152, 0
    %v1481 = vsel %vm1233, %v157, 0
    %1483 = vmatprep.subr.mxu0 0.0
    %1484 = vmatpush1.msra.mxu0 %v699
    %1485 = vmatprep.subr.mxu0 0.0
    %1486 = vmatpush1.msra.mxu0 %v704
    %1487 = vmatprep.subr.mxu0 0.0
    %1488 = vmatpush1.msra.mxu0 %v709
    %1489 = vmatprep.subr.mxu0 0.0
    %1490 = vmatpush1.msra.mxu0 %v714
    %1491 = vmatprep.subr.mxu0 0.0
    %1492 = vmatpush1.msra.mxu0 0.0
    %1493 = vmatprep.subr.mxu0 0.0
    %1494 = vmatpush1.msra.mxu0 0.0
    %1495 = vmatprep.subr.mxu0 0.0
    %1496 = vmatpush1.msra.mxu0 0.0
    %1497 = vmatprep.subr.mxu0 0.0
    %1498 = vmatpush1.msra.mxu0 0.0
    %1499 = vmatprep.subr.mxu0 0.0
    %1500 = vmatpush1.msra.mxu0 0.0
    %1501 = vmatprep.subr.mxu0 0.0
    %1502 = vmatpush1.msra.mxu0 0.0
    %1503 = vmatprep.subr.mxu0 0.0
    %1504 = vmatpush1.msra.mxu0 0.0
    %1505 = vmatprep.subr.mxu0 0.0
    %1506 = vmatpush1.msra.mxu0 0.0
    %1507 = vmatprep.subr.mxu0 0.0
    %1508 = vmatpush1.msra.mxu0 0.0
    %1509 = vmatprep.subr.mxu0 0.0
    %1510 = vmatpush1.msra.mxu0 0.0
    %1511 = vmatprep.subr.mxu0 0.0
    %1512 = vmatpush1.msra.mxu0 0.0
    %1513 = vmatprep.subr.mxu0 0.0
    %1514 = vmatpush1.msra.mxu0 0.0
    %1515 = vmatprep.subr.mxu0 0.0
    %1516 = vmatpush1.msra.mxu0 0.0
    %1517 = vmatprep.subr.mxu0 0.0
    %1518 = vmatpush1.msra.mxu0 0.0
    %1519 = vmatprep.subr.mxu0 0.0
    %1520 = vmatpush1.msra.mxu0 0.0
    %1521 = vmatprep.subr.mxu0 0.0
    %1522 = vmatpush1.msra.mxu0 0.0
    %1523 = vmatprep.subr.mxu0 0.0
    %1524 = vmatpush1.msra.mxu0 0.0
    %1525 = vmatprep.subr.mxu0 0.0
    %1526 = vmatpush1.msra.mxu0 0.0
    %1527 = vmatprep.subr.mxu0 0.0
    %1528 = vmatpush1.msra.mxu0 0.0
    %1529 = vmatprep.subr.mxu0 0.0
    %1530 = vmatpush1.msra.mxu0 0.0
    %1531 = vmatprep.subr.mxu0 0.0
    %1532 = vmatpush1.msra.mxu0 0.0
    %1533 = vmatprep.subr.mxu0 0.0
    %1534 = vmatpush1.msra.mxu0 0.0
    %1535 = vmatprep.subr.mxu0 0.0
    %1536 = vmatpush1.msra.mxu0 0.0
    %1537 = vmatprep.subr.mxu0 0.0
    %1538 = vmatpush1.msra.mxu0 0.0
    %1539 = vmatprep.subr.mxu0 0.0
    %1540 = vmatpush1.msra.mxu0 0.0
    %1541 = vmatprep.subr.mxu0 0.0
    %1542 = vmatpush1.msra.mxu0 0.0
    %1543 = vmatprep.subr.mxu0 0.0
    %1544 = vmatpush1.msra.mxu0 0.0
    %1545 = vmatprep.subr.mxu0 0.0
    %1546 = vmatpush1.msra.mxu0 0.0
    %1547 = vmatprep.mubr.f32.mxu0 0.0
    %1548 = vmatmul.mubr.f32.gmra.mrb[0].mxu0 %v1478
    %v1549 = vpop.f32.mrb[0].mxu0
    %v1550 = vadd.f32 0.0, %v1549
    %v1551 = vpop.f32.mrb[0].mxu0
    %1552 = vmatprep.mubr.f32.mxu0 0.0
    %1553 = vmatmul.mubr.f32.gmra.mrb[0].mxu0 %v1481
    %v1554 = vpop.f32.mrb[0].mxu0
    %v1555 = vadd.f32 0.0, %v1554
    %v1556 = vpop.f32.mrb[0].mxu0
    %1557 = vdwg.mxu0
    %v1559 = vsel %vm1233, %v162, 0
    %v1562 = vsel %vm1233, %v167, 0
    %1564 = vmatprep.subr.mxu0 0.0
    %1565 = vmatpush1.msra.mxu0 %v828
    %1566 = vmatprep.subr.mxu0 0.0
    %1567 = vmatpush1.msra.mxu0 %v833
    %1568 = vmatprep.subr.mxu0 0.0
    %1569 = vmatpush1.msra.mxu0 %v838
    %1570 = vmatprep.subr.mxu0 0.0
    %1571 = vmatpush1.msra.mxu0 %v843
    %1572 = vmatprep.subr.mxu0 0.0
    %1573 = vmatpush1.msra.mxu0 0.0
    %1574 = vmatprep.subr.mxu0 0.0
    %1575 = vmatpush1.msra.mxu0 0.0
    %1576 = vmatprep.subr.mxu0 0.0
    %1577 = vmatpush1.msra.mxu0 0.0
    %1578 = vmatprep.subr.mxu0 0.0
    %1579 = vmatpush1.msra.mxu0 0.0
    %1580 = vmatprep.subr.mxu0 0.0
    %1581 = vmatpush1.msra.mxu0 0.0
    %1582 = vmatprep.subr.mxu0 0.0
    %1583 = vmatpush1.msra.mxu0 0.0
    %1584 = vmatprep.subr.mxu0 0.0
    %1585 = vmatpush1.msra.mxu0 0.0
    %1586 = vmatprep.subr.mxu0 0.0
    %1587 = vmatpush1.msra.mxu0 0.0
    %1588 = vmatprep.subr.mxu0 0.0
    %1589 = vmatpush1.msra.mxu0 0.0
    %1590 = vmatprep.subr.mxu0 0.0
    %1591 = vmatpush1.msra.mxu0 0.0
    %1592 = vmatprep.subr.mxu0 0.0
    %1593 = vmatpush1.msra.mxu0 0.0
    %1594 = vmatprep.subr.mxu0 0.0
    %1595 = vmatpush1.msra.mxu0 0.0
    %1596 = vmatprep.subr.mxu0 0.0
    %1597 = vmatpush1.msra.mxu0 0.0
    %1598 = vmatprep.subr.mxu0 0.0
    %1599 = vmatpush1.msra.mxu0 0.0
    %1600 = vmatprep.subr.mxu0 0.0
    %1601 = vmatpush1.msra.mxu0 0.0
    %1602 = vmatprep.subr.mxu0 0.0
    %1603 = vmatpush1.msra.mxu0 0.0
    %1604 = vmatprep.subr.mxu0 0.0
    %1605 = vmatpush1.msra.mxu0 0.0
    %1606 = vmatprep.subr.mxu0 0.0
    %1607 = vmatpush1.msra.mxu0 0.0
    %1608 = vmatprep.subr.mxu0 0.0
    %1609 = vmatpush1.msra.mxu0 0.0
    %1610 = vmatprep.subr.mxu0 0.0
    %1611 = vmatpush1.msra.mxu0 0.0
    %1612 = vmatprep.subr.mxu0 0.0
    %1613 = vmatpush1.msra.mxu0 0.0
    %1614 = vmatprep.subr.mxu0 0.0
    %1615 = vmatpush1.msra.mxu0 0.0
    %1616 = vmatprep.subr.mxu0 0.0
    %1617 = vmatpush1.msra.mxu0 0.0
    %1618 = vmatprep.subr.mxu0 0.0
    %1619 = vmatpush1.msra.mxu0 0.0
    %1620 = vmatprep.subr.mxu0 0.0
    %1621 = vmatpush1.msra.mxu0 0.0
    %1622 = vmatprep.subr.mxu0 0.0
    %1623 = vmatpush1.msra.mxu0 0.0
    %1624 = vmatprep.subr.mxu0 0.0
    %1625 = vmatpush1.msra.mxu0 0.0
    %1626 = vmatprep.subr.mxu0 0.0
    %1627 = vmatpush1.msra.mxu0 0.0
    %1628 = vmatprep.mubr.f32.mxu0 0.0
    %1629 = vmatmul.mubr.f32.gmra.mrb[0].mxu0 %v1559
    %v1630 = vpop.f32.mrb[0].mxu0
    %v1631 = vadd.f32 0.0, %v1630
    %v1632 = vpop.f32.mrb[0].mxu0
    %1633 = vmatprep.mubr.f32.mxu0 0.0
    %1634 = vmatmul.mubr.f32.gmra.mrb[0].mxu0 %v1562
    %v1635 = vpop.f32.mrb[0].mxu0
    %v1636 = vadd.f32 0.0, %v1635
    %v1637 = vpop.f32.mrb[0].mxu0
    %1638 = vdwg.mxu0
    %v1640 = vsel %vm1233, %v172, 0
    %v1643 = vsel %vm1233, %v177, 0
    %1645 = vmatprep.subr.mxu0 0.0
    %1646 = vmatpush1.msra.mxu0 %v957
    %1647 = vmatprep.subr.mxu0 0.0
    %1648 = vmatpush1.msra.mxu0 %v962
    %1649 = vmatprep.subr.mxu0 0.0
    %1650 = vmatpush1.msra.mxu0 %v967
    %1651 = vmatprep.subr.mxu0 0.0
    %1652 = vmatpush1.msra.mxu0 %v972
    %1653 = vmatprep.subr.mxu0 0.0
    %1654 = vmatpush1.msra.mxu0 0.0
    %1655 = vmatprep.subr.mxu0 0.0
    %1656 = vmatpush1.msra.mxu0 0.0
    %1657 = vmatprep.subr.mxu0 0.0
    %1658 = vmatpush1.msra.mxu0 0.0
    %1659 = vmatprep.subr.mxu0 0.0
    %1660 = vmatpush1.msra.mxu0 0.0
    %1661 = vmatprep.subr.mxu0 0.0
    %1662 = vmatpush1.msra.mxu0 0.0
    %1663 = vmatprep.subr.mxu0 0.0
    %1664 = vmatpush1.msra.mxu0 0.0
    %1665 = vmatprep.subr.mxu0 0.0
    %1666 = vmatpush1.msra.mxu0 0.0
    %1667 = vmatprep.subr.mxu0 0.0
    %1668 = vmatpush1.msra.mxu0 0.0
    %1669 = vmatprep.subr.mxu0 0.0
    %1670 = vmatpush1.msra.mxu0 0.0
    %1671 = vmatprep.subr.mxu0 0.0
    %1672 = vmatpush1.msra.mxu0 0.0
    %1673 = vmatprep.subr.mxu0 0.0
    %1674 = vmatpush1.msra.mxu0 0.0
    %1675 = vmatprep.subr.mxu0 0.0
    %1676 = vmatpush1.msra.mxu0 0.0
    %1677 = vmatprep.subr.mxu0 0.0
    %1678 = vmatpush1.msra.mxu0 0.0
    %1679 = vmatprep.subr.mxu0 0.0
    %1680 = vmatpush1.msra.mxu0 0.0
    %1681 = vmatprep.subr.mxu0 0.0
    %1682 = vmatpush1.msra.mxu0 0.0
    %1683 = vmatprep.subr.mxu0 0.0
    %1684 = vmatpush1.msra.mxu0 0.0
    %1685 = vmatprep.subr.mxu0 0.0
    %1686 = vmatpush1.msra.mxu0 0.0
    %1687 = vmatprep.subr.mxu0 0.0
    %1688 = vmatpush1.msra.mxu0 0.0
    %1689 = vmatprep.subr.mxu0 0.0
    %1690 = vmatpush1.msra.mxu0 0.0
    %1691 = vmatprep.subr.mxu0 0.0
    %1692 = vmatpush1.msra.mxu0 0.0
    %1693 = vmatprep.subr.mxu0 0.0
    %1694 = vmatpush1.msra.mxu0 0.0
    %1695 = vmatprep.subr.mxu0 0.0
    %1696 = vmatpush1.msra.mxu0 0.0
    %1697 = vmatprep.subr.mxu0 0.0
    %1698 = vmatpush1.msra.mxu0 0.0
    %1699 = vmatprep.subr.mxu0 0.0
    %1700 = vmatpush1.msra.mxu0 0.0
    %1701 = vmatprep.subr.mxu0 0.0
    %1702 = vmatpush1.msra.mxu0 0.0
    %1703 = vmatprep.subr.mxu0 0.0
    %1704 = vmatpush1.msra.mxu0 0.0
    %1705 = vmatprep.subr.mxu0 0.0
    %1706 = vmatpush1.msra.mxu0 0.0
    %1707 = vmatprep.subr.mxu0 0.0
    %1708 = vmatpush1.msra.mxu0 0.0
    %1709 = vmatprep.mubr.f32.mxu0 0.0
    %1710 = vmatmul.mubr.f32.gmra.mrb[0].mxu0 %v1640
    %v1711 = vpop.f32.mrb[0].mxu0
    %v1712 = vadd.f32 0.0, %v1711
    %v1713 = vpop.f32.mrb[0].mxu0
    %1714 = vmatprep.mubr.f32.mxu0 0.0
    %1715 = vmatmul.mubr.f32.gmra.mrb[0].mxu0 %v1643
    %v1716 = vpop.f32.mrb[0].mxu0
    %v1717 = vadd.f32 0.0, %v1716
    %v1718 = vpop.f32.mrb[0].mxu0
    %1719 = vdwg.mxu0
    %v1721 = vsel %vm1233, %v182, 0
    %v1724 = vsel %vm1233, %v187, 0
    %1726 = vmatprep.subr.mxu0 0.0
    %1727 = vmatpush1.msra.mxu0 %v1086
    %1728 = vmatprep.subr.mxu0 0.0
    %1729 = vmatpush1.msra.mxu0 %v1091
    %1730 = vmatprep.subr.mxu0 0.0
    %1731 = vmatpush1.msra.mxu0 %v1096
    %1732 = vmatprep.subr.mxu0 0.0
    %1733 = vmatpush1.msra.mxu0 %v1101
    %1734 = vmatprep.subr.mxu0 0.0
    %1735 = vmatpush1.msra.mxu0 0.0
    %1736 = vmatprep.subr.mxu0 0.0
    %1737 = vmatpush1.msra.mxu0 0.0
    %1738 = vmatprep.subr.mxu0 0.0
    %1739 = vmatpush1.msra.mxu0 0.0
    %1740 = vmatprep.subr.mxu0 0.0
    %1741 = vmatpush1.msra.mxu0 0.0
    %1742 = vmatprep.subr.mxu0 0.0
    %1743 = vmatpush1.msra.mxu0 0.0
    %1744 = vmatprep.subr.mxu0 0.0
    %1745 = vmatpush1.msra.mxu0 0.0
    %1746 = vmatprep.subr.mxu0 0.0
    %1747 = vmatpush1.msra.mxu0 0.0
    %1748 = vmatprep.subr.mxu0 0.0
    %1749 = vmatpush1.msra.mxu0 0.0
    %1750 = vmatprep.subr.mxu0 0.0
    %1751 = vmatpush1.msra.mxu0 0.0
    %1752 = vmatprep.subr.mxu0 0.0
    %1753 = vmatpush1.msra.mxu0 0.0
    %1754 = vmatprep.subr.mxu0 0.0
    %1755 = vmatpush1.msra.mxu0 0.0
    %1756 = vmatprep.subr.mxu0 0.0
    %1757 = vmatpush1.msra.mxu0 0.0
    %1758 = vmatprep.subr.mxu0 0.0
    %1759 = vmatpush1.msra.mxu0 0.0
    %1760 = vmatprep.subr.mxu0 0.0
    %1761 = vmatpush1.msra.mxu0 0.0
    %1762 = vmatprep.subr.mxu0 0.0
    %1763 = vmatpush1.msra.mxu0 0.0
    %1764 = vmatprep.subr.mxu0 0.0
    %1765 = vmatpush1.msra.mxu0 0.0
    %1766 = vmatprep.subr.mxu0 0.0
    %1767 = vmatpush1.msra.mxu0 0.0
    %1768 = vmatprep.subr.mxu0 0.0
    %1769 = vmatpush1.msra.mxu0 0.0
    %1770 = vmatprep.subr.mxu0 0.0
    %1771 = vmatpush1.msra.mxu0 0.0
    %1772 = vmatprep.subr.mxu0 0.0
    %1773 = vmatpush1.msra.mxu0 0.0
    %1774 = vmatprep.subr.mxu0 0.0
    %1775 = vmatpush1.msra.mxu0 0.0
    %1776 = vmatprep.subr.mxu0 0.0
    %1777 = vmatpush1.msra.mxu0 0.0
    %1778 = vmatprep.subr.mxu0 0.0
    %1779 = vmatpush1.msra.mxu0 0.0
    %1780 = vmatprep.subr.mxu0 0.0
    %1781 = vmatpush1.msra.mxu0 0.0
    %1782 = vmatprep.subr.mxu0 0.0
    %1783 = vmatpush1.msra.mxu0 0.0
    %1784 = vmatprep.subr.mxu0 0.0
    %1785 = vmatpush1.msra.mxu0 0.0
    %1786 = vmatprep.subr.mxu0 0.0
    %1787 = vmatpush1.msra.mxu0 0.0
    %1788 = vmatprep.subr.mxu0 0.0
    %1789 = vmatpush1.msra.mxu0 0.0
    %1790 = vmatprep.mubr.f32.mxu0 0.0
    %1791 = vmatmul.mubr.f32.gmra.mrb[0].mxu0 %v1721
    %v1792 = vpop.f32.mrb[0].mxu0
    %v1793 = vadd.f32 0.0, %v1792
    %v1794 = vpop.f32.mrb[0].mxu0
    %1795 = vmatprep.mubr.f32.mxu0 0.0
    %1796 = vmatmul.mubr.f32.gmra.mrb[0].mxu0 %v1724
    %v1797 = vpop.f32.mrb[0].mxu0
    %v1798 = vadd.f32 0.0, %v1797
    %v1799 = vpop.f32.mrb[0].mxu0
    %1800 = vdwg.mxu0
    %v1802 = vsel %vm1233, %v192, 0
    %v1805 = vsel %vm1233, %v197, 0
    %1807 = vmatprep.subr.mxu0 0.0
    %1808 = vmatpush1.msra.mxu0 %v1215
    %1809 = vmatprep.subr.mxu0 0.0
    %1810 = vmatpush1.msra.mxu0 %v1220
    %1811 = vmatprep.subr.mxu0 0.0
    %1812 = vmatpush1.msra.mxu0 %v1225
    %1813 = vmatprep.subr.mxu0 0.0
    %1814 = vmatpush1.msra.mxu0 %v1230
    %1815 = vmatprep.subr.mxu0 0.0
    %1816 = vmatpush1.msra.mxu0 0.0
    %1817 = vmatprep.subr.mxu0 0.0
    %1818 = vmatpush1.msra.mxu0 0.0
    %1819 = vmatprep.subr.mxu0 0.0
    %1820 = vmatpush1.msra.mxu0 0.0
    %1821 = vmatprep.subr.mxu0 0.0
    %1822 = vmatpush1.msra.mxu0 0.0
    %1823 = vmatprep.subr.mxu0 0.0
    %1824 = vmatpush1.msra.mxu0 0.0
    %1825 = vmatprep.subr.mxu0 0.0
    %1826 = vmatpush1.msra.mxu0 0.0
    %1827 = vmatprep.subr.mxu0 0.0
    %1828 = vmatpush1.msra.mxu0 0.0
    %1829 = vmatprep.subr.mxu0 0.0
    %1830 = vmatpush1.msra.mxu0 0.0
    %1831 = vmatprep.subr.mxu0 0.0
    %1832 = vmatpush1.msra.mxu0 0.0
    %1833 = vmatprep.subr.mxu0 0.0
    %1834 = vmatpush1.msra.mxu0 0.0
    %1835 = vmatprep.subr.mxu0 0.0
    %1836 = vmatpush1.msra.mxu0 0.0
    %1837 = vmatprep.subr.mxu0 0.0
    %1838 = vmatpush1.msra.mxu0 0.0
    %1839 = vmatprep.subr.mxu0 0.0
    %1840 = vmatpush1.msra.mxu0 0.0
    %1841 = vmatprep.subr.mxu0 0.0
    %1842 = vmatpush1.msra.mxu0 0.0
    %1843 = vmatprep.subr.mxu0 0.0
    %1844 = vmatpush1.msra.mxu0 0.0
    %1845 = vmatprep.subr.mxu0 0.0
    %1846 = vmatpush1.msra.mxu0 0.0
    %1847 = vmatprep.subr.mxu0 0.0
    %1848 = vmatpush1.msra.mxu0 0.0
    %1849 = vmatprep.subr.mxu0 0.0
    %1850 = vmatpush1.msra.mxu0 0.0
    %1851 = vmatprep.subr.mxu0 0.0
    %1852 = vmatpush1.msra.mxu0 0.0
    %1853 = vmatprep.subr.mxu0 0.0
    %1854 = vmatpush1.msra.mxu0 0.0
    %1855 = vmatprep.subr.mxu0 0.0
    %1856 = vmatpush1.msra.mxu0 0.0
    %1857 = vmatprep.subr.mxu0 0.0
    %1858 = vmatpush1.msra.mxu0 0.0
    %1859 = vmatprep.subr.mxu0 0.0
    %1860 = vmatpush1.msra.mxu0 0.0
    %1861 = vmatprep.subr.mxu0 0.0
    %1862 = vmatpush1.msra.mxu0 0.0
    %1863 = vmatprep.subr.mxu0 0.0
    %1864 = vmatpush1.msra.mxu0 0.0
    %1865 = vmatprep.subr.mxu0 0.0
    %1866 = vmatpush1.msra.mxu0 0.0
    %1867 = vmatprep.subr.mxu0 0.0
    %1868 = vmatpush1.msra.mxu0 0.0
    %1869 = vmatprep.subr.mxu0 0.0
    %1870 = vmatpush1.msra.mxu0 0.0
    %1871 = vmatprep.mubr.f32.mxu0 0.0
    %1872 = vmatmul.mubr.f32.gmra.mrb[0].mxu0 %v1802
    %v1873 = vpop.f32.mrb[0].mxu0
    %v1874 = vadd.f32 0.0, %v1873
    %v1875 = vpop.f32.mrb[0].mxu0
    %1876 = vmatprep.mubr.f32.mxu0 0.0
    %1877 = vmatmul.mubr.f32.gmra.mrb[0].mxu0 %v1805
    %v1878 = vpop.f32.mrb[0].mxu0
    %v1879 = vadd.f32 0.0, %v1878
    %v1880 = vpop.f32.mrb[0].mxu0
    %1881 = vdwg.mxu0
    %1882 = vrot.lane.b32.xlu0 %v122, 96
    %v1883 = vpop.permute.xlu0 %1882
    %1884 = vrot.lane.b32.xlu0 %v127, 96
    %v1885 = vpop.permute.xlu0 %1884
    %1888 = vxpose.xlu0.b32.start [1/16] %v1883, 128
    %1889 = vxpose.xlu0.b32.cont [2/16] %v1885, 128
    %1890 = vxpose.xlu0.b32.cont [3/16] 0.0, 128
    %1891 = vxpose.xlu0.b32.cont [4/16] 0.0, 128
    %1892 = vxpose.xlu0.b32.cont [5/16] 0.0, 128
    %1893 = vxpose.xlu0.b32.cont [6/16] 0.0, 128
    %1894 = vxpose.xlu0.b32.cont [7/16] 0.0, 128
    %1895 = vxpose.xlu0.b32.cont [8/16] 0.0, 128
    %1896 = vxpose.xlu0.b32.cont [9/16] 0.0, 128
    %1897 = vxpose.xlu0.b32.cont [10/16] 0.0, 128
    %1898 = vxpose.xlu0.b32.cont [11/16] 0.0, 128
    %1899 = vxpose.xlu0.b32.cont [12/16] 0.0, 128
    %1900 = vxpose.xlu0.b32.cont [13/16] 0.0, 128
    %1901 = vxpose.xlu0.b32.cont [14/16] 0.0, 128
    %1902 = vxpose.xlu0.b32.cont [15/16] 0.0, 128
    %1903 = vxpose.xlu0.b32.end [16/16] 0.0, 128
    %v1904 = vpop.trf.xlu0
    %v1905 = vpop.trf.xlu0
    %v1906 = vpop.trf.xlu0
    %v1907 = vpop.trf.xlu0
    %v1908 = vpop.trf.xlu0
    %v1909 = vpop.trf.xlu0
    %v1910 = vpop.trf.xlu0
    %v1911 = vpop.trf.xlu0
    %v1912 = vpop.trf.xlu0
    %v1913 = vpop.trf.xlu0
    %v1914 = vpop.trf.xlu0
    %v1915 = vpop.trf.xlu0
    %v1916 = vpop.trf.xlu0
    %v1917 = vpop.trf.xlu0
    %v1918 = vpop.trf.xlu0
    %v1919 = vpop.trf.xlu0
    %v1921 = vsel %vm232, %v1904, 0
    %v1924 = vsel %vm232, %v1905, 0
    %v1927 = vsel %vm232, %v1906, 0
    %v1930 = vsel %vm232, %v1907, 0
    %1932 = vmatprep.subr.mxu0 0.0
    %1933 = vmatpush1.msra.mxu0 %v1883
    %1934 = vmatprep.subr.mxu0 0.0
    %1935 = vmatpush1.msra.mxu0 %v1885
    %1936 = vmatprep.subr.mxu0 0.0
    %1937 = vmatpush1.msra.mxu0 0.0
    %1938 = vmatprep.subr.mxu0 0.0
    %1939 = vmatpush1.msra.mxu0 0.0
    %1940 = vmatprep.subr.mxu0 0.0
    %1941 = vmatpush1.msra.mxu0 0.0
    %1942 = vmatprep.subr.mxu0 0.0
    %1943 = vmatpush1.msra.mxu0 0.0
    %1944 = vmatprep.subr.mxu0 0.0
    %1945 = vmatpush1.msra.mxu0 0.0
    %1946 = vmatprep.subr.mxu0 0.0
    %1947 = vmatpush1.msra.mxu0 0.0
    %1948 = vmatprep.subr.mxu0 0.0
    %1949 = vmatpush1.msra.mxu0 0.0
    %1950 = vmatprep.subr.mxu0 0.0
    %1951 = vmatpush1.msra.mxu0 0.0
    %1952 = vmatprep.subr.mxu0 0.0
    %1953 = vmatpush1.msra.mxu0 0.0
    %1954 = vmatprep.subr.mxu0 0.0
    %1955 = vmatpush1.msra.mxu0 0.0
    %1956 = vmatprep.subr.mxu0 0.0
    %1957 = vmatpush1.msra.mxu0 0.0
    %1958 = vmatprep.subr.mxu0 0.0
    %1959 = vmatpush1.msra.mxu0 0.0
    %1960 = vmatprep.subr.mxu0 0.0
    %1961 = vmatpush1.msra.mxu0 0.0
    %1962 = vmatprep.subr.mxu0 0.0
    %1963 = vmatpush1.msra.mxu0 0.0
    %1964 = vmatprep.subr.mxu0 0.0
    %1965 = vmatpush1.msra.mxu0 0.0
    %1966 = vmatprep.subr.mxu0 0.0
    %1967 = vmatpush1.msra.mxu0 0.0
    %1968 = vmatprep.subr.mxu0 0.0
    %1969 = vmatpush1.msra.mxu0 0.0
    %1970 = vmatprep.subr.mxu0 0.0
    %1971 = vmatpush1.msra.mxu0 0.0
    %1972 = vmatprep.subr.mxu0 0.0
    %1973 = vmatpush1.msra.mxu0 0.0
    %1974 = vmatprep.subr.mxu0 0.0
    %1975 = vmatpush1.msra.mxu0 0.0
    %1976 = vmatprep.subr.mxu0 0.0
    %1977 = vmatpush1.msra.mxu0 0.0
    %1978 = vmatprep.subr.mxu0 0.0
    %1979 = vmatpush1.msra.mxu0 0.0
    %1980 = vmatprep.subr.mxu0 0.0
    %1981 = vmatpush1.msra.mxu0 0.0
    %1982 = vmatprep.subr.mxu0 0.0
    %1983 = vmatpush1.msra.mxu0 0.0
    %1984 = vmatprep.subr.mxu0 0.0
    %1985 = vmatpush1.msra.mxu0 0.0
    %1986 = vmatprep.subr.mxu0 0.0
    %1987 = vmatpush1.msra.mxu0 0.0
    %1988 = vmatprep.subr.mxu0 0.0
    %1989 = vmatpush1.msra.mxu0 0.0
    %1990 = vmatprep.subr.mxu0 0.0
    %1991 = vmatpush1.msra.mxu0 0.0
    %1992 = vmatprep.subr.mxu0 0.0
    %1993 = vmatpush1.msra.mxu0 0.0
    %1994 = vmatprep.subr.mxu0 0.0
    %1995 = vmatpush1.msra.mxu0 0.0
    %1996 = vmatprep.mubr.f32.mxu0 0.0
    %1997 = vmatmul.mubr.f32.gmra.mrb[0].mxu0 %v1921
    %v1998 = vpop.f32.mrb[0].mxu0
    %v1999 = vadd.f32 0.0, %v1998
    %v2000 = vpop.f32.mrb[0].mxu0
    %2001 = vmatprep.mubr.f32.mxu0 0.0
    %2002 = vmatmul.mubr.f32.gmra.mrb[0].mxu0 %v1924
    %v2003 = vpop.f32.mrb[0].mxu0
    %v2004 = vadd.f32 0.0, %v2003
    %v2005 = vpop.f32.mrb[0].mxu0
    %2006 = vmatprep.mubr.f32.mxu0 0.0
    %2007 = vmatmul.mubr.f32.gmra.mrb[0].mxu0 %v1927
    %v2008 = vpop.f32.mrb[0].mxu0
    %v2009 = vadd.f32 0.0, %v2008
    %v2010 = vpop.f32.mrb[0].mxu0
    %2011 = vmatprep.mubr.f32.mxu0 0.0
    %2012 = vmatmul.mubr.f32.gmra.mrb[0].mxu0 %v1930
    %v2013 = vpop.f32.mrb[0].mxu0
    %v2014 = vadd.f32 0.0, %v2013
    %v2015 = vpop.f32.mrb[0].mxu0
    %2016 = vdwg.mxu0
    %2017 = vrot.lane.b32.xlu0 %v132, 96
    %v2018 = vpop.permute.xlu0 %2017
    %2019 = vrot.lane.b32.xlu0 %v137, 96
    %v2020 = vpop.permute.xlu0 %2019
    %2023 = vxpose.xlu0.b32.start [1/16] %v2018, 128
    %2024 = vxpose.xlu0.b32.cont [2/16] %v2020, 128
    %2025 = vxpose.xlu0.b32.cont [3/16] 0.0, 128
    %2026 = vxpose.xlu0.b32.cont [4/16] 0.0, 128
    %2027 = vxpose.xlu0.b32.cont [5/16] 0.0, 128
    %2028 = vxpose.xlu0.b32.cont [6/16] 0.0, 128
    %2029 = vxpose.xlu0.b32.cont [7/16] 0.0, 128
    %2030 = vxpose.xlu0.b32.cont [8/16] 0.0, 128
    %2031 = vxpose.xlu0.b32.cont [9/16] 0.0, 128
    %2032 = vxpose.xlu0.b32.cont [10/16] 0.0, 128
    %2033 = vxpose.xlu0.b32.cont [11/16] 0.0, 128
    %2034 = vxpose.xlu0.b32.cont [12/16] 0.0, 128
    %2035 = vxpose.xlu0.b32.cont [13/16] 0.0, 128
    %2036 = vxpose.xlu0.b32.cont [14/16] 0.0, 128
    %2037 = vxpose.xlu0.b32.cont [15/16] 0.0, 128
    %2038 = vxpose.xlu0.b32.end [16/16] 0.0, 128
    %v2039 = vpop.trf.xlu0
    %v2040 = vpop.trf.xlu0
    %v2041 = vpop.trf.xlu0
    %v2042 = vpop.trf.xlu0
    %v2043 = vpop.trf.xlu0
    %v2044 = vpop.trf.xlu0
    %v2045 = vpop.trf.xlu0
    %v2046 = vpop.trf.xlu0
    %v2047 = vpop.trf.xlu0
    %v2048 = vpop.trf.xlu0
    %v2049 = vpop.trf.xlu0
    %v2050 = vpop.trf.xlu0
    %v2051 = vpop.trf.xlu0
    %v2052 = vpop.trf.xlu0
    %v2053 = vpop.trf.xlu0
    %v2054 = vpop.trf.xlu0
    %v2056 = vsel %vm232, %v2039, 0
    %v2059 = vsel %vm232, %v2040, 0
    %v2062 = vsel %vm232, %v2041, 0
    %v2065 = vsel %vm232, %v2042, 0
    %2067 = vmatprep.subr.mxu0 0.0
    %2068 = vmatpush1.msra.mxu0 %v2018
    %2069 = vmatprep.subr.mxu0 0.0
    %2070 = vmatpush1.msra.mxu0 %v2020
    %2071 = vmatprep.subr.mxu0 0.0
    %2072 = vmatpush1.msra.mxu0 0.0
    %2073 = vmatprep.subr.mxu0 0.0
    %2074 = vmatpush1.msra.mxu0 0.0
    %2075 = vmatprep.subr.mxu0 0.0
    %2076 = vmatpush1.msra.mxu0 0.0
    %2077 = vmatprep.subr.mxu0 0.0
    %2078 = vmatpush1.msra.mxu0 0.0
    %2079 = vmatprep.subr.mxu0 0.0
    %2080 = vmatpush1.msra.mxu0 0.0
    %2081 = vmatprep.subr.mxu0 0.0
    %2082 = vmatpush1.msra.mxu0 0.0
    %2083 = vmatprep.subr.mxu0 0.0
    %2084 = vmatpush1.msra.mxu0 0.0
    %2085 = vmatprep.subr.mxu0 0.0
    %2086 = vmatpush1.msra.mxu0 0.0
    %2087 = vmatprep.subr.mxu0 0.0
    %2088 = vmatpush1.msra.mxu0 0.0
    %2089 = vmatprep.subr.mxu0 0.0
    %2090 = vmatpush1.msra.mxu0 0.0
    %2091 = vmatprep.subr.mxu0 0.0
    %2092 = vmatpush1.msra.mxu0 0.0
    %2093 = vmatprep.subr.mxu0 0.0
    %2094 = vmatpush1.msra.mxu0 0.0
    %2095 = vmatprep.subr.mxu0 0.0
    %2096 = vmatpush1.msra.mxu0 0.0
    %2097 = vmatprep.subr.mxu0 0.0
    %2098 = vmatpush1.msra.mxu0 0.0
    %2099 = vmatprep.subr.mxu0 0.0
    %2100 = vmatpush1.msra.mxu0 0.0
    %2101 = vmatprep.subr.mxu0 0.0
    %2102 = vmatpush1.msra.mxu0 0.0
    %2103 = vmatprep.subr.mxu0 0.0
    %2104 = vmatpush1.msra.mxu0 0.0
    %2105 = vmatprep.subr.mxu0 0.0
    %2106 = vmatpush1.msra.mxu0 0.0
    %2107 = vmatprep.subr.mxu0 0.0
    %2108 = vmatpush1.msra.mxu0 0.0
    %2109 = vmatprep.subr.mxu0 0.0
    %2110 = vmatpush1.msra.mxu0 0.0
    %2111 = vmatprep.subr.mxu0 0.0
    %2112 = vmatpush1.msra.mxu0 0.0
    %2113 = vmatprep.subr.mxu0 0.0
    %2114 = vmatpush1.msra.mxu0 0.0
    %2115 = vmatprep.subr.mxu0 0.0
    %2116 = vmatpush1.msra.mxu0 0.0
    %2117 = vmatprep.subr.mxu0 0.0
    %2118 = vmatpush1.msra.mxu0 0.0
    %2119 = vmatprep.subr.mxu0 0.0
    %2120 = vmatpush1.msra.mxu0 0.0
    %2121 = vmatprep.subr.mxu0 0.0
    %2122 = vmatpush1.msra.mxu0 0.0
    %2123 = vmatprep.subr.mxu0 0.0
    %2124 = vmatpush1.msra.mxu0 0.0
    %2125 = vmatprep.subr.mxu0 0.0
    %2126 = vmatpush1.msra.mxu0 0.0
    %2127 = vmatprep.subr.mxu0 0.0
    %2128 = vmatpush1.msra.mxu0 0.0
    %2129 = vmatprep.subr.mxu0 0.0
    %2130 = vmatpush1.msra.mxu0 0.0
    %2131 = vmatprep.mubr.f32.mxu0 0.0
    %2132 = vmatmul.mubr.f32.gmra.mrb[0].mxu0 %v2056
    %v2133 = vpop.f32.mrb[0].mxu0
    %v2134 = vadd.f32 0.0, %v2133
    %v2135 = vpop.f32.mrb[0].mxu0
    %2136 = vmatprep.mubr.f32.mxu0 0.0
    %2137 = vmatmul.mubr.f32.gmra.mrb[0].mxu0 %v2059
    %v2138 = vpop.f32.mrb[0].mxu0
    %v2139 = vadd.f32 0.0, %v2138
    %v2140 = vpop.f32.mrb[0].mxu0
    %2141 = vmatprep.mubr.f32.mxu0 0.0
    %2142 = vmatmul.mubr.f32.gmra.mrb[0].mxu0 %v2062
    %v2143 = vpop.f32.mrb[0].mxu0
    %v2144 = vadd.f32 0.0, %v2143
    %v2145 = vpop.f32.mrb[0].mxu0
    %2146 = vmatprep.mubr.f32.mxu0 0.0
    %2147 = vmatmul.mubr.f32.gmra.mrb[0].mxu0 %v2065
    %v2148 = vpop.f32.mrb[0].mxu0
    %v2149 = vadd.f32 0.0, %v2148
    %v2150 = vpop.f32.mrb[0].mxu0
    %2151 = vdwg.mxu0
    %2152 = vrot.lane.b32.xlu0 %v142, 96
    %v2153 = vpop.permute.xlu0 %2152
    %2154 = vrot.lane.b32.xlu0 %v147, 96
    %v2155 = vpop.permute.xlu0 %2154
    %2158 = vxpose.xlu0.b32.start [1/16] %v2153, 128
    %2159 = vxpose.xlu0.b32.cont [2/16] %v2155, 128
    %2160 = vxpose.xlu0.b32.cont [3/16] 0.0, 128
    %2161 = vxpose.xlu0.b32.cont [4/16] 0.0, 128
    %2162 = vxpose.xlu0.b32.cont [5/16] 0.0, 128
    %2163 = vxpose.xlu0.b32.cont [6/16] 0.0, 128
    %2164 = vxpose.xlu0.b32.cont [7/16] 0.0, 128
    %2165 = vxpose.xlu0.b32.cont [8/16] 0.0, 128
    %2166 = vxpose.xlu0.b32.cont [9/16] 0.0, 128
    %2167 = vxpose.xlu0.b32.cont [10/16] 0.0, 128
    %2168 = vxpose.xlu0.b32.cont [11/16] 0.0, 128
    %2169 = vxpose.xlu0.b32.cont [12/16] 0.0, 128
    %2170 = vxpose.xlu0.b32.cont [13/16] 0.0, 128
    %2171 = vxpose.xlu0.b32.cont [14/16] 0.0, 128
    %2172 = vxpose.xlu0.b32.cont [15/16] 0.0, 128
    %2173 = vxpose.xlu0.b32.end [16/16] 0.0, 128
    %v2174 = vpop.trf.xlu0
    %v2175 = vpop.trf.xlu0
    %v2176 = vpop.trf.xlu0
    %v2177 = vpop.trf.xlu0
    %v2178 = vpop.trf.xlu0
    %v2179 = vpop.trf.xlu0
    %v2180 = vpop.trf.xlu0
    %v2181 = vpop.trf.xlu0
    %v2182 = vpop.trf.xlu0
    %v2183 = vpop.trf.xlu0
    %v2184 = vpop.trf.xlu0
    %v2185 = vpop.trf.xlu0
    %v2186 = vpop.trf.xlu0
    %v2187 = vpop.trf.xlu0
    %v2188 = vpop.trf.xlu0
    %v2189 = vpop.trf.xlu0
    %v2191 = vsel %vm232, %v2174, 0
    %v2194 = vsel %vm232, %v2175, 0
    %v2197 = vsel %vm232, %v2176, 0
    %v2200 = vsel %vm232, %v2177, 0
    %2202 = vmatprep.subr.mxu0 0.0
    %2203 = vmatpush1.msra.mxu0 %v2153
    %2204 = vmatprep.subr.mxu0 0.0
    %2205 = vmatpush1.msra.mxu0 %v2155
    %2206 = vmatprep.subr.mxu0 0.0
    %2207 = vmatpush1.msra.mxu0 0.0
    %2208 = vmatprep.subr.mxu0 0.0
    %2209 = vmatpush1.msra.mxu0 0.0
    %2210 = vmatprep.subr.mxu0 0.0
    %2211 = vmatpush1.msra.mxu0 0.0
    %2212 = vmatprep.subr.mxu0 0.0
    %2213 = vmatpush1.msra.mxu0 0.0
    %2214 = vmatprep.subr.mxu0 0.0
    %2215 = vmatpush1.msra.mxu0 0.0
    %2216 = vmatprep.subr.mxu0 0.0
    %2217 = vmatpush1.msra.mxu0 0.0
    %2218 = vmatprep.subr.mxu0 0.0
    %2219 = vmatpush1.msra.mxu0 0.0
    %2220 = vmatprep.subr.mxu0 0.0
    %2221 = vmatpush1.msra.mxu0 0.0
    %2222 = vmatprep.subr.mxu0 0.0
    %2223 = vmatpush1.msra.mxu0 0.0
    %2224 = vmatprep.subr.mxu0 0.0
    %2225 = vmatpush1.msra.mxu0 0.0
    %2226 = vmatprep.subr.mxu0 0.0
    %2227 = vmatpush1.msra.mxu0 0.0
    %2228 = vmatprep.subr.mxu0 0.0
    %2229 = vmatpush1.msra.mxu0 0.0
    %2230 = vmatprep.subr.mxu0 0.0
    %2231 = vmatpush1.msra.mxu0 0.0
    %2232 = vmatprep.subr.mxu0 0.0
    %2233 = vmatpush1.msra.mxu0 0.0
    %2234 = vmatprep.subr.mxu0 0.0
    %2235 = vmatpush1.msra.mxu0 0.0
    %2236 = vmatprep.subr.mxu0 0.0
    %2237 = vmatpush1.msra.mxu0 0.0
    %2238 = vmatprep.subr.mxu0 0.0
    %2239 = vmatpush1.msra.mxu0 0.0
    %2240 = vmatprep.subr.mxu0 0.0
    %2241 = vmatpush1.msra.mxu0 0.0
    %2242 = vmatprep.subr.mxu0 0.0
    %2243 = vmatpush1.msra.mxu0 0.0
    %2244 = vmatprep.subr.mxu0 0.0
    %2245 = vmatpush1.msra.mxu0 0.0
    %2246 = vmatprep.subr.mxu0 0.0
    %2247 = vmatpush1.msra.mxu0 0.0
    %2248 = vmatprep.subr.mxu0 0.0
    %2249 = vmatpush1.msra.mxu0 0.0
    %2250 = vmatprep.subr.mxu0 0.0
    %2251 = vmatpush1.msra.mxu0 0.0
    %2252 = vmatprep.subr.mxu0 0.0
    %2253 = vmatpush1.msra.mxu0 0.0
    %2254 = vmatprep.subr.mxu0 0.0
    %2255 = vmatpush1.msra.mxu0 0.0
    %2256 = vmatprep.subr.mxu0 0.0
    %2257 = vmatpush1.msra.mxu0 0.0
    %2258 = vmatprep.subr.mxu0 0.0
    %2259 = vmatpush1.msra.mxu0 0.0
    %2260 = vmatprep.subr.mxu0 0.0
    %2261 = vmatpush1.msra.mxu0 0.0
    %2262 = vmatprep.subr.mxu0 0.0
    %2263 = vmatpush1.msra.mxu0 0.0
    %2264 = vmatprep.subr.mxu0 0.0
    %2265 = vmatpush1.msra.mxu0 0.0
    %2266 = vmatprep.mubr.f32.mxu0 0.0
    %2267 = vmatmul.mubr.f32.gmra.mrb[0].mxu0 %v2191
    %v2268 = vpop.f32.mrb[0].mxu0
    %v2269 = vadd.f32 0.0, %v2268
    %v2270 = vpop.f32.mrb[0].mxu0
    %2271 = vmatprep.mubr.f32.mxu0 0.0
    %2272 = vmatmul.mubr.f32.gmra.mrb[0].mxu0 %v2194
    %v2273 = vpop.f32.mrb[0].mxu0
    %v2274 = vadd.f32 0.0, %v2273
    %v2275 = vpop.f32.mrb[0].mxu0
    %2276 = vmatprep.mubr.f32.mxu0 0.0
    %2277 = vmatmul.mubr.f32.gmra.mrb[0].mxu0 %v2197
    %v2278 = vpop.f32.mrb[0].mxu0
    %v2279 = vadd.f32 0.0, %v2278
    %v2280 = vpop.f32.mrb[0].mxu0
    %2281 = vmatprep.mubr.f32.mxu0 0.0
    %2282 = vmatmul.mubr.f32.gmra.mrb[0].mxu0 %v2200
    %v2283 = vpop.f32.mrb[0].mxu0
    %v2284 = vadd.f32 0.0, %v2283
    %v2285 = vpop.f32.mrb[0].mxu0
    %2286 = vdwg.mxu0
    %2287 = vrot.lane.b32.xlu0 %v152, 96
    %v2288 = vpop.permute.xlu0 %2287
    %2289 = vrot.lane.b32.xlu0 %v157, 96
    %v2290 = vpop.permute.xlu0 %2289
    %2293 = vxpose.xlu0.b32.start [1/16] %v2288, 128
    %2294 = vxpose.xlu0.b32.cont [2/16] %v2290, 128
    %2295 = vxpose.xlu0.b32.cont [3/16] 0.0, 128
    %2296 = vxpose.xlu0.b32.cont [4/16] 0.0, 128
    %2297 = vxpose.xlu0.b32.cont [5/16] 0.0, 128
    %2298 = vxpose.xlu0.b32.cont [6/16] 0.0, 128
    %2299 = vxpose.xlu0.b32.cont [7/16] 0.0, 128
    %2300 = vxpose.xlu0.b32.cont [8/16] 0.0, 128
    %2301 = vxpose.xlu0.b32.cont [9/16] 0.0, 128
    %2302 = vxpose.xlu0.b32.cont [10/16] 0.0, 128
    %2303 = vxpose.xlu0.b32.cont [11/16] 0.0, 128
    %2304 = vxpose.xlu0.b32.cont [12/16] 0.0, 128
    %2305 = vxpose.xlu0.b32.cont [13/16] 0.0, 128
    %2306 = vxpose.xlu0.b32.cont [14/16] 0.0, 128
    %2307 = vxpose.xlu0.b32.cont [15/16] 0.0, 128
    %2308 = vxpose.xlu0.b32.end [16/16] 0.0, 128
    %v2309 = vpop.trf.xlu0
    %v2310 = vpop.trf.xlu0
    %v2311 = vpop.trf.xlu0
    %v2312 = vpop.trf.xlu0
    %v2313 = vpop.trf.xlu0
    %v2314 = vpop.trf.xlu0
    %v2315 = vpop.trf.xlu0
    %v2316 = vpop.trf.xlu0
    %v2317 = vpop.trf.xlu0
    %v2318 = vpop.trf.xlu0
    %v2319 = vpop.trf.xlu0
    %v2320 = vpop.trf.xlu0
    %v2321 = vpop.trf.xlu0
    %v2322 = vpop.trf.xlu0
    %v2323 = vpop.trf.xlu0
    %v2324 = vpop.trf.xlu0
    %v2326 = vsel %vm232, %v2309, 0
    %v2329 = vsel %vm232, %v2310, 0
    %v2332 = vsel %vm232, %v2311, 0
    %v2335 = vsel %vm232, %v2312, 0
    %2337 = vmatprep.subr.mxu0 0.0
    %2338 = vmatpush1.msra.mxu0 %v2288
    %2339 = vmatprep.subr.mxu0 0.0
    %2340 = vmatpush1.msra.mxu0 %v2290
    %2341 = vmatprep.subr.mxu0 0.0
    %2342 = vmatpush1.msra.mxu0 0.0
    %2343 = vmatprep.subr.mxu0 0.0
    %2344 = vmatpush1.msra.mxu0 0.0
    %2345 = vmatprep.subr.mxu0 0.0
    %2346 = vmatpush1.msra.mxu0 0.0
    %2347 = vmatprep.subr.mxu0 0.0
    %2348 = vmatpush1.msra.mxu0 0.0
    %2349 = vmatprep.subr.mxu0 0.0
    %2350 = vmatpush1.msra.mxu0 0.0
    %2351 = vmatprep.subr.mxu0 0.0
    %2352 = vmatpush1.msra.mxu0 0.0
    %2353 = vmatprep.subr.mxu0 0.0
    %2354 = vmatpush1.msra.mxu0 0.0
    %2355 = vmatprep.subr.mxu0 0.0
    %2356 = vmatpush1.msra.mxu0 0.0
    %2357 = vmatprep.subr.mxu0 0.0
    %2358 = vmatpush1.msra.mxu0 0.0
    %2359 = vmatprep.subr.mxu0 0.0
    %2360 = vmatpush1.msra.mxu0 0.0
    %2361 = vmatprep.subr.mxu0 0.0
    %2362 = vmatpush1.msra.mxu0 0.0
    %2363 = vmatprep.subr.mxu0 0.0
    %2364 = vmatpush1.msra.mxu0 0.0
    %2365 = vmatprep.subr.mxu0 0.0
    %2366 = vmatpush1.msra.mxu0 0.0
    %2367 = vmatprep.subr.mxu0 0.0
    %2368 = vmatpush1.msra.mxu0 0.0
    %2369 = vmatprep.subr.mxu0 0.0
    %2370 = vmatpush1.msra.mxu0 0.0
    %2371 = vmatprep.subr.mxu0 0.0
    %2372 = vmatpush1.msra.mxu0 0.0
    %2373 = vmatprep.subr.mxu0 0.0
    %2374 = vmatpush1.msra.mxu0 0.0
    %2375 = vmatprep.subr.mxu0 0.0
    %2376 = vmatpush1.msra.mxu0 0.0
    %2377 = vmatprep.subr.mxu0 0.0
    %2378 = vmatpush1.msra.mxu0 0.0
    %2379 = vmatprep.subr.mxu0 0.0
    %2380 = vmatpush1.msra.mxu0 0.0
    %2381 = vmatprep.subr.mxu0 0.0
    %2382 = vmatpush1.msra.mxu0 0.0
    %2383 = vmatprep.subr.mxu0 0.0
    %2384 = vmatpush1.msra.mxu0 0.0
    %2385 = vmatprep.subr.mxu0 0.0
    %2386 = vmatpush1.msra.mxu0 0.0
    %2387 = vmatprep.subr.mxu0 0.0
    %2388 = vmatpush1.msra.mxu0 0.0
    %2389 = vmatprep.subr.mxu0 0.0
    %2390 = vmatpush1.msra.mxu0 0.0
    %2391 = vmatprep.subr.mxu0 0.0
    %2392 = vmatpush1.msra.mxu0 0.0
    %2393 = vmatprep.subr.mxu0 0.0
    %2394 = vmatpush1.msra.mxu0 0.0
    %2395 = vmatprep.subr.mxu0 0.0
    %2396 = vmatpush1.msra.mxu0 0.0
    %2397 = vmatprep.subr.mxu0 0.0
    %2398 = vmatpush1.msra.mxu0 0.0
    %2399 = vmatprep.subr.mxu0 0.0
    %2400 = vmatpush1.msra.mxu0 0.0
    %2401 = vmatprep.mubr.f32.mxu0 0.0
    %2402 = vmatmul.mubr.f32.gmra.mrb[0].mxu0 %v2326
    %v2403 = vpop.f32.mrb[0].mxu0
    %v2404 = vadd.f32 0.0, %v2403
    %v2405 = vpop.f32.mrb[0].mxu0
    %2406 = vmatprep.mubr.f32.mxu0 0.0
    %2407 = vmatmul.mubr.f32.gmra.mrb[0].mxu0 %v2329
    %v2408 = vpop.f32.mrb[0].mxu0
    %v2409 = vadd.f32 0.0, %v2408
    %v2410 = vpop.f32.mrb[0].mxu0
    %2411 = vmatprep.mubr.f32.mxu0 0.0
    %2412 = vmatmul.mubr.f32.gmra.mrb[0].mxu0 %v2332
    %v2413 = vpop.f32.mrb[0].mxu0
    %v2414 = vadd.f32 0.0, %v2413
    %v2415 = vpop.f32.mrb[0].mxu0
    %2416 = vmatprep.mubr.f32.mxu0 0.0
    %2417 = vmatmul.mubr.f32.gmra.mrb[0].mxu0 %v2335
    %v2418 = vpop.f32.mrb[0].mxu0
    %v2419 = vadd.f32 0.0, %v2418
    %v2420 = vpop.f32.mrb[0].mxu0
    %2421 = vdwg.mxu0
    %2422 = vrot.lane.b32.xlu0 %v162, 96
    %v2423 = vpop.permute.xlu0 %2422
    %2424 = vrot.lane.b32.xlu0 %v167, 96
    %v2425 = vpop.permute.xlu0 %2424
    %2428 = vxpose.xlu0.b32.start [1/16] %v2423, 128
    %2429 = vxpose.xlu0.b32.cont [2/16] %v2425, 128
    %2430 = vxpose.xlu0.b32.cont [3/16] 0.0, 128
    %2431 = vxpose.xlu0.b32.cont [4/16] 0.0, 128
    %2432 = vxpose.xlu0.b32.cont [5/16] 0.0, 128
    %2433 = vxpose.xlu0.b32.cont [6/16] 0.0, 128
    %2434 = vxpose.xlu0.b32.cont [7/16] 0.0, 128
    %2435 = vxpose.xlu0.b32.cont [8/16] 0.0, 128
    %2436 = vxpose.xlu0.b32.cont [9/16] 0.0, 128
    %2437 = vxpose.xlu0.b32.cont [10/16] 0.0, 128
    %2438 = vxpose.xlu0.b32.cont [11/16] 0.0, 128
    %2439 = vxpose.xlu0.b32.cont [12/16] 0.0, 128
    %2440 = vxpose.xlu0.b32.cont [13/16] 0.0, 128
    %2441 = vxpose.xlu0.b32.cont [14/16] 0.0, 128
    %2442 = vxpose.xlu0.b32.cont [15/16] 0.0, 128
    %2443 = vxpose.xlu0.b32.end [16/16] 0.0, 128
    %v2444 = vpop.trf.xlu0
    %v2445 = vpop.trf.xlu0
    %v2446 = vpop.trf.xlu0
    %v2447 = vpop.trf.xlu0
    %v2448 = vpop.trf.xlu0
    %v2449 = vpop.trf.xlu0
    %v2450 = vpop.trf.xlu0
    %v2451 = vpop.trf.xlu0
    %v2452 = vpop.trf.xlu0
    %v2453 = vpop.trf.xlu0
    %v2454 = vpop.trf.xlu0
    %v2455 = vpop.trf.xlu0
    %v2456 = vpop.trf.xlu0
    %v2457 = vpop.trf.xlu0
    %v2458 = vpop.trf.xlu0
    %v2459 = vpop.trf.xlu0
    %v2461 = vsel %vm232, %v2444, 0
    %v2464 = vsel %vm232, %v2445, 0
    %v2467 = vsel %vm232, %v2446, 0
    %v2470 = vsel %vm232, %v2447, 0
    %2472 = vmatprep.subr.mxu0 0.0
    %2473 = vmatpush1.msra.mxu0 %v2423
    %2474 = vmatprep.subr.mxu0 0.0
    %2475 = vmatpush1.msra.mxu0 %v2425
    %2476 = vmatprep.subr.mxu0 0.0
    %2477 = vmatpush1.msra.mxu0 0.0
    %2478 = vmatprep.subr.mxu0 0.0
    %2479 = vmatpush1.msra.mxu0 0.0
    %2480 = vmatprep.subr.mxu0 0.0
    %2481 = vmatpush1.msra.mxu0 0.0
    %2482 = vmatprep.subr.mxu0 0.0
    %2483 = vmatpush1.msra.mxu0 0.0
    %2484 = vmatprep.subr.mxu0 0.0
    %2485 = vmatpush1.msra.mxu0 0.0
    %2486 = vmatprep.subr.mxu0 0.0
    %2487 = vmatpush1.msra.mxu0 0.0
    %2488 = vmatprep.subr.mxu0 0.0
    %2489 = vmatpush1.msra.mxu0 0.0
    %2490 = vmatprep.subr.mxu0 0.0
    %2491 = vmatpush1.msra.mxu0 0.0
    %2492 = vmatprep.subr.mxu0 0.0
    %2493 = vmatpush1.msra.mxu0 0.0
    %2494 = vmatprep.subr.mxu0 0.0
    %2495 = vmatpush1.msra.mxu0 0.0
    %2496 = vmatprep.subr.mxu0 0.0
    %2497 = vmatpush1.msra.mxu0 0.0
    %2498 = vmatprep.subr.mxu0 0.0
    %2499 = vmatpush1.msra.mxu0 0.0
    %2500 = vmatprep.subr.mxu0 0.0
    %2501 = vmatpush1.msra.mxu0 0.0
    %2502 = vmatprep.subr.mxu0 0.0
    %2503 = vmatpush1.msra.mxu0 0.0
    %2504 = vmatprep.subr.mxu0 0.0
    %2505 = vmatpush1.msra.mxu0 0.0
    %2506 = vmatprep.subr.mxu0 0.0
    %2507 = vmatpush1.msra.mxu0 0.0
    %2508 = vmatprep.subr.mxu0 0.0
    %2509 = vmatpush1.msra.mxu0 0.0
    %2510 = vmatprep.subr.mxu0 0.0
    %2511 = vmatpush1.msra.mxu0 0.0
    %2512 = vmatprep.subr.mxu0 0.0
    %2513 = vmatpush1.msra.mxu0 0.0
    %2514 = vmatprep.subr.mxu0 0.0
    %2515 = vmatpush1.msra.mxu0 0.0
    %2516 = vmatprep.subr.mxu0 0.0
    %2517 = vmatpush1.msra.mxu0 0.0
    %2518 = vmatprep.subr.mxu0 0.0
    %2519 = vmatpush1.msra.mxu0 0.0
    %2520 = vmatprep.subr.mxu0 0.0
    %2521 = vmatpush1.msra.mxu0 0.0
    %2522 = vmatprep.subr.mxu0 0.0
    %2523 = vmatpush1.msra.mxu0 0.0
    %2524 = vmatprep.subr.mxu0 0.0
    %2525 = vmatpush1.msra.mxu0 0.0
    %2526 = vmatprep.subr.mxu0 0.0
    %2527 = vmatpush1.msra.mxu0 0.0
    %2528 = vmatprep.subr.mxu0 0.0
    %2529 = vmatpush1.msra.mxu0 0.0
    %2530 = vmatprep.subr.mxu0 0.0
    %2531 = vmatpush1.msra.mxu0 0.0
    %2532 = vmatprep.subr.mxu0 0.0
    %2533 = vmatpush1.msra.mxu0 0.0
    %2534 = vmatprep.subr.mxu0 0.0
    %2535 = vmatpush1.msra.mxu0 0.0
    %2536 = vmatprep.mubr.f32.mxu0 0.0
    %2537 = vmatmul.mubr.f32.gmra.mrb[0].mxu0 %v2461
    %v2538 = vpop.f32.mrb[0].mxu0
    %v2539 = vadd.f32 0.0, %v2538
    %v2540 = vpop.f32.mrb[0].mxu0
    %2541 = vmatprep.mubr.f32.mxu0 0.0
    %2542 = vmatmul.mubr.f32.gmra.mrb[0].mxu0 %v2464
    %v2543 = vpop.f32.mrb[0].mxu0
    %v2544 = vadd.f32 0.0, %v2543
    %v2545 = vpop.f32.mrb[0].mxu0
    %2546 = vmatprep.mubr.f32.mxu0 0.0
    %2547 = vmatmul.mubr.f32.gmra.mrb[0].mxu0 %v2467
    %v2548 = vpop.f32.mrb[0].mxu0
    %v2549 = vadd.f32 0.0, %v2548
    %v2550 = vpop.f32.mrb[0].mxu0
    %2551 = vmatprep.mubr.f32.mxu0 0.0
    %2552 = vmatmul.mubr.f32.gmra.mrb[0].mxu0 %v2470
    %v2553 = vpop.f32.mrb[0].mxu0
    %v2554 = vadd.f32 0.0, %v2553
    %v2555 = vpop.f32.mrb[0].mxu0
    %2556 = vdwg.mxu0
    %2557 = vrot.lane.b32.xlu0 %v172, 96
    %v2558 = vpop.permute.xlu0 %2557
    %2559 = vrot.lane.b32.xlu0 %v177, 96
    %v2560 = vpop.permute.xlu0 %2559
    %2563 = vxpose.xlu0.b32.start [1/16] %v2558, 128
    %2564 = vxpose.xlu0.b32.cont [2/16] %v2560, 128
    %2565 = vxpose.xlu0.b32.cont [3/16] 0.0, 128
    %2566 = vxpose.xlu0.b32.cont [4/16] 0.0, 128
    %2567 = vxpose.xlu0.b32.cont [5/16] 0.0, 128
    %2568 = vxpose.xlu0.b32.cont [6/16] 0.0, 128
    %2569 = vxpose.xlu0.b32.cont [7/16] 0.0, 128
    %2570 = vxpose.xlu0.b32.cont [8/16] 0.0, 128
    %2571 = vxpose.xlu0.b32.cont [9/16] 0.0, 128
    %2572 = vxpose.xlu0.b32.cont [10/16] 0.0, 128
    %2573 = vxpose.xlu0.b32.cont [11/16] 0.0, 128
    %2574 = vxpose.xlu0.b32.cont [12/16] 0.0, 128
    %2575 = vxpose.xlu0.b32.cont [13/16] 0.0, 128
    %2576 = vxpose.xlu0.b32.cont [14/16] 0.0, 128
    %2577 = vxpose.xlu0.b32.cont [15/16] 0.0, 128
    %2578 = vxpose.xlu0.b32.end [16/16] 0.0, 128
    %v2579 = vpop.trf.xlu0
    %v2580 = vpop.trf.xlu0
    %v2581 = vpop.trf.xlu0
    %v2582 = vpop.trf.xlu0
    %v2583 = vpop.trf.xlu0
    %v2584 = vpop.trf.xlu0
    %v2585 = vpop.trf.xlu0
    %v2586 = vpop.trf.xlu0
    %v2587 = vpop.trf.xlu0
    %v2588 = vpop.trf.xlu0
    %v2589 = vpop.trf.xlu0
    %v2590 = vpop.trf.xlu0
    %v2591 = vpop.trf.xlu0
    %v2592 = vpop.trf.xlu0
    %v2593 = vpop.trf.xlu0
    %v2594 = vpop.trf.xlu0
    %v2596 = vsel %vm232, %v2579, 0
    %v2599 = vsel %vm232, %v2580, 0
    %v2602 = vsel %vm232, %v2581, 0
    %v2605 = vsel %vm232, %v2582, 0
    %2607 = vmatprep.subr.mxu0 0.0
    %2608 = vmatpush1.msra.mxu0 %v2558
    %2609 = vmatprep.subr.mxu0 0.0
    %2610 = vmatpush1.msra.mxu0 %v2560
    %2611 = vmatprep.subr.mxu0 0.0
    %2612 = vmatpush1.msra.mxu0 0.0
    %2613 = vmatprep.subr.mxu0 0.0
    %2614 = vmatpush1.msra.mxu0 0.0
    %2615 = vmatprep.subr.mxu0 0.0
    %2616 = vmatpush1.msra.mxu0 0.0
    %2617 = vmatprep.subr.mxu0 0.0
    %2618 = vmatpush1.msra.mxu0 0.0
    %2619 = vmatprep.subr.mxu0 0.0
    %2620 = vmatpush1.msra.mxu0 0.0
    %2621 = vmatprep.subr.mxu0 0.0
    %2622 = vmatpush1.msra.mxu0 0.0
    %2623 = vmatprep.subr.mxu0 0.0
    %2624 = vmatpush1.msra.mxu0 0.0
    %2625 = vmatprep.subr.mxu0 0.0
    %2626 = vmatpush1.msra.mxu0 0.0
    %2627 = vmatprep.subr.mxu0 0.0
    %2628 = vmatpush1.msra.mxu0 0.0
    %2629 = vmatprep.subr.mxu0 0.0
    %2630 = vmatpush1.msra.mxu0 0.0
    %2631 = vmatprep.subr.mxu0 0.0
    %2632 = vmatpush1.msra.mxu0 0.0
    %2633 = vmatprep.subr.mxu0 0.0
    %2634 = vmatpush1.msra.mxu0 0.0
    %2635 = vmatprep.subr.mxu0 0.0
    %2636 = vmatpush1.msra.mxu0 0.0
    %2637 = vmatprep.subr.mxu0 0.0
    %2638 = vmatpush1.msra.mxu0 0.0
    %2639 = vmatprep.subr.mxu0 0.0
    %2640 = vmatpush1.msra.mxu0 0.0
    %2641 = vmatprep.subr.mxu0 0.0
    %2642 = vmatpush1.msra.mxu0 0.0
    %2643 = vmatprep.subr.mxu0 0.0
    %2644 = vmatpush1.msra.mxu0 0.0
    %2645 = vmatprep.subr.mxu0 0.0
    %2646 = vmatpush1.msra.mxu0 0.0
    %2647 = vmatprep.subr.mxu0 0.0
    %2648 = vmatpush1.msra.mxu0 0.0
    %2649 = vmatprep.subr.mxu0 0.0
    %2650 = vmatpush1.msra.mxu0 0.0
    %2651 = vmatprep.subr.mxu0 0.0
    %2652 = vmatpush1.msra.mxu0 0.0
    %2653 = vmatprep.subr.mxu0 0.0
    %2654 = vmatpush1.msra.mxu0 0.0
    %2655 = vmatprep.subr.mxu0 0.0
    %2656 = vmatpush1.msra.mxu0 0.0
    %2657 = vmatprep.subr.mxu0 0.0
    %2658 = vmatpush1.msra.mxu0 0.0
    %2659 = vmatprep.subr.mxu0 0.0
    %2660 = vmatpush1.msra.mxu0 0.0
    %2661 = vmatprep.subr.mxu0 0.0
    %2662 = vmatpush1.msra.mxu0 0.0
    %2663 = vmatprep.subr.mxu0 0.0
    %2664 = vmatpush1.msra.mxu0 0.0
    %2665 = vmatprep.subr.mxu0 0.0
    %2666 = vmatpush1.msra.mxu0 0.0
    %2667 = vmatprep.subr.mxu0 0.0
    %2668 = vmatpush1.msra.mxu0 0.0
    %2669 = vmatprep.subr.mxu0 0.0
    %2670 = vmatpush1.msra.mxu0 0.0
    %2671 = vmatprep.mubr.f32.mxu0 0.0
    %2672 = vmatmul.mubr.f32.gmra.mrb[0].mxu0 %v2596
    %v2673 = vpop.f32.mrb[0].mxu0
    %v2674 = vadd.f32 0.0, %v2673
    %v2675 = vpop.f32.mrb[0].mxu0
    %2676 = vmatprep.mubr.f32.mxu0 0.0
    %2677 = vmatmul.mubr.f32.gmra.mrb[0].mxu0 %v2599
    %v2678 = vpop.f32.mrb[0].mxu0
    %v2679 = vadd.f32 0.0, %v2678
    %v2680 = vpop.f32.mrb[0].mxu0
    %2681 = vmatprep.mubr.f32.mxu0 0.0
    %2682 = vmatmul.mubr.f32.gmra.mrb[0].mxu0 %v2602
    %v2683 = vpop.f32.mrb[0].mxu0
    %v2684 = vadd.f32 0.0, %v2683
    %v2685 = vpop.f32.mrb[0].mxu0
    %2686 = vmatprep.mubr.f32.mxu0 0.0
    %2687 = vmatmul.mubr.f32.gmra.mrb[0].mxu0 %v2605
    %v2688 = vpop.f32.mrb[0].mxu0
    %v2689 = vadd.f32 0.0, %v2688
    %v2690 = vpop.f32.mrb[0].mxu0
    %2691 = vdwg.mxu0
    %2692 = vrot.lane.b32.xlu0 %v182, 96
    %v2693 = vpop.permute.xlu0 %2692
    %2694 = vrot.lane.b32.xlu0 %v187, 96
    %v2695 = vpop.permute.xlu0 %2694
    %2698 = vxpose.xlu0.b32.start [1/16] %v2693, 128
    %2699 = vxpose.xlu0.b32.cont [2/16] %v2695, 128
    %2700 = vxpose.xlu0.b32.cont [3/16] 0.0, 128
    %2701 = vxpose.xlu0.b32.cont [4/16] 0.0, 128
    %2702 = vxpose.xlu0.b32.cont [5/16] 0.0, 128
    %2703 = vxpose.xlu0.b32.cont [6/16] 0.0, 128
    %2704 = vxpose.xlu0.b32.cont [7/16] 0.0, 128
    %2705 = vxpose.xlu0.b32.cont [8/16] 0.0, 128
    %2706 = vxpose.xlu0.b32.cont [9/16] 0.0, 128
    %2707 = vxpose.xlu0.b32.cont [10/16] 0.0, 128
    %2708 = vxpose.xlu0.b32.cont [11/16] 0.0, 128
    %2709 = vxpose.xlu0.b32.cont [12/16] 0.0, 128
    %2710 = vxpose.xlu0.b32.cont [13/16] 0.0, 128
    %2711 = vxpose.xlu0.b32.cont [14/16] 0.0, 128
    %2712 = vxpose.xlu0.b32.cont [15/16] 0.0, 128
    %2713 = vxpose.xlu0.b32.end [16/16] 0.0, 128
    %v2714 = vpop.trf.xlu0
    %v2715 = vpop.trf.xlu0
    %v2716 = vpop.trf.xlu0
    %v2717 = vpop.trf.xlu0
    %v2718 = vpop.trf.xlu0
    %v2719 = vpop.trf.xlu0
    %v2720 = vpop.trf.xlu0
    %v2721 = vpop.trf.xlu0
    %v2722 = vpop.trf.xlu0
    %v2723 = vpop.trf.xlu0
    %v2724 = vpop.trf.xlu0
    %v2725 = vpop.trf.xlu0
    %v2726 = vpop.trf.xlu0
    %v2727 = vpop.trf.xlu0
    %v2728 = vpop.trf.xlu0
    %v2729 = vpop.trf.xlu0
    %v2731 = vsel %vm232, %v2714, 0
    %v2734 = vsel %vm232, %v2715, 0
    %v2737 = vsel %vm232, %v2716, 0
    %v2740 = vsel %vm232, %v2717, 0
    %2742 = vmatprep.subr.mxu0 0.0
    %2743 = vmatpush1.msra.mxu0 %v2693
    %2744 = vmatprep.subr.mxu0 0.0
    %2745 = vmatpush1.msra.mxu0 %v2695
    %2746 = vmatprep.subr.mxu0 0.0
    %2747 = vmatpush1.msra.mxu0 0.0
    %2748 = vmatprep.subr.mxu0 0.0
    %2749 = vmatpush1.msra.mxu0 0.0
    %2750 = vmatprep.subr.mxu0 0.0
    %2751 = vmatpush1.msra.mxu0 0.0
    %2752 = vmatprep.subr.mxu0 0.0
    %2753 = vmatpush1.msra.mxu0 0.0
    %2754 = vmatprep.subr.mxu0 0.0
    %2755 = vmatpush1.msra.mxu0 0.0
    %2756 = vmatprep.subr.mxu0 0.0
    %2757 = vmatpush1.msra.mxu0 0.0
    %2758 = vmatprep.subr.mxu0 0.0
    %2759 = vmatpush1.msra.mxu0 0.0
    %2760 = vmatprep.subr.mxu0 0.0
    %2761 = vmatpush1.msra.mxu0 0.0
    %2762 = vmatprep.subr.mxu0 0.0
    %2763 = vmatpush1.msra.mxu0 0.0
    %2764 = vmatprep.subr.mxu0 0.0
    %2765 = vmatpush1.msra.mxu0 0.0
    %2766 = vmatprep.subr.mxu0 0.0
    %2767 = vmatpush1.msra.mxu0 0.0
    %2768 = vmatprep.subr.mxu0 0.0
    %2769 = vmatpush1.msra.mxu0 0.0
    %2770 = vmatprep.subr.mxu0 0.0
    %2771 = vmatpush1.msra.mxu0 0.0
    %2772 = vmatprep.subr.mxu0 0.0
    %2773 = vmatpush1.msra.mxu0 0.0
    %2774 = vmatprep.subr.mxu0 0.0
    %2775 = vmatpush1.msra.mxu0 0.0
    %2776 = vmatprep.subr.mxu0 0.0
    %2777 = vmatpush1.msra.mxu0 0.0
    %2778 = vmatprep.subr.mxu0 0.0
    %2779 = vmatpush1.msra.mxu0 0.0
    %2780 = vmatprep.subr.mxu0 0.0
    %2781 = vmatpush1.msra.mxu0 0.0
    %2782 = vmatprep.subr.mxu0 0.0
    %2783 = vmatpush1.msra.mxu0 0.0
    %2784 = vmatprep.subr.mxu0 0.0
    %2785 = vmatpush1.msra.mxu0 0.0
    %2786 = vmatprep.subr.mxu0 0.0
    %2787 = vmatpush1.msra.mxu0 0.0
    %2788 = vmatprep.subr.mxu0 0.0
    %2789 = vmatpush1.msra.mxu0 0.0
    %2790 = vmatprep.subr.mxu0 0.0
    %2791 = vmatpush1.msra.mxu0 0.0
    %2792 = vmatprep.subr.mxu0 0.0
    %2793 = vmatpush1.msra.mxu0 0.0
    %2794 = vmatprep.subr.mxu0 0.0
    %2795 = vmatpush1.msra.mxu0 0.0
    %2796 = vmatprep.subr.mxu0 0.0
    %2797 = vmatpush1.msra.mxu0 0.0
    %2798 = vmatprep.subr.mxu0 0.0
    %2799 = vmatpush1.msra.mxu0 0.0
    %2800 = vmatprep.subr.mxu0 0.0
    %2801 = vmatpush1.msra.mxu0 0.0
    %2802 = vmatprep.subr.mxu0 0.0
    %2803 = vmatpush1.msra.mxu0 0.0
    %2804 = vmatprep.subr.mxu0 0.0
    %2805 = vmatpush1.msra.mxu0 0.0
    %2806 = vmatprep.mubr.f32.mxu0 0.0
    %2807 = vmatmul.mubr.f32.gmra.mrb[0].mxu0 %v2731
    %v2808 = vpop.f32.mrb[0].mxu0
    %v2809 = vadd.f32 0.0, %v2808
    %v2810 = vpop.f32.mrb[0].mxu0
    %2811 = vmatprep.mubr.f32.mxu0 0.0
    %2812 = vmatmul.mubr.f32.gmra.mrb[0].mxu0 %v2734
    %v2813 = vpop.f32.mrb[0].mxu0
    %v2814 = vadd.f32 0.0, %v2813
    %v2815 = vpop.f32.mrb[0].mxu0
    %2816 = vmatprep.mubr.f32.mxu0 0.0
    %2817 = vmatmul.mubr.f32.gmra.mrb[0].mxu0 %v2737
    %v2818 = vpop.f32.mrb[0].mxu0
    %v2819 = vadd.f32 0.0, %v2818
    %v2820 = vpop.f32.mrb[0].mxu0
    %2821 = vmatprep.mubr.f32.mxu0 0.0
    %2822 = vmatmul.mubr.f32.gmra.mrb[0].mxu0 %v2740
    %v2823 = vpop.f32.mrb[0].mxu0
    %v2824 = vadd.f32 0.0, %v2823
    %v2825 = vpop.f32.mrb[0].mxu0
    %2826 = vdwg.mxu0
    %2827 = vrot.lane.b32.xlu0 %v192, 96
    %v2828 = vpop.permute.xlu0 %2827
    %2829 = vrot.lane.b32.xlu0 %v197, 96
    %v2830 = vpop.permute.xlu0 %2829
    %2833 = vxpose.xlu0.b32.start [1/16] %v2828, 128
    %2834 = vxpose.xlu0.b32.cont [2/16] %v2830, 128
    %2835 = vxpose.xlu0.b32.cont [3/16] 0.0, 128
    %2836 = vxpose.xlu0.b32.cont [4/16] 0.0, 128
    %2837 = vxpose.xlu0.b32.cont [5/16] 0.0, 128
    %2838 = vxpose.xlu0.b32.cont [6/16] 0.0, 128
    %2839 = vxpose.xlu0.b32.cont [7/16] 0.0, 128
    %2840 = vxpose.xlu0.b32.cont [8/16] 0.0, 128
    %2841 = vxpose.xlu0.b32.cont [9/16] 0.0, 128
    %2842 = vxpose.xlu0.b32.cont [10/16] 0.0, 128
    %2843 = vxpose.xlu0.b32.cont [11/16] 0.0, 128
    %2844 = vxpose.xlu0.b32.cont [12/16] 0.0, 128
    %2845 = vxpose.xlu0.b32.cont [13/16] 0.0, 128
    %2846 = vxpose.xlu0.b32.cont [14/16] 0.0, 128
    %2847 = vxpose.xlu0.b32.cont [15/16] 0.0, 128
    %2848 = vxpose.xlu0.b32.end [16/16] 0.0, 128
    %v2849 = vpop.trf.xlu0
    %v2850 = vpop.trf.xlu0
    %v2851 = vpop.trf.xlu0
    %v2852 = vpop.trf.xlu0
    %v2853 = vpop.trf.xlu0
    %v2854 = vpop.trf.xlu0
    %v2855 = vpop.trf.xlu0
    %v2856 = vpop.trf.xlu0
    %v2857 = vpop.trf.xlu0
    %v2858 = vpop.trf.xlu0
    %v2859 = vpop.trf.xlu0
    %v2860 = vpop.trf.xlu0
    %v2861 = vpop.trf.xlu0
    %v2862 = vpop.trf.xlu0
    %v2863 = vpop.trf.xlu0
    %v2864 = vpop.trf.xlu0
    %v2866 = vsel %vm232, %v2849, 0
    %v2869 = vsel %vm232, %v2850, 0
    %v2872 = vsel %vm232, %v2851, 0
    %v2875 = vsel %vm232, %v2852, 0
    %2877 = vmatprep.subr.mxu0 0.0
    %2878 = vmatpush1.msra.mxu0 %v2828
    %2879 = vmatprep.subr.mxu0 0.0
    %2880 = vmatpush1.msra.mxu0 %v2830
    %2881 = vmatprep.subr.mxu0 0.0
    %2882 = vmatpush1.msra.mxu0 0.0
    %2883 = vmatprep.subr.mxu0 0.0
    %2884 = vmatpush1.msra.mxu0 0.0
    %2885 = vmatprep.subr.mxu0 0.0
    %2886 = vmatpush1.msra.mxu0 0.0
    %2887 = vmatprep.subr.mxu0 0.0
    %2888 = vmatpush1.msra.mxu0 0.0
    %2889 = vmatprep.subr.mxu0 0.0
    %2890 = vmatpush1.msra.mxu0 0.0
    %2891 = vmatprep.subr.mxu0 0.0
    %2892 = vmatpush1.msra.mxu0 0.0
    %2893 = vmatprep.subr.mxu0 0.0
    %2894 = vmatpush1.msra.mxu0 0.0
    %2895 = vmatprep.subr.mxu0 0.0
    %2896 = vmatpush1.msra.mxu0 0.0
    %2897 = vmatprep.subr.mxu0 0.0
    %2898 = vmatpush1.msra.mxu0 0.0
    %2899 = vmatprep.subr.mxu0 0.0
    %2900 = vmatpush1.msra.mxu0 0.0
    %2901 = vmatprep.subr.mxu0 0.0
    %2902 = vmatpush1.msra.mxu0 0.0
    %2903 = vmatprep.subr.mxu0 0.0
    %2904 = vmatpush1.msra.mxu0 0.0
    %2905 = vmatprep.subr.mxu0 0.0
    %2906 = vmatpush1.msra.mxu0 0.0
    %2907 = vmatprep.subr.mxu0 0.0
    %2908 = vmatpush1.msra.mxu0 0.0
    %2909 = vmatprep.subr.mxu0 0.0
    %2910 = vmatpush1.msra.mxu0 0.0
    %2911 = vmatprep.subr.mxu0 0.0
    %2912 = vmatpush1.msra.mxu0 0.0
    %2913 = vmatprep.subr.mxu0 0.0
    %2914 = vmatpush1.msra.mxu0 0.0
    %2915 = vmatprep.subr.mxu0 0.0
    %2916 = vmatpush1.msra.mxu0 0.0
    %2917 = vmatprep.subr.mxu0 0.0
    %2918 = vmatpush1.msra.mxu0 0.0
    %2919 = vmatprep.subr.mxu0 0.0
    %2920 = vmatpush1.msra.mxu0 0.0
    %2921 = vmatprep.subr.mxu0 0.0
    %2922 = vmatpush1.msra.mxu0 0.0
    %2923 = vmatprep.subr.mxu0 0.0
    %2924 = vmatpush1.msra.mxu0 0.0
    %2925 = vmatprep.subr.mxu0 0.0
    %2926 = vmatpush1.msra.mxu0 0.0
    %2927 = vmatprep.subr.mxu0 0.0
    %2928 = vmatpush1.msra.mxu0 0.0
    %2929 = vmatprep.subr.mxu0 0.0
    %2930 = vmatpush1.msra.mxu0 0.0
    %2931 = vmatprep.subr.mxu0 0.0
    %2932 = vmatpush1.msra.mxu0 0.0
    %2933 = vmatprep.subr.mxu0 0.0
    %2934 = vmatpush1.msra.mxu0 0.0
    %2935 = vmatprep.subr.mxu0 0.0
    %2936 = vmatpush1.msra.mxu0 0.0
    %2937 = vmatprep.subr.mxu0 0.0
    %2938 = vmatpush1.msra.mxu0 0.0
    %2939 = vmatprep.subr.mxu0 0.0
    %2940 = vmatpush1.msra.mxu0 0.0
    %2941 = vmatprep.mubr.f32.mxu0 0.0
    %2942 = vmatmul.mubr.f32.gmra.mrb[0].mxu0 %v2866
    %v2943 = vpop.f32.mrb[0].mxu0
    %v2944 = vadd.f32 0.0, %v2943
    %v2945 = vpop.f32.mrb[0].mxu0
    %2946 = vmatprep.mubr.f32.mxu0 0.0
    %2947 = vmatmul.mubr.f32.gmra.mrb[0].mxu0 %v2869
    %v2948 = vpop.f32.mrb[0].mxu0
    %v2949 = vadd.f32 0.0, %v2948
    %v2950 = vpop.f32.mrb[0].mxu0
    %2951 = vmatprep.mubr.f32.mxu0 0.0
    %2952 = vmatmul.mubr.f32.gmra.mrb[0].mxu0 %v2872
    %v2953 = vpop.f32.mrb[0].mxu0
    %v2954 = vadd.f32 0.0, %v2953
    %v2955 = vpop.f32.mrb[0].mxu0
    %2956 = vmatprep.mubr.f32.mxu0 0.0
    %2957 = vmatmul.mubr.f32.gmra.mrb[0].mxu0 %v2875
    %v2958 = vpop.f32.mrb[0].mxu0
    %v2959 = vadd.f32 0.0, %v2958
    %v2960 = vpop.f32.mrb[0].mxu0
    %2961 = vdwg.mxu0
    %v2962 = vsel %vm1233, %v1883, 0
    %v2964 = vsel %vm1233, %v1885, 0
    %2966 = vmatprep.subr.mxu0 0.0
    %2967 = vmatpush1.msra.mxu0 %v1999
    %2968 = vmatprep.subr.mxu0 0.0
    %2969 = vmatpush1.msra.mxu0 %v2004
    %2970 = vmatprep.subr.mxu0 0.0
    %2971 = vmatpush1.msra.mxu0 %v2009
    %2972 = vmatprep.subr.mxu0 0.0
    %2973 = vmatpush1.msra.mxu0 %v2014
    %2974 = vmatprep.subr.mxu0 0.0
    %2975 = vmatpush1.msra.mxu0 0.0
    %2976 = vmatprep.subr.mxu0 0.0
    %2977 = vmatpush1.msra.mxu0 0.0
    %2978 = vmatprep.subr.mxu0 0.0
    %2979 = vmatpush1.msra.mxu0 0.0
    %2980 = vmatprep.subr.mxu0 0.0
    %2981 = vmatpush1.msra.mxu0 0.0
    %2982 = vmatprep.subr.mxu0 0.0
    %2983 = vmatpush1.msra.mxu0 0.0
    %2984 = vmatprep.subr.mxu0 0.0
    %2985 = vmatpush1.msra.mxu0 0.0
    %2986 = vmatprep.subr.mxu0 0.0
    %2987 = vmatpush1.msra.mxu0 0.0
    %2988 = vmatprep.subr.mxu0 0.0
    %2989 = vmatpush1.msra.mxu0 0.0
    %2990 = vmatprep.subr.mxu0 0.0
    %2991 = vmatpush1.msra.mxu0 0.0
    %2992 = vmatprep.subr.mxu0 0.0
    %2993 = vmatpush1.msra.mxu0 0.0
    %2994 = vmatprep.subr.mxu0 0.0
    %2995 = vmatpush1.msra.mxu0 0.0
    %2996 = vmatprep.subr.mxu0 0.0
    %2997 = vmatpush1.msra.mxu0 0.0
    %2998 = vmatprep.subr.mxu0 0.0
    %2999 = vmatpush1.msra.mxu0 0.0
    %3000 = vmatprep.subr.mxu0 0.0
    %3001 = vmatpush1.msra.mxu0 0.0
    %3002 = vmatprep.subr.mxu0 0.0
    %3003 = vmatpush1.msra.mxu0 0.0
    %3004 = vmatprep.subr.mxu0 0.0
    %3005 = vmatpush1.msra.mxu0 0.0
    %3006 = vmatprep.subr.mxu0 0.0
    %3007 = vmatpush1.msra.mxu0 0.0
    %3008 = vmatprep.subr.mxu0 0.0
    %3009 = vmatpush1.msra.mxu0 0.0
    %3010 = vmatprep.subr.mxu0 0.0
    %3011 = vmatpush1.msra.mxu0 0.0
    %3012 = vmatprep.subr.mxu0 0.0
    %3013 = vmatpush1.msra.mxu0 0.0
    %3014 = vmatprep.subr.mxu0 0.0
    %3015 = vmatpush1.msra.mxu0 0.0
    %3016 = vmatprep.subr.mxu0 0.0
    %3017 = vmatpush1.msra.mxu0 0.0
    %3018 = vmatprep.subr.mxu0 0.0
    %3019 = vmatpush1.msra.mxu0 0.0
    %3020 = vmatprep.subr.mxu0 0.0
    %3021 = vmatpush1.msra.mxu0 0.0
    %3022 = vmatprep.subr.mxu0 0.0
    %3023 = vmatpush1.msra.mxu0 0.0
    %3024 = vmatprep.subr.mxu0 0.0
    %3025 = vmatpush1.msra.mxu0 0.0
    %3026 = vmatprep.subr.mxu0 0.0
    %3027 = vmatpush1.msra.mxu0 0.0
    %3028 = vmatprep.subr.mxu0 0.0
    %3029 = vmatpush1.msra.mxu0 0.0
    %3030 = vmatprep.mubr.f32.mxu0 0.0
    %3031 = vmatmul.mubr.f32.gmra.mrb[0].mxu0 %v2962
    %v3032 = vpop.f32.mrb[0].mxu0
    %v3033 = vadd.f32 0.0, %v3032
    %v3034 = vpop.f32.mrb[0].mxu0
    %3035 = vmatprep.mubr.f32.mxu0 0.0
    %3036 = vmatmul.mubr.f32.gmra.mrb[0].mxu0 %v2964
    %v3037 = vpop.f32.mrb[0].mxu0
    %v3038 = vadd.f32 0.0, %v3037
    %v3039 = vpop.f32.mrb[0].mxu0
    %3040 = vdwg.mxu0
    %v3041 = vsel %vm1233, %v2018, 0
    %v3043 = vsel %vm1233, %v2020, 0
    %3045 = vmatprep.subr.mxu0 0.0
    %3046 = vmatpush1.msra.mxu0 %v2134
    %3047 = vmatprep.subr.mxu0 0.0
    %3048 = vmatpush1.msra.mxu0 %v2139
    %3049 = vmatprep.subr.mxu0 0.0
    %3050 = vmatpush1.msra.mxu0 %v2144
    %3051 = vmatprep.subr.mxu0 0.0
    %3052 = vmatpush1.msra.mxu0 %v2149
    %3053 = vmatprep.subr.mxu0 0.0
    %3054 = vmatpush1.msra.mxu0 0.0
    %3055 = vmatprep.subr.mxu0 0.0
    %3056 = vmatpush1.msra.mxu0 0.0
    %3057 = vmatprep.subr.mxu0 0.0
    %3058 = vmatpush1.msra.mxu0 0.0
    %3059 = vmatprep.subr.mxu0 0.0
    %3060 = vmatpush1.msra.mxu0 0.0
    %3061 = vmatprep.subr.mxu0 0.0
    %3062 = vmatpush1.msra.mxu0 0.0
    %3063 = vmatprep.subr.mxu0 0.0
    %3064 = vmatpush1.msra.mxu0 0.0
    %3065 = vmatprep.subr.mxu0 0.0
    %3066 = vmatpush1.msra.mxu0 0.0
    %3067 = vmatprep.subr.mxu0 0.0
    %3068 = vmatpush1.msra.mxu0 0.0
    %3069 = vmatprep.subr.mxu0 0.0
    %3070 = vmatpush1.msra.mxu0 0.0
    %3071 = vmatprep.subr.mxu0 0.0
    %3072 = vmatpush1.msra.mxu0 0.0
    %3073 = vmatprep.subr.mxu0 0.0
    %3074 = vmatpush1.msra.mxu0 0.0
    %3075 = vmatprep.subr.mxu0 0.0
    %3076 = vmatpush1.msra.mxu0 0.0
    %3077 = vmatprep.subr.mxu0 0.0
    %3078 = vmatpush1.msra.mxu0 0.0
    %3079 = vmatprep.subr.mxu0 0.0
    %3080 = vmatpush1.msra.mxu0 0.0
    %3081 = vmatprep.subr.mxu0 0.0
    %3082 = vmatpush1.msra.mxu0 0.0
    %3083 = vmatprep.subr.mxu0 0.0
    %3084 = vmatpush1.msra.mxu0 0.0
    %3085 = vmatprep.subr.mxu0 0.0
    %3086 = vmatpush1.msra.mxu0 0.0
    %3087 = vmatprep.subr.mxu0 0.0
    %3088 = vmatpush1.msra.mxu0 0.0
    %3089 = vmatprep.subr.mxu0 0.0
    %3090 = vmatpush1.msra.mxu0 0.0
    %3091 = vmatprep.subr.mxu0 0.0
    %3092 = vmatpush1.msra.mxu0 0.0
    %3093 = vmatprep.subr.mxu0 0.0
    %3094 = vmatpush1.msra.mxu0 0.0
    %3095 = vmatprep.subr.mxu0 0.0
    %3096 = vmatpush1.msra.mxu0 0.0
    %3097 = vmatprep.subr.mxu0 0.0
    %3098 = vmatpush1.msra.mxu0 0.0
    %3099 = vmatprep.subr.mxu0 0.0
    %3100 = vmatpush1.msra.mxu0 0.0
    %3101 = vmatprep.subr.mxu0 0.0
    %3102 = vmatpush1.msra.mxu0 0.0
    %3103 = vmatprep.subr.mxu0 0.0
    %3104 = vmatpush1.msra.mxu0 0.0
    %3105 = vmatprep.subr.mxu0 0.0
    %3106 = vmatpush1.msra.mxu0 0.0
    %3107 = vmatprep.subr.mxu0 0.0
    %3108 = vmatpush1.msra.mxu0 0.0
    %3109 = vmatprep.mubr.f32.mxu0 0.0
    %3110 = vmatmul.mubr.f32.gmra.mrb[0].mxu0 %v3041
    %v3111 = vpop.f32.mrb[0].mxu0
    %v3112 = vadd.f32 0.0, %v3111
    %v3113 = vpop.f32.mrb[0].mxu0
    %3114 = vmatprep.mubr.f32.mxu0 0.0
    %3115 = vmatmul.mubr.f32.gmra.mrb[0].mxu0 %v3043
    %v3116 = vpop.f32.mrb[0].mxu0
    %v3117 = vadd.f32 0.0, %v3116
    %v3118 = vpop.f32.mrb[0].mxu0
    %3119 = vdwg.mxu0
    %v3120 = vsel %vm1233, %v2153, 0
    %v3122 = vsel %vm1233, %v2155, 0
    %3124 = vmatprep.subr.mxu0 0.0
    %3125 = vmatpush1.msra.mxu0 %v2269
    %3126 = vmatprep.subr.mxu0 0.0
    %3127 = vmatpush1.msra.mxu0 %v2274
    %3128 = vmatprep.subr.mxu0 0.0
    %3129 = vmatpush1.msra.mxu0 %v2279
    %3130 = vmatprep.subr.mxu0 0.0
    %3131 = vmatpush1.msra.mxu0 %v2284
    %3132 = vmatprep.subr.mxu0 0.0
    %3133 = vmatpush1.msra.mxu0 0.0
    %3134 = vmatprep.subr.mxu0 0.0
    %3135 = vmatpush1.msra.mxu0 0.0
    %3136 = vmatprep.subr.mxu0 0.0
    %3137 = vmatpush1.msra.mxu0 0.0
    %3138 = vmatprep.subr.mxu0 0.0
    %3139 = vmatpush1.msra.mxu0 0.0
    %3140 = vmatprep.subr.mxu0 0.0
    %3141 = vmatpush1.msra.mxu0 0.0
    %3142 = vmatprep.subr.mxu0 0.0
    %3143 = vmatpush1.msra.mxu0 0.0
    %3144 = vmatprep.subr.mxu0 0.0
    %3145 = vmatpush1.msra.mxu0 0.0
    %3146 = vmatprep.subr.mxu0 0.0
    %3147 = vmatpush1.msra.mxu0 0.0
    %3148 = vmatprep.subr.mxu0 0.0
    %3149 = vmatpush1.msra.mxu0 0.0
    %3150 = vmatprep.subr.mxu0 0.0
    %3151 = vmatpush1.msra.mxu0 0.0
    %3152 = vmatprep.subr.mxu0 0.0
    %3153 = vmatpush1.msra.mxu0 0.0
    %3154 = vmatprep.subr.mxu0 0.0
    %3155 = vmatpush1.msra.mxu0 0.0
    %3156 = vmatprep.subr.mxu0 0.0
    %3157 = vmatpush1.msra.mxu0 0.0
    %3158 = vmatprep.subr.mxu0 0.0
    %3159 = vmatpush1.msra.mxu0 0.0
    %3160 = vmatprep.subr.mxu0 0.0
    %3161 = vmatpush1.msra.mxu0 0.0
    %3162 = vmatprep.subr.mxu0 0.0
    %3163 = vmatpush1.msra.mxu0 0.0
    %3164 = vmatprep.subr.mxu0 0.0
    %3165 = vmatpush1.msra.mxu0 0.0
    %3166 = vmatprep.subr.mxu0 0.0
    %3167 = vmatpush1.msra.mxu0 0.0
    %3168 = vmatprep.subr.mxu0 0.0
    %3169 = vmatpush1.msra.mxu0 0.0
    %3170 = vmatprep.subr.mxu0 0.0
    %3171 = vmatpush1.msra.mxu0 0.0
    %3172 = vmatprep.subr.mxu0 0.0
    %3173 = vmatpush1.msra.mxu0 0.0
    %3174 = vmatprep.subr.mxu0 0.0
    %3175 = vmatpush1.msra.mxu0 0.0
    %3176 = vmatprep.subr.mxu0 0.0
    %3177 = vmatpush1.msra.mxu0 0.0
    %3178 = vmatprep.subr.mxu0 0.0
    %3179 = vmatpush1.msra.mxu0 0.0
    %3180 = vmatprep.subr.mxu0 0.0
    %3181 = vmatpush1.msra.mxu0 0.0
    %3182 = vmatprep.subr.mxu0 0.0
    %3183 = vmatpush1.msra.mxu0 0.0
    %3184 = vmatprep.subr.mxu0 0.0
    %3185 = vmatpush1.msra.mxu0 0.0
    %3186 = vmatprep.subr.mxu0 0.0
    %3187 = vmatpush1.msra.mxu0 0.0
    %3188 = vmatprep.mubr.f32.mxu0 0.0
    %3189 = vmatmul.mubr.f32.gmra.mrb[0].mxu0 %v3120
    %v3190 = vpop.f32.mrb[0].mxu0
    %v3191 = vadd.f32 0.0, %v3190
    %v3192 = vpop.f32.mrb[0].mxu0
    %3193 = vmatprep.mubr.f32.mxu0 0.0
    %3194 = vmatmul.mubr.f32.gmra.mrb[0].mxu0 %v3122
    %v3195 = vpop.f32.mrb[0].mxu0
    %v3196 = vadd.f32 0.0, %v3195
    %v3197 = vpop.f32.mrb[0].mxu0
    %3198 = vdwg.mxu0
    %v3199 = vsel %vm1233, %v2288, 0
    %v3201 = vsel %vm1233, %v2290, 0
    %3203 = vmatprep.subr.mxu0 0.0
    %3204 = vmatpush1.msra.mxu0 %v2404
    %3205 = vmatprep.subr.mxu0 0.0
    %3206 = vmatpush1.msra.mxu0 %v2409
    %3207 = vmatprep.subr.mxu0 0.0
    %3208 = vmatpush1.msra.mxu0 %v2414
    %3209 = vmatprep.subr.mxu0 0.0
    %3210 = vmatpush1.msra.mxu0 %v2419
    %3211 = vmatprep.subr.mxu0 0.0
    %3212 = vmatpush1.msra.mxu0 0.0
    %3213 = vmatprep.subr.mxu0 0.0
    %3214 = vmatpush1.msra.mxu0 0.0
    %3215 = vmatprep.subr.mxu0 0.0
    %3216 = vmatpush1.msra.mxu0 0.0
    %3217 = vmatprep.subr.mxu0 0.0
    %3218 = vmatpush1.msra.mxu0 0.0
    %3219 = vmatprep.subr.mxu0 0.0
    %3220 = vmatpush1.msra.mxu0 0.0
    %3221 = vmatprep.subr.mxu0 0.0
    %3222 = vmatpush1.msra.mxu0 0.0
    %3223 = vmatprep.subr.mxu0 0.0
    %3224 = vmatpush1.msra.mxu0 0.0
    %3225 = vmatprep.subr.mxu0 0.0
    %3226 = vmatpush1.msra.mxu0 0.0
    %3227 = vmatprep.subr.mxu0 0.0
    %3228 = vmatpush1.msra.mxu0 0.0
    %3229 = vmatprep.subr.mxu0 0.0
    %3230 = vmatpush1.msra.mxu0 0.0
    %3231 = vmatprep.subr.mxu0 0.0
    %3232 = vmatpush1.msra.mxu0 0.0
    %3233 = vmatprep.subr.mxu0 0.0
    %3234 = vmatpush1.msra.mxu0 0.0
    %3235 = vmatprep.subr.mxu0 0.0
    %3236 = vmatpush1.msra.mxu0 0.0
    %3237 = vmatprep.subr.mxu0 0.0
    %3238 = vmatpush1.msra.mxu0 0.0
    %3239 = vmatprep.subr.mxu0 0.0
    %3240 = vmatpush1.msra.mxu0 0.0
    %3241 = vmatprep.subr.mxu0 0.0
    %3242 = vmatpush1.msra.mxu0 0.0
    %3243 = vmatprep.subr.mxu0 0.0
    %3244 = vmatpush1.msra.mxu0 0.0
    %3245 = vmatprep.subr.mxu0 0.0
    %3246 = vmatpush1.msra.mxu0 0.0
    %3247 = vmatprep.subr.mxu0 0.0
    %3248 = vmatpush1.msra.mxu0 0.0
    %3249 = vmatprep.subr.mxu0 0.0
    %3250 = vmatpush1.msra.mxu0 0.0
    %3251 = vmatprep.subr.mxu0 0.0
    %3252 = vmatpush1.msra.mxu0 0.0
    %3253 = vmatprep.subr.mxu0 0.0
    %3254 = vmatpush1.msra.mxu0 0.0
    %3255 = vmatprep.subr.mxu0 0.0
    %3256 = vmatpush1.msra.mxu0 0.0
    %3257 = vmatprep.subr.mxu0 0.0
    %3258 = vmatpush1.msra.mxu0 0.0
    %3259 = vmatprep.subr.mxu0 0.0
    %3260 = vmatpush1.msra.mxu0 0.0
    %3261 = vmatprep.subr.mxu0 0.0
    %3262 = vmatpush1.msra.mxu0 0.0
    %3263 = vmatprep.subr.mxu0 0.0
    %3264 = vmatpush1.msra.mxu0 0.0
    %3265 = vmatprep.subr.mxu0 0.0
    %3266 = vmatpush1.msra.mxu0 0.0
    %3267 = vmatprep.mubr.f32.mxu0 0.0
    %3268 = vmatmul.mubr.f32.gmra.mrb[0].mxu0 %v3199
    %v3269 = vpop.f32.mrb[0].mxu0
    %v3270 = vadd.f32 0.0, %v3269
    %v3271 = vpop.f32.mrb[0].mxu0
    %3272 = vmatprep.mubr.f32.mxu0 0.0
    %3273 = vmatmul.mubr.f32.gmra.mrb[0].mxu0 %v3201
    %v3274 = vpop.f32.mrb[0].mxu0
    %v3275 = vadd.f32 0.0, %v3274
    %v3276 = vpop.f32.mrb[0].mxu0
    %3277 = vdwg.mxu0
    %v3278 = vsel %vm1233, %v2423, 0
    %v3280 = vsel %vm1233, %v2425, 0
    %3282 = vmatprep.subr.mxu0 0.0
    %3283 = vmatpush1.msra.mxu0 %v2539
    %3284 = vmatprep.subr.mxu0 0.0
    %3285 = vmatpush1.msra.mxu0 %v2544
    %3286 = vmatprep.subr.mxu0 0.0
    %3287 = vmatpush1.msra.mxu0 %v2549
    %3288 = vmatprep.subr.mxu0 0.0
    %3289 = vmatpush1.msra.mxu0 %v2554
    %3290 = vmatprep.subr.mxu0 0.0
    %3291 = vmatpush1.msra.mxu0 0.0
    %3292 = vmatprep.subr.mxu0 0.0
    %3293 = vmatpush1.msra.mxu0 0.0
    %3294 = vmatprep.subr.mxu0 0.0
    %3295 = vmatpush1.msra.mxu0 0.0
    %3296 = vmatprep.subr.mxu0 0.0
    %3297 = vmatpush1.msra.mxu0 0.0
    %3298 = vmatprep.subr.mxu0 0.0
    %3299 = vmatpush1.msra.mxu0 0.0
    %3300 = vmatprep.subr.mxu0 0.0
    %3301 = vmatpush1.msra.mxu0 0.0
    %3302 = vmatprep.subr.mxu0 0.0
    %3303 = vmatpush1.msra.mxu0 0.0
    %3304 = vmatprep.subr.mxu0 0.0
    %3305 = vmatpush1.msra.mxu0 0.0
    %3306 = vmatprep.subr.mxu0 0.0
    %3307 = vmatpush1.msra.mxu0 0.0
    %3308 = vmatprep.subr.mxu0 0.0
    %3309 = vmatpush1.msra.mxu0 0.0
    %3310 = vmatprep.subr.mxu0 0.0
    %3311 = vmatpush1.msra.mxu0 0.0
    %3312 = vmatprep.subr.mxu0 0.0
    %3313 = vmatpush1.msra.mxu0 0.0
    %3314 = vmatprep.subr.mxu0 0.0
    %3315 = vmatpush1.msra.mxu0 0.0
    %3316 = vmatprep.subr.mxu0 0.0
    %3317 = vmatpush1.msra.mxu0 0.0
    %3318 = vmatprep.subr.mxu0 0.0
    %3319 = vmatpush1.msra.mxu0 0.0
    %3320 = vmatprep.subr.mxu0 0.0
    %3321 = vmatpush1.msra.mxu0 0.0
    %3322 = vmatprep.subr.mxu0 0.0
    %3323 = vmatpush1.msra.mxu0 0.0
    %3324 = vmatprep.subr.mxu0 0.0
    %3325 = vmatpush1.msra.mxu0 0.0
    %3326 = vmatprep.subr.mxu0 0.0
    %3327 = vmatpush1.msra.mxu0 0.0
    %3328 = vmatprep.subr.mxu0 0.0
    %3329 = vmatpush1.msra.mxu0 0.0
    %3330 = vmatprep.subr.mxu0 0.0
    %3331 = vmatpush1.msra.mxu0 0.0
    %3332 = vmatprep.subr.mxu0 0.0
    %3333 = vmatpush1.msra.mxu0 0.0
    %3334 = vmatprep.subr.mxu0 0.0
    %3335 = vmatpush1.msra.mxu0 0.0
    %3336 = vmatprep.subr.mxu0 0.0
    %3337 = vmatpush1.msra.mxu0 0.0
    %3338 = vmatprep.subr.mxu0 0.0
    %3339 = vmatpush1.msra.mxu0 0.0
    %3340 = vmatprep.subr.mxu0 0.0
    %3341 = vmatpush1.msra.mxu0 0.0
    %3342 = vmatprep.subr.mxu0 0.0
    %3343 = vmatpush1.msra.mxu0 0.0
    %3344 = vmatprep.subr.mxu0 0.0
    %3345 = vmatpush1.msra.mxu0 0.0
    %3346 = vmatprep.mubr.f32.mxu0 0.0
    %3347 = vmatmul.mubr.f32.gmra.mrb[0].mxu0 %v3278
    %v3348 = vpop.f32.mrb[0].mxu0
    %v3349 = vadd.f32 0.0, %v3348
    %v3350 = vpop.f32.mrb[0].mxu0
    %3351 = vmatprep.mubr.f32.mxu0 0.0
    %3352 = vmatmul.mubr.f32.gmra.mrb[0].mxu0 %v3280
    %v3353 = vpop.f32.mrb[0].mxu0
    %v3354 = vadd.f32 0.0, %v3353
    %v3355 = vpop.f32.mrb[0].mxu0
    %3356 = vdwg.mxu0
    %v3357 = vsel %vm1233, %v2558, 0
    %v3359 = vsel %vm1233, %v2560, 0
    %3361 = vmatprep.subr.mxu0 0.0
    %3362 = vmatpush1.msra.mxu0 %v2674
    %3363 = vmatprep.subr.mxu0 0.0
    %3364 = vmatpush1.msra.mxu0 %v2679
    %3365 = vmatprep.subr.mxu0 0.0
    %3366 = vmatpush1.msra.mxu0 %v2684
    %3367 = vmatprep.subr.mxu0 0.0
    %3368 = vmatpush1.msra.mxu0 %v2689
    %3369 = vmatprep.subr.mxu0 0.0
    %3370 = vmatpush1.msra.mxu0 0.0
    %3371 = vmatprep.subr.mxu0 0.0
    %3372 = vmatpush1.msra.mxu0 0.0
    %3373 = vmatprep.subr.mxu0 0.0
    %3374 = vmatpush1.msra.mxu0 0.0
    %3375 = vmatprep.subr.mxu0 0.0
    %3376 = vmatpush1.msra.mxu0 0.0
    %3377 = vmatprep.subr.mxu0 0.0
    %3378 = vmatpush1.msra.mxu0 0.0
    %3379 = vmatprep.subr.mxu0 0.0
    %3380 = vmatpush1.msra.mxu0 0.0
    %3381 = vmatprep.subr.mxu0 0.0
    %3382 = vmatpush1.msra.mxu0 0.0
    %3383 = vmatprep.subr.mxu0 0.0
    %3384 = vmatpush1.msra.mxu0 0.0
    %3385 = vmatprep.subr.mxu0 0.0
    %3386 = vmatpush1.msra.mxu0 0.0
    %3387 = vmatprep.subr.mxu0 0.0
    %3388 = vmatpush1.msra.mxu0 0.0
    %3389 = vmatprep.subr.mxu0 0.0
    %3390 = vmatpush1.msra.mxu0 0.0
    %3391 = vmatprep.subr.mxu0 0.0
    %3392 = vmatpush1.msra.mxu0 0.0
    %3393 = vmatprep.subr.mxu0 0.0
    %3394 = vmatpush1.msra.mxu0 0.0
    %3395 = vmatprep.subr.mxu0 0.0
    %3396 = vmatpush1.msra.mxu0 0.0
    %3397 = vmatprep.subr.mxu0 0.0
    %3398 = vmatpush1.msra.mxu0 0.0
    %3399 = vmatprep.subr.mxu0 0.0
    %3400 = vmatpush1.msra.mxu0 0.0
    %3401 = vmatprep.subr.mxu0 0.0
    %3402 = vmatpush1.msra.mxu0 0.0
    %3403 = vmatprep.subr.mxu0 0.0
    %3404 = vmatpush1.msra.mxu0 0.0
    %3405 = vmatprep.subr.mxu0 0.0
    %3406 = vmatpush1.msra.mxu0 0.0
    %3407 = vmatprep.subr.mxu0 0.0
    %3408 = vmatpush1.msra.mxu0 0.0
    %3409 = vmatprep.subr.mxu0 0.0
    %3410 = vmatpush1.msra.mxu0 0.0
    %3411 = vmatprep.subr.mxu0 0.0
    %3412 = vmatpush1.msra.mxu0 0.0
    %3413 = vmatprep.subr.mxu0 0.0
    %3414 = vmatpush1.msra.mxu0 0.0
    %3415 = vmatprep.subr.mxu0 0.0
    %3416 = vmatpush1.msra.mxu0 0.0
    %3417 = vmatprep.subr.mxu0 0.0
    %3418 = vmatpush1.msra.mxu0 0.0
    %3419 = vmatprep.subr.mxu0 0.0
    %3420 = vmatpush1.msra.mxu0 0.0
    %3421 = vmatprep.subr.mxu0 0.0
    %3422 = vmatpush1.msra.mxu0 0.0
    %3423 = vmatprep.subr.mxu0 0.0
    %3424 = vmatpush1.msra.mxu0 0.0
    %3425 = vmatprep.mubr.f32.mxu0 0.0
    %3426 = vmatmul.mubr.f32.gmra.mrb[0].mxu0 %v3357
    %v3427 = vpop.f32.mrb[0].mxu0
    %v3428 = vadd.f32 0.0, %v3427
    %v3429 = vpop.f32.mrb[0].mxu0
    %3430 = vmatprep.mubr.f32.mxu0 0.0
    %3431 = vmatmul.mubr.f32.gmra.mrb[0].mxu0 %v3359
    %v3432 = vpop.f32.mrb[0].mxu0
    %v3433 = vadd.f32 0.0, %v3432
    %v3434 = vpop.f32.mrb[0].mxu0
    %3435 = vdwg.mxu0
    %v3436 = vsel %vm1233, %v2693, 0
    %v3438 = vsel %vm1233, %v2695, 0
    %3440 = vmatprep.subr.mxu0 0.0
    %3441 = vmatpush1.msra.mxu0 %v2809
    %3442 = vmatprep.subr.mxu0 0.0
    %3443 = vmatpush1.msra.mxu0 %v2814
    %3444 = vmatprep.subr.mxu0 0.0
    %3445 = vmatpush1.msra.mxu0 %v2819
    %3446 = vmatprep.subr.mxu0 0.0
    %3447 = vmatpush1.msra.mxu0 %v2824
    %3448 = vmatprep.subr.mxu0 0.0
    %3449 = vmatpush1.msra.mxu0 0.0
    %3450 = vmatprep.subr.mxu0 0.0
    %3451 = vmatpush1.msra.mxu0 0.0
    %3452 = vmatprep.subr.mxu0 0.0
    %3453 = vmatpush1.msra.mxu0 0.0
    %3454 = vmatprep.subr.mxu0 0.0
    %3455 = vmatpush1.msra.mxu0 0.0
    %3456 = vmatprep.subr.mxu0 0.0
    %3457 = vmatpush1.msra.mxu0 0.0
    %3458 = vmatprep.subr.mxu0 0.0
    %3459 = vmatpush1.msra.mxu0 0.0
    %3460 = vmatprep.subr.mxu0 0.0
    %3461 = vmatpush1.msra.mxu0 0.0
    %3462 = vmatprep.subr.mxu0 0.0
    %3463 = vmatpush1.msra.mxu0 0.0
    %3464 = vmatprep.subr.mxu0 0.0
    %3465 = vmatpush1.msra.mxu0 0.0
    %3466 = vmatprep.subr.mxu0 0.0
    %3467 = vmatpush1.msra.mxu0 0.0
    %3468 = vmatprep.subr.mxu0 0.0
    %3469 = vmatpush1.msra.mxu0 0.0
    %3470 = vmatprep.subr.mxu0 0.0
    %3471 = vmatpush1.msra.mxu0 0.0
    %3472 = vmatprep.subr.mxu0 0.0
    %3473 = vmatpush1.msra.mxu0 0.0
    %3474 = vmatprep.subr.mxu0 0.0
    %3475 = vmatpush1.msra.mxu0 0.0
    %3476 = vmatprep.subr.mxu0 0.0
    %3477 = vmatpush1.msra.mxu0 0.0
    %3478 = vmatprep.subr.mxu0 0.0
    %3479 = vmatpush1.msra.mxu0 0.0
    %3480 = vmatprep.subr.mxu0 0.0
    %3481 = vmatpush1.msra.mxu0 0.0
    %3482 = vmatprep.subr.mxu0 0.0
    %3483 = vmatpush1.msra.mxu0 0.0
    %3484 = vmatprep.subr.mxu0 0.0
    %3485 = vmatpush1.msra.mxu0 0.0
    %3486 = vmatprep.subr.mxu0 0.0
    %3487 = vmatpush1.msra.mxu0 0.0
    %3488 = vmatprep.subr.mxu0 0.0
    %3489 = vmatpush1.msra.mxu0 0.0
    %3490 = vmatprep.subr.mxu0 0.0
    %3491 = vmatpush1.msra.mxu0 0.0
    %3492 = vmatprep.subr.mxu0 0.0
    %3493 = vmatpush1.msra.mxu0 0.0
    %3494 = vmatprep.subr.mxu0 0.0
    %3495 = vmatpush1.msra.mxu0 0.0
    %3496 = vmatprep.subr.mxu0 0.0
    %3497 = vmatpush1.msra.mxu0 0.0
    %3498 = vmatprep.subr.mxu0 0.0
    %3499 = vmatpush1.msra.mxu0 0.0
    %3500 = vmatprep.subr.mxu0 0.0
    %3501 = vmatpush1.msra.mxu0 0.0
    %3502 = vmatprep.subr.mxu0 0.0
    %3503 = vmatpush1.msra.mxu0 0.0
    %3504 = vmatprep.mubr.f32.mxu0 0.0
    %3505 = vmatmul.mubr.f32.gmra.mrb[0].mxu0 %v3436
    %v3506 = vpop.f32.mrb[0].mxu0
    %v3507 = vadd.f32 0.0, %v3506
    %v3508 = vpop.f32.mrb[0].mxu0
    %3509 = vmatprep.mubr.f32.mxu0 0.0
    %3510 = vmatmul.mubr.f32.gmra.mrb[0].mxu0 %v3438
    %v3511 = vpop.f32.mrb[0].mxu0
    %v3512 = vadd.f32 0.0, %v3511
    %v3513 = vpop.f32.mrb[0].mxu0
    %3514 = vdwg.mxu0
    %v3515 = vsel %vm1233, %v2828, 0
    %v3517 = vsel %vm1233, %v2830, 0
    %3519 = vmatprep.subr.mxu0 0.0
    %3520 = vmatpush1.msra.mxu0 %v2944
    %3521 = vmatprep.subr.mxu0 0.0
    %3522 = vmatpush1.msra.mxu0 %v2949
    %3523 = vmatprep.subr.mxu0 0.0
    %3524 = vmatpush1.msra.mxu0 %v2954
    %3525 = vmatprep.subr.mxu0 0.0
    %3526 = vmatpush1.msra.mxu0 %v2959
    %3527 = vmatprep.subr.mxu0 0.0
    %3528 = vmatpush1.msra.mxu0 0.0
    %3529 = vmatprep.subr.mxu0 0.0
    %3530 = vmatpush1.msra.mxu0 0.0
    %3531 = vmatprep.subr.mxu0 0.0
    %3532 = vmatpush1.msra.mxu0 0.0
    %3533 = vmatprep.subr.mxu0 0.0
    %3534 = vmatpush1.msra.mxu0 0.0
    %3535 = vmatprep.subr.mxu0 0.0
    %3536 = vmatpush1.msra.mxu0 0.0
    %3537 = vmatprep.subr.mxu0 0.0
    %3538 = vmatpush1.msra.mxu0 0.0
    %3539 = vmatprep.subr.mxu0 0.0
    %3540 = vmatpush1.msra.mxu0 0.0
    %3541 = vmatprep.subr.mxu0 0.0
    %3542 = vmatpush1.msra.mxu0 0.0
    %3543 = vmatprep.subr.mxu0 0.0
    %3544 = vmatpush1.msra.mxu0 0.0
    %3545 = vmatprep.subr.mxu0 0.0
    %3546 = vmatpush1.msra.mxu0 0.0
    %3547 = vmatprep.subr.mxu0 0.0
    %3548 = vmatpush1.msra.mxu0 0.0
    %3549 = vmatprep.subr.mxu0 0.0
    %3550 = vmatpush1.msra.mxu0 0.0
    %3551 = vmatprep.subr.mxu0 0.0
    %3552 = vmatpush1.msra.mxu0 0.0
    %3553 = vmatprep.subr.mxu0 0.0
    %3554 = vmatpush1.msra.mxu0 0.0
    %3555 = vmatprep.subr.mxu0 0.0
    %3556 = vmatpush1.msra.mxu0 0.0
    %3557 = vmatprep.subr.mxu0 0.0
    %3558 = vmatpush1.msra.mxu0 0.0
    %3559 = vmatprep.subr.mxu0 0.0
    %3560 = vmatpush1.msra.mxu0 0.0
    %3561 = vmatprep.subr.mxu0 0.0
    %3562 = vmatpush1.msra.mxu0 0.0
    %3563 = vmatprep.subr.mxu0 0.0
    %3564 = vmatpush1.msra.mxu0 0.0
    %3565 = vmatprep.subr.mxu0 0.0
    %3566 = vmatpush1.msra.mxu0 0.0
    %3567 = vmatprep.subr.mxu0 0.0
    %3568 = vmatpush1.msra.mxu0 0.0
    %3569 = vmatprep.subr.mxu0 0.0
    %3570 = vmatpush1.msra.mxu0 0.0
    %3571 = vmatprep.subr.mxu0 0.0
    %3572 = vmatpush1.msra.mxu0 0.0
    %3573 = vmatprep.subr.mxu0 0.0
    %3574 = vmatpush1.msra.mxu0 0.0
    %3575 = vmatprep.subr.mxu0 0.0
    %3576 = vmatpush1.msra.mxu0 0.0
    %3577 = vmatprep.subr.mxu0 0.0
    %3578 = vmatpush1.msra.mxu0 0.0
    %3579 = vmatprep.subr.mxu0 0.0
    %3580 = vmatpush1.msra.mxu0 0.0
    %3581 = vmatprep.subr.mxu0 0.0
    %3582 = vmatpush1.msra.mxu0 0.0
    %3583 = vmatprep.mubr.f32.mxu0 0.0
    %3584 = vmatmul.mubr.f32.gmra.mrb[0].mxu0 %v3515
    %v3585 = vpop.f32.mrb[0].mxu0
    %v3586 = vadd.f32 0.0, %v3585
    %v3587 = vpop.f32.mrb[0].mxu0
    %3588 = vmatprep.mubr.f32.mxu0 0.0
    %3589 = vmatmul.mubr.f32.gmra.mrb[0].mxu0 %v3517
    %v3590 = vpop.f32.mrb[0].mxu0
    %v3591 = vadd.f32 0.0, %v3590
    %v3592 = vpop.f32.mrb[0].mxu0
    %3593 = vdwg.mxu0
    %3610 = vrot.lane.b32.xlu0 %v3033, 32
    %v3611 = vpop.permute.xlu0 %3610
    %3612 = vrot.lane.b32.xlu0 %v3038, 32
    %v3613 = vpop.permute.xlu0 %3612
    %3614 = vrot.lane.b32.xlu0 %v3112, 32
    %v3615 = vpop.permute.xlu0 %3614
    %3616 = vrot.lane.b32.xlu0 %v3117, 32
    %v3617 = vpop.permute.xlu0 %3616
    %3618 = vrot.lane.b32.xlu0 %v3191, 32
    %v3619 = vpop.permute.xlu0 %3618
    %3620 = vrot.lane.b32.xlu0 %v3196, 32
    %v3621 = vpop.permute.xlu0 %3620
    %3622 = vrot.lane.b32.xlu0 %v3270, 32
    %v3623 = vpop.permute.xlu0 %3622
    %3624 = vrot.lane.b32.xlu0 %v3275, 32
    %v3625 = vpop.permute.xlu0 %3624
    %3626 = vrot.lane.b32.xlu0 %v3349, 32
    %v3627 = vpop.permute.xlu0 %3626
    %3628 = vrot.lane.b32.xlu0 %v3354, 32
    %v3629 = vpop.permute.xlu0 %3628
    %3630 = vrot.lane.b32.xlu0 %v3428, 32
    %v3631 = vpop.permute.xlu0 %3630
    %3632 = vrot.lane.b32.xlu0 %v3433, 32
    %v3633 = vpop.permute.xlu0 %3632
    %3634 = vrot.lane.b32.xlu0 %v3507, 32
    %v3635 = vpop.permute.xlu0 %3634
    %3636 = vrot.lane.b32.xlu0 %v3512, 32
    %v3637 = vpop.permute.xlu0 %3636
    %3638 = vrot.lane.b32.xlu0 %v3586, 32
    %v3639 = vpop.permute.xlu0 %3638
    %3640 = vrot.lane.b32.xlu0 %v3591, 32
    %v3641 = vpop.permute.xlu0 %3640
    %v3658 = vsel %vm1233, %v1307, %v3611
    %v3659 = vsel %vm1233, %v1312, %v3613
    %v3660 = vsel %vm1233, %v1388, %v3615
    %v3661 = vsel %vm1233, %v1393, %v3617
    %v3662 = vsel %vm1233, %v1469, %v3619
    %v3663 = vsel %vm1233, %v1474, %v3621
    %v3664 = vsel %vm1233, %v1550, %v3623
    %v3665 = vsel %vm1233, %v1555, %v3625
    %v3666 = vsel %vm1233, %v1631, %v3627
    %v3667 = vsel %vm1233, %v1636, %v3629
    %v3668 = vsel %vm1233, %v1712, %v3631
    %v3669 = vsel %vm1233, %v1717, %v3633
    %v3670 = vsel %vm1233, %v1793, %v3635
    %v3671 = vsel %vm1233, %v1798, %v3637
    %v3672 = vsel %vm1233, %v1874, %v3639
    %v3673 = vsel %vm1233, %v1879, %v3641
    %vm3674 = vcmask 523264
    %v3676 = vsel %vm3674, %v3658, 0
    %v3679 = vsel %vm3674, %v3659, 0
    %v3682 = vsel %vm3674, %v3660, 0
    %v3685 = vsel %vm3674, %v3661, 0
    %v3688 = vsel %vm3674, %v3662, 0
    %v3691 = vsel %vm3674, %v3663, 0
    %v3694 = vsel %vm3674, %v3664, 0
    %v3697 = vsel %vm3674, %v3665, 0
    %v3700 = vsel %vm3674, %v3666, 0
    %v3703 = vsel %vm3674, %v3667, 0
    %v3706 = vsel %vm3674, %v3668, 0
    %v3709 = vsel %vm3674, %v3669, 0
    %v3712 = vsel %vm3674, %v3670, 0
    %v3715 = vsel %vm3674, %v3671, 0
    %v3718 = vsel %vm3674, %v3672, 0
    %v3721 = vsel %vm3674, %v3673, 0
    %3723 = vmatprep.subr.mxu0 0.0
    %3724 = vmatpush1.msra.mxu0 %v31
    %3725 = vmatprep.subr.mxu0 0.0
    %3726 = vmatpush1.msra.mxu0 %v32
    %3727 = vmatprep.subr.mxu0 0.0
    %3728 = vmatpush1.msra.mxu0 %v33
    %3729 = vmatprep.subr.mxu0 0.0
    %3730 = vmatpush1.msra.mxu0 %v34
    %3731 = vmatprep.subr.mxu0 0.0
    %3732 = vmatpush1.msra.mxu0 %v35
    %3733 = vmatprep.subr.mxu0 0.0
    %3734 = vmatpush1.msra.mxu0 %v36
    %3735 = vmatprep.subr.mxu0 0.0
    %3736 = vmatpush1.msra.mxu0 %v37
    %3737 = vmatprep.subr.mxu0 0.0
    %3738 = vmatpush1.msra.mxu0 %v38
    %3739 = vmatprep.subr.mxu0 0.0
    %3740 = vmatpush1.msra.mxu0 0.0
    %3741 = vmatprep.subr.mxu0 0.0
    %3742 = vmatpush1.msra.mxu0 0.0
    %3743 = vmatprep.subr.mxu0 0.0
    %3744 = vmatpush1.msra.mxu0 0.0
    %3745 = vmatprep.subr.mxu0 0.0
    %3746 = vmatpush1.msra.mxu0 0.0
    %3747 = vmatprep.subr.mxu0 0.0
    %3748 = vmatpush1.msra.mxu0 0.0
    %3749 = vmatprep.subr.mxu0 0.0
    %3750 = vmatpush1.msra.mxu0 0.0
    %3751 = vmatprep.subr.mxu0 0.0
    %3752 = vmatpush1.msra.mxu0 0.0
    %3753 = vmatprep.subr.mxu0 0.0
    %3754 = vmatpush1.msra.mxu0 0.0
    %3755 = vmatprep.subr.mxu0 0.0
    %3756 = vmatpush1.msra.mxu0 0.0
    %3757 = vmatprep.subr.mxu0 0.0
    %3758 = vmatpush1.msra.mxu0 0.0
    %3759 = vmatprep.subr.mxu0 0.0
    %3760 = vmatpush1.msra.mxu0 0.0
    %3761 = vmatprep.subr.mxu0 0.0
    %3762 = vmatpush1.msra.mxu0 0.0
    %3763 = vmatprep.subr.mxu0 0.0
    %3764 = vmatpush1.msra.mxu0 0.0
    %3765 = vmatprep.subr.mxu0 0.0
    %3766 = vmatpush1.msra.mxu0 0.0
    %3767 = vmatprep.subr.mxu0 0.0
    %3768 = vmatpush1.msra.mxu0 0.0
    %3769 = vmatprep.subr.mxu0 0.0
    %3770 = vmatpush1.msra.mxu0 0.0
    %3771 = vmatprep.subr.mxu0 0.0
    %3772 = vmatpush1.msra.mxu0 0.0
    %3773 = vmatprep.subr.mxu0 0.0
    %3774 = vmatpush1.msra.mxu0 0.0
    %3775 = vmatprep.subr.mxu0 0.0
    %3776 = vmatpush1.msra.mxu0 0.0
    %3777 = vmatprep.subr.mxu0 0.0
    %3778 = vmatpush1.msra.mxu0 0.0
    %3779 = vmatprep.subr.mxu0 0.0
    %3780 = vmatpush1.msra.mxu0 0.0
    %3781 = vmatprep.subr.mxu0 0.0
    %3782 = vmatpush1.msra.mxu0 0.0
    %3783 = vmatprep.subr.mxu0 0.0
    %3784 = vmatpush1.msra.mxu0 0.0
    %3785 = vmatprep.subr.mxu0 0.0
    %3786 = vmatpush1.msra.mxu0 0.0
    %3787 = vmatprep.mubr.f32.mxu0 0.0
    %3788 = vmatmul.mubr.f32.gmra.mrb[0].mxu0 %v3676
    %v3789 = vpop.f32.mrb[0].mxu0
    %v3790 = vadd.f32 0.0, %v3789
    %v3791 = vpop.f32.mrb[0].mxu0
    %3792 = vmatprep.mubr.f32.mxu0 0.0
    %3793 = vmatmul.mubr.f32.gmra.mrb[0].mxu0 %v3679
    %v3794 = vpop.f32.mrb[0].mxu0
    %v3795 = vadd.f32 0.0, %v3794
    %v3796 = vpop.f32.mrb[0].mxu0
    %3797 = vmatprep.mubr.f32.mxu0 0.0
    %3798 = vmatmul.mubr.f32.gmra.mrb[0].mxu0 %v3682
    %v3799 = vpop.f32.mrb[0].mxu0
    %v3800 = vadd.f32 0.0, %v3799
    %v3801 = vpop.f32.mrb[0].mxu0
    %3802 = vmatprep.mubr.f32.mxu0 0.0
    %3803 = vmatmul.mubr.f32.gmra.mrb[0].mxu0 %v3685
    %v3804 = vpop.f32.mrb[0].mxu0
    %v3805 = vadd.f32 0.0, %v3804
    %v3806 = vpop.f32.mrb[0].mxu0
    %3807 = vmatprep.mubr.f32.mxu0 0.0
    %3808 = vmatmul.mubr.f32.gmra.mrb[0].mxu0 %v3688
    %v3809 = vpop.f32.mrb[0].mxu0
    %v3810 = vadd.f32 0.0, %v3809
    %v3811 = vpop.f32.mrb[0].mxu0
    %3812 = vmatprep.mubr.f32.mxu0 0.0
    %3813 = vmatmul.mubr.f32.gmra.mrb[0].mxu0 %v3691
    %v3814 = vpop.f32.mrb[0].mxu0
    %v3815 = vadd.f32 0.0, %v3814
    %v3816 = vpop.f32.mrb[0].mxu0
    %3817 = vmatprep.mubr.f32.mxu0 0.0
    %3818 = vmatmul.mubr.f32.gmra.mrb[0].mxu0 %v3694
    %v3819 = vpop.f32.mrb[0].mxu0
    %v3820 = vadd.f32 0.0, %v3819
    %v3821 = vpop.f32.mrb[0].mxu0
    %3822 = vmatprep.mubr.f32.mxu0 0.0
    %3823 = vmatmul.mubr.f32.gmra.mrb[0].mxu0 %v3697
    %v3824 = vpop.f32.mrb[0].mxu0
    %v3825 = vadd.f32 0.0, %v3824
    %v3826 = vpop.f32.mrb[0].mxu0
    %3827 = vmatprep.mubr.f32.mxu0 0.0
    %3828 = vmatmul.mubr.f32.gmra.mrb[0].mxu0 %v3700
    %v3829 = vpop.f32.mrb[0].mxu0
    %v3830 = vadd.f32 0.0, %v3829
    %v3831 = vpop.f32.mrb[0].mxu0
    %3832 = vmatprep.mubr.f32.mxu0 0.0
    %3833 = vmatmul.mubr.f32.gmra.mrb[0].mxu0 %v3703
    %v3834 = vpop.f32.mrb[0].mxu0
    %v3835 = vadd.f32 0.0, %v3834
    %v3836 = vpop.f32.mrb[0].mxu0
    %3837 = vmatprep.mubr.f32.mxu0 0.0
    %3838 = vmatmul.mubr.f32.gmra.mrb[0].mxu0 %v3706
    %v3839 = vpop.f32.mrb[0].mxu0
    %v3840 = vadd.f32 0.0, %v3839
    %v3841 = vpop.f32.mrb[0].mxu0
    %3842 = vmatprep.mubr.f32.mxu0 0.0
    %3843 = vmatmul.mubr.f32.gmra.mrb[0].mxu0 %v3709
    %v3844 = vpop.f32.mrb[0].mxu0
    %v3845 = vadd.f32 0.0, %v3844
    %v3846 = vpop.f32.mrb[0].mxu0
    %3847 = vmatprep.mubr.f32.mxu0 0.0
    %3848 = vmatmul.mubr.f32.gmra.mrb[0].mxu0 %v3712
    %v3849 = vpop.f32.mrb[0].mxu0
    %v3850 = vadd.f32 0.0, %v3849
    %v3851 = vpop.f32.mrb[0].mxu0
    %3852 = vmatprep.mubr.f32.mxu0 0.0
    %3853 = vmatmul.mubr.f32.gmra.mrb[0].mxu0 %v3715
    %v3854 = vpop.f32.mrb[0].mxu0
    %v3855 = vadd.f32 0.0, %v3854
    %v3856 = vpop.f32.mrb[0].mxu0
    %3857 = vmatprep.mubr.f32.mxu0 0.0
    %3858 = vmatmul.mubr.f32.gmra.mrb[0].mxu0 %v3718
    %v3859 = vpop.f32.mrb[0].mxu0
    %v3860 = vadd.f32 0.0, %v3859
    %v3861 = vpop.f32.mrb[0].mxu0
    %3862 = vmatprep.mubr.f32.mxu0 0.0
    %3863 = vmatmul.mubr.f32.gmra.mrb[0].mxu0 %v3721
    %v3864 = vpop.f32.mrb[0].mxu0
    %v3865 = vadd.f32 0.0, %v3864
    %v3866 = vpop.f32.mrb[0].mxu0
    %3867 = vdwg.mxu0
    %3868 = vst [vmem:[#allocation2] sm:$0xff] %v3790
    %3869 = vst [vmem:[#allocation2 + $0x8] sm:$0xff] %v3795
    %3870 = vst [vmem:[#allocation2 + $0x10] sm:$0xff] %v3800
    %3871 = vst [vmem:[#allocation2 + $0x18] sm:$0xff] %v3805
    %3872 = vst [vmem:[#allocation2 + $0x20] sm:$0xff] %v3810
    %3873 = vst [vmem:[#allocation2 + $0x28] sm:$0xff] %v3815
    %3874 = vst [vmem:[#allocation2 + $0x30] sm:$0xff] %v3820
    %3875 = vst [vmem:[#allocation2 + $0x38] sm:$0xff] %v3825
    %3876 = vst [vmem:[#allocation2 + $0x40] sm:$0xff] %v3830
    %3877 = vst [vmem:[#allocation2 + $0x48] sm:$0xff] %v3835
    %3878 = vst [vmem:[#allocation2 + $0x50] sm:$0xff] %v3840
    %3879 = vst [vmem:[#allocation2 + $0x58] sm:$0xff] %v3845
    %3880 = vst [vmem:[#allocation2 + $0x60] sm:$0xff] %v3850
    %3881 = vst [vmem:[#allocation2 + $0x68] sm:$0xff] %v3855
    %3882 = vst [vmem:[#allocation2 + $0x70] sm:$0xff] %v3860
    %3883 = vst [vmem:[#allocation2 + $0x78] sm:$0xff] %v3865
    // Predicated region
    $region14: #{tpu_custom_call.1} parent=1 // pred_check
      _
    $region15: #{tpu_custom_call.1} parent=1 // pred_check_branch
      %3885 = sbr.rel (0) target = $region17
    $region16: #{tpu_custom_call.1} parent=1 // pred_region
      %s3887 = ssub.s32 2048, 2048
      %3888 = vsyncadd [#allocation3], %s3887
      %s3889 = sshll.u32 [#allocation2], 4
      %s3890 = int_to_ptr.vmem [resolvable:$true] %s3889
      %3895 = dma.vmem_to_hbm [thread:$0]  %s3890, 2048, %s3, [#allocation3], 128, 128, 8
    $region17: #{tpu_custom_call.1} parent=1 // pred_fallthru
      _
    // Predicated region
    $region18: #{tpu_custom_call.1} parent=1 // pred_check
      _
    $region19: #{tpu_custom_call.1} parent=1 // pred_check_branch
      %3897 = sbr.rel (0) target = $region21
    $region20: #{tpu_custom_call.1} parent=1 // pred_region
      %3898 = dma.done [#allocation3], 2048
    $region21: #{tpu_custom_call.1} parent=1 // pred_fallthru
      _
    %3899 = vsyncpa [#allocation3], 1

// kernel: tpu_custom_call.1
$region0: #{tpu_custom_call.1}
  #allocation0 [shape = 'u32[]', space=smem, size = 0x4, offset = 0x4, fixed_abs, tag = 'smem constant byte address 0x4 - core index']
  #allocation1 [shape = 'u32[144,128]{1,0:T(1,128)}', space=vmem, size = 0x12000, scoped, tag = 'internal scratch']
  %s0 = inlined_call_operand.vmem [shape: f32[8,16,128], index: 0, kind: input, shape index: {}]
  %s1 = inlined_call_operand.vmem [shape: f32[128,64], index: 1, kind: input, shape index: {}]
  %s2 = inlined_call_operand.vmem [shape: f32[64,128], index: 2, kind: input, shape index: {}]
  %s3 = inlined_call_operand.hbm [shape: f32[8,16,128], index: 3, kind: output, shape index: {}]
  %s4 = sld [smem:[#allocation0]]
  $region22: #{tpu_custom_call.1} parent=0
    _
  %s6 = ssub.s32 1, %s4
  %s7 = scalar_select 0, %s6, %s4
  $region1: #{tpu_custom_call.1} parent=0
    #allocation2 [shape = 'u8[65536]{0}', space=vmem, size = 0x10000, scoped, tag = 'output window, operand 0, single buffered']
    #allocation3 [shape = 's32[1]{0}', space=sflag, size = 0x4, scoped, tag = 'scoped memory for tpu_custom_call.1']
    %8 = vsyncpa [#allocation3], 0
    // Predicated region
    $region2: #{tpu_custom_call.1} parent=1 // pred_check
      _
    $region3: #{tpu_custom_call.1} parent=1 // pred_check_branch
      %10 = sbr.rel (0) target = $region5
    $region4: #{tpu_custom_call.1} parent=1 // pred_region
      _
    $region5: #{tpu_custom_call.1} parent=1 // pred_fallthru
      _
    // Predicated region
    $region6: #{tpu_custom_call.1} parent=1 // pred_check
      _
    $region7: #{tpu_custom_call.1} parent=1 // pred_check_branch
      %12 = sbr.rel (0) target = $region9
    $region8: #{tpu_custom_call.1} parent=1 // pred_region
      _
    $region9: #{tpu_custom_call.1} parent=1 // pred_fallthru
      _
    // Predicated region
    $region10: #{tpu_custom_call.1} parent=1 // pred_check
      _
    $region11: #{tpu_custom_call.1} parent=1 // pred_check_branch
      %14 = sbr.rel (0) target = $region13
    $region12: #{tpu_custom_call.1} parent=1 // pred_region
      _
    $region13: #{tpu_custom_call.1} parent=1 // pred_fallthru
      _
    %v15 = vld [vmem:[%s1] sm:$0xff]
    %v16 = vld [vmem:[%s1 + $0x8] sm:$0xff]
    %v17 = vld [vmem:[%s1 + $0x10] sm:$0xff]
    %v18 = vld [vmem:[%s1 + $0x18] sm:$0xff]
    %v19 = vld [vmem:[%s1 + $0x20] sm:$0xff]
    %v20 = vld [vmem:[%s1 + $0x28] sm:$0xff]
    %v21 = vld [vmem:[%s1 + $0x30] sm:$0xff]
    %v22 = vld [vmem:[%s1 + $0x38] sm:$0xff]
    %v23 = vld [vmem:[%s1 + $0x40] sm:$0xff]
    %v24 = vld [vmem:[%s1 + $0x48] sm:$0xff]
    %v25 = vld [vmem:[%s1 + $0x50] sm:$0xff]
    %v26 = vld [vmem:[%s1 + $0x58] sm:$0xff]
    %v27 = vld [vmem:[%s1 + $0x60] sm:$0xff]
    %v28 = vld [vmem:[%s1 + $0x68] sm:$0xff]
    %v29 = vld [vmem:[%s1 + $0x70] sm:$0xff]
    %v30 = vld [vmem:[%s1 + $0x78] sm:$0xff]
    %v31 = vld [vmem:[%s2] sm:$0xff]
    %v32 = vld [vmem:[%s2 + $0x8] sm:$0xff]
    %v33 = vld [vmem:[%s2 + $0x10] sm:$0xff]
    %v34 = vld [vmem:[%s2 + $0x18] sm:$0xff]
    %v35 = vld [vmem:[%s2 + $0x20] sm:$0xff]
    %v36 = vld [vmem:[%s2 + $0x28] sm:$0xff]
    %v37 = vld [vmem:[%s2 + $0x30] sm:$0xff]
    %v38 = vld [vmem:[%s2 + $0x38] sm:$0xff]
    %v39 = vld [vmem:[%s0] sm:$0xff]
    %v40 = vld [vmem:[%s0 + $0x8] sm:$0xff]
    %v41 = vld [vmem:[%s0 + $0x10] sm:$0xff]
    %v42 = vld [vmem:[%s0 + $0x18] sm:$0xff]
    %v43 = vld [vmem:[%s0 + $0x20] sm:$0xff]
    %v44 = vld [vmem:[%s0 + $0x28] sm:$0xff]
    %v45 = vld [vmem:[%s0 + $0x30] sm:$0xff]
    %v46 = vld [vmem:[%s0 + $0x38] sm:$0xff]
    %v47 = vld [vmem:[%s0 + $0x40] sm:$0xff]
    %v48 = vld [vmem:[%s0 + $0x48] sm:$0xff]
    %v49 = vld [vmem:[%s0 + $0x50] sm:$0xff]
    %v50 = vld [vmem:[%s0 + $0x58] sm:$0xff]
    %v51 = vld [vmem:[%s0 + $0x60] sm:$0xff]
    %v52 = vld [vmem:[%s0 + $0x68] sm:$0xff]
    %v53 = vld [vmem:[%s0 + $0x70] sm:$0xff]
    %v54 = vld [vmem:[%s0 + $0x78] sm:$0xff]
    %55 = vmatprep.subr.mxu0 0.0
    %56 = vmatpush1.msra.mxu0 %v15
    %57 = vmatprep.subr.mxu0 0.0
    %58 = vmatpush1.msra.mxu0 %v16
    %59 = vmatprep.subr.mxu0 0.0
    %60 = vmatpush1.msra.mxu0 %v17
    %61 = vmatprep.subr.mxu0 0.0
    %62 = vmatpush1.msra.mxu0 %v18
    %63 = vmatprep.subr.mxu0 0.0
    %64 = vmatpush1.msra.mxu0 %v19
    %65 = vmatprep.subr.mxu0 0.0
    %66 = vmatpush1.msra.mxu0 %v20
    %67 = vmatprep.subr.mxu0 0.0
    %68 = vmatpush1.msra.mxu0 %v21
    %69 = vmatprep.subr.mxu0 0.0
    %70 = vmatpush1.msra.mxu0 %v22
    %71 = vmatprep.subr.mxu0 0.0
    %72 = vmatpush1.msra.mxu0 %v23
    %73 = vmatprep.subr.mxu0 0.0
    %74 = vmatpush1.msra.mxu0 %v24
    %75 = vmatprep.subr.mxu0 0.0
    %76 = vmatpush1.msra.mxu0 %v25
    %77 = vmatprep.subr.mxu0 0.0
    %78 = vmatpush1.msra.mxu0 %v26
    %79 = vmatprep.subr.mxu0 0.0
    %80 = vmatpush1.msra.mxu0 %v27
    %81 = vmatprep.subr.mxu0 0.0
    %82 = vmatpush1.msra.mxu0 %v28
    %83 = vmatprep.subr.mxu0 0.0
    %84 = vmatpush1.msra.mxu0 %v29
    %85 = vmatprep.subr.mxu0 0.0
    %86 = vmatpush1.msra.mxu0 %v30
    %87 = vmatprep.subr.mxu0 0.0
    %88 = vmatpush1.msra.mxu0 0.0
    %89 = vmatprep.subr.mxu0 0.0
    %90 = vmatpush1.msra.mxu0 0.0
    %91 = vmatprep.subr.mxu0 0.0
    %92 = vmatpush1.msra.mxu0 0.0
    %93 = vmatprep.subr.mxu0 0.0
    %94 = vmatpush1.msra.mxu0 0.0
    %95 = vmatprep.subr.mxu0 0.0
    %96 = vmatpush1.msra.mxu0 0.0
    %97 = vmatprep.subr.mxu0 0.0
    %98 = vmatpush1.msra.mxu0 0.0
    %99 = vmatprep.subr.mxu0 0.0
    %100 = vmatpush1.msra.mxu0 0.0
    %101 = vmatprep.subr.mxu0 0.0
    %102 = vmatpush1.msra.mxu0 0.0
    %103 = vmatprep.subr.mxu0 0.0
    %104 = vmatpush1.msra.mxu0 0.0
    %105 = vmatprep.subr.mxu0 0.0
    %106 = vmatpush1.msra.mxu0 0.0
    %107 = vmatprep.subr.mxu0 0.0
    %108 = vmatpush1.msra.mxu0 0.0
    %109 = vmatprep.subr.mxu0 0.0
    %110 = vmatpush1.msra.mxu0 0.0
    %111 = vmatprep.subr.mxu0 0.0
    %112 = vmatpush1.msra.mxu0 0.0
    %113 = vmatprep.subr.mxu0 0.0
    %114 = vmatpush1.msra.mxu0 0.0
    %115 = vmatprep.subr.mxu0 0.0
    %116 = vmatpush1.msra.mxu0 0.0
    %117 = vmatprep.subr.mxu0 0.0
    %118 = vmatpush1.msra.mxu0 0.0
    %119 = vmatprep.mubr.f32.mxu0 0.0
    %120 = vmatmul.mubr.f32.gmra.mrb[0].mxu0 %v39
    %v121 = vpop.f32.mrb[0].mxu0
    %v122 = vadd.f32 0.0, %v121
    %v123 = vpop.f32.mrb[0].mxu0
    %124 = vmatprep.mubr.f32.mxu0 0.0
    %125 = vmatmul.mubr.f32.gmra.mrb[0].mxu0 %v40
    %v126 = vpop.f32.mrb[0].mxu0
    %v127 = vadd.f32 0.0, %v126
    %v128 = vpop.f32.mrb[0].mxu0
    %129 = vmatprep.mubr.f32.mxu0 0.0
    %130 = vmatmul.mubr.f32.gmra.mrb[0].mxu0 %v41
    %v131 = vpop.f32.mrb[0].mxu0
    %v132 = vadd.f32 0.0, %v131
    %v133 = vpop.f32.mrb[0].mxu0
    %134 = vmatprep.mubr.f32.mxu0 0.0
    %135 = vmatmul.mubr.f32.gmra.mrb[0].mxu0 %v42
    %v136 = vpop.f32.mrb[0].mxu0
    %v137 = vadd.f32 0.0, %v136
    %v138 = vpop.f32.mrb[0].mxu0
    %139 = vmatprep.mubr.f32.mxu0 0.0
    %140 = vmatmul.mubr.f32.gmra.mrb[0].mxu0 %v43
    %v141 = vpop.f32.mrb[0].mxu0
    %v142 = vadd.f32 0.0, %v141
    %v143 = vpop.f32.mrb[0].mxu0
    %144 = vmatprep.mubr.f32.mxu0 0.0
    %145 = vmatmul.mubr.f32.gmra.mrb[0].mxu0 %v44
    %v146 = vpop.f32.mrb[0].mxu0
    %v147 = vadd.f32 0.0, %v146
    %v148 = vpop.f32.mrb[0].mxu0
    %149 = vmatprep.mubr.f32.mxu0 0.0
    %150 = vmatmul.mubr.f32.gmra.mrb[0].mxu0 %v45
    %v151 = vpop.f32.mrb[0].mxu0
    %v152 = vadd.f32 0.0, %v151
    %v153 = vpop.f32.mrb[0].mxu0
    %154 = vmatprep.mubr.f32.mxu0 0.0
    %155 = vmatmul.mubr.f32.gmra.mrb[0].mxu0 %v46
    %v156 = vpop.f32.mrb[0].mxu0
    %v157 = vadd.f32 0.0, %v156
    %v158 = vpop.f32.mrb[0].mxu0
    %159 = vmatprep.mubr.f32.mxu0 0.0
    %160 = vmatmul.mubr.f32.gmra.mrb[0].mxu0 %v47
    %v161 = vpop.f32.mrb[0].mxu0
    %v162 = vadd.f32 0.0, %v161
    %v163 = vpop.f32.mrb[0].mxu0
    %164 = vmatprep.mubr.f32.mxu0 0.0
    %165 = vmatmul.mubr.f32.gmra.mrb[0].mxu0 %v48
    %v166 = vpop.f32.mrb[0].mxu0
    %v167 = vadd.f32 0.0, %v166
    %v168 = vpop.f32.mrb[0].mxu0
    %169 = vmatprep.mubr.f32.mxu0 0.0
    %170 = vmatmul.mubr.f32.gmra.mrb[0].mxu0 %v49
    %v171 = vpop.f32.mrb[0].mxu0
    %v172 = vadd.f32 0.0, %v171
    %v173 = vpop.f32.mrb[0].mxu0
    %174 = vmatprep.mubr.f32.mxu0 0.0
    %175 = vmatmul.mubr.f32.gmra.mrb[0].mxu0 %v50
    %v176 = vpop.f32.mrb[0].mxu0
    %v177 = vadd.f32 0.0, %v176
    %v178 = vpop.f32.mrb[0].mxu0
    %179 = vmatprep.mubr.f32.mxu0 0.0
    %180 = vmatmul.mubr.f32.gmra.mrb[0].mxu0 %v51
    %v181 = vpop.f32.mrb[0].mxu0
    %v182 = vadd.f32 0.0, %v181
    %v183 = vpop.f32.mrb[0].mxu0
    %184 = vmatprep.mubr.f32.mxu0 0.0
    %185 = vmatmul.mubr.f32.gmra.mrb[0].mxu0 %v52
    %v186 = vpop.f32.mrb[0].mxu0
    %v187 = vadd.f32 0.0, %v186
    %v188 = vpop.f32.mrb[0].mxu0
    %189 = vmatprep.mubr.f32.mxu0 0.0
    %190 = vmatmul.mubr.f32.gmra.mrb[0].mxu0 %v53
    %v191 = vpop.f32.mrb[0].mxu0
    %v192 = vadd.f32 0.0, %v191
    %v193 = vpop.f32.mrb[0].mxu0
    %194 = vmatprep.mubr.f32.mxu0 0.0
    %195 = vmatmul.mubr.f32.gmra.mrb[0].mxu0 %v54
    %v196 = vpop.f32.mrb[0].mxu0
    %v197 = vadd.f32 0.0, %v196
    %v198 = vpop.f32.mrb[0].mxu0
    %199 = vdwg.mxu0
    %200 = vxpose.xlu0.b32.start [1/16] %v122, 128
    %201 = vxpose.xlu0.b32.cont [2/16] %v127, 128
    %202 = vxpose.xlu0.b32.cont [3/16] 0.0, 128
    %203 = vxpose.xlu0.b32.cont [4/16] 0.0, 128
    %204 = vxpose.xlu0.b32.cont [5/16] 0.0, 128
    %205 = vxpose.xlu0.b32.cont [6/16] 0.0, 128
    %206 = vxpose.xlu0.b32.cont [7/16] 0.0, 128
    %207 = vxpose.xlu0.b32.cont [8/16] 0.0, 128
    %208 = vxpose.xlu0.b32.cont [9/16] 0.0, 128
    %209 = vxpose.xlu0.b32.cont [10/16] 0.0, 128
    %210 = vxpose.xlu0.b32.cont [11/16] 0.0, 128
    %211 = vxpose.xlu0.b32.cont [12/16] 0.0, 128
    %212 = vxpose.xlu0.b32.cont [13/16] 0.0, 128
    %213 = vxpose.xlu0.b32.cont [14/16] 0.0, 128
    %214 = vxpose.xlu0.b32.cont [15/16] 0.0, 128
    %215 = vxpose.xlu0.b32.end [16/16] 0.0, 128
    %v216 = vpop.trf.xlu0
    %v217 = vpop.trf.xlu0
    %v218 = vpop.trf.xlu0
    %v219 = vpop.trf.xlu0
    %v220 = vpop.trf.xlu0
    %v221 = vpop.trf.xlu0
    %v222 = vpop.trf.xlu0
    %v223 = vpop.trf.xlu0
    %v224 = vpop.trf.xlu0
    %v225 = vpop.trf.xlu0
    %v226 = vpop.trf.xlu0
    %v227 = vpop.trf.xlu0
    %v228 = vpop.trf.xlu0
    %v229 = vpop.trf.xlu0
    %v230 = vpop.trf.xlu0
    %v231 = vpop.trf.xlu0
    %vm232 = vcmask 130048
    %v234 = vsel %vm232, %v216, 0
    %v237 = vsel %vm232, %v217, 0
    %v240 = vsel %vm232, %v218, 0
    %v243 = vsel %vm232, %v219, 0
    %245 = vmatprep.subr.mxu0 0.0
    %246 = vmatpush1.msra.mxu0 %v122
    %247 = vmatprep.subr.mxu0 0.0
    %248 = vmatpush1.msra.mxu0 %v127
    %249 = vmatprep.subr.mxu0 0.0
    %250 = vmatpush1.msra.mxu0 0.0
    %251 = vmatprep.subr.mxu0 0.0
    %252 = vmatpush1.msra.mxu0 0.0
    %253 = vmatprep.subr.mxu0 0.0
    %254 = vmatpush1.msra.mxu0 0.0
    %255 = vmatprep.subr.mxu0 0.0
    %256 = vmatpush1.msra.mxu0 0.0
    %257 = vmatprep.subr.mxu0 0.0
    %258 = vmatpush1.msra.mxu0 0.0
    %259 = vmatprep.subr.mxu0 0.0
    %260 = vmatpush1.msra.mxu0 0.0
    %261 = vmatprep.subr.mxu0 0.0
    %262 = vmatpush1.msra.mxu0 0.0
    %263 = vmatprep.subr.mxu0 0.0
    %264 = vmatpush1.msra.mxu0 0.0
    %265 = vmatprep.subr.mxu0 0.0
    %266 = vmatpush1.msra.mxu0 0.0
    %267 = vmatprep.subr.mxu0 0.0
    %268 = vmatpush1.msra.mxu0 0.0
    %269 = vmatprep.subr.mxu0 0.0
    %270 = vmatpush1.msra.mxu0 0.0
    %271 = vmatprep.subr.mxu0 0.0
    %272 = vmatpush1.msra.mxu0 0.0
    %273 = vmatprep.subr.mxu0 0.0
    %274 = vmatpush1.msra.mxu0 0.0
    %275 = vmatprep.subr.mxu0 0.0
    %276 = vmatpush1.msra.mxu0 0.0
    %277 = vmatprep.subr.mxu0 0.0
    %278 = vmatpush1.msra.mxu0 0.0
    %279 = vmatprep.subr.mxu0 0.0
    %280 = vmatpush1.msra.mxu0 0.0
    %281 = vmatprep.subr.mxu0 0.0
    %282 = vmatpush1.msra.mxu0 0.0
    %283 = vmatprep.subr.mxu0 0.0
    %284 = vmatpush1.msra.mxu0 0.0
    %285 = vmatprep.subr.mxu0 0.0
    %286 = vmatpush1.msra.mxu0 0.0
    %287 = vmatprep.subr.mxu0 0.0
    %288 = vmatpush1.msra.mxu0 0.0
    %289 = vmatprep.subr.mxu0 0.0
    %290 = vmatpush1.msra.mxu0 0.0
    %291 = vmatprep.subr.mxu0 0.0
    %292 = vmatpush1.msra.mxu0 0.0
    %293 = vmatprep.subr.mxu0 0.0
    %294 = vmatpush1.msra.mxu0 0.0
    %295 = vmatprep.subr.mxu0 0.0
    %296 = vmatpush1.msra.mxu0 0.0
    %297 = vmatprep.subr.mxu0 0.0
    %298 = vmatpush1.msra.mxu0 0.0
    %299 = vmatprep.subr.mxu0 0.0
    %300 = vmatpush1.msra.mxu0 0.0
    %301 = vmatprep.subr.mxu0 0.0
    %302 = vmatpush1.msra.mxu0 0.0
    %303 = vmatprep.subr.mxu0 0.0
    %304 = vmatpush1.msra.mxu0 0.0
    %305 = vmatprep.subr.mxu0 0.0
    %306 = vmatpush1.msra.mxu0 0.0
    %307 = vmatprep.subr.mxu0 0.0
    %308 = vmatpush1.msra.mxu0 0.0
    %309 = vmatprep.mubr.f32.mxu0 0.0
    %310 = vmatmul.mubr.f32.gmra.mrb[0].mxu0 %v234
    %v311 = vpop.f32.mrb[0].mxu0
    %v312 = vadd.f32 0.0, %v311
    %v313 = vpop.f32.mrb[0].mxu0
    %314 = vmatprep.mubr.f32.mxu0 0.0
    %315 = vmatmul.mubr.f32.gmra.mrb[0].mxu0 %v237
    %v316 = vpop.f32.mrb[0].mxu0
    %v317 = vadd.f32 0.0, %v316
    %v318 = vpop.f32.mrb[0].mxu0
    %319 = vmatprep.mubr.f32.mxu0 0.0
    %320 = vmatmul.mubr.f32.gmra.mrb[0].mxu0 %v240
    %v321 = vpop.f32.mrb[0].mxu0
    %v322 = vadd.f32 0.0, %v321
    %v323 = vpop.f32.mrb[0].mxu0
    %324 = vmatprep.mubr.f32.mxu0 0.0
    %325 = vmatmul.mubr.f32.gmra.mrb[0].mxu0 %v243
    %v326 = vpop.f32.mrb[0].mxu0
    %v327 = vadd.f32 0.0, %v326
    %v328 = vpop.f32.mrb[0].mxu0
    %329 = vdwg.mxu0
    %330 = vxpose.xlu0.b32.start [1/16] %v132, 128
    %331 = vxpose.xlu0.b32.cont [2/16] %v137, 128
    %332 = vxpose.xlu0.b32.cont [3/16] 0.0, 128
    %333 = vxpose.xlu0.b32.cont [4/16] 0.0, 128
    %334 = vxpose.xlu0.b32.cont [5/16] 0.0, 128
    %335 = vxpose.xlu0.b32.cont [6/16] 0.0, 128
    %336 = vxpose.xlu0.b32.cont [7/16] 0.0, 128
    %337 = vxpose.xlu0.b32.cont [8/16] 0.0, 128
    %338 = vxpose.xlu0.b32.cont [9/16] 0.0, 128
    %339 = vxpose.xlu0.b32.cont [10/16] 0.0, 128
    %340 = vxpose.xlu0.b32.cont [11/16] 0.0, 128
    %341 = vxpose.xlu0.b32.cont [12/16] 0.0, 128
    %342 = vxpose.xlu0.b32.cont [13/16] 0.0, 128
    %343 = vxpose.xlu0.b32.cont [14/16] 0.0, 128
    %344 = vxpose.xlu0.b32.cont [15/16] 0.0, 128
    %345 = vxpose.xlu0.b32.end [16/16] 0.0, 128
    %v346 = vpop.trf.xlu0
    %v347 = vpop.trf.xlu0
    %v348 = vpop.trf.xlu0
    %v349 = vpop.trf.xlu0
    %v350 = vpop.trf.xlu0
    %v351 = vpop.trf.xlu0
    %v352 = vpop.trf.xlu0
    %v353 = vpop.trf.xlu0
    %v354 = vpop.trf.xlu0
    %v355 = vpop.trf.xlu0
    %v356 = vpop.trf.xlu0
    %v357 = vpop.trf.xlu0
    %v358 = vpop.trf.xlu0
    %v359 = vpop.trf.xlu0
    %v360 = vpop.trf.xlu0
    %v361 = vpop.trf.xlu0
    %v363 = vsel %vm232, %v346, 0
    %v366 = vsel %vm232, %v347, 0
    %v369 = vsel %vm232, %v348, 0
    %v372 = vsel %vm232, %v349, 0
    %374 = vmatprep.subr.mxu0 0.0
    %375 = vmatpush1.msra.mxu0 %v132
    %376 = vmatprep.subr.mxu0 0.0
    %377 = vmatpush1.msra.mxu0 %v137
    %378 = vmatprep.subr.mxu0 0.0
    %379 = vmatpush1.msra.mxu0 0.0
    %380 = vmatprep.subr.mxu0 0.0
    %381 = vmatpush1.msra.mxu0 0.0
    %382 = vmatprep.subr.mxu0 0.0
    %383 = vmatpush1.msra.mxu0 0.0
    %384 = vmatprep.subr.mxu0 0.0
    %385 = vmatpush1.msra.mxu0 0.0
    %386 = vmatprep.subr.mxu0 0.0
    %387 = vmatpush1.msra.mxu0 0.0
    %388 = vmatprep.subr.mxu0 0.0
    %389 = vmatpush1.msra.mxu0 0.0
    %390 = vmatprep.subr.mxu0 0.0
    %391 = vmatpush1.msra.mxu0 0.0
    %392 = vmatprep.subr.mxu0 0.0
    %393 = vmatpush1.msra.mxu0 0.0
    %394 = vmatprep.subr.mxu0 0.0
    %395 = vmatpush1.msra.mxu0 0.0
    %396 = vmatprep.subr.mxu0 0.0
    %397 = vmatpush1.msra.mxu0 0.0
    %398 = vmatprep.subr.mxu0 0.0
    %399 = vmatpush1.msra.mxu0 0.0
    %400 = vmatprep.subr.mxu0 0.0
    %401 = vmatpush1.msra.mxu0 0.0
    %402 = vmatprep.subr.mxu0 0.0
    %403 = vmatpush1.msra.mxu0 0.0
    %404 = vmatprep.subr.mxu0 0.0
    %405 = vmatpush1.msra.mxu0 0.0
    %406 = vmatprep.subr.mxu0 0.0
    %407 = vmatpush1.msra.mxu0 0.0
    %408 = vmatprep.subr.mxu0 0.0
    %409 = vmatpush1.msra.mxu0 0.0
    %410 = vmatprep.subr.mxu0 0.0
    %411 = vmatpush1.msra.mxu0 0.0
    %412 = vmatprep.subr.mxu0 0.0
    %413 = vmatpush1.msra.mxu0 0.0
    %414 = vmatprep.subr.mxu0 0.0
    %415 = vmatpush1.msra.mxu0 0.0
    %416 = vmatprep.subr.mxu0 0.0
    %417 = vmatpush1.msra.mxu0 0.0
    %418 = vmatprep.subr.mxu0 0.0
    %419 = vmatpush1.msra.mxu0 0.0
    %420 = vmatprep.subr.mxu0 0.0
    %421 = vmatpush1.msra.mxu0 0.0
    %422 = vmatprep.subr.mxu0 0.0
    %423 = vmatpush1.msra.mxu0 0.0
    %424 = vmatprep.subr.mxu0 0.0
    %425 = vmatpush1.msra.mxu0 0.0
    %426 = vmatprep.subr.mxu0 0.0
    %427 = vmatpush1.msra.mxu0 0.0
    %428 = vmatprep.subr.mxu0 0.0
    %429 = vmatpush1.msra.mxu0 0.0
    %430 = vmatprep.subr.mxu0 0.0
    %431 = vmatpush1.msra.mxu0 0.0
    %432 = vmatprep.subr.mxu0 0.0
    %433 = vmatpush1.msra.mxu0 0.0
    %434 = vmatprep.subr.mxu0 0.0
    %435 = vmatpush1.msra.mxu0 0.0
    %436 = vmatprep.subr.mxu0 0.0
    %437 = vmatpush1.msra.mxu0 0.0
    %438 = vmatprep.mubr.f32.mxu0 0.0
    %439 = vmatmul.mubr.f32.gmra.mrb[0].mxu0 %v363
    %v440 = vpop.f32.mrb[0].mxu0
    %v441 = vadd.f32 0.0, %v440
    %v442 = vpop.f32.mrb[0].mxu0
    %443 = vmatprep.mubr.f32.mxu0 0.0
    %444 = vmatmul.mubr.f32.gmra.mrb[0].mxu0 %v366
    %v445 = vpop.f32.mrb[0].mxu0
    %v446 = vadd.f32 0.0, %v445
    %v447 = vpop.f32.mrb[0].mxu0
    %448 = vmatprep.mubr.f32.mxu0 0.0
    %449 = vmatmul.mubr.f32.gmra.mrb[0].mxu0 %v369
    %v450 = vpop.f32.mrb[0].mxu0
    %v451 = vadd.f32 0.0, %v450
    %v452 = vpop.f32.mrb[0].mxu0
    %453 = vmatprep.mubr.f32.mxu0 0.0
    %454 = vmatmul.mubr.f32.gmra.mrb[0].mxu0 %v372
    %v455 = vpop.f32.mrb[0].mxu0
    %v456 = vadd.f32 0.0, %v455
    %v457 = vpop.f32.mrb[0].mxu0
    %458 = vdwg.mxu0
    %459 = vxpose.xlu0.b32.start [1/16] %v142, 128
    %460 = vxpose.xlu0.b32.cont [2/16] %v147, 128
    %461 = vxpose.xlu0.b32.cont [3/16] 0.0, 128
    %462 = vxpose.xlu0.b32.cont [4/16] 0.0, 128
    %463 = vxpose.xlu0.b32.cont [5/16] 0.0, 128
    %464 = vxpose.xlu0.b32.cont [6/16] 0.0, 128
    %465 = vxpose.xlu0.b32.cont [7/16] 0.0, 128
    %466 = vxpose.xlu0.b32.cont [8/16] 0.0, 128
    %467 = vxpose.xlu0.b32.cont [9/16] 0.0, 128
    %468 = vxpose.xlu0.b32.cont [10/16] 0.0, 128
    %469 = vxpose.xlu0.b32.cont [11/16] 0.0, 128
    %470 = vxpose.xlu0.b32.cont [12/16] 0.0, 128
    %471 = vxpose.xlu0.b32.cont [13/16] 0.0, 128
    %472 = vxpose.xlu0.b32.cont [14/16] 0.0, 128
    %473 = vxpose.xlu0.b32.cont [15/16] 0.0, 128
    %474 = vxpose.xlu0.b32.end [16/16] 0.0, 128
    %v475 = vpop.trf.xlu0
    %v476 = vpop.trf.xlu0
    %v477 = vpop.trf.xlu0
    %v478 = vpop.trf.xlu0
    %v479 = vpop.trf.xlu0
    %v480 = vpop.trf.xlu0
    %v481 = vpop.trf.xlu0
    %v482 = vpop.trf.xlu0
    %v483 = vpop.trf.xlu0
    %v484 = vpop.trf.xlu0
    %v485 = vpop.trf.xlu0
    %v486 = vpop.trf.xlu0
    %v487 = vpop.trf.xlu0
    %v488 = vpop.trf.xlu0
    %v489 = vpop.trf.xlu0
    %v490 = vpop.trf.xlu0
    %v492 = vsel %vm232, %v475, 0
    %v495 = vsel %vm232, %v476, 0
    %v498 = vsel %vm232, %v477, 0
    %v501 = vsel %vm232, %v478, 0
    %503 = vmatprep.subr.mxu0 0.0
    %504 = vmatpush1.msra.mxu0 %v142
    %505 = vmatprep.subr.mxu0 0.0
    %506 = vmatpush1.msra.mxu0 %v147
    %507 = vmatprep.subr.mxu0 0.0
    %508 = vmatpush1.msra.mxu0 0.0
    %509 = vmatprep.subr.mxu0 0.0
    %510 = vmatpush1.msra.mxu0 0.0
    %511 = vmatprep.subr.mxu0 0.0
    %512 = vmatpush1.msra.mxu0 0.0
    %513 = vmatprep.subr.mxu0 0.0
    %514 = vmatpush1.msra.mxu0 0.0
    %515 = vmatprep.subr.mxu0 0.0
    %516 = vmatpush1.msra.mxu0 0.0
    %517 = vmatprep.subr.mxu0 0.0
    %518 = vmatpush1.msra.mxu0 0.0
    %519 = vmatprep.subr.mxu0 0.0
    %520 = vmatpush1.msra.mxu0 0.0
    %521 = vmatprep.subr.mxu0 0.0
    %522 = vmatpush1.msra.mxu0 0.0
    %523 = vmatprep.subr.mxu0 0.0
    %524 = vmatpush1.msra.mxu0 0.0
    %525 = vmatprep.subr.mxu0 0.0
    %526 = vmatpush1.msra.mxu0 0.0
    %527 = vmatprep.subr.mxu0 0.0
    %528 = vmatpush1.msra.mxu0 0.0
    %529 = vmatprep.subr.mxu0 0.0
    %530 = vmatpush1.msra.mxu0 0.0
    %531 = vmatprep.subr.mxu0 0.0
    %532 = vmatpush1.msra.mxu0 0.0
    %533 = vmatprep.subr.mxu0 0.0
    %534 = vmatpush1.msra.mxu0 0.0
    %535 = vmatprep.subr.mxu0 0.0
    %536 = vmatpush1.msra.mxu0 0.0
    %537 = vmatprep.subr.mxu0 0.0
    %538 = vmatpush1.msra.mxu0 0.0
    %539 = vmatprep.subr.mxu0 0.0
    %540 = vmatpush1.msra.mxu0 0.0
    %541 = vmatprep.subr.mxu0 0.0
    %542 = vmatpush1.msra.mxu0 0.0
    %543 = vmatprep.subr.mxu0 0.0
    %544 = vmatpush1.msra.mxu0 0.0
    %545 = vmatprep.subr.mxu0 0.0
    %546 = vmatpush1.msra.mxu0 0.0
    %547 = vmatprep.subr.mxu0 0.0
    %548 = vmatpush1.msra.mxu0 0.0
    %549 = vmatprep.subr.mxu0 0.0
    %550 = vmatpush1.msra.mxu0 0.0
    %551 = vmatprep.subr.mxu0 0.0
    %552 = vmatpush1.msra.mxu0 0.0
    %553 = vmatprep.subr.mxu0 0.0
    %554 = vmatpush1.msra.mxu0 0.0
    %555 = vmatprep.subr.mxu0 0.0
    %556 = vmatpush1.msra.mxu0 0.0
    %557 = vmatprep.subr.mxu0 0.0
    %558 = vmatpush1.msra.mxu0 0.0
    %559 = vmatprep.subr.mxu0 0.0
    %560 = vmatpush1.msra.mxu0 0.0
    %561 = vmatprep.subr.mxu0 0.0
    %562 = vmatpush1.msra.mxu0 0.0
    %563 = vmatprep.subr.mxu0 0.0
    %564 = vmatpush1.msra.mxu0 0.0
    %565 = vmatprep.subr.mxu0 0.0
    %566 = vmatpush1.msra.mxu0 0.0
    %567 = vmatprep.mubr.f32.mxu0 0.0
    %568 = vmatmul.mubr.f32.gmra.mrb[0].mxu0 %v492
    %v569 = vpop.f32.mrb[0].mxu0
    %v570 = vadd.f32 0.0, %v569
    %v571 = vpop.f32.mrb[0].mxu0
    %572 = vmatprep.mubr.f32.mxu0 0.0
    %573 = vmatmul.mubr.f32.gmra.mrb[0].mxu0 %v495
    %v574 = vpop.f32.mrb[0].mxu0
    %v575 = vadd.f32 0.0, %v574
    %v576 = vpop.f32.mrb[0].mxu0
    %577 = vmatprep.mubr.f32.mxu0 0.0
    %578 = vmatmul.mubr.f32.gmra.mrb[0].mxu0 %v498
    %v579 = vpop.f32.mrb[0].mxu0
    %v580 = vadd.f32 0.0, %v579
    %v581 = vpop.f32.mrb[0].mxu0
    %582 = vmatprep.mubr.f32.mxu0 0.0
    %583 = vmatmul.mubr.f32.gmra.mrb[0].mxu0 %v501
    %v584 = vpop.f32.mrb[0].mxu0
    %v585 = vadd.f32 0.0, %v584
    %v586 = vpop.f32.mrb[0].mxu0
    %587 = vdwg.mxu0
    %588 = vxpose.xlu0.b32.start [1/16] %v152, 128
    %589 = vxpose.xlu0.b32.cont [2/16] %v157, 128
    %590 = vxpose.xlu0.b32.cont [3/16] 0.0, 128
    %591 = vxpose.xlu0.b32.cont [4/16] 0.0, 128
    %592 = vxpose.xlu0.b32.cont [5/16] 0.0, 128
    %593 = vxpose.xlu0.b32.cont [6/16] 0.0, 128
    %594 = vxpose.xlu0.b32.cont [7/16] 0.0, 128
    %595 = vxpose.xlu0.b32.cont [8/16] 0.0, 128
    %596 = vxpose.xlu0.b32.cont [9/16] 0.0, 128
    %597 = vxpose.xlu0.b32.cont [10/16] 0.0, 128
    %598 = vxpose.xlu0.b32.cont [11/16] 0.0, 128
    %599 = vxpose.xlu0.b32.cont [12/16] 0.0, 128
    %600 = vxpose.xlu0.b32.cont [13/16] 0.0, 128
    %601 = vxpose.xlu0.b32.cont [14/16] 0.0, 128
    %602 = vxpose.xlu0.b32.cont [15/16] 0.0, 128
    %603 = vxpose.xlu0.b32.end [16/16] 0.0, 128
    %v604 = vpop.trf.xlu0
    %v605 = vpop.trf.xlu0
    %v606 = vpop.trf.xlu0
    %v607 = vpop.trf.xlu0
    %v608 = vpop.trf.xlu0
    %v609 = vpop.trf.xlu0
    %v610 = vpop.trf.xlu0
    %v611 = vpop.trf.xlu0
    %v612 = vpop.trf.xlu0
    %v613 = vpop.trf.xlu0
    %v614 = vpop.trf.xlu0
    %v615 = vpop.trf.xlu0
    %v616 = vpop.trf.xlu0
    %v617 = vpop.trf.xlu0
    %v618 = vpop.trf.xlu0
    %v619 = vpop.trf.xlu0
    %v621 = vsel %vm232, %v604, 0
    %v624 = vsel %vm232, %v605, 0
    %v627 = vsel %vm232, %v606, 0
    %v630 = vsel %vm232, %v607, 0
    %632 = vmatprep.subr.mxu0 0.0
    %633 = vmatpush1.msra.mxu0 %v152
    %634 = vmatprep.subr.mxu0 0.0
    %635 = vmatpush1.msra.mxu0 %v157
    %636 = vmatprep.subr.mxu0 0.0
    %637 = vmatpush1.msra.mxu0 0.0
    %638 = vmatprep.subr.mxu0 0.0
    %639 = vmatpush1.msra.mxu0 0.0
    %640 = vmatprep.subr.mxu0 0.0
    %641 = vmatpush1.msra.mxu0 0.0
    %642 = vmatprep.subr.mxu0 0.0
    %643 = vmatpush1.msra.mxu0 0.0
    %644 = vmatprep.subr.mxu0 0.0
    %645 = vmatpush1.msra.mxu0 0.0
    %646 = vmatprep.subr.mxu0 0.0
    %647 = vmatpush1.msra.mxu0 0.0
    %648 = vmatprep.subr.mxu0 0.0
    %649 = vmatpush1.msra.mxu0 0.0
    %650 = vmatprep.subr.mxu0 0.0
    %651 = vmatpush1.msra.mxu0 0.0
    %652 = vmatprep.subr.mxu0 0.0
    %653 = vmatpush1.msra.mxu0 0.0
    %654 = vmatprep.subr.mxu0 0.0
    %655 = vmatpush1.msra.mxu0 0.0
    %656 = vmatprep.subr.mxu0 0.0
    %657 = vmatpush1.msra.mxu0 0.0
    %658 = vmatprep.subr.mxu0 0.0
    %659 = vmatpush1.msra.mxu0 0.0
    %660 = vmatprep.subr.mxu0 0.0
    %661 = vmatpush1.msra.mxu0 0.0
    %662 = vmatprep.subr.mxu0 0.0
    %663 = vmatpush1.msra.mxu0 0.0
    %664 = vmatprep.subr.mxu0 0.0
    %665 = vmatpush1.msra.mxu0 0.0
    %666 = vmatprep.subr.mxu0 0.0
    %667 = vmatpush1.msra.mxu0 0.0
    %668 = vmatprep.subr.mxu0 0.0
    %669 = vmatpush1.msra.mxu0 0.0
    %670 = vmatprep.subr.mxu0 0.0
    %671 = vmatpush1.msra.mxu0 0.0
    %672 = vmatprep.subr.mxu0 0.0
    %673 = vmatpush1.msra.mxu0 0.0
    %674 = vmatprep.subr.mxu0 0.0
    %675 = vmatpush1.msra.mxu0 0.0
    %676 = vmatprep.subr.mxu0 0.0
    %677 = vmatpush1.msra.mxu0 0.0
    %678 = vmatprep.subr.mxu0 0.0
    %679 = vmatpush1.msra.mxu0 0.0
    %680 = vmatprep.subr.mxu0 0.0
    %681 = vmatpush1.msra.mxu0 0.0
    %682 = vmatprep.subr.mxu0 0.0
    %683 = vmatpush1.msra.mxu0 0.0
    %684 = vmatprep.subr.mxu0 0.0
    %685 = vmatpush1.msra.mxu0 0.0
    %686 = vmatprep.subr.mxu0 0.0
    %687 = vmatpush1.msra.mxu0 0.0
    %688 = vmatprep.subr.mxu0 0.0
    %689 = vmatpush1.msra.mxu0 0.0
    %690 = vmatprep.subr.mxu0 0.0
    %691 = vmatpush1.msra.mxu0 0.0
    %692 = vmatprep.subr.mxu0 0.0
    %693 = vmatpush1.msra.mxu0 0.0
    %694 = vmatprep.subr.mxu0 0.0
    %695 = vmatpush1.msra.mxu0 0.0
    %696 = vmatprep.mubr.f32.mxu0 0.0
    %697 = vmatmul.mubr.f32.gmra.mrb[0].mxu0 %v621
    %v698 = vpop.f32.mrb[0].mxu0
    %v699 = vadd.f32 0.0, %v698
    %v700 = vpop.f32.mrb[0].mxu0
    %701 = vmatprep.mubr.f32.mxu0 0.0
    %702 = vmatmul.mubr.f32.gmra.mrb[0].mxu0 %v624
    %v703 = vpop.f32.mrb[0].mxu0
    %v704 = vadd.f32 0.0, %v703
    %v705 = vpop.f32.mrb[0].mxu0
    %706 = vmatprep.mubr.f32.mxu0 0.0
    %707 = vmatmul.mubr.f32.gmra.mrb[0].mxu0 %v627
    %v708 = vpop.f32.mrb[0].mxu0
    %v709 = vadd.f32 0.0, %v708
    %v710 = vpop.f32.mrb[0].mxu0
    %711 = vmatprep.mubr.f32.mxu0 0.0
    %712 = vmatmul.mubr.f32.gmra.mrb[0].mxu0 %v630
    %v713 = vpop.f32.mrb[0].mxu0
    %v714 = vadd.f32 0.0, %v713
    %v715 = vpop.f32.mrb[0].mxu0
    %716 = vdwg.mxu0
    %717 = vxpose.xlu0.b32.start [1/16] %v162, 128
    %718 = vxpose.xlu0.b32.cont [2/16] %v167, 128
    %719 = vxpose.xlu0.b32.cont [3/16] 0.0, 128
    %720 = vxpose.xlu0.b32.cont [4/16] 0.0, 128
    %721 = vxpose.xlu0.b32.cont [5/16] 0.0, 128
    %722 = vxpose.xlu0.b32.cont [6/16] 0.0, 128
    %723 = vxpose.xlu0.b32.cont [7/16] 0.0, 128
    %724 = vxpose.xlu0.b32.cont [8/16] 0.0, 128
    %725 = vxpose.xlu0.b32.cont [9/16] 0.0, 128
    %726 = vxpose.xlu0.b32.cont [10/16] 0.0, 128
    %727 = vxpose.xlu0.b32.cont [11/16] 0.0, 128
    %728 = vxpose.xlu0.b32.cont [12/16] 0.0, 128
    %729 = vxpose.xlu0.b32.cont [13/16] 0.0, 128
    %730 = vxpose.xlu0.b32.cont [14/16] 0.0, 128
    %731 = vxpose.xlu0.b32.cont [15/16] 0.0, 128
    %732 = vxpose.xlu0.b32.end [16/16] 0.0, 128
    %v733 = vpop.trf.xlu0
    %v734 = vpop.trf.xlu0
    %v735 = vpop.trf.xlu0
    %v736 = vpop.trf.xlu0
    %v737 = vpop.trf.xlu0
    %v738 = vpop.trf.xlu0
    %v739 = vpop.trf.xlu0
    %v740 = vpop.trf.xlu0
    %v741 = vpop.trf.xlu0
    %v742 = vpop.trf.xlu0
    %v743 = vpop.trf.xlu0
    %v744 = vpop.trf.xlu0
    %v745 = vpop.trf.xlu0
    %v746 = vpop.trf.xlu0
    %v747 = vpop.trf.xlu0
    %v748 = vpop.trf.xlu0
    %v750 = vsel %vm232, %v733, 0
    %v753 = vsel %vm232, %v734, 0
    %v756 = vsel %vm232, %v735, 0
    %v759 = vsel %vm232, %v736, 0
    %761 = vmatprep.subr.mxu0 0.0
    %762 = vmatpush1.msra.mxu0 %v162
    %763 = vmatprep.subr.mxu0 0.0
    %764 = vmatpush1.msra.mxu0 %v167
    %765 = vmatprep.subr.mxu0 0.0
    %766 = vmatpush1.msra.mxu0 0.0
    %767 = vmatprep.subr.mxu0 0.0
    %768 = vmatpush1.msra.mxu0 0.0
    %769 = vmatprep.subr.mxu0 0.0
    %770 = vmatpush1.msra.mxu0 0.0
    %771 = vmatprep.subr.mxu0 0.0
    %772 = vmatpush1.msra.mxu0 0.0
    %773 = vmatprep.subr.mxu0 0.0
    %774 = vmatpush1.msra.mxu0 0.0
    %775 = vmatprep.subr.mxu0 0.0
    %776 = vmatpush1.msra.mxu0 0.0
    %777 = vmatprep.subr.mxu0 0.0
    %778 = vmatpush1.msra.mxu0 0.0
    %779 = vmatprep.subr.mxu0 0.0
    %780 = vmatpush1.msra.mxu0 0.0
    %781 = vmatprep.subr.mxu0 0.0
    %782 = vmatpush1.msra.mxu0 0.0
    %783 = vmatprep.subr.mxu0 0.0
    %784 = vmatpush1.msra.mxu0 0.0
    %785 = vmatprep.subr.mxu0 0.0
    %786 = vmatpush1.msra.mxu0 0.0
    %787 = vmatprep.subr.mxu0 0.0
    %788 = vmatpush1.msra.mxu0 0.0
    %789 = vmatprep.subr.mxu0 0.0
    %790 = vmatpush1.msra.mxu0 0.0
    %791 = vmatprep.subr.mxu0 0.0
    %792 = vmatpush1.msra.mxu0 0.0
    %793 = vmatprep.subr.mxu0 0.0
    %794 = vmatpush1.msra.mxu0 0.0
    %795 = vmatprep.subr.mxu0 0.0
    %796 = vmatpush1.msra.mxu0 0.0
    %797 = vmatprep.subr.mxu0 0.0
    %798 = vmatpush1.msra.mxu0 0.0
    %799 = vmatprep.subr.mxu0 0.0
    %800 = vmatpush1.msra.mxu0 0.0
    %801 = vmatprep.subr.mxu0 0.0
    %802 = vmatpush1.msra.mxu0 0.0
    %803 = vmatprep.subr.mxu0 0.0
    %804 = vmatpush1.msra.mxu0 0.0
    %805 = vmatprep.subr.mxu0 0.0
    %806 = vmatpush1.msra.mxu0 0.0
    %807 = vmatprep.subr.mxu0 0.0
    %808 = vmatpush1.msra.mxu0 0.0
    %809 = vmatprep.subr.mxu0 0.0
    %810 = vmatpush1.msra.mxu0 0.0
    %811 = vmatprep.subr.mxu0 0.0
    %812 = vmatpush1.msra.mxu0 0.0
    %813 = vmatprep.subr.mxu0 0.0
    %814 = vmatpush1.msra.mxu0 0.0
    %815 = vmatprep.subr.mxu0 0.0
    %816 = vmatpush1.msra.mxu0 0.0
    %817 = vmatprep.subr.mxu0 0.0
    %818 = vmatpush1.msra.mxu0 0.0
    %819 = vmatprep.subr.mxu0 0.0
    %820 = vmatpush1.msra.mxu0 0.0
    %821 = vmatprep.subr.mxu0 0.0
    %822 = vmatpush1.msra.mxu0 0.0
    %823 = vmatprep.subr.mxu0 0.0
    %824 = vmatpush1.msra.mxu0 0.0
    %825 = vmatprep.mubr.f32.mxu0 0.0
    %826 = vmatmul.mubr.f32.gmra.mrb[0].mxu0 %v750
    %v827 = vpop.f32.mrb[0].mxu0
    %v828 = vadd.f32 0.0, %v827
    %v829 = vpop.f32.mrb[0].mxu0
    %830 = vmatprep.mubr.f32.mxu0 0.0
    %831 = vmatmul.mubr.f32.gmra.mrb[0].mxu0 %v753
    %v832 = vpop.f32.mrb[0].mxu0
    %v833 = vadd.f32 0.0, %v832
    %v834 = vpop.f32.mrb[0].mxu0
    %835 = vmatprep.mubr.f32.mxu0 0.0
    %836 = vmatmul.mubr.f32.gmra.mrb[0].mxu0 %v756
    %v837 = vpop.f32.mrb[0].mxu0
    %v838 = vadd.f32 0.0, %v837
    %v839 = vpop.f32.mrb[0].mxu0
    %840 = vmatprep.mubr.f32.mxu0 0.0
    %841 = vmatmul.mubr.f32.gmra.mrb[0].mxu0 %v759
    %v842 = vpop.f32.mrb[0].mxu0
    %v843 = vadd.f32 0.0, %v842
    %v844 = vpop.f32.mrb[0].mxu0
    %845 = vdwg.mxu0
    %846 = vxpose.xlu0.b32.start [1/16] %v172, 128
    %847 = vxpose.xlu0.b32.cont [2/16] %v177, 128
    %848 = vxpose.xlu0.b32.cont [3/16] 0.0, 128
    %849 = vxpose.xlu0.b32.cont [4/16] 0.0, 128
    %850 = vxpose.xlu0.b32.cont [5/16] 0.0, 128
    %851 = vxpose.xlu0.b32.cont [6/16] 0.0, 128
    %852 = vxpose.xlu0.b32.cont [7/16] 0.0, 128
    %853 = vxpose.xlu0.b32.cont [8/16] 0.0, 128
    %854 = vxpose.xlu0.b32.cont [9/16] 0.0, 128
    %855 = vxpose.xlu0.b32.cont [10/16] 0.0, 128
    %856 = vxpose.xlu0.b32.cont [11/16] 0.0, 128
    %857 = vxpose.xlu0.b32.cont [12/16] 0.0, 128
    %858 = vxpose.xlu0.b32.cont [13/16] 0.0, 128
    %859 = vxpose.xlu0.b32.cont [14/16] 0.0, 128
    %860 = vxpose.xlu0.b32.cont [15/16] 0.0, 128
    %861 = vxpose.xlu0.b32.end [16/16] 0.0, 128
    %v862 = vpop.trf.xlu0
    %v863 = vpop.trf.xlu0
    %v864 = vpop.trf.xlu0
    %v865 = vpop.trf.xlu0
    %v866 = vpop.trf.xlu0
    %v867 = vpop.trf.xlu0
    %v868 = vpop.trf.xlu0
    %v869 = vpop.trf.xlu0
    %v870 = vpop.trf.xlu0
    %v871 = vpop.trf.xlu0
    %v872 = vpop.trf.xlu0
    %v873 = vpop.trf.xlu0
    %v874 = vpop.trf.xlu0
    %v875 = vpop.trf.xlu0
    %v876 = vpop.trf.xlu0
    %v877 = vpop.trf.xlu0
    %v879 = vsel %vm232, %v862, 0
    %v882 = vsel %vm232, %v863, 0
    %v885 = vsel %vm232, %v864, 0
    %v888 = vsel %vm232, %v865, 0
    %890 = vmatprep.subr.mxu0 0.0
    %891 = vmatpush1.msra.mxu0 %v172
    %892 = vmatprep.subr.mxu0 0.0
    %893 = vmatpush1.msra.mxu0 %v177
    %894 = vmatprep.subr.mxu0 0.0
    %895 = vmatpush1.msra.mxu0 0.0
    %896 = vmatprep.subr.mxu0 0.0
    %897 = vmatpush1.msra.mxu0 0.0
    %898 = vmatprep.subr.mxu0 0.0
    %899 = vmatpush1.msra.mxu0 0.0
    %900 = vmatprep.subr.mxu0 0.0
    %901 = vmatpush1.msra.mxu0 0.0
    %902 = vmatprep.subr.mxu0 0.0
    %903 = vmatpush1.msra.mxu0 0.0
    %904 = vmatprep.subr.mxu0 0.0
    %905 = vmatpush1.msra.mxu0 0.0
    %906 = vmatprep.subr.mxu0 0.0
    %907 = vmatpush1.msra.mxu0 0.0
    %908 = vmatprep.subr.mxu0 0.0
    %909 = vmatpush1.msra.mxu0 0.0
    %910 = vmatprep.subr.mxu0 0.0
    %911 = vmatpush1.msra.mxu0 0.0
    %912 = vmatprep.subr.mxu0 0.0
    %913 = vmatpush1.msra.mxu0 0.0
    %914 = vmatprep.subr.mxu0 0.0
    %915 = vmatpush1.msra.mxu0 0.0
    %916 = vmatprep.subr.mxu0 0.0
    %917 = vmatpush1.msra.mxu0 0.0
    %918 = vmatprep.subr.mxu0 0.0
    %919 = vmatpush1.msra.mxu0 0.0
    %920 = vmatprep.subr.mxu0 0.0
    %921 = vmatpush1.msra.mxu0 0.0
    %922 = vmatprep.subr.mxu0 0.0
    %923 = vmatpush1.msra.mxu0 0.0
    %924 = vmatprep.subr.mxu0 0.0
    %925 = vmatpush1.msra.mxu0 0.0
    %926 = vmatprep.subr.mxu0 0.0
    %927 = vmatpush1.msra.mxu0 0.0
    %928 = vmatprep.subr.mxu0 0.0
    %929 = vmatpush1.msra.mxu0 0.0
    %930 = vmatprep.subr.mxu0 0.0
    %931 = vmatpush1.msra.mxu0 0.0
    %932 = vmatprep.subr.mxu0 0.0
    %933 = vmatpush1.msra.mxu0 0.0
    %934 = vmatprep.subr.mxu0 0.0
    %935 = vmatpush1.msra.mxu0 0.0
    %936 = vmatprep.subr.mxu0 0.0
    %937 = vmatpush1.msra.mxu0 0.0
    %938 = vmatprep.subr.mxu0 0.0
    %939 = vmatpush1.msra.mxu0 0.0
    %940 = vmatprep.subr.mxu0 0.0
    %941 = vmatpush1.msra.mxu0 0.0
    %942 = vmatprep.subr.mxu0 0.0
    %943 = vmatpush1.msra.mxu0 0.0
    %944 = vmatprep.subr.mxu0 0.0
    %945 = vmatpush1.msra.mxu0 0.0
    %946 = vmatprep.subr.mxu0 0.0
    %947 = vmatpush1.msra.mxu0 0.0
    %948 = vmatprep.subr.mxu0 0.0
    %949 = vmatpush1.msra.mxu0 0.0
    %950 = vmatprep.subr.mxu0 0.0
    %951 = vmatpush1.msra.mxu0 0.0
    %952 = vmatprep.subr.mxu0 0.0
    %953 = vmatpush1.msra.mxu0 0.0
    %954 = vmatprep.mubr.f32.mxu0 0.0
    %955 = vmatmul.mubr.f32.gmra.mrb[0].mxu0 %v879
    %v956 = vpop.f32.mrb[0].mxu0
    %v957 = vadd.f32 0.0, %v956
    %v958 = vpop.f32.mrb[0].mxu0
    %959 = vmatprep.mubr.f32.mxu0 0.0
    %960 = vmatmul.mubr.f32.gmra.mrb[0].mxu0 %v882
    %v961 = vpop.f32.mrb[0].mxu0
    %v962 = vadd.f32 0.0, %v961
    %v963 = vpop.f32.mrb[0].mxu0
    %964 = vmatprep.mubr.f32.mxu0 0.0
    %965 = vmatmul.mubr.f32.gmra.mrb[0].mxu0 %v885
    %v966 = vpop.f32.mrb[0].mxu0
    %v967 = vadd.f32 0.0, %v966
    %v968 = vpop.f32.mrb[0].mxu0
    %969 = vmatprep.mubr.f32.mxu0 0.0
    %970 = vmatmul.mubr.f32.gmra.mrb[0].mxu0 %v888
    %v971 = vpop.f32.mrb[0].mxu0
    %v972 = vadd.f32 0.0, %v971
    %v973 = vpop.f32.mrb[0].mxu0
    %974 = vdwg.mxu0
    %975 = vxpose.xlu0.b32.start [1/16] %v182, 128
    %976 = vxpose.xlu0.b32.cont [2/16] %v187, 128
    %977 = vxpose.xlu0.b32.cont [3/16] 0.0, 128
    %978 = vxpose.xlu0.b32.cont [4/16] 0.0, 128
    %979 = vxpose.xlu0.b32.cont [5/16] 0.0, 128
    %980 = vxpose.xlu0.b32.cont [6/16] 0.0, 128
    %981 = vxpose.xlu0.b32.cont [7/16] 0.0, 128
    %982 = vxpose.xlu0.b32.cont [8/16] 0.0, 128
    %983 = vxpose.xlu0.b32.cont [9/16] 0.0, 128
    %984 = vxpose.xlu0.b32.cont [10/16] 0.0, 128
    %985 = vxpose.xlu0.b32.cont [11/16] 0.0, 128
    %986 = vxpose.xlu0.b32.cont [12/16] 0.0, 128
    %987 = vxpose.xlu0.b32.cont [13/16] 0.0, 128
    %988 = vxpose.xlu0.b32.cont [14/16] 0.0, 128
    %989 = vxpose.xlu0.b32.cont [15/16] 0.0, 128
    %990 = vxpose.xlu0.b32.end [16/16] 0.0, 128
    %v991 = vpop.trf.xlu0
    %v992 = vpop.trf.xlu0
    %v993 = vpop.trf.xlu0
    %v994 = vpop.trf.xlu0
    %v995 = vpop.trf.xlu0
    %v996 = vpop.trf.xlu0
    %v997 = vpop.trf.xlu0
    %v998 = vpop.trf.xlu0
    %v999 = vpop.trf.xlu0
    %v1000 = vpop.trf.xlu0
    %v1001 = vpop.trf.xlu0
    %v1002 = vpop.trf.xlu0
    %v1003 = vpop.trf.xlu0
    %v1004 = vpop.trf.xlu0
    %v1005 = vpop.trf.xlu0
    %v1006 = vpop.trf.xlu0
    %v1008 = vsel %vm232, %v991, 0
    %v1011 = vsel %vm232, %v992, 0
    %v1014 = vsel %vm232, %v993, 0
    %v1017 = vsel %vm232, %v994, 0
    %1019 = vmatprep.subr.mxu0 0.0
    %1020 = vmatpush1.msra.mxu0 %v182
    %1021 = vmatprep.subr.mxu0 0.0
    %1022 = vmatpush1.msra.mxu0 %v187
    %1023 = vmatprep.subr.mxu0 0.0
    %1024 = vmatpush1.msra.mxu0 0.0
    %1025 = vmatprep.subr.mxu0 0.0
    %1026 = vmatpush1.msra.mxu0 0.0
    %1027 = vmatprep.subr.mxu0 0.0
    %1028 = vmatpush1.msra.mxu0 0.0
    %1029 = vmatprep.subr.mxu0 0.0
    %1030 = vmatpush1.msra.mxu0 0.0
    %1031 = vmatprep.subr.mxu0 0.0
    %1032 = vmatpush1.msra.mxu0 0.0
    %1033 = vmatprep.subr.mxu0 0.0
    %1034 = vmatpush1.msra.mxu0 0.0
    %1035 = vmatprep.subr.mxu0 0.0
    %1036 = vmatpush1.msra.mxu0 0.0
    %1037 = vmatprep.subr.mxu0 0.0
    %1038 = vmatpush1.msra.mxu0 0.0
    %1039 = vmatprep.subr.mxu0 0.0
    %1040 = vmatpush1.msra.mxu0 0.0
    %1041 = vmatprep.subr.mxu0 0.0
    %1042 = vmatpush1.msra.mxu0 0.0
    %1043 = vmatprep.subr.mxu0 0.0
    %1044 = vmatpush1.msra.mxu0 0.0
    %1045 = vmatprep.subr.mxu0 0.0
    %1046 = vmatpush1.msra.mxu0 0.0
    %1047 = vmatprep.subr.mxu0 0.0
    %1048 = vmatpush1.msra.mxu0 0.0
    %1049 = vmatprep.subr.mxu0 0.0
    %1050 = vmatpush1.msra.mxu0 0.0
    %1051 = vmatprep.subr.mxu0 0.0
    %1052 = vmatpush1.msra.mxu0 0.0
    %1053 = vmatprep.subr.mxu0 0.0
    %1054 = vmatpush1.msra.mxu0 0.0
    %1055 = vmatprep.subr.mxu0 0.0
    %1056 = vmatpush1.msra.mxu0 0.0
    %1057 = vmatprep.subr.mxu0 0.0
    %1058 = vmatpush1.msra.mxu0 0.0
    %1059 = vmatprep.subr.mxu0 0.0
    %1060 = vmatpush1.msra.mxu0 0.0
    %1061 = vmatprep.subr.mxu0 0.0
    %1062 = vmatpush1.msra.mxu0 0.0
    %1063 = vmatprep.subr.mxu0 0.0
    %1064 = vmatpush1.msra.mxu0 0.0
    %1065 = vmatprep.subr.mxu0 0.0
    %1066 = vmatpush1.msra.mxu0 0.0
    %1067 = vmatprep.subr.mxu0 0.0
    %1068 = vmatpush1.msra.mxu0 0.0
    %1069 = vmatprep.subr.mxu0 0.0
    %1070 = vmatpush1.msra.mxu0 0.0
    %1071 = vmatprep.subr.mxu0 0.0
    %1072 = vmatpush1.msra.mxu0 0.0
    %1073 = vmatprep.subr.mxu0 0.0
    %1074 = vmatpush1.msra.mxu0 0.0
    %1075 = vmatprep.subr.mxu0 0.0
    %1076 = vmatpush1.msra.mxu0 0.0
    %1077 = vmatprep.subr.mxu0 0.0
    %1078 = vmatpush1.msra.mxu0 0.0
    %1079 = vmatprep.subr.mxu0 0.0
    %1080 = vmatpush1.msra.mxu0 0.0
    %1081 = vmatprep.subr.mxu0 0.0
    %1082 = vmatpush1.msra.mxu0 0.0
    %1083 = vmatprep.mubr.f32.mxu0 0.0
    %1084 = vmatmul.mubr.f32.gmra.mrb[0].mxu0 %v1008
    %v1085 = vpop.f32.mrb[0].mxu0
    %v1086 = vadd.f32 0.0, %v1085
    %v1087 = vpop.f32.mrb[0].mxu0
    %1088 = vmatprep.mubr.f32.mxu0 0.0
    %1089 = vmatmul.mubr.f32.gmra.mrb[0].mxu0 %v1011
    %v1090 = vpop.f32.mrb[0].mxu0
    %v1091 = vadd.f32 0.0, %v1090
    %v1092 = vpop.f32.mrb[0].mxu0
    %1093 = vmatprep.mubr.f32.mxu0 0.0
    %1094 = vmatmul.mubr.f32.gmra.mrb[0].mxu0 %v1014
    %v1095 = vpop.f32.mrb[0].mxu0
    %v1096 = vadd.f32 0.0, %v1095
    %v1097 = vpop.f32.mrb[0].mxu0
    %1098 = vmatprep.mubr.f32.mxu0 0.0
    %1099 = vmatmul.mubr.f32.gmra.mrb[0].mxu0 %v1017
    %v1100 = vpop.f32.mrb[0].mxu0
    %v1101 = vadd.f32 0.0, %v1100
    %v1102 = vpop.f32.mrb[0].mxu0
    %1103 = vdwg.mxu0
    %1104 = vxpose.xlu0.b32.start [1/16] %v192, 128
    %1105 = vxpose.xlu0.b32.cont [2/16] %v197, 128
    %1106 = vxpose.xlu0.b32.cont [3/16] 0.0, 128
    %1107 = vxpose.xlu0.b32.cont [4/16] 0.0, 128
    %1108 = vxpose.xlu0.b32.cont [5/16] 0.0, 128
    %1109 = vxpose.xlu0.b32.cont [6/16] 0.0, 128
    %1110 = vxpose.xlu0.b32.cont [7/16] 0.0, 128
    %1111 = vxpose.xlu0.b32.cont [8/16] 0.0, 128
    %1112 = vxpose.xlu0.b32.cont [9/16] 0.0, 128
    %1113 = vxpose.xlu0.b32.cont [10/16] 0.0, 128
    %1114 = vxpose.xlu0.b32.cont [11/16] 0.0, 128
    %1115 = vxpose.xlu0.b32.cont [12/16] 0.0, 128
    %1116 = vxpose.xlu0.b32.cont [13/16] 0.0, 128
    %1117 = vxpose.xlu0.b32.cont [14/16] 0.0, 128
    %1118 = vxpose.xlu0.b32.cont [15/16] 0.0, 128
    %1119 = vxpose.xlu0.b32.end [16/16] 0.0, 128
    %v1120 = vpop.trf.xlu0
    %v1121 = vpop.trf.xlu0
    %v1122 = vpop.trf.xlu0
    %v1123 = vpop.trf.xlu0
    %v1124 = vpop.trf.xlu0
    %v1125 = vpop.trf.xlu0
    %v1126 = vpop.trf.xlu0
    %v1127 = vpop.trf.xlu0
    %v1128 = vpop.trf.xlu0
    %v1129 = vpop.trf.xlu0
    %v1130 = vpop.trf.xlu0
    %v1131 = vpop.trf.xlu0
    %v1132 = vpop.trf.xlu0
    %v1133 = vpop.trf.xlu0
    %v1134 = vpop.trf.xlu0
    %v1135 = vpop.trf.xlu0
    %v1137 = vsel %vm232, %v1120, 0
    %v1140 = vsel %vm232, %v1121, 0
    %v1143 = vsel %vm232, %v1122, 0
    %v1146 = vsel %vm232, %v1123, 0
    %1148 = vmatprep.subr.mxu0 0.0
    %1149 = vmatpush1.msra.mxu0 %v192
    %1150 = vmatprep.subr.mxu0 0.0
    %1151 = vmatpush1.msra.mxu0 %v197
    %1152 = vmatprep.subr.mxu0 0.0
    %1153 = vmatpush1.msra.mxu0 0.0
    %1154 = vmatprep.subr.mxu0 0.0
    %1155 = vmatpush1.msra.mxu0 0.0
    %1156 = vmatprep.subr.mxu0 0.0
    %1157 = vmatpush1.msra.mxu0 0.0
    %1158 = vmatprep.subr.mxu0 0.0
    %1159 = vmatpush1.msra.mxu0 0.0
    %1160 = vmatprep.subr.mxu0 0.0
    %1161 = vmatpush1.msra.mxu0 0.0
    %1162 = vmatprep.subr.mxu0 0.0
    %1163 = vmatpush1.msra.mxu0 0.0
    %1164 = vmatprep.subr.mxu0 0.0
    %1165 = vmatpush1.msra.mxu0 0.0
    %1166 = vmatprep.subr.mxu0 0.0
    %1167 = vmatpush1.msra.mxu0 0.0
    %1168 = vmatprep.subr.mxu0 0.0
    %1169 = vmatpush1.msra.mxu0 0.0
    %1170 = vmatprep.subr.mxu0 0.0
    %1171 = vmatpush1.msra.mxu0 0.0
    %1172 = vmatprep.subr.mxu0 0.0
    %1173 = vmatpush1.msra.mxu0 0.0
    %1174 = vmatprep.subr.mxu0 0.0
    %1175 = vmatpush1.msra.mxu0 0.0
    %1176 = vmatprep.subr.mxu0 0.0
    %1177 = vmatpush1.msra.mxu0 0.0
    %1178 = vmatprep.subr.mxu0 0.0
    %1179 = vmatpush1.msra.mxu0 0.0
    %1180 = vmatprep.subr.mxu0 0.0
    %1181 = vmatpush1.msra.mxu0 0.0
    %1182 = vmatprep.subr.mxu0 0.0
    %1183 = vmatpush1.msra.mxu0 0.0
    %1184 = vmatprep.subr.mxu0 0.0
    %1185 = vmatpush1.msra.mxu0 0.0
    %1186 = vmatprep.subr.mxu0 0.0
    %1187 = vmatpush1.msra.mxu0 0.0
    %1188 = vmatprep.subr.mxu0 0.0
    %1189 = vmatpush1.msra.mxu0 0.0
    %1190 = vmatprep.subr.mxu0 0.0
    %1191 = vmatpush1.msra.mxu0 0.0
    %1192 = vmatprep.subr.mxu0 0.0
    %1193 = vmatpush1.msra.mxu0 0.0
    %1194 = vmatprep.subr.mxu0 0.0
    %1195 = vmatpush1.msra.mxu0 0.0
    %1196 = vmatprep.subr.mxu0 0.0
    %1197 = vmatpush1.msra.mxu0 0.0
    %1198 = vmatprep.subr.mxu0 0.0
    %1199 = vmatpush1.msra.mxu0 0.0
    %1200 = vmatprep.subr.mxu0 0.0
    %1201 = vmatpush1.msra.mxu0 0.0
    %1202 = vmatprep.subr.mxu0 0.0
    %1203 = vmatpush1.msra.mxu0 0.0
    %1204 = vmatprep.subr.mxu0 0.0
    %1205 = vmatpush1.msra.mxu0 0.0
    %1206 = vmatprep.subr.mxu0 0.0
    %1207 = vmatpush1.msra.mxu0 0.0
    %1208 = vmatprep.subr.mxu0 0.0
    %1209 = vmatpush1.msra.mxu0 0.0
    %1210 = vmatprep.subr.mxu0 0.0
    %1211 = vmatpush1.msra.mxu0 0.0
    %1212 = vmatprep.mubr.f32.mxu0 0.0
    %1213 = vmatmul.mubr.f32.gmra.mrb[0].mxu0 %v1137
    %v1214 = vpop.f32.mrb[0].mxu0
    %v1215 = vadd.f32 0.0, %v1214
    %v1216 = vpop.f32.mrb[0].mxu0
    %1217 = vmatprep.mubr.f32.mxu0 0.0
    %1218 = vmatmul.mubr.f32.gmra.mrb[0].mxu0 %v1140
    %v1219 = vpop.f32.mrb[0].mxu0
    %v1220 = vadd.f32 0.0, %v1219
    %v1221 = vpop.f32.mrb[0].mxu0
    %1222 = vmatprep.mubr.f32.mxu0 0.0
    %1223 = vmatmul.mubr.f32.gmra.mrb[0].mxu0 %v1143
    %v1224 = vpop.f32.mrb[0].mxu0
    %v1225 = vadd.f32 0.0, %v1224
    %v1226 = vpop.f32.mrb[0].mxu0
    %1227 = vmatprep.mubr.f32.mxu0 0.0
    %1228 = vmatmul.mubr.f32.gmra.mrb[0].mxu0 %v1146
    %v1229 = vpop.f32.mrb[0].mxu0
    %v1230 = vadd.f32 0.0, %v1229
    %v1231 = vpop.f32.mrb[0].mxu0
    %1232 = vdwg.mxu0
    %vm1233 = vcmask 261120
    %v1235 = vsel %vm1233, %v122, 0
    %v1238 = vsel %vm1233, %v127, 0
    %1240 = vmatprep.subr.mxu0 0.0
    %1241 = vmatpush1.msra.mxu0 %v312
    %1242 = vmatprep.subr.mxu0 0.0
    %1243 = vmatpush1.msra.mxu0 %v317
    %1244 = vmatprep.subr.mxu0 0.0
    %1245 = vmatpush1.msra.mxu0 %v322
    %1246 = vmatprep.subr.mxu0 0.0
    %1247 = vmatpush1.msra.mxu0 %v327
    %1248 = vmatprep.subr.mxu0 0.0
    %1249 = vmatpush1.msra.mxu0 0.0
    %1250 = vmatprep.subr.mxu0 0.0
    %1251 = vmatpush1.msra.mxu0 0.0
    %1252 = vmatprep.subr.mxu0 0.0
    %1253 = vmatpush1.msra.mxu0 0.0
    %1254 = vmatprep.subr.mxu0 0.0
    %1255 = vmatpush1.msra.mxu0 0.0
    %1256 = vmatprep.subr.mxu0 0.0
    %1257 = vmatpush1.msra.mxu0 0.0
    %1258 = vmatprep.subr.mxu0 0.0
    %1259 = vmatpush1.msra.mxu0 0.0
    %1260 = vmatprep.subr.mxu0 0.0
    %1261 = vmatpush1.msra.mxu0 0.0
    %1262 = vmatprep.subr.mxu0 0.0
    %1263 = vmatpush1.msra.mxu0 0.0
    %1264 = vmatprep.subr.mxu0 0.0
    %1265 = vmatpush1.msra.mxu0 0.0
    %1266 = vmatprep.subr.mxu0 0.0
    %1267 = vmatpush1.msra.mxu0 0.0
    %1268 = vmatprep.subr.mxu0 0.0
    %1269 = vmatpush1.msra.mxu0 0.0
    %1270 = vmatprep.subr.mxu0 0.0
    %1271 = vmatpush1.msra.mxu0 0.0
    %1272 = vmatprep.subr.mxu0 0.0
    %1273 = vmatpush1.msra.mxu0 0.0
    %1274 = vmatprep.subr.mxu0 0.0
    %1275 = vmatpush1.msra.mxu0 0.0
    %1276 = vmatprep.subr.mxu0 0.0
    %1277 = vmatpush1.msra.mxu0 0.0
    %1278 = vmatprep.subr.mxu0 0.0
    %1279 = vmatpush1.msra.mxu0 0.0
    %1280 = vmatprep.subr.mxu0 0.0
    %1281 = vmatpush1.msra.mxu0 0.0
    %1282 = vmatprep.subr.mxu0 0.0
    %1283 = vmatpush1.msra.mxu0 0.0
    %1284 = vmatprep.subr.mxu0 0.0
    %1285 = vmatpush1.msra.mxu0 0.0
    %1286 = vmatprep.subr.mxu0 0.0
    %1287 = vmatpush1.msra.mxu0 0.0
    %1288 = vmatprep.subr.mxu0 0.0
    %1289 = vmatpush1.msra.mxu0 0.0
    %1290 = vmatprep.subr.mxu0 0.0
    %1291 = vmatpush1.msra.mxu0 0.0
    %1292 = vmatprep.subr.mxu0 0.0
    %1293 = vmatpush1.msra.mxu0 0.0
    %1294 = vmatprep.subr.mxu0 0.0
    %1295 = vmatpush1.msra.mxu0 0.0
    %1296 = vmatprep.subr.mxu0 0.0
    %1297 = vmatpush1.msra.mxu0 0.0
    %1298 = vmatprep.subr.mxu0 0.0
    %1299 = vmatpush1.msra.mxu0 0.0
    %1300 = vmatprep.subr.mxu0 0.0
    %1301 = vmatpush1.msra.mxu0 0.0
    %1302 = vmatprep.subr.mxu0 0.0
    %1303 = vmatpush1.msra.mxu0 0.0
    %1304 = vmatprep.mubr.f32.mxu0 0.0
    %1305 = vmatmul.mubr.f32.gmra.mrb[0].mxu0 %v1235
    %v1306 = vpop.f32.mrb[0].mxu0
    %v1307 = vadd.f32 0.0, %v1306
    %v1308 = vpop.f32.mrb[0].mxu0
    %1309 = vmatprep.mubr.f32.mxu0 0.0
    %1310 = vmatmul.mubr.f32.gmra.mrb[0].mxu0 %v1238
    %v1311 = vpop.f32.mrb[0].mxu0
    %v1312 = vadd.f32 0.0, %v1311
    %v1313 = vpop.f32.mrb[0].mxu0
    %1314 = vdwg.mxu0
    %v1316 = vsel %vm1233, %v132, 0
    %v1319 = vsel %vm1233, %v137, 0
    %1321 = vmatprep.subr.mxu0 0.0
    %1322 = vmatpush1.msra.mxu0 %v441
    %1323 = vmatprep.subr.mxu0 0.0
    %1324 = vmatpush1.msra.mxu0 %v446
    %1325 = vmatprep.subr.mxu0 0.0
    %1326 = vmatpush1.msra.mxu0 %v451
    %1327 = vmatprep.subr.mxu0 0.0
    %1328 = vmatpush1.msra.mxu0 %v456
    %1329 = vmatprep.subr.mxu0 0.0
    %1330 = vmatpush1.msra.mxu0 0.0
    %1331 = vmatprep.subr.mxu0 0.0
    %1332 = vmatpush1.msra.mxu0 0.0
    %1333 = vmatprep.subr.mxu0 0.0
    %1334 = vmatpush1.msra.mxu0 0.0
    %1335 = vmatprep.subr.mxu0 0.0
    %1336 = vmatpush1.msra.mxu0 0.0
    %1337 = vmatprep.subr.mxu0 0.0
    %1338 = vmatpush1.msra.mxu0 0.0
    %1339 = vmatprep.subr.mxu0 0.0
    %1340 = vmatpush1.msra.mxu0 0.0
    %1341 = vmatprep.subr.mxu0 0.0
    %1342 = vmatpush1.msra.mxu0 0.0
    %1343 = vmatprep.subr.mxu0 0.0
    %1344 = vmatpush1.msra.mxu0 0.0
    %1345 = vmatprep.subr.mxu0 0.0
    %1346 = vmatpush1.msra.mxu0 0.0
    %1347 = vmatprep.subr.mxu0 0.0
    %1348 = vmatpush1.msra.mxu0 0.0
    %1349 = vmatprep.subr.mxu0 0.0
    %1350 = vmatpush1.msra.mxu0 0.0
    %1351 = vmatprep.subr.mxu0 0.0
    %1352 = vmatpush1.msra.mxu0 0.0
    %1353 = vmatprep.subr.mxu0 0.0
    %1354 = vmatpush1.msra.mxu0 0.0
    %1355 = vmatprep.subr.mxu0 0.0
    %1356 = vmatpush1.msra.mxu0 0.0
    %1357 = vmatprep.subr.mxu0 0.0
    %1358 = vmatpush1.msra.mxu0 0.0
    %1359 = vmatprep.subr.mxu0 0.0
    %1360 = vmatpush1.msra.mxu0 0.0
    %1361 = vmatprep.subr.mxu0 0.0
    %1362 = vmatpush1.msra.mxu0 0.0
    %1363 = vmatprep.subr.mxu0 0.0
    %1364 = vmatpush1.msra.mxu0 0.0
    %1365 = vmatprep.subr.mxu0 0.0
    %1366 = vmatpush1.msra.mxu0 0.0
    %1367 = vmatprep.subr.mxu0 0.0
    %1368 = vmatpush1.msra.mxu0 0.0
    %1369 = vmatprep.subr.mxu0 0.0
    %1370 = vmatpush1.msra.mxu0 0.0
    %1371 = vmatprep.subr.mxu0 0.0
    %1372 = vmatpush1.msra.mxu0 0.0
    %1373 = vmatprep.subr.mxu0 0.0
    %1374 = vmatpush1.msra.mxu0 0.0
    %1375 = vmatprep.subr.mxu0 0.0
    %1376 = vmatpush1.msra.mxu0 0.0
    %1377 = vmatprep.subr.mxu0 0.0
    %1378 = vmatpush1.msra.mxu0 0.0
    %1379 = vmatprep.subr.mxu0 0.0
    %1380 = vmatpush1.msra.mxu0 0.0
    %1381 = vmatprep.subr.mxu0 0.0
    %1382 = vmatpush1.msra.mxu0 0.0
    %1383 = vmatprep.subr.mxu0 0.0
    %1384 = vmatpush1.msra.mxu0 0.0
    %1385 = vmatprep.mubr.f32.mxu0 0.0
    %1386 = vmatmul.mubr.f32.gmra.mrb[0].mxu0 %v1316
    %v1387 = vpop.f32.mrb[0].mxu0
    %v1388 = vadd.f32 0.0, %v1387
    %v1389 = vpop.f32.mrb[0].mxu0
    %1390 = vmatprep.mubr.f32.mxu0 0.0
    %1391 = vmatmul.mubr.f32.gmra.mrb[0].mxu0 %v1319
    %v1392 = vpop.f32.mrb[0].mxu0
    %v1393 = vadd.f32 0.0, %v1392
    %v1394 = vpop.f32.mrb[0].mxu0
    %1395 = vdwg.mxu0
    %v1397 = vsel %vm1233, %v142, 0
    %v1400 = vsel %vm1233, %v147, 0
    %1402 = vmatprep.subr.mxu0 0.0
    %1403 = vmatpush1.msra.mxu0 %v570
    %1404 = vmatprep.subr.mxu0 0.0
    %1405 = vmatpush1.msra.mxu0 %v575
    %1406 = vmatprep.subr.mxu0 0.0
    %1407 = vmatpush1.msra.mxu0 %v580
    %1408 = vmatprep.subr.mxu0 0.0
    %1409 = vmatpush1.msra.mxu0 %v585
    %1410 = vmatprep.subr.mxu0 0.0
    %1411 = vmatpush1.msra.mxu0 0.0
    %1412 = vmatprep.subr.mxu0 0.0
    %1413 = vmatpush1.msra.mxu0 0.0
    %1414 = vmatprep.subr.mxu0 0.0
    %1415 = vmatpush1.msra.mxu0 0.0
    %1416 = vmatprep.subr.mxu0 0.0
    %1417 = vmatpush1.msra.mxu0 0.0
    %1418 = vmatprep.subr.mxu0 0.0
    %1419 = vmatpush1.msra.mxu0 0.0
    %1420 = vmatprep.subr.mxu0 0.0
    %1421 = vmatpush1.msra.mxu0 0.0
    %1422 = vmatprep.subr.mxu0 0.0
    %1423 = vmatpush1.msra.mxu0 0.0
    %1424 = vmatprep.subr.mxu0 0.0
    %1425 = vmatpush1.msra.mxu0 0.0
    %1426 = vmatprep.subr.mxu0 0.0
    %1427 = vmatpush1.msra.mxu0 0.0
    %1428 = vmatprep.subr.mxu0 0.0
    %1429 = vmatpush1.msra.mxu0 0.0
    %1430 = vmatprep.subr.mxu0 0.0
    %1431 = vmatpush1.msra.mxu0 0.0
    %1432 = vmatprep.subr.mxu0 0.0
    %1433 = vmatpush1.msra.mxu0 0.0
    %1434 = vmatprep.subr.mxu0 0.0
    %1435 = vmatpush1.msra.mxu0 0.0
    %1436 = vmatprep.subr.mxu0 0.0
    %1437 = vmatpush1.msra.mxu0 0.0
    %1438 = vmatprep.subr.mxu0 0.0
    %1439 = vmatpush1.msra.mxu0 0.0
    %1440 = vmatprep.subr.mxu0 0.0
    %1441 = vmatpush1.msra.mxu0 0.0
    %1442 = vmatprep.subr.mxu0 0.0
    %1443 = vmatpush1.msra.mxu0 0.0
    %1444 = vmatprep.subr.mxu0 0.0
    %1445 = vmatpush1.msra.mxu0 0.0
    %1446 = vmatprep.subr.mxu0 0.0
    %1447 = vmatpush1.msra.mxu0 0.0
    %1448 = vmatprep.subr.mxu0 0.0
    %1449 = vmatpush1.msra.mxu0 0.0
    %1450 = vmatprep.subr.mxu0 0.0
    %1451 = vmatpush1.msra.mxu0 0.0
    %1452 = vmatprep.subr.mxu0 0.0
    %1453 = vmatpush1.msra.mxu0 0.0
    %1454 = vmatprep.subr.mxu0 0.0
    %1455 = vmatpush1.msra.mxu0 0.0
    %1456 = vmatprep.subr.mxu0 0.0
    %1457 = vmatpush1.msra.mxu0 0.0
    %1458 = vmatprep.subr.mxu0 0.0
    %1459 = vmatpush1.msra.mxu0 0.0
    %1460 = vmatprep.subr.mxu0 0.0
    %1461 = vmatpush1.msra.mxu0 0.0
    %1462 = vmatprep.subr.mxu0 0.0
    %1463 = vmatpush1.msra.mxu0 0.0
    %1464 = vmatprep.subr.mxu0 0.0
    %1465 = vmatpush1.msra.mxu0 0.0
    %1466 = vmatprep.mubr.f32.mxu0 0.0
    %1467 = vmatmul.mubr.f32.gmra.mrb[0].mxu0 %v1397
    %v1468 = vpop.f32.mrb[0].mxu0
    %v1469 = vadd.f32 0.0, %v1468
    %v1470 = vpop.f32.mrb[0].mxu0
    %1471 = vmatprep.mubr.f32.mxu0 0.0
    %1472 = vmatmul.mubr.f32.gmra.mrb[0].mxu0 %v1400
    %v1473 = vpop.f32.mrb[0].mxu0
    %v1474 = vadd.f32 0.0, %v1473
    %v1475 = vpop.f32.mrb[0].mxu0
    %1476 = vdwg.mxu0
    %v1478 = vsel %vm1233, %v152, 0
    %v1481 = vsel %vm1233, %v157, 0
    %1483 = vmatprep.subr.mxu0 0.0
    %1484 = vmatpush1.msra.mxu0 %v699
    %1485 = vmatprep.subr.mxu0 0.0
    %1486 = vmatpush1.msra.mxu0 %v704
    %1487 = vmatprep.subr.mxu0 0.0
    %1488 = vmatpush1.msra.mxu0 %v709
    %1489 = vmatprep.subr.mxu0 0.0
    %1490 = vmatpush1.msra.mxu0 %v714
    %1491 = vmatprep.subr.mxu0 0.0
    %1492 = vmatpush1.msra.mxu0 0.0
    %1493 = vmatprep.subr.mxu0 0.0
    %1494 = vmatpush1.msra.mxu0 0.0
    %1495 = vmatprep.subr.mxu0 0.0
    %1496 = vmatpush1.msra.mxu0 0.0
    %1497 = vmatprep.subr.mxu0 0.0
    %1498 = vmatpush1.msra.mxu0 0.0
    %1499 = vmatprep.subr.mxu0 0.0
    %1500 = vmatpush1.msra.mxu0 0.0
    %1501 = vmatprep.subr.mxu0 0.0
    %1502 = vmatpush1.msra.mxu0 0.0
    %1503 = vmatprep.subr.mxu0 0.0
    %1504 = vmatpush1.msra.mxu0 0.0
    %1505 = vmatprep.subr.mxu0 0.0
    %1506 = vmatpush1.msra.mxu0 0.0
    %1507 = vmatprep.subr.mxu0 0.0
    %1508 = vmatpush1.msra.mxu0 0.0
    %1509 = vmatprep.subr.mxu0 0.0
    %1510 = vmatpush1.msra.mxu0 0.0
    %1511 = vmatprep.subr.mxu0 0.0
    %1512 = vmatpush1.msra.mxu0 0.0
    %1513 = vmatprep.subr.mxu0 0.0
    %1514 = vmatpush1.msra.mxu0 0.0
    %1515 = vmatprep.subr.mxu0 0.0
    %1516 = vmatpush1.msra.mxu0 0.0
    %1517 = vmatprep.subr.mxu0 0.0
    %1518 = vmatpush1.msra.mxu0 0.0
    %1519 = vmatprep.subr.mxu0 0.0
    %1520 = vmatpush1.msra.mxu0 0.0
    %1521 = vmatprep.subr.mxu0 0.0
    %1522 = vmatpush1.msra.mxu0 0.0
    %1523 = vmatprep.subr.mxu0 0.0
    %1524 = vmatpush1.msra.mxu0 0.0
    %1525 = vmatprep.subr.mxu0 0.0
    %1526 = vmatpush1.msra.mxu0 0.0
    %1527 = vmatprep.subr.mxu0 0.0
    %1528 = vmatpush1.msra.mxu0 0.0
    %1529 = vmatprep.subr.mxu0 0.0
    %1530 = vmatpush1.msra.mxu0 0.0
    %1531 = vmatprep.subr.mxu0 0.0
    %1532 = vmatpush1.msra.mxu0 0.0
    %1533 = vmatprep.subr.mxu0 0.0
    %1534 = vmatpush1.msra.mxu0 0.0
    %1535 = vmatprep.subr.mxu0 0.0
    %1536 = vmatpush1.msra.mxu0 0.0
    %1537 = vmatprep.subr.mxu0 0.0
    %1538 = vmatpush1.msra.mxu0 0.0
    %1539 = vmatprep.subr.mxu0 0.0
    %1540 = vmatpush1.msra.mxu0 0.0
    %1541 = vmatprep.subr.mxu0 0.0
    %1542 = vmatpush1.msra.mxu0 0.0
    %1543 = vmatprep.subr.mxu0 0.0
    %1544 = vmatpush1.msra.mxu0 0.0
    %1545 = vmatprep.subr.mxu0 0.0
    %1546 = vmatpush1.msra.mxu0 0.0
    %1547 = vmatprep.mubr.f32.mxu0 0.0
    %1548 = vmatmul.mubr.f32.gmra.mrb[0].mxu0 %v1478
    %v1549 = vpop.f32.mrb[0].mxu0
    %v1550 = vadd.f32 0.0, %v1549
    %v1551 = vpop.f32.mrb[0].mxu0
    %1552 = vmatprep.mubr.f32.mxu0 0.0
    %1553 = vmatmul.mubr.f32.gmra.mrb[0].mxu0 %v1481
    %v1554 = vpop.f32.mrb[0].mxu0
    %v1555 = vadd.f32 0.0, %v1554
    %v1556 = vpop.f32.mrb[0].mxu0
    %1557 = vdwg.mxu0
    %v1559 = vsel %vm1233, %v162, 0
    %v1562 = vsel %vm1233, %v167, 0
    %1564 = vmatprep.subr.mxu0 0.0
    %1565 = vmatpush1.msra.mxu0 %v828
    %1566 = vmatprep.subr.mxu0 0.0
    %1567 = vmatpush1.msra.mxu0 %v833
    %1568 = vmatprep.subr.mxu0 0.0
    %1569 = vmatpush1.msra.mxu0 %v838
    %1570 = vmatprep.subr.mxu0 0.0
    %1571 = vmatpush1.msra.mxu0 %v843
    %1572 = vmatprep.subr.mxu0 0.0
    %1573 = vmatpush1.msra.mxu0 0.0
    %1574 = vmatprep.subr.mxu0 0.0
    %1575 = vmatpush1.msra.mxu0 0.0
    %1576 = vmatprep.subr.mxu0 0.0
    %1577 = vmatpush1.msra.mxu0 0.0
    %1578 = vmatprep.subr.mxu0 0.0
    %1579 = vmatpush1.msra.mxu0 0.0
    %1580 = vmatprep.subr.mxu0 0.0
    %1581 = vmatpush1.msra.mxu0 0.0
    %1582 = vmatprep.subr.mxu0 0.0
    %1583 = vmatpush1.msra.mxu0 0.0
    %1584 = vmatprep.subr.mxu0 0.0
    %1585 = vmatpush1.msra.mxu0 0.0
    %1586 = vmatprep.subr.mxu0 0.0
    %1587 = vmatpush1.msra.mxu0 0.0
    %1588 = vmatprep.subr.mxu0 0.0
    %1589 = vmatpush1.msra.mxu0 0.0
    %1590 = vmatprep.subr.mxu0 0.0
    %1591 = vmatpush1.msra.mxu0 0.0
    %1592 = vmatprep.subr.mxu0 0.0
    %1593 = vmatpush1.msra.mxu0 0.0
    %1594 = vmatprep.subr.mxu0 0.0
    %1595 = vmatpush1.msra.mxu0 0.0
    %1596 = vmatprep.subr.mxu0 0.0
    %1597 = vmatpush1.msra.mxu0 0.0
    %1598 = vmatprep.subr.mxu0 0.0
    %1599 = vmatpush1.msra.mxu0 0.0
    %1600 = vmatprep.subr.mxu0 0.0
    %1601 = vmatpush1.msra.mxu0 0.0
    %1602 = vmatprep.subr.mxu0 0.0
    %1603 = vmatpush1.msra.mxu0 0.0
    %1604 = vmatprep.subr.mxu0 0.0
    %1605 = vmatpush1.msra.mxu0 0.0
    %1606 = vmatprep.subr.mxu0 0.0
    %1607 = vmatpush1.msra.mxu0 0.0
    %1608 = vmatprep.subr.mxu0 0.0
    %1609 = vmatpush1.msra.mxu0 0.0
    %1610 = vmatprep.subr.mxu0 0.0
    %1611 = vmatpush1.msra.mxu0 0.0
    %1612 = vmatprep.subr.mxu0 0.0
    %1613 = vmatpush1.msra.mxu0 0.0
    %1614 = vmatprep.subr.mxu0 0.0
    %1615 = vmatpush1.msra.mxu0 0.0
    %1616 = vmatprep.subr.mxu0 0.0
    %1617 = vmatpush1.msra.mxu0 0.0
    %1618 = vmatprep.subr.mxu0 0.0
    %1619 = vmatpush1.msra.mxu0 0.0
    %1620 = vmatprep.subr.mxu0 0.0
    %1621 = vmatpush1.msra.mxu0 0.0
    %1622 = vmatprep.subr.mxu0 0.0
    %1623 = vmatpush1.msra.mxu0 0.0
    %1624 = vmatprep.subr.mxu0 0.0
    %1625 = vmatpush1.msra.mxu0 0.0
    %1626 = vmatprep.subr.mxu0 0.0
    %1627 = vmatpush1.msra.mxu0 0.0
    %1628 = vmatprep.mubr.f32.mxu0 0.0
    %1629 = vmatmul.mubr.f32.gmra.mrb[0].mxu0 %v1559
    %v1630 = vpop.f32.mrb[0].mxu0
    %v1631 = vadd.f32 0.0, %v1630
    %v1632 = vpop.f32.mrb[0].mxu0
    %1633 = vmatprep.mubr.f32.mxu0 0.0
    %1634 = vmatmul.mubr.f32.gmra.mrb[0].mxu0 %v1562
    %v1635 = vpop.f32.mrb[0].mxu0
    %v1636 = vadd.f32 0.0, %v1635
    %v1637 = vpop.f32.mrb[0].mxu0
    %1638 = vdwg.mxu0
    %v1640 = vsel %vm1233, %v172, 0
    %v1643 = vsel %vm1233, %v177, 0
    %1645 = vmatprep.subr.mxu0 0.0
    %1646 = vmatpush1.msra.mxu0 %v957
    %1647 = vmatprep.subr.mxu0 0.0
    %1648 = vmatpush1.msra.mxu0 %v962
    %1649 = vmatprep.subr.mxu0 0.0
    %1650 = vmatpush1.msra.mxu0 %v967
    %1651 = vmatprep.subr.mxu0 0.0
    %1652 = vmatpush1.msra.mxu0 %v972
    %1653 = vmatprep.subr.mxu0 0.0
    %1654 = vmatpush1.msra.mxu0 0.0
    %1655 = vmatprep.subr.mxu0 0.0
    %1656 = vmatpush1.msra.mxu0 0.0
    %1657 = vmatprep.subr.mxu0 0.0
    %1658 = vmatpush1.msra.mxu0 0.0
    %1659 = vmatprep.subr.mxu0 0.0
    %1660 = vmatpush1.msra.mxu0 0.0
    %1661 = vmatprep.subr.mxu0 0.0
    %1662 = vmatpush1.msra.mxu0 0.0
    %1663 = vmatprep.subr.mxu0 0.0
    %1664 = vmatpush1.msra.mxu0 0.0
    %1665 = vmatprep.subr.mxu0 0.0
    %1666 = vmatpush1.msra.mxu0 0.0
    %1667 = vmatprep.subr.mxu0 0.0
    %1668 = vmatpush1.msra.mxu0 0.0
    %1669 = vmatprep.subr.mxu0 0.0
    %1670 = vmatpush1.msra.mxu0 0.0
    %1671 = vmatprep.subr.mxu0 0.0
    %1672 = vmatpush1.msra.mxu0 0.0
    %1673 = vmatprep.subr.mxu0 0.0
    %1674 = vmatpush1.msra.mxu0 0.0
    %1675 = vmatprep.subr.mxu0 0.0
    %1676 = vmatpush1.msra.mxu0 0.0
    %1677 = vmatprep.subr.mxu0 0.0
    %1678 = vmatpush1.msra.mxu0 0.0
    %1679 = vmatprep.subr.mxu0 0.0
    %1680 = vmatpush1.msra.mxu0 0.0
    %1681 = vmatprep.subr.mxu0 0.0
    %1682 = vmatpush1.msra.mxu0 0.0
    %1683 = vmatprep.subr.mxu0 0.0
    %1684 = vmatpush1.msra.mxu0 0.0
    %1685 = vmatprep.subr.mxu0 0.0
    %1686 = vmatpush1.msra.mxu0 0.0
    %1687 = vmatprep.subr.mxu0 0.0
    %1688 = vmatpush1.msra.mxu0 0.0
    %1689 = vmatprep.subr.mxu0 0.0
    %1690 = vmatpush1.msra.mxu0 0.0
    %1691 = vmatprep.subr.mxu0 0.0
    %1692 = vmatpush1.msra.mxu0 0.0
    %1693 = vmatprep.subr.mxu0 0.0
    %1694 = vmatpush1.msra.mxu0 0.0
    %1695 = vmatprep.subr.mxu0 0.0
    %1696 = vmatpush1.msra.mxu0 0.0
    %1697 = vmatprep.subr.mxu0 0.0
    %1698 = vmatpush1.msra.mxu0 0.0
    %1699 = vmatprep.subr.mxu0 0.0
    %1700 = vmatpush1.msra.mxu0 0.0
    %1701 = vmatprep.subr.mxu0 0.0
    %1702 = vmatpush1.msra.mxu0 0.0
    %1703 = vmatprep.subr.mxu0 0.0
    %1704 = vmatpush1.msra.mxu0 0.0
    %1705 = vmatprep.subr.mxu0 0.0
    %1706 = vmatpush1.msra.mxu0 0.0
    %1707 = vmatprep.subr.mxu0 0.0
    %1708 = vmatpush1.msra.mxu0 0.0
    %1709 = vmatprep.mubr.f32.mxu0 0.0
    %1710 = vmatmul.mubr.f32.gmra.mrb[0].mxu0 %v1640
    %v1711 = vpop.f32.mrb[0].mxu0
    %v1712 = vadd.f32 0.0, %v1711
    %v1713 = vpop.f32.mrb[0].mxu0
    %1714 = vmatprep.mubr.f32.mxu0 0.0
    %1715 = vmatmul.mubr.f32.gmra.mrb[0].mxu0 %v1643
    %v1716 = vpop.f32.mrb[0].mxu0
    %v1717 = vadd.f32 0.0, %v1716
    %v1718 = vpop.f32.mrb[0].mxu0
    %1719 = vdwg.mxu0
    %v1721 = vsel %vm1233, %v182, 0
    %v1724 = vsel %vm1233, %v187, 0
    %1726 = vmatprep.subr.mxu0 0.0
    %1727 = vmatpush1.msra.mxu0 %v1086
    %1728 = vmatprep.subr.mxu0 0.0
    %1729 = vmatpush1.msra.mxu0 %v1091
    %1730 = vmatprep.subr.mxu0 0.0
    %1731 = vmatpush1.msra.mxu0 %v1096
    %1732 = vmatprep.subr.mxu0 0.0
    %1733 = vmatpush1.msra.mxu0 %v1101
    %1734 = vmatprep.subr.mxu0 0.0
    %1735 = vmatpush1.msra.mxu0 0.0
    %1736 = vmatprep.subr.mxu0 0.0
    %1737 = vmatpush1.msra.mxu0 0.0
    %1738 = vmatprep.subr.mxu0 0.0
    %1739 = vmatpush1.msra.mxu0 0.0
    %1740 = vmatprep.subr.mxu0 0.0
    %1741 = vmatpush1.msra.mxu0 0.0
    %1742 = vmatprep.subr.mxu0 0.0
    %1743 = vmatpush1.msra.mxu0 0.0
    %1744 = vmatprep.subr.mxu0 0.0
    %1745 = vmatpush1.msra.mxu0 0.0
    %1746 = vmatprep.subr.mxu0 0.0
    %1747 = vmatpush1.msra.mxu0 0.0
    %1748 = vmatprep.subr.mxu0 0.0
    %1749 = vmatpush1.msra.mxu0 0.0
    %1750 = vmatprep.subr.mxu0 0.0
    %1751 = vmatpush1.msra.mxu0 0.0
    %1752 = vmatprep.subr.mxu0 0.0
    %1753 = vmatpush1.msra.mxu0 0.0
    %1754 = vmatprep.subr.mxu0 0.0
    %1755 = vmatpush1.msra.mxu0 0.0
    %1756 = vmatprep.subr.mxu0 0.0
    %1757 = vmatpush1.msra.mxu0 0.0
    %1758 = vmatprep.subr.mxu0 0.0
    %1759 = vmatpush1.msra.mxu0 0.0
    %1760 = vmatprep.subr.mxu0 0.0
    %1761 = vmatpush1.msra.mxu0 0.0
    %1762 = vmatprep.subr.mxu0 0.0
    %1763 = vmatpush1.msra.mxu0 0.0
    %1764 = vmatprep.subr.mxu0 0.0
    %1765 = vmatpush1.msra.mxu0 0.0
    %1766 = vmatprep.subr.mxu0 0.0
    %1767 = vmatpush1.msra.mxu0 0.0
    %1768 = vmatprep.subr.mxu0 0.0
    %1769 = vmatpush1.msra.mxu0 0.0
    %1770 = vmatprep.subr.mxu0 0.0
    %1771 = vmatpush1.msra.mxu0 0.0
    %1772 = vmatprep.subr.mxu0 0.0
    %1773 = vmatpush1.msra.mxu0 0.0
    %1774 = vmatprep.subr.mxu0 0.0
    %1775 = vmatpush1.msra.mxu0 0.0
    %1776 = vmatprep.subr.mxu0 0.0
    %1777 = vmatpush1.msra.mxu0 0.0
    %1778 = vmatprep.subr.mxu0 0.0
    %1779 = vmatpush1.msra.mxu0 0.0
    %1780 = vmatprep.subr.mxu0 0.0
    %1781 = vmatpush1.msra.mxu0 0.0
    %1782 = vmatprep.subr.mxu0 0.0
    %1783 = vmatpush1.msra.mxu0 0.0
    %1784 = vmatprep.subr.mxu0 0.0
    %1785 = vmatpush1.msra.mxu0 0.0
    %1786 = vmatprep.subr.mxu0 0.0
    %1787 = vmatpush1.msra.mxu0 0.0
    %1788 = vmatprep.subr.mxu0 0.0
    %1789 = vmatpush1.msra.mxu0 0.0
    %1790 = vmatprep.mubr.f32.mxu0 0.0
    %1791 = vmatmul.mubr.f32.gmra.mrb[0].mxu0 %v1721
    %v1792 = vpop.f32.mrb[0].mxu0
    %v1793 = vadd.f32 0.0, %v1792
    %v1794 = vpop.f32.mrb[0].mxu0
    %1795 = vmatprep.mubr.f32.mxu0 0.0
    %1796 = vmatmul.mubr.f32.gmra.mrb[0].mxu0 %v1724
    %v1797 = vpop.f32.mrb[0].mxu0
    %v1798 = vadd.f32 0.0, %v1797
    %v1799 = vpop.f32.mrb[0].mxu0
    %1800 = vdwg.mxu0
    %v1802 = vsel %vm1233, %v192, 0
    %v1805 = vsel %vm1233, %v197, 0
    %1807 = vmatprep.subr.mxu0 0.0
    %1808 = vmatpush1.msra.mxu0 %v1215
    %1809 = vmatprep.subr.mxu0 0.0
    %1810 = vmatpush1.msra.mxu0 %v1220
    %1811 = vmatprep.subr.mxu0 0.0
    %1812 = vmatpush1.msra.mxu0 %v1225
    %1813 = vmatprep.subr.mxu0 0.0
    %1814 = vmatpush1.msra.mxu0 %v1230
    %1815 = vmatprep.subr.mxu0 0.0
    %1816 = vmatpush1.msra.mxu0 0.0
    %1817 = vmatprep.subr.mxu0 0.0
    %1818 = vmatpush1.msra.mxu0 0.0
    %1819 = vmatprep.subr.mxu0 0.0
    %1820 = vmatpush1.msra.mxu0 0.0
    %1821 = vmatprep.subr.mxu0 0.0
    %1822 = vmatpush1.msra.mxu0 0.0
    %1823 = vmatprep.subr.mxu0 0.0
    %1824 = vmatpush1.msra.mxu0 0.0
    %1825 = vmatprep.subr.mxu0 0.0
    %1826 = vmatpush1.msra.mxu0 0.0
    %1827 = vmatprep.subr.mxu0 0.0
    %1828 = vmatpush1.msra.mxu0 0.0
    %1829 = vmatprep.subr.mxu0 0.0
    %1830 = vmatpush1.msra.mxu0 0.0
    %1831 = vmatprep.subr.mxu0 0.0
    %1832 = vmatpush1.msra.mxu0 0.0
    %1833 = vmatprep.subr.mxu0 0.0
    %1834 = vmatpush1.msra.mxu0 0.0
    %1835 = vmatprep.subr.mxu0 0.0
    %1836 = vmatpush1.msra.mxu0 0.0
    %1837 = vmatprep.subr.mxu0 0.0
    %1838 = vmatpush1.msra.mxu0 0.0
    %1839 = vmatprep.subr.mxu0 0.0
    %1840 = vmatpush1.msra.mxu0 0.0
    %1841 = vmatprep.subr.mxu0 0.0
    %1842 = vmatpush1.msra.mxu0 0.0
    %1843 = vmatprep.subr.mxu0 0.0
    %1844 = vmatpush1.msra.mxu0 0.0
    %1845 = vmatprep.subr.mxu0 0.0
    %1846 = vmatpush1.msra.mxu0 0.0
    %1847 = vmatprep.subr.mxu0 0.0
    %1848 = vmatpush1.msra.mxu0 0.0
    %1849 = vmatprep.subr.mxu0 0.0
    %1850 = vmatpush1.msra.mxu0 0.0
    %1851 = vmatprep.subr.mxu0 0.0
    %1852 = vmatpush1.msra.mxu0 0.0
    %1853 = vmatprep.subr.mxu0 0.0
    %1854 = vmatpush1.msra.mxu0 0.0
    %1855 = vmatprep.subr.mxu0 0.0
    %1856 = vmatpush1.msra.mxu0 0.0
    %1857 = vmatprep.subr.mxu0 0.0
    %1858 = vmatpush1.msra.mxu0 0.0
    %1859 = vmatprep.subr.mxu0 0.0
    %1860 = vmatpush1.msra.mxu0 0.0
    %1861 = vmatprep.subr.mxu0 0.0
    %1862 = vmatpush1.msra.mxu0 0.0
    %1863 = vmatprep.subr.mxu0 0.0
    %1864 = vmatpush1.msra.mxu0 0.0
    %1865 = vmatprep.subr.mxu0 0.0
    %1866 = vmatpush1.msra.mxu0 0.0
    %1867 = vmatprep.subr.mxu0 0.0
    %1868 = vmatpush1.msra.mxu0 0.0
    %1869 = vmatprep.subr.mxu0 0.0
    %1870 = vmatpush1.msra.mxu0 0.0
    %1871 = vmatprep.mubr.f32.mxu0 0.0
    %1872 = vmatmul.mubr.f32.gmra.mrb[0].mxu0 %v1802
    %v1873 = vpop.f32.mrb[0].mxu0
    %v1874 = vadd.f32 0.0, %v1873
    %v1875 = vpop.f32.mrb[0].mxu0
    %1876 = vmatprep.mubr.f32.mxu0 0.0
    %1877 = vmatmul.mubr.f32.gmra.mrb[0].mxu0 %v1805
    %v1878 = vpop.f32.mrb[0].mxu0
    %v1879 = vadd.f32 0.0, %v1878
    %v1880 = vpop.f32.mrb[0].mxu0
    %1881 = vdwg.mxu0
    %1882 = vrot.lane.b32.xlu0 %v122, 96
    %v1883 = vpop.permute.xlu0 %1882
    %1884 = vrot.lane.b32.xlu0 %v127, 96
    %v1885 = vpop.permute.xlu0 %1884
    %1888 = vxpose.xlu0.b32.start [1/16] %v1883, 128
    %1889 = vxpose.xlu0.b32.cont [2/16] %v1885, 128
    %1890 = vxpose.xlu0.b32.cont [3/16] 0.0, 128
    %1891 = vxpose.xlu0.b32.cont [4/16] 0.0, 128
    %1892 = vxpose.xlu0.b32.cont [5/16] 0.0, 128
    %1893 = vxpose.xlu0.b32.cont [6/16] 0.0, 128
    %1894 = vxpose.xlu0.b32.cont [7/16] 0.0, 128
    %1895 = vxpose.xlu0.b32.cont [8/16] 0.0, 128
    %1896 = vxpose.xlu0.b32.cont [9/16] 0.0, 128
    %1897 = vxpose.xlu0.b32.cont [10/16] 0.0, 128
    %1898 = vxpose.xlu0.b32.cont [11/16] 0.0, 128
    %1899 = vxpose.xlu0.b32.cont [12/16] 0.0, 128
    %1900 = vxpose.xlu0.b32.cont [13/16] 0.0, 128
    %1901 = vxpose.xlu0.b32.cont [14/16] 0.0, 128
    %1902 = vxpose.xlu0.b32.cont [15/16] 0.0, 128
    %1903 = vxpose.xlu0.b32.end [16/16] 0.0, 128
    %v1904 = vpop.trf.xlu0
    %v1905 = vpop.trf.xlu0
    %v1906 = vpop.trf.xlu0
    %v1907 = vpop.trf.xlu0
    %v1908 = vpop.trf.xlu0
    %v1909 = vpop.trf.xlu0
    %v1910 = vpop.trf.xlu0
    %v1911 = vpop.trf.xlu0
    %v1912 = vpop.trf.xlu0
    %v1913 = vpop.trf.xlu0
    %v1914 = vpop.trf.xlu0
    %v1915 = vpop.trf.xlu0
    %v1916 = vpop.trf.xlu0
    %v1917 = vpop.trf.xlu0
    %v1918 = vpop.trf.xlu0
    %v1919 = vpop.trf.xlu0
    %v1921 = vsel %vm232, %v1904, 0
    %v1924 = vsel %vm232, %v1905, 0
    %v1927 = vsel %vm232, %v1906, 0
    %v1930 = vsel %vm232, %v1907, 0
    %1932 = vmatprep.subr.mxu0 0.0
    %1933 = vmatpush1.msra.mxu0 %v1883
    %1934 = vmatprep.subr.mxu0 0.0
    %1935 = vmatpush1.msra.mxu0 %v1885
    %1936 = vmatprep.subr.mxu0 0.0
    %1937 = vmatpush1.msra.mxu0 0.0
    %1938 = vmatprep.subr.mxu0 0.0
    %1939 = vmatpush1.msra.mxu0 0.0
    %1940 = vmatprep.subr.mxu0 0.0
    %1941 = vmatpush1.msra.mxu0 0.0
    %1942 = vmatprep.subr.mxu0 0.0
    %1943 = vmatpush1.msra.mxu0 0.0
    %1944 = vmatprep.subr.mxu0 0.0
    %1945 = vmatpush1.msra.mxu0 0.0
    %1946 = vmatprep.subr.mxu0 0.0
    %1947 = vmatpush1.msra.mxu0 0.0
    %1948 = vmatprep.subr.mxu0 0.0
    %1949 = vmatpush1.msra.mxu0 0.0
    %1950 = vmatprep.subr.mxu0 0.0
    %1951 = vmatpush1.msra.mxu0 0.0
    %1952 = vmatprep.subr.mxu0 0.0
    %1953 = vmatpush1.msra.mxu0 0.0
    %1954 = vmatprep.subr.mxu0 0.0
    %1955 = vmatpush1.msra.mxu0 0.0
    %1956 = vmatprep.subr.mxu0 0.0
    %1957 = vmatpush1.msra.mxu0 0.0
    %1958 = vmatprep.subr.mxu0 0.0
    %1959 = vmatpush1.msra.mxu0 0.0
    %1960 = vmatprep.subr.mxu0 0.0
    %1961 = vmatpush1.msra.mxu0 0.0
    %1962 = vmatprep.subr.mxu0 0.0
    %1963 = vmatpush1.msra.mxu0 0.0
    %1964 = vmatprep.subr.mxu0 0.0
    %1965 = vmatpush1.msra.mxu0 0.0
    %1966 = vmatprep.subr.mxu0 0.0
    %1967 = vmatpush1.msra.mxu0 0.0
    %1968 = vmatprep.subr.mxu0 0.0
    %1969 = vmatpush1.msra.mxu0 0.0
    %1970 = vmatprep.subr.mxu0 0.0
    %1971 = vmatpush1.msra.mxu0 0.0
    %1972 = vmatprep.subr.mxu0 0.0
    %1973 = vmatpush1.msra.mxu0 0.0
    %1974 = vmatprep.subr.mxu0 0.0
    %1975 = vmatpush1.msra.mxu0 0.0
    %1976 = vmatprep.subr.mxu0 0.0
    %1977 = vmatpush1.msra.mxu0 0.0
    %1978 = vmatprep.subr.mxu0 0.0
    %1979 = vmatpush1.msra.mxu0 0.0
    %1980 = vmatprep.subr.mxu0 0.0
    %1981 = vmatpush1.msra.mxu0 0.0
    %1982 = vmatprep.subr.mxu0 0.0
    %1983 = vmatpush1.msra.mxu0 0.0
    %1984 = vmatprep.subr.mxu0 0.0
    %1985 = vmatpush1.msra.mxu0 0.0
    %1986 = vmatprep.subr.mxu0 0.0
    %1987 = vmatpush1.msra.mxu0 0.0
    %1988 = vmatprep.subr.mxu0 0.0
    %1989 = vmatpush1.msra.mxu0 0.0
    %1990 = vmatprep.subr.mxu0 0.0
    %1991 = vmatpush1.msra.mxu0 0.0
    %1992 = vmatprep.subr.mxu0 0.0
    %1993 = vmatpush1.msra.mxu0 0.0
    %1994 = vmatprep.subr.mxu0 0.0
    %1995 = vmatpush1.msra.mxu0 0.0
    %1996 = vmatprep.mubr.f32.mxu0 0.0
    %1997 = vmatmul.mubr.f32.gmra.mrb[0].mxu0 %v1921
    %v1998 = vpop.f32.mrb[0].mxu0
    %v1999 = vadd.f32 0.0, %v1998
    %v2000 = vpop.f32.mrb[0].mxu0
    %2001 = vmatprep.mubr.f32.mxu0 0.0
    %2002 = vmatmul.mubr.f32.gmra.mrb[0].mxu0 %v1924
    %v2003 = vpop.f32.mrb[0].mxu0
    %v2004 = vadd.f32 0.0, %v2003
    %v2005 = vpop.f32.mrb[0].mxu0
    %2006 = vmatprep.mubr.f32.mxu0 0.0
    %2007 = vmatmul.mubr.f32.gmra.mrb[0].mxu0 %v1927
    %v2008 = vpop.f32.mrb[0].mxu0
    %v2009 = vadd.f32 0.0, %v2008
    %v2010 = vpop.f32.mrb[0].mxu0
    %2011 = vmatprep.mubr.f32.mxu0 0.0
    %2012 = vmatmul.mubr.f32.gmra.mrb[0].mxu0 %v1930
    %v2013 = vpop.f32.mrb[0].mxu0
    %v2014 = vadd.f32 0.0, %v2013
    %v2015 = vpop.f32.mrb[0].mxu0
    %2016 = vdwg.mxu0
    %2017 = vrot.lane.b32.xlu0 %v132, 96
    %v2018 = vpop.permute.xlu0 %2017
    %2019 = vrot.lane.b32.xlu0 %v137, 96
    %v2020 = vpop.permute.xlu0 %2019
    %2023 = vxpose.xlu0.b32.start [1/16] %v2018, 128
    %2024 = vxpose.xlu0.b32.cont [2/16] %v2020, 128
    %2025 = vxpose.xlu0.b32.cont [3/16] 0.0, 128
    %2026 = vxpose.xlu0.b32.cont [4/16] 0.0, 128
    %2027 = vxpose.xlu0.b32.cont [5/16] 0.0, 128
    %2028 = vxpose.xlu0.b32.cont [6/16] 0.0, 128
    %2029 = vxpose.xlu0.b32.cont [7/16] 0.0, 128
    %2030 = vxpose.xlu0.b32.cont [8/16] 0.0, 128
    %2031 = vxpose.xlu0.b32.cont [9/16] 0.0, 128
    %2032 = vxpose.xlu0.b32.cont [10/16] 0.0, 128
    %2033 = vxpose.xlu0.b32.cont [11/16] 0.0, 128
    %2034 = vxpose.xlu0.b32.cont [12/16] 0.0, 128
    %2035 = vxpose.xlu0.b32.cont [13/16] 0.0, 128
    %2036 = vxpose.xlu0.b32.cont [14/16] 0.0, 128
    %2037 = vxpose.xlu0.b32.cont [15/16] 0.0, 128
    %2038 = vxpose.xlu0.b32.end [16/16] 0.0, 128
    %v2039 = vpop.trf.xlu0
    %v2040 = vpop.trf.xlu0
    %v2041 = vpop.trf.xlu0
    %v2042 = vpop.trf.xlu0
    %v2043 = vpop.trf.xlu0
    %v2044 = vpop.trf.xlu0
    %v2045 = vpop.trf.xlu0
    %v2046 = vpop.trf.xlu0
    %v2047 = vpop.trf.xlu0
    %v2048 = vpop.trf.xlu0
    %v2049 = vpop.trf.xlu0
    %v2050 = vpop.trf.xlu0
    %v2051 = vpop.trf.xlu0
    %v2052 = vpop.trf.xlu0
    %v2053 = vpop.trf.xlu0
    %v2054 = vpop.trf.xlu0
    %v2056 = vsel %vm232, %v2039, 0
    %v2059 = vsel %vm232, %v2040, 0
    %v2062 = vsel %vm232, %v2041, 0
    %v2065 = vsel %vm232, %v2042, 0
    %2067 = vmatprep.subr.mxu0 0.0
    %2068 = vmatpush1.msra.mxu0 %v2018
    %2069 = vmatprep.subr.mxu0 0.0
    %2070 = vmatpush1.msra.mxu0 %v2020
    %2071 = vmatprep.subr.mxu0 0.0
    %2072 = vmatpush1.msra.mxu0 0.0
    %2073 = vmatprep.subr.mxu0 0.0
    %2074 = vmatpush1.msra.mxu0 0.0
    %2075 = vmatprep.subr.mxu0 0.0
    %2076 = vmatpush1.msra.mxu0 0.0
    %2077 = vmatprep.subr.mxu0 0.0
    %2078 = vmatpush1.msra.mxu0 0.0
    %2079 = vmatprep.subr.mxu0 0.0
    %2080 = vmatpush1.msra.mxu0 0.0
    %2081 = vmatprep.subr.mxu0 0.0
    %2082 = vmatpush1.msra.mxu0 0.0
    %2083 = vmatprep.subr.mxu0 0.0
    %2084 = vmatpush1.msra.mxu0 0.0
    %2085 = vmatprep.subr.mxu0 0.0
    %2086 = vmatpush1.msra.mxu0 0.0
    %2087 = vmatprep.subr.mxu0 0.0
    %2088 = vmatpush1.msra.mxu0 0.0
    %2089 = vmatprep.subr.mxu0 0.0
    %2090 = vmatpush1.msra.mxu0 0.0
    %2091 = vmatprep.subr.mxu0 0.0
    %2092 = vmatpush1.msra.mxu0 0.0
    %2093 = vmatprep.subr.mxu0 0.0
    %2094 = vmatpush1.msra.mxu0 0.0
    %2095 = vmatprep.subr.mxu0 0.0
    %2096 = vmatpush1.msra.mxu0 0.0
    %2097 = vmatprep.subr.mxu0 0.0
    %2098 = vmatpush1.msra.mxu0 0.0
    %2099 = vmatprep.subr.mxu0 0.0
    %2100 = vmatpush1.msra.mxu0 0.0
    %2101 = vmatprep.subr.mxu0 0.0
    %2102 = vmatpush1.msra.mxu0 0.0
    %2103 = vmatprep.subr.mxu0 0.0
    %2104 = vmatpush1.msra.mxu0 0.0
    %2105 = vmatprep.subr.mxu0 0.0
    %2106 = vmatpush1.msra.mxu0 0.0
    %2107 = vmatprep.subr.mxu0 0.0
    %2108 = vmatpush1.msra.mxu0 0.0
    %2109 = vmatprep.subr.mxu0 0.0
    %2110 = vmatpush1.msra.mxu0 0.0
    %2111 = vmatprep.subr.mxu0 0.0
    %2112 = vmatpush1.msra.mxu0 0.0
    %2113 = vmatprep.subr.mxu0 0.0
    %2114 = vmatpush1.msra.mxu0 0.0
    %2115 = vmatprep.subr.mxu0 0.0
    %2116 = vmatpush1.msra.mxu0 0.0
    %2117 = vmatprep.subr.mxu0 0.0
    %2118 = vmatpush1.msra.mxu0 0.0
    %2119 = vmatprep.subr.mxu0 0.0
    %2120 = vmatpush1.msra.mxu0 0.0
    %2121 = vmatprep.subr.mxu0 0.0
    %2122 = vmatpush1.msra.mxu0 0.0
    %2123 = vmatprep.subr.mxu0 0.0
    %2124 = vmatpush1.msra.mxu0 0.0
    %2125 = vmatprep.subr.mxu0 0.0
    %2126 = vmatpush1.msra.mxu0 0.0
    %2127 = vmatprep.subr.mxu0 0.0
    %2128 = vmatpush1.msra.mxu0 0.0
    %2129 = vmatprep.subr.mxu0 0.0
    %2130 = vmatpush1.msra.mxu0 0.0
    %2131 = vmatprep.mubr.f32.mxu0 0.0
    %2132 = vmatmul.mubr.f32.gmra.mrb[0].mxu0 %v2056
    %v2133 = vpop.f32.mrb[0].mxu0
    %v2134 = vadd.f32 0.0, %v2133
    %v2135 = vpop.f32.mrb[0].mxu0
    %2136 = vmatprep.mubr.f32.mxu0 0.0
    %2137 = vmatmul.mubr.f32.gmra.mrb[0].mxu0 %v2059
    %v2138 = vpop.f32.mrb[0].mxu0
    %v2139 = vadd.f32 0.0, %v2138
    %v2140 = vpop.f32.mrb[0].mxu0
    %2141 = vmatprep.mubr.f32.mxu0 0.0
    %2142 = vmatmul.mubr.f32.gmra.mrb[0].mxu0 %v2062
    %v2143 = vpop.f32.mrb[0].mxu0
    %v2144 = vadd.f32 0.0, %v2143
    %v2145 = vpop.f32.mrb[0].mxu0
    %2146 = vmatprep.mubr.f32.mxu0 0.0
    %2147 = vmatmul.mubr.f32.gmra.mrb[0].mxu0 %v2065
    %v2148 = vpop.f32.mrb[0].mxu0
    %v2149 = vadd.f32 0.0, %v2148
    %v2150 = vpop.f32.mrb[0].mxu0
    %2151 = vdwg.mxu0
    %2152 = vrot.lane.b32.xlu0 %v142, 96
    %v2153 = vpop.permute.xlu0 %2152
    %2154 = vrot.lane.b32.xlu0 %v147, 96
    %v2155 = vpop.permute.xlu0 %2154
    %2158 = vxpose.xlu0.b32.start [1/16] %v2153, 128
    %2159 = vxpose.xlu0.b32.cont [2/16] %v2155, 128
    %2160 = vxpose.xlu0.b32.cont [3/16] 0.0, 128
    %2161 = vxpose.xlu0.b32.cont [4/16] 0.0, 128
    %2162 = vxpose.xlu0.b32.cont [5/16] 0.0, 128
    %2163 = vxpose.xlu0.b32.cont [6/16] 0.0, 128
    %2164 = vxpose.xlu0.b32.cont [7/16] 0.0, 128
    %2165 = vxpose.xlu0.b32.cont [8/16] 0.0, 128
    %2166 = vxpose.xlu0.b32.cont [9/16] 0.0, 128
    %2167 = vxpose.xlu0.b32.cont [10/16] 0.0, 128
    %2168 = vxpose.xlu0.b32.cont [11/16] 0.0, 128
    %2169 = vxpose.xlu0.b32.cont [12/16] 0.0, 128
    %2170 = vxpose.xlu0.b32.cont [13/16] 0.0, 128
    %2171 = vxpose.xlu0.b32.cont [14/16] 0.0, 128
    %2172 = vxpose.xlu0.b32.cont [15/16] 0.0, 128
    %2173 = vxpose.xlu0.b32.end [16/16] 0.0, 128
    %v2174 = vpop.trf.xlu0
    %v2175 = vpop.trf.xlu0
    %v2176 = vpop.trf.xlu0
    %v2177 = vpop.trf.xlu0
    %v2178 = vpop.trf.xlu0
    %v2179 = vpop.trf.xlu0
    %v2180 = vpop.trf.xlu0
    %v2181 = vpop.trf.xlu0
    %v2182 = vpop.trf.xlu0
    %v2183 = vpop.trf.xlu0
    %v2184 = vpop.trf.xlu0
    %v2185 = vpop.trf.xlu0
    %v2186 = vpop.trf.xlu0
    %v2187 = vpop.trf.xlu0
    %v2188 = vpop.trf.xlu0
    %v2189 = vpop.trf.xlu0
    %v2191 = vsel %vm232, %v2174, 0
    %v2194 = vsel %vm232, %v2175, 0
    %v2197 = vsel %vm232, %v2176, 0
    %v2200 = vsel %vm232, %v2177, 0
    %2202 = vmatprep.subr.mxu0 0.0
    %2203 = vmatpush1.msra.mxu0 %v2153
    %2204 = vmatprep.subr.mxu0 0.0
    %2205 = vmatpush1.msra.mxu0 %v2155
    %2206 = vmatprep.subr.mxu0 0.0
    %2207 = vmatpush1.msra.mxu0 0.0
    %2208 = vmatprep.subr.mxu0 0.0
    %2209 = vmatpush1.msra.mxu0 0.0
    %2210 = vmatprep.subr.mxu0 0.0
    %2211 = vmatpush1.msra.mxu0 0.0
    %2212 = vmatprep.subr.mxu0 0.0
    %2213 = vmatpush1.msra.mxu0 0.0
    %2214 = vmatprep.subr.mxu0 0.0
    %2215 = vmatpush1.msra.mxu0 0.0
    %2216 = vmatprep.subr.mxu0 0.0
    %2217 = vmatpush1.msra.mxu0 0.0
    %2218 = vmatprep.subr.mxu0 0.0
    %2219 = vmatpush1.msra.mxu0 0.0
    %2220 = vmatprep.subr.mxu0 0.0
    %2221 = vmatpush1.msra.mxu0 0.0
    %2222 = vmatprep.subr.mxu0 0.0
    %2223 = vmatpush1.msra.mxu0 0.0
    %2224 = vmatprep.subr.mxu0 0.0
    %2225 = vmatpush1.msra.mxu0 0.0
    %2226 = vmatprep.subr.mxu0 0.0
    %2227 = vmatpush1.msra.mxu0 0.0
    %2228 = vmatprep.subr.mxu0 0.0
    %2229 = vmatpush1.msra.mxu0 0.0
    %2230 = vmatprep.subr.mxu0 0.0
    %2231 = vmatpush1.msra.mxu0 0.0
    %2232 = vmatprep.subr.mxu0 0.0
    %2233 = vmatpush1.msra.mxu0 0.0
    %2234 = vmatprep.subr.mxu0 0.0
    %2235 = vmatpush1.msra.mxu0 0.0
    %2236 = vmatprep.subr.mxu0 0.0
    %2237 = vmatpush1.msra.mxu0 0.0
    %2238 = vmatprep.subr.mxu0 0.0
    %2239 = vmatpush1.msra.mxu0 0.0
    %2240 = vmatprep.subr.mxu0 0.0
    %2241 = vmatpush1.msra.mxu0 0.0
    %2242 = vmatprep.subr.mxu0 0.0
    %2243 = vmatpush1.msra.mxu0 0.0
    %2244 = vmatprep.subr.mxu0 0.0
    %2245 = vmatpush1.msra.mxu0 0.0
    %2246 = vmatprep.subr.mxu0 0.0
    %2247 = vmatpush1.msra.mxu0 0.0
    %2248 = vmatprep.subr.mxu0 0.0
    %2249 = vmatpush1.msra.mxu0 0.0
    %2250 = vmatprep.subr.mxu0 0.0
    %2251 = vmatpush1.msra.mxu0 0.0
    %2252 = vmatprep.subr.mxu0 0.0
    %2253 = vmatpush1.msra.mxu0 0.0
    %2254 = vmatprep.subr.mxu0 0.0
    %2255 = vmatpush1.msra.mxu0 0.0
    %2256 = vmatprep.subr.mxu0 0.0
    %2257 = vmatpush1.msra.mxu0 0.0
    %2258 = vmatprep.subr.mxu0 0.0
    %2259 = vmatpush1.msra.mxu0 0.0
    %2260 = vmatprep.subr.mxu0 0.0
    %2261 = vmatpush1.msra.mxu0 0.0
    %2262 = vmatprep.subr.mxu0 0.0
    %2263 = vmatpush1.msra.mxu0 0.0
    %2264 = vmatprep.subr.mxu0 0.0
    %2265 = vmatpush1.msra.mxu0 0.0
    %2266 = vmatprep.mubr.f32.mxu0 0.0
    %2267 = vmatmul.mubr.f32.gmra.mrb[0].mxu0 %v2191
    %v2268 = vpop.f32.mrb[0].mxu0
    %v2269 = vadd.f32 0.0, %v2268
    %v2270 = vpop.f32.mrb[0].mxu0
    %2271 = vmatprep.mubr.f32.mxu0 0.0
    %2272 = vmatmul.mubr.f32.gmra.mrb[0].mxu0 %v2194
    %v2273 = vpop.f32.mrb[0].mxu0
    %v2274 = vadd.f32 0.0, %v2273
    %v2275 = vpop.f32.mrb[0].mxu0
    %2276 = vmatprep.mubr.f32.mxu0 0.0
    %2277 = vmatmul.mubr.f32.gmra.mrb[0].mxu0 %v2197
    %v2278 = vpop.f32.mrb[0].mxu0
    %v2279 = vadd.f32 0.0, %v2278
    %v2280 = vpop.f32.mrb[0].mxu0
    %2281 = vmatprep.mubr.f32.mxu0 0.0
    %2282 = vmatmul.mubr.f32.gmra.mrb[0].mxu0 %v2200
    %v2283 = vpop.f32.mrb[0].mxu0
    %v2284 = vadd.f32 0.0, %v2283
    %v2285 = vpop.f32.mrb[0].mxu0
    %2286 = vdwg.mxu0
    %2287 = vrot.lane.b32.xlu0 %v152, 96
    %v2288 = vpop.permute.xlu0 %2287
    %2289 = vrot.lane.b32.xlu0 %v157, 96
    %v2290 = vpop.permute.xlu0 %2289
    %2293 = vxpose.xlu0.b32.start [1/16] %v2288, 128
    %2294 = vxpose.xlu0.b32.cont [2/16] %v2290, 128
    %2295 = vxpose.xlu0.b32.cont [3/16] 0.0, 128
    %2296 = vxpose.xlu0.b32.cont [4/16] 0.0, 128
    %2297 = vxpose.xlu0.b32.cont [5/16] 0.0, 128
    %2298 = vxpose.xlu0.b32.cont [6/16] 0.0, 128
    %2299 = vxpose.xlu0.b32.cont [7/16] 0.0, 128
    %2300 = vxpose.xlu0.b32.cont [8/16] 0.0, 128
    %2301 = vxpose.xlu0.b32.cont [9/16] 0.0, 128
    %2302 = vxpose.xlu0.b32.cont [10/16] 0.0, 128
    %2303 = vxpose.xlu0.b32.cont [11/16] 0.0, 128
    %2304 = vxpose.xlu0.b32.cont [12/16] 0.0, 128
    %2305 = vxpose.xlu0.b32.cont [13/16] 0.0, 128
    %2306 = vxpose.xlu0.b32.cont [14/16] 0.0, 128
    %2307 = vxpose.xlu0.b32.cont [15/16] 0.0, 128
    %2308 = vxpose.xlu0.b32.end [16/16] 0.0, 128
    %v2309 = vpop.trf.xlu0
    %v2310 = vpop.trf.xlu0
    %v2311 = vpop.trf.xlu0
    %v2312 = vpop.trf.xlu0
    %v2313 = vpop.trf.xlu0
    %v2314 = vpop.trf.xlu0
    %v2315 = vpop.trf.xlu0
    %v2316 = vpop.trf.xlu0
    %v2317 = vpop.trf.xlu0
    %v2318 = vpop.trf.xlu0
    %v2319 = vpop.trf.xlu0
    %v2320 = vpop.trf.xlu0
    %v2321 = vpop.trf.xlu0
    %v2322 = vpop.trf.xlu0
    %v2323 = vpop.trf.xlu0
    %v2324 = vpop.trf.xlu0
    %v2326 = vsel %vm232, %v2309, 0
    %v2329 = vsel %vm232, %v2310, 0
    %v2332 = vsel %vm232, %v2311, 0
    %v2335 = vsel %vm232, %v2312, 0
    %2337 = vmatprep.subr.mxu0 0.0
    %2338 = vmatpush1.msra.mxu0 %v2288
    %2339 = vmatprep.subr.mxu0 0.0
    %2340 = vmatpush1.msra.mxu0 %v2290
    %2341 = vmatprep.subr.mxu0 0.0
    %2342 = vmatpush1.msra.mxu0 0.0
    %2343 = vmatprep.subr.mxu0 0.0
    %2344 = vmatpush1.msra.mxu0 0.0
    %2345 = vmatprep.subr.mxu0 0.0
    %2346 = vmatpush1.msra.mxu0 0.0
    %2347 = vmatprep.subr.mxu0 0.0
    %2348 = vmatpush1.msra.mxu0 0.0
    %2349 = vmatprep.subr.mxu0 0.0
    %2350 = vmatpush1.msra.mxu0 0.0
    %2351 = vmatprep.subr.mxu0 0.0
    %2352 = vmatpush1.msra.mxu0 0.0
    %2353 = vmatprep.subr.mxu0 0.0
    %2354 = vmatpush1.msra.mxu0 0.0
    %2355 = vmatprep.subr.mxu0 0.0
    %2356 = vmatpush1.msra.mxu0 0.0
    %2357 = vmatprep.subr.mxu0 0.0
    %2358 = vmatpush1.msra.mxu0 0.0
    %2359 = vmatprep.subr.mxu0 0.0
    %2360 = vmatpush1.msra.mxu0 0.0
    %2361 = vmatprep.subr.mxu0 0.0
    %2362 = vmatpush1.msra.mxu0 0.0
    %2363 = vmatprep.subr.mxu0 0.0
    %2364 = vmatpush1.msra.mxu0 0.0
    %2365 = vmatprep.subr.mxu0 0.0
    %2366 = vmatpush1.msra.mxu0 0.0
    %2367 = vmatprep.subr.mxu0 0.0
    %2368 = vmatpush1.msra.mxu0 0.0
    %2369 = vmatprep.subr.mxu0 0.0
    %2370 = vmatpush1.msra.mxu0 0.0
    %2371 = vmatprep.subr.mxu0 0.0
    %2372 = vmatpush1.msra.mxu0 0.0
    %2373 = vmatprep.subr.mxu0 0.0
    %2374 = vmatpush1.msra.mxu0 0.0
    %2375 = vmatprep.subr.mxu0 0.0
    %2376 = vmatpush1.msra.mxu0 0.0
    %2377 = vmatprep.subr.mxu0 0.0
    %2378 = vmatpush1.msra.mxu0 0.0
    %2379 = vmatprep.subr.mxu0 0.0
    %2380 = vmatpush1.msra.mxu0 0.0
    %2381 = vmatprep.subr.mxu0 0.0
    %2382 = vmatpush1.msra.mxu0 0.0
    %2383 = vmatprep.subr.mxu0 0.0
    %2384 = vmatpush1.msra.mxu0 0.0
    %2385 = vmatprep.subr.mxu0 0.0
    %2386 = vmatpush1.msra.mxu0 0.0
    %2387 = vmatprep.subr.mxu0 0.0
    %2388 = vmatpush1.msra.mxu0 0.0
    %2389 = vmatprep.subr.mxu0 0.0
    %2390 = vmatpush1.msra.mxu0 0.0
    %2391 = vmatprep.subr.mxu0 0.0
    %2392 = vmatpush1.msra.mxu0 0.0
    %2393 = vmatprep.subr.mxu0 0.0
    %2394 = vmatpush1.msra.mxu0 0.0
    %2395 = vmatprep.subr.mxu0 0.0
    %2396 = vmatpush1.msra.mxu0 0.0
    %2397 = vmatprep.subr.mxu0 0.0
    %2398 = vmatpush1.msra.mxu0 0.0
    %2399 = vmatprep.subr.mxu0 0.0
    %2400 = vmatpush1.msra.mxu0 0.0
    %2401 = vmatprep.mubr.f32.mxu0 0.0
    %2402 = vmatmul.mubr.f32.gmra.mrb[0].mxu0 %v2326
    %v2403 = vpop.f32.mrb[0].mxu0
    %v2404 = vadd.f32 0.0, %v2403
    %v2405 = vpop.f32.mrb[0].mxu0
    %2406 = vmatprep.mubr.f32.mxu0 0.0
    %2407 = vmatmul.mubr.f32.gmra.mrb[0].mxu0 %v2329
    %v2408 = vpop.f32.mrb[0].mxu0
    %v2409 = vadd.f32 0.0, %v2408
    %v2410 = vpop.f32.mrb[0].mxu0
    %2411 = vmatprep.mubr.f32.mxu0 0.0
    %2412 = vmatmul.mubr.f32.gmra.mrb[0].mxu0 %v2332
    %v2413 = vpop.f32.mrb[0].mxu0
    %v2414 = vadd.f32 0.0, %v2413
    %v2415 = vpop.f32.mrb[0].mxu0
    %2416 = vmatprep.mubr.f32.mxu0 0.0
    %2417 = vmatmul.mubr.f32.gmra.mrb[0].mxu0 %v2335
    %v2418 = vpop.f32.mrb[0].mxu0
    %v2419 = vadd.f32 0.0, %v2418
    %v2420 = vpop.f32.mrb[0].mxu0
    %2421 = vdwg.mxu0
    %2422 = vrot.lane.b32.xlu0 %v162, 96
    %v2423 = vpop.permute.xlu0 %2422
    %2424 = vrot.lane.b32.xlu0 %v167, 96
    %v2425 = vpop.permute.xlu0 %2424
    %2428 = vxpose.xlu0.b32.start [1/16] %v2423, 128
    %2429 = vxpose.xlu0.b32.cont [2/16] %v2425, 128
    %2430 = vxpose.xlu0.b32.cont [3/16] 0.0, 128
    %2431 = vxpose.xlu0.b32.cont [4/16] 0.0, 128
    %2432 = vxpose.xlu0.b32.cont [5/16] 0.0, 128
    %2433 = vxpose.xlu0.b32.cont [6/16] 0.0, 128
    %2434 = vxpose.xlu0.b32.cont [7/16] 0.0, 128
    %2435 = vxpose.xlu0.b32.cont [8/16] 0.0, 128
    %2436 = vxpose.xlu0.b32.cont [9/16] 0.0, 128
    %2437 = vxpose.xlu0.b32.cont [10/16] 0.0, 128
    %2438 = vxpose.xlu0.b32.cont [11/16] 0.0, 128
    %2439 = vxpose.xlu0.b32.cont [12/16] 0.0, 128
    %2440 = vxpose.xlu0.b32.cont [13/16] 0.0, 128
    %2441 = vxpose.xlu0.b32.cont [14/16] 0.0, 128
    %2442 = vxpose.xlu0.b32.cont [15/16] 0.0, 128
    %2443 = vxpose.xlu0.b32.end [16/16] 0.0, 128
    %v2444 = vpop.trf.xlu0
    %v2445 = vpop.trf.xlu0
    %v2446 = vpop.trf.xlu0
    %v2447 = vpop.trf.xlu0
    %v2448 = vpop.trf.xlu0
    %v2449 = vpop.trf.xlu0
    %v2450 = vpop.trf.xlu0
    %v2451 = vpop.trf.xlu0
    %v2452 = vpop.trf.xlu0
    %v2453 = vpop.trf.xlu0
    %v2454 = vpop.trf.xlu0
    %v2455 = vpop.trf.xlu0
    %v2456 = vpop.trf.xlu0
    %v2457 = vpop.trf.xlu0
    %v2458 = vpop.trf.xlu0
    %v2459 = vpop.trf.xlu0
    %v2461 = vsel %vm232, %v2444, 0
    %v2464 = vsel %vm232, %v2445, 0
    %v2467 = vsel %vm232, %v2446, 0
    %v2470 = vsel %vm232, %v2447, 0
    %2472 = vmatprep.subr.mxu0 0.0
    %2473 = vmatpush1.msra.mxu0 %v2423
    %2474 = vmatprep.subr.mxu0 0.0
    %2475 = vmatpush1.msra.mxu0 %v2425
    %2476 = vmatprep.subr.mxu0 0.0
    %2477 = vmatpush1.msra.mxu0 0.0
    %2478 = vmatprep.subr.mxu0 0.0
    %2479 = vmatpush1.msra.mxu0 0.0
    %2480 = vmatprep.subr.mxu0 0.0
    %2481 = vmatpush1.msra.mxu0 0.0
    %2482 = vmatprep.subr.mxu0 0.0
    %2483 = vmatpush1.msra.mxu0 0.0
    %2484 = vmatprep.subr.mxu0 0.0
    %2485 = vmatpush1.msra.mxu0 0.0
    %2486 = vmatprep.subr.mxu0 0.0
    %2487 = vmatpush1.msra.mxu0 0.0
    %2488 = vmatprep.subr.mxu0 0.0
    %2489 = vmatpush1.msra.mxu0 0.0
    %2490 = vmatprep.subr.mxu0 0.0
    %2491 = vmatpush1.msra.mxu0 0.0
    %2492 = vmatprep.subr.mxu0 0.0
    %2493 = vmatpush1.msra.mxu0 0.0
    %2494 = vmatprep.subr.mxu0 0.0
    %2495 = vmatpush1.msra.mxu0 0.0
    %2496 = vmatprep.subr.mxu0 0.0
    %2497 = vmatpush1.msra.mxu0 0.0
    %2498 = vmatprep.subr.mxu0 0.0
    %2499 = vmatpush1.msra.mxu0 0.0
    %2500 = vmatprep.subr.mxu0 0.0
    %2501 = vmatpush1.msra.mxu0 0.0
    %2502 = vmatprep.subr.mxu0 0.0
    %2503 = vmatpush1.msra.mxu0 0.0
    %2504 = vmatprep.subr.mxu0 0.0
    %2505 = vmatpush1.msra.mxu0 0.0
    %2506 = vmatprep.subr.mxu0 0.0
    %2507 = vmatpush1.msra.mxu0 0.0
    %2508 = vmatprep.subr.mxu0 0.0
    %2509 = vmatpush1.msra.mxu0 0.0
    %2510 = vmatprep.subr.mxu0 0.0
    %2511 = vmatpush1.msra.mxu0 0.0
    %2512 = vmatprep.subr.mxu0 0.0
    %2513 = vmatpush1.msra.mxu0 0.0
    %2514 = vmatprep.subr.mxu0 0.0
    %2515 = vmatpush1.msra.mxu0 0.0
    %2516 = vmatprep.subr.mxu0 0.0
    %2517 = vmatpush1.msra.mxu0 0.0
    %2518 = vmatprep.subr.mxu0 0.0
    %2519 = vmatpush1.msra.mxu0 0.0
    %2520 = vmatprep.subr.mxu0 0.0
    %2521 = vmatpush1.msra.mxu0 0.0
    %2522 = vmatprep.subr.mxu0 0.0
    %2523 = vmatpush1.msra.mxu0 0.0
    %2524 = vmatprep.subr.mxu0 0.0
    %2525 = vmatpush1.msra.mxu0 0.0
    %2526 = vmatprep.subr.mxu0 0.0
    %2527 = vmatpush1.msra.mxu0 0.0
    %2528 = vmatprep.subr.mxu0 0.0
    %2529 = vmatpush1.msra.mxu0 0.0
    %2530 = vmatprep.subr.mxu0 0.0
    %2531 = vmatpush1.msra.mxu0 0.0
    %2532 = vmatprep.subr.mxu0 0.0
    %2533 = vmatpush1.msra.mxu0 0.0
    %2534 = vmatprep.subr.mxu0 0.0
    %2535 = vmatpush1.msra.mxu0 0.0
    %2536 = vmatprep.mubr.f32.mxu0 0.0
    %2537 = vmatmul.mubr.f32.gmra.mrb[0].mxu0 %v2461
    %v2538 = vpop.f32.mrb[0].mxu0
    %v2539 = vadd.f32 0.0, %v2538
    %v2540 = vpop.f32.mrb[0].mxu0
    %2541 = vmatprep.mubr.f32.mxu0 0.0
    %2542 = vmatmul.mubr.f32.gmra.mrb[0].mxu0 %v2464
    %v2543 = vpop.f32.mrb[0].mxu0
    %v2544 = vadd.f32 0.0, %v2543
    %v2545 = vpop.f32.mrb[0].mxu0
    %2546 = vmatprep.mubr.f32.mxu0 0.0
    %2547 = vmatmul.mubr.f32.gmra.mrb[0].mxu0 %v2467
    %v2548 = vpop.f32.mrb[0].mxu0
    %v2549 = vadd.f32 0.0, %v2548
    %v2550 = vpop.f32.mrb[0].mxu0
    %2551 = vmatprep.mubr.f32.mxu0 0.0
    %2552 = vmatmul.mubr.f32.gmra.mrb[0].mxu0 %v2470
    %v2553 = vpop.f32.mrb[0].mxu0
    %v2554 = vadd.f32 0.0, %v2553
    %v2555 = vpop.f32.mrb[0].mxu0
    %2556 = vdwg.mxu0
    %2557 = vrot.lane.b32.xlu0 %v172, 96
    %v2558 = vpop.permute.xlu0 %2557
    %2559 = vrot.lane.b32.xlu0 %v177, 96
    %v2560 = vpop.permute.xlu0 %2559
    %2563 = vxpose.xlu0.b32.start [1/16] %v2558, 128
    %2564 = vxpose.xlu0.b32.cont [2/16] %v2560, 128
    %2565 = vxpose.xlu0.b32.cont [3/16] 0.0, 128
    %2566 = vxpose.xlu0.b32.cont [4/16] 0.0, 128
    %2567 = vxpose.xlu0.b32.cont [5/16] 0.0, 128
    %2568 = vxpose.xlu0.b32.cont [6/16] 0.0, 128
    %2569 = vxpose.xlu0.b32.cont [7/16] 0.0, 128
    %2570 = vxpose.xlu0.b32.cont [8/16] 0.0, 128
    %2571 = vxpose.xlu0.b32.cont [9/16] 0.0, 128
    %2572 = vxpose.xlu0.b32.cont [10/16] 0.0, 128
    %2573 = vxpose.xlu0.b32.cont [11/16] 0.0, 128
    %2574 = vxpose.xlu0.b32.cont [12/16] 0.0, 128
    %2575 = vxpose.xlu0.b32.cont [13/16] 0.0, 128
    %2576 = vxpose.xlu0.b32.cont [14/16] 0.0, 128
    %2577 = vxpose.xlu0.b32.cont [15/16] 0.0, 128
    %2578 = vxpose.xlu0.b32.end [16/16] 0.0, 128
    %v2579 = vpop.trf.xlu0
    %v2580 = vpop.trf.xlu0
    %v2581 = vpop.trf.xlu0
    %v2582 = vpop.trf.xlu0
    %v2583 = vpop.trf.xlu0
    %v2584 = vpop.trf.xlu0
    %v2585 = vpop.trf.xlu0
    %v2586 = vpop.trf.xlu0
    %v2587 = vpop.trf.xlu0
    %v2588 = vpop.trf.xlu0
    %v2589 = vpop.trf.xlu0
    %v2590 = vpop.trf.xlu0
    %v2591 = vpop.trf.xlu0
    %v2592 = vpop.trf.xlu0
    %v2593 = vpop.trf.xlu0
    %v2594 = vpop.trf.xlu0
    %v2596 = vsel %vm232, %v2579, 0
    %v2599 = vsel %vm232, %v2580, 0
    %v2602 = vsel %vm232, %v2581, 0
    %v2605 = vsel %vm232, %v2582, 0
    %2607 = vmatprep.subr.mxu0 0.0
    %2608 = vmatpush1.msra.mxu0 %v2558
    %2609 = vmatprep.subr.mxu0 0.0
    %2610 = vmatpush1.msra.mxu0 %v2560
    %2611 = vmatprep.subr.mxu0 0.0
    %2612 = vmatpush1.msra.mxu0 0.0
    %2613 = vmatprep.subr.mxu0 0.0
    %2614 = vmatpush1.msra.mxu0 0.0
    %2615 = vmatprep.subr.mxu0 0.0
    %2616 = vmatpush1.msra.mxu0 0.0
    %2617 = vmatprep.subr.mxu0 0.0
    %2618 = vmatpush1.msra.mxu0 0.0
    %2619 = vmatprep.subr.mxu0 0.0
    %2620 = vmatpush1.msra.mxu0 0.0
    %2621 = vmatprep.subr.mxu0 0.0
    %2622 = vmatpush1.msra.mxu0 0.0
    %2623 = vmatprep.subr.mxu0 0.0
    %2624 = vmatpush1.msra.mxu0 0.0
    %2625 = vmatprep.subr.mxu0 0.0
    %2626 = vmatpush1.msra.mxu0 0.0
    %2627 = vmatprep.subr.mxu0 0.0
    %2628 = vmatpush1.msra.mxu0 0.0
    %2629 = vmatprep.subr.mxu0 0.0
    %2630 = vmatpush1.msra.mxu0 0.0
    %2631 = vmatprep.subr.mxu0 0.0
    %2632 = vmatpush1.msra.mxu0 0.0
    %2633 = vmatprep.subr.mxu0 0.0
    %2634 = vmatpush1.msra.mxu0 0.0
    %2635 = vmatprep.subr.mxu0 0.0
    %2636 = vmatpush1.msra.mxu0 0.0
    %2637 = vmatprep.subr.mxu0 0.0
    %2638 = vmatpush1.msra.mxu0 0.0
    %2639 = vmatprep.subr.mxu0 0.0
    %2640 = vmatpush1.msra.mxu0 0.0
    %2641 = vmatprep.subr.mxu0 0.0
    %2642 = vmatpush1.msra.mxu0 0.0
    %2643 = vmatprep.subr.mxu0 0.0
    %2644 = vmatpush1.msra.mxu0 0.0
    %2645 = vmatprep.subr.mxu0 0.0
    %2646 = vmatpush1.msra.mxu0 0.0
    %2647 = vmatprep.subr.mxu0 0.0
    %2648 = vmatpush1.msra.mxu0 0.0
    %2649 = vmatprep.subr.mxu0 0.0
    %2650 = vmatpush1.msra.mxu0 0.0
    %2651 = vmatprep.subr.mxu0 0.0
    %2652 = vmatpush1.msra.mxu0 0.0
    %2653 = vmatprep.subr.mxu0 0.0
    %2654 = vmatpush1.msra.mxu0 0.0
    %2655 = vmatprep.subr.mxu0 0.0
    %2656 = vmatpush1.msra.mxu0 0.0
    %2657 = vmatprep.subr.mxu0 0.0
    %2658 = vmatpush1.msra.mxu0 0.0
    %2659 = vmatprep.subr.mxu0 0.0
    %2660 = vmatpush1.msra.mxu0 0.0
    %2661 = vmatprep.subr.mxu0 0.0
    %2662 = vmatpush1.msra.mxu0 0.0
    %2663 = vmatprep.subr.mxu0 0.0
    %2664 = vmatpush1.msra.mxu0 0.0
    %2665 = vmatprep.subr.mxu0 0.0
    %2666 = vmatpush1.msra.mxu0 0.0
    %2667 = vmatprep.subr.mxu0 0.0
    %2668 = vmatpush1.msra.mxu0 0.0
    %2669 = vmatprep.subr.mxu0 0.0
    %2670 = vmatpush1.msra.mxu0 0.0
    %2671 = vmatprep.mubr.f32.mxu0 0.0
    %2672 = vmatmul.mubr.f32.gmra.mrb[0].mxu0 %v2596
    %v2673 = vpop.f32.mrb[0].mxu0
    %v2674 = vadd.f32 0.0, %v2673
    %v2675 = vpop.f32.mrb[0].mxu0
    %2676 = vmatprep.mubr.f32.mxu0 0.0
    %2677 = vmatmul.mubr.f32.gmra.mrb[0].mxu0 %v2599
    %v2678 = vpop.f32.mrb[0].mxu0
    %v2679 = vadd.f32 0.0, %v2678
    %v2680 = vpop.f32.mrb[0].mxu0
    %2681 = vmatprep.mubr.f32.mxu0 0.0
    %2682 = vmatmul.mubr.f32.gmra.mrb[0].mxu0 %v2602
    %v2683 = vpop.f32.mrb[0].mxu0
    %v2684 = vadd.f32 0.0, %v2683
    %v2685 = vpop.f32.mrb[0].mxu0
    %2686 = vmatprep.mubr.f32.mxu0 0.0
    %2687 = vmatmul.mubr.f32.gmra.mrb[0].mxu0 %v2605
    %v2688 = vpop.f32.mrb[0].mxu0
    %v2689 = vadd.f32 0.0, %v2688
    %v2690 = vpop.f32.mrb[0].mxu0
    %2691 = vdwg.mxu0
    %2692 = vrot.lane.b32.xlu0 %v182, 96
    %v2693 = vpop.permute.xlu0 %2692
    %2694 = vrot.lane.b32.xlu0 %v187, 96
    %v2695 = vpop.permute.xlu0 %2694
    %2698 = vxpose.xlu0.b32.start [1/16] %v2693, 128
    %2699 = vxpose.xlu0.b32.cont [2/16] %v2695, 128
    %2700 = vxpose.xlu0.b32.cont [3/16] 0.0, 128
    %2701 = vxpose.xlu0.b32.cont [4/16] 0.0, 128
    %2702 = vxpose.xlu0.b32.cont [5/16] 0.0, 128
    %2703 = vxpose.xlu0.b32.cont [6/16] 0.0, 128
    %2704 = vxpose.xlu0.b32.cont [7/16] 0.0, 128
    %2705 = vxpose.xlu0.b32.cont [8/16] 0.0, 128
    %2706 = vxpose.xlu0.b32.cont [9/16] 0.0, 128
    %2707 = vxpose.xlu0.b32.cont [10/16] 0.0, 128
    %2708 = vxpose.xlu0.b32.cont [11/16] 0.0, 128
    %2709 = vxpose.xlu0.b32.cont [12/16] 0.0, 128
    %2710 = vxpose.xlu0.b32.cont [13/16] 0.0, 128
    %2711 = vxpose.xlu0.b32.cont [14/16] 0.0, 128
    %2712 = vxpose.xlu0.b32.cont [15/16] 0.0, 128
    %2713 = vxpose.xlu0.b32.end [16/16] 0.0, 128
    %v2714 = vpop.trf.xlu0
    %v2715 = vpop.trf.xlu0
    %v2716 = vpop.trf.xlu0
    %v2717 = vpop.trf.xlu0
    %v2718 = vpop.trf.xlu0
    %v2719 = vpop.trf.xlu0
    %v2720 = vpop.trf.xlu0
    %v2721 = vpop.trf.xlu0
    %v2722 = vpop.trf.xlu0
    %v2723 = vpop.trf.xlu0
    %v2724 = vpop.trf.xlu0
    %v2725 = vpop.trf.xlu0
    %v2726 = vpop.trf.xlu0
    %v2727 = vpop.trf.xlu0
    %v2728 = vpop.trf.xlu0
    %v2729 = vpop.trf.xlu0
    %v2731 = vsel %vm232, %v2714, 0
    %v2734 = vsel %vm232, %v2715, 0
    %v2737 = vsel %vm232, %v2716, 0
    %v2740 = vsel %vm232, %v2717, 0
    %2742 = vmatprep.subr.mxu0 0.0
    %2743 = vmatpush1.msra.mxu0 %v2693
    %2744 = vmatprep.subr.mxu0 0.0
    %2745 = vmatpush1.msra.mxu0 %v2695
    %2746 = vmatprep.subr.mxu0 0.0
    %2747 = vmatpush1.msra.mxu0 0.0
    %2748 = vmatprep.subr.mxu0 0.0
    %2749 = vmatpush1.msra.mxu0 0.0
    %2750 = vmatprep.subr.mxu0 0.0
    %2751 = vmatpush1.msra.mxu0 0.0
    %2752 = vmatprep.subr.mxu0 0.0
    %2753 = vmatpush1.msra.mxu0 0.0
    %2754 = vmatprep.subr.mxu0 0.0
    %2755 = vmatpush1.msra.mxu0 0.0
    %2756 = vmatprep.subr.mxu0 0.0
    %2757 = vmatpush1.msra.mxu0 0.0
    %2758 = vmatprep.subr.mxu0 0.0
    %2759 = vmatpush1.msra.mxu0 0.0
    %2760 = vmatprep.subr.mxu0 0.0
    %2761 = vmatpush1.msra.mxu0 0.0
    %2762 = vmatprep.subr.mxu0 0.0
    %2763 = vmatpush1.msra.mxu0 0.0
    %2764 = vmatprep.subr.mxu0 0.0
    %2765 = vmatpush1.msra.mxu0 0.0
    %2766 = vmatprep.subr.mxu0 0.0
    %2767 = vmatpush1.msra.mxu0 0.0
    %2768 = vmatprep.subr.mxu0 0.0
    %2769 = vmatpush1.msra.mxu0 0.0
    %2770 = vmatprep.subr.mxu0 0.0
    %2771 = vmatpush1.msra.mxu0 0.0
    %2772 = vmatprep.subr.mxu0 0.0
    %2773 = vmatpush1.msra.mxu0 0.0
    %2774 = vmatprep.subr.mxu0 0.0
    %2775 = vmatpush1.msra.mxu0 0.0
    %2776 = vmatprep.subr.mxu0 0.0
    %2777 = vmatpush1.msra.mxu0 0.0
    %2778 = vmatprep.subr.mxu0 0.0
    %2779 = vmatpush1.msra.mxu0 0.0
    %2780 = vmatprep.subr.mxu0 0.0
    %2781 = vmatpush1.msra.mxu0 0.0
    %2782 = vmatprep.subr.mxu0 0.0
    %2783 = vmatpush1.msra.mxu0 0.0
    %2784 = vmatprep.subr.mxu0 0.0
    %2785 = vmatpush1.msra.mxu0 0.0
    %2786 = vmatprep.subr.mxu0 0.0
    %2787 = vmatpush1.msra.mxu0 0.0
    %2788 = vmatprep.subr.mxu0 0.0
    %2789 = vmatpush1.msra.mxu0 0.0
    %2790 = vmatprep.subr.mxu0 0.0
    %2791 = vmatpush1.msra.mxu0 0.0
    %2792 = vmatprep.subr.mxu0 0.0
    %2793 = vmatpush1.msra.mxu0 0.0
    %2794 = vmatprep.subr.mxu0 0.0
    %2795 = vmatpush1.msra.mxu0 0.0
    %2796 = vmatprep.subr.mxu0 0.0
    %2797 = vmatpush1.msra.mxu0 0.0
    %2798 = vmatprep.subr.mxu0 0.0
    %2799 = vmatpush1.msra.mxu0 0.0
    %2800 = vmatprep.subr.mxu0 0.0
    %2801 = vmatpush1.msra.mxu0 0.0
    %2802 = vmatprep.subr.mxu0 0.0
    %2803 = vmatpush1.msra.mxu0 0.0
    %2804 = vmatprep.subr.mxu0 0.0
    %2805 = vmatpush1.msra.mxu0 0.0
    %2806 = vmatprep.mubr.f32.mxu0 0.0
    %2807 = vmatmul.mubr.f32.gmra.mrb[0].mxu0 %v2731
    %v2808 = vpop.f32.mrb[0].mxu0
    %v2809 = vadd.f32 0.0, %v2808
    %v2810 = vpop.f32.mrb[0].mxu0
    %2811 = vmatprep.mubr.f32.mxu0 0.0
    %2812 = vmatmul.mubr.f32.gmra.mrb[0].mxu0 %v2734
    %v2813 = vpop.f32.mrb[0].mxu0
    %v2814 = vadd.f32 0.0, %v2813
    %v2815 = vpop.f32.mrb[0].mxu0
    %2816 = vmatprep.mubr.f32.mxu0 0.0
    %2817 = vmatmul.mubr.f32.gmra.mrb[0].mxu0 %v2737
    %v2818 = vpop.f32.mrb[0].mxu0
    %v2819 = vadd.f32 0.0, %v2818
    %v2820 = vpop.f32.mrb[0].mxu0
    %2821 = vmatprep.mubr.f32.mxu0 0.0
    %2822 = vmatmul.mubr.f32.gmra.mrb[0].mxu0 %v2740
    %v2823 = vpop.f32.mrb[0].mxu0
    %v2824 = vadd.f32 0.0, %v2823
    %v2825 = vpop.f32.mrb[0].mxu0
    %2826 = vdwg.mxu0
    %2827 = vrot.lane.b32.xlu0 %v192, 96
    %v2828 = vpop.permute.xlu0 %2827
    %2829 = vrot.lane.b32.xlu0 %v197, 96
    %v2830 = vpop.permute.xlu0 %2829
    %2833 = vxpose.xlu0.b32.start [1/16] %v2828, 128
    %2834 = vxpose.xlu0.b32.cont [2/16] %v2830, 128
    %2835 = vxpose.xlu0.b32.cont [3/16] 0.0, 128
    %2836 = vxpose.xlu0.b32.cont [4/16] 0.0, 128
    %2837 = vxpose.xlu0.b32.cont [5/16] 0.0, 128
    %2838 = vxpose.xlu0.b32.cont [6/16] 0.0, 128
    %2839 = vxpose.xlu0.b32.cont [7/16] 0.0, 128
    %2840 = vxpose.xlu0.b32.cont [8/16] 0.0, 128
    %2841 = vxpose.xlu0.b32.cont [9/16] 0.0, 128
    %2842 = vxpose.xlu0.b32.cont [10/16] 0.0, 128
    %2843 = vxpose.xlu0.b32.cont [11/16] 0.0, 128
    %2844 = vxpose.xlu0.b32.cont [12/16] 0.0, 128
    %2845 = vxpose.xlu0.b32.cont [13/16] 0.0, 128
    %2846 = vxpose.xlu0.b32.cont [14/16] 0.0, 128
    %2847 = vxpose.xlu0.b32.cont [15/16] 0.0, 128
    %2848 = vxpose.xlu0.b32.end [16/16] 0.0, 128
    %v2849 = vpop.trf.xlu0
    %v2850 = vpop.trf.xlu0
    %v2851 = vpop.trf.xlu0
    %v2852 = vpop.trf.xlu0
    %v2853 = vpop.trf.xlu0
    %v2854 = vpop.trf.xlu0
    %v2855 = vpop.trf.xlu0
    %v2856 = vpop.trf.xlu0
    %v2857 = vpop.trf.xlu0
    %v2858 = vpop.trf.xlu0
    %v2859 = vpop.trf.xlu0
    %v2860 = vpop.trf.xlu0
    %v2861 = vpop.trf.xlu0
    %v2862 = vpop.trf.xlu0
    %v2863 = vpop.trf.xlu0
    %v2864 = vpop.trf.xlu0
    %v2866 = vsel %vm232, %v2849, 0
    %v2869 = vsel %vm232, %v2850, 0
    %v2872 = vsel %vm232, %v2851, 0
    %v2875 = vsel %vm232, %v2852, 0
    %2877 = vmatprep.subr.mxu0 0.0
    %2878 = vmatpush1.msra.mxu0 %v2828
    %2879 = vmatprep.subr.mxu0 0.0
    %2880 = vmatpush1.msra.mxu0 %v2830
    %2881 = vmatprep.subr.mxu0 0.0
    %2882 = vmatpush1.msra.mxu0 0.0
    %2883 = vmatprep.subr.mxu0 0.0
    %2884 = vmatpush1.msra.mxu0 0.0
    %2885 = vmatprep.subr.mxu0 0.0
    %2886 = vmatpush1.msra.mxu0 0.0
    %2887 = vmatprep.subr.mxu0 0.0
    %2888 = vmatpush1.msra.mxu0 0.0
    %2889 = vmatprep.subr.mxu0 0.0
    %2890 = vmatpush1.msra.mxu0 0.0
    %2891 = vmatprep.subr.mxu0 0.0
    %2892 = vmatpush1.msra.mxu0 0.0
    %2893 = vmatprep.subr.mxu0 0.0
    %2894 = vmatpush1.msra.mxu0 0.0
    %2895 = vmatprep.subr.mxu0 0.0
    %2896 = vmatpush1.msra.mxu0 0.0
    %2897 = vmatprep.subr.mxu0 0.0
    %2898 = vmatpush1.msra.mxu0 0.0
    %2899 = vmatprep.subr.mxu0 0.0
    %2900 = vmatpush1.msra.mxu0 0.0
    %2901 = vmatprep.subr.mxu0 0.0
    %2902 = vmatpush1.msra.mxu0 0.0
    %2903 = vmatprep.subr.mxu0 0.0
    %2904 = vmatpush1.msra.mxu0 0.0
    %2905 = vmatprep.subr.mxu0 0.0
    %2906 = vmatpush1.msra.mxu0 0.0
    %2907 = vmatprep.subr.mxu0 0.0
    %2908 = vmatpush1.msra.mxu0 0.0
    %2909 = vmatprep.subr.mxu0 0.0
    %2910 = vmatpush1.msra.mxu0 0.0
    %2911 = vmatprep.subr.mxu0 0.0
    %2912 = vmatpush1.msra.mxu0 0.0
    %2913 = vmatprep.subr.mxu0 0.0
    %2914 = vmatpush1.msra.mxu0 0.0
    %2915 = vmatprep.subr.mxu0 0.0
    %2916 = vmatpush1.msra.mxu0 0.0
    %2917 = vmatprep.subr.mxu0 0.0
    %2918 = vmatpush1.msra.mxu0 0.0
    %2919 = vmatprep.subr.mxu0 0.0
    %2920 = vmatpush1.msra.mxu0 0.0
    %2921 = vmatprep.subr.mxu0 0.0
    %2922 = vmatpush1.msra.mxu0 0.0
    %2923 = vmatprep.subr.mxu0 0.0
    %2924 = vmatpush1.msra.mxu0 0.0
    %2925 = vmatprep.subr.mxu0 0.0
    %2926 = vmatpush1.msra.mxu0 0.0
    %2927 = vmatprep.subr.mxu0 0.0
    %2928 = vmatpush1.msra.mxu0 0.0
    %2929 = vmatprep.subr.mxu0 0.0
    %2930 = vmatpush1.msra.mxu0 0.0
    %2931 = vmatprep.subr.mxu0 0.0
    %2932 = vmatpush1.msra.mxu0 0.0
    %2933 = vmatprep.subr.mxu0 0.0
    %2934 = vmatpush1.msra.mxu0 0.0
    %2935 = vmatprep.subr.mxu0 0.0
    %2936 = vmatpush1.msra.mxu0 0.0
    %2937 = vmatprep.subr.mxu0 0.0
    %2938 = vmatpush1.msra.mxu0 0.0
    %2939 = vmatprep.subr.mxu0 0.0
    %2940 = vmatpush1.msra.mxu0 0.0
    %2941 = vmatprep.mubr.f32.mxu0 0.0
    %2942 = vmatmul.mubr.f32.gmra.mrb[0].mxu0 %v2866
    %v2943 = vpop.f32.mrb[0].mxu0
    %v2944 = vadd.f32 0.0, %v2943
    %v2945 = vpop.f32.mrb[0].mxu0
    %2946 = vmatprep.mubr.f32.mxu0 0.0
    %2947 = vmatmul.mubr.f32.gmra.mrb[0].mxu0 %v2869
    %v2948 = vpop.f32.mrb[0].mxu0
    %v2949 = vadd.f32 0.0, %v2948
    %v2950 = vpop.f32.mrb[0].mxu0
    %2951 = vmatprep.mubr.f32.mxu0 0.0
    %2952 = vmatmul.mubr.f32.gmra.mrb[0].mxu0 %v2872
    %v2953 = vpop.f32.mrb[0].mxu0
    %v2954 = vadd.f32 0.0, %v2953
    %v2955 = vpop.f32.mrb[0].mxu0
    %2956 = vmatprep.mubr.f32.mxu0 0.0
    %2957 = vmatmul.mubr.f32.gmra.mrb[0].mxu0 %v2875
    %v2958 = vpop.f32.mrb[0].mxu0
    %v2959 = vadd.f32 0.0, %v2958
    %v2960 = vpop.f32.mrb[0].mxu0
    %2961 = vdwg.mxu0
    %v2962 = vsel %vm1233, %v1883, 0
    %v2964 = vsel %vm1233, %v1885, 0
    %2966 = vmatprep.subr.mxu0 0.0
    %2967 = vmatpush1.msra.mxu0 %v1999
    %2968 = vmatprep.subr.mxu0 0.0
    %2969 = vmatpush1.msra.mxu0 %v2004
    %2970 = vmatprep.subr.mxu0 0.0
    %2971 = vmatpush1.msra.mxu0 %v2009
    %2972 = vmatprep.subr.mxu0 0.0
    %2973 = vmatpush1.msra.mxu0 %v2014
    %2974 = vmatprep.subr.mxu0 0.0
    %2975 = vmatpush1.msra.mxu0 0.0
    %2976 = vmatprep.subr.mxu0 0.0
    %2977 = vmatpush1.msra.mxu0 0.0
    %2978 = vmatprep.subr.mxu0 0.0
    %2979 = vmatpush1.msra.mxu0 0.0
    %2980 = vmatprep.subr.mxu0 0.0
    %2981 = vmatpush1.msra.mxu0 0.0
    %2982 = vmatprep.subr.mxu0 0.0
    %2983 = vmatpush1.msra.mxu0 0.0
    %2984 = vmatprep.subr.mxu0 0.0
    %2985 = vmatpush1.msra.mxu0 0.0
    %2986 = vmatprep.subr.mxu0 0.0
    %2987 = vmatpush1.msra.mxu0 0.0
    %2988 = vmatprep.subr.mxu0 0.0
    %2989 = vmatpush1.msra.mxu0 0.0
    %2990 = vmatprep.subr.mxu0 0.0
    %2991 = vmatpush1.msra.mxu0 0.0
    %2992 = vmatprep.subr.mxu0 0.0
    %2993 = vmatpush1.msra.mxu0 0.0
    %2994 = vmatprep.subr.mxu0 0.0
    %2995 = vmatpush1.msra.mxu0 0.0
    %2996 = vmatprep.subr.mxu0 0.0
    %2997 = vmatpush1.msra.mxu0 0.0
    %2998 = vmatprep.subr.mxu0 0.0
    %2999 = vmatpush1.msra.mxu0 0.0
    %3000 = vmatprep.subr.mxu0 0.0
    %3001 = vmatpush1.msra.mxu0 0.0
    %3002 = vmatprep.subr.mxu0 0.0
    %3003 = vmatpush1.msra.mxu0 0.0
    %3004 = vmatprep.subr.mxu0 0.0
    %3005 = vmatpush1.msra.mxu0 0.0
    %3006 = vmatprep.subr.mxu0 0.0
    %3007 = vmatpush1.msra.mxu0 0.0
    %3008 = vmatprep.subr.mxu0 0.0
    %3009 = vmatpush1.msra.mxu0 0.0
    %3010 = vmatprep.subr.mxu0 0.0
    %3011 = vmatpush1.msra.mxu0 0.0
    %3012 = vmatprep.subr.mxu0 0.0
    %3013 = vmatpush1.msra.mxu0 0.0
    %3014 = vmatprep.subr.mxu0 0.0
    %3015 = vmatpush1.msra.mxu0 0.0
    %3016 = vmatprep.subr.mxu0 0.0
    %3017 = vmatpush1.msra.mxu0 0.0
    %3018 = vmatprep.subr.mxu0 0.0
    %3019 = vmatpush1.msra.mxu0 0.0
    %3020 = vmatprep.subr.mxu0 0.0
    %3021 = vmatpush1.msra.mxu0 0.0
    %3022 = vmatprep.subr.mxu0 0.0
    %3023 = vmatpush1.msra.mxu0 0.0
    %3024 = vmatprep.subr.mxu0 0.0
    %3025 = vmatpush1.msra.mxu0 0.0
    %3026 = vmatprep.subr.mxu0 0.0
    %3027 = vmatpush1.msra.mxu0 0.0
    %3028 = vmatprep.subr.mxu0 0.0
    %3029 = vmatpush1.msra.mxu0 0.0
    %3030 = vmatprep.mubr.f32.mxu0 0.0
    %3031 = vmatmul.mubr.f32.gmra.mrb[0].mxu0 %v2962
    %v3032 = vpop.f32.mrb[0].mxu0
    %v3033 = vadd.f32 0.0, %v3032
    %v3034 = vpop.f32.mrb[0].mxu0
    %3035 = vmatprep.mubr.f32.mxu0 0.0
    %3036 = vmatmul.mubr.f32.gmra.mrb[0].mxu0 %v2964
    %v3037 = vpop.f32.mrb[0].mxu0
    %v3038 = vadd.f32 0.0, %v3037
    %v3039 = vpop.f32.mrb[0].mxu0
    %3040 = vdwg.mxu0
    %v3041 = vsel %vm1233, %v2018, 0
    %v3043 = vsel %vm1233, %v2020, 0
    %3045 = vmatprep.subr.mxu0 0.0
    %3046 = vmatpush1.msra.mxu0 %v2134
    %3047 = vmatprep.subr.mxu0 0.0
    %3048 = vmatpush1.msra.mxu0 %v2139
    %3049 = vmatprep.subr.mxu0 0.0
    %3050 = vmatpush1.msra.mxu0 %v2144
    %3051 = vmatprep.subr.mxu0 0.0
    %3052 = vmatpush1.msra.mxu0 %v2149
    %3053 = vmatprep.subr.mxu0 0.0
    %3054 = vmatpush1.msra.mxu0 0.0
    %3055 = vmatprep.subr.mxu0 0.0
    %3056 = vmatpush1.msra.mxu0 0.0
    %3057 = vmatprep.subr.mxu0 0.0
    %3058 = vmatpush1.msra.mxu0 0.0
    %3059 = vmatprep.subr.mxu0 0.0
    %3060 = vmatpush1.msra.mxu0 0.0
    %3061 = vmatprep.subr.mxu0 0.0
    %3062 = vmatpush1.msra.mxu0 0.0
    %3063 = vmatprep.subr.mxu0 0.0
    %3064 = vmatpush1.msra.mxu0 0.0
    %3065 = vmatprep.subr.mxu0 0.0
    %3066 = vmatpush1.msra.mxu0 0.0
    %3067 = vmatprep.subr.mxu0 0.0
    %3068 = vmatpush1.msra.mxu0 0.0
    %3069 = vmatprep.subr.mxu0 0.0
    %3070 = vmatpush1.msra.mxu0 0.0
    %3071 = vmatprep.subr.mxu0 0.0
    %3072 = vmatpush1.msra.mxu0 0.0
    %3073 = vmatprep.subr.mxu0 0.0
    %3074 = vmatpush1.msra.mxu0 0.0
    %3075 = vmatprep.subr.mxu0 0.0
    %3076 = vmatpush1.msra.mxu0 0.0
    %3077 = vmatprep.subr.mxu0 0.0
    %3078 = vmatpush1.msra.mxu0 0.0
    %3079 = vmatprep.subr.mxu0 0.0
    %3080 = vmatpush1.msra.mxu0 0.0
    %3081 = vmatprep.subr.mxu0 0.0
    %3082 = vmatpush1.msra.mxu0 0.0
    %3083 = vmatprep.subr.mxu0 0.0
    %3084 = vmatpush1.msra.mxu0 0.0
    %3085 = vmatprep.subr.mxu0 0.0
    %3086 = vmatpush1.msra.mxu0 0.0
    %3087 = vmatprep.subr.mxu0 0.0
    %3088 = vmatpush1.msra.mxu0 0.0
    %3089 = vmatprep.subr.mxu0 0.0
    %3090 = vmatpush1.msra.mxu0 0.0
    %3091 = vmatprep.subr.mxu0 0.0
    %3092 = vmatpush1.msra.mxu0 0.0
    %3093 = vmatprep.subr.mxu0 0.0
    %3094 = vmatpush1.msra.mxu0 0.0
    %3095 = vmatprep.subr.mxu0 0.0
    %3096 = vmatpush1.msra.mxu0 0.0
    %3097 = vmatprep.subr.mxu0 0.0
    %3098 = vmatpush1.msra.mxu0 0.0
    %3099 = vmatprep.subr.mxu0 0.0
    %3100 = vmatpush1.msra.mxu0 0.0
    %3101 = vmatprep.subr.mxu0 0.0
    %3102 = vmatpush1.msra.mxu0 0.0
    %3103 = vmatprep.subr.mxu0 0.0
    %3104 = vmatpush1.msra.mxu0 0.0
    %3105 = vmatprep.subr.mxu0 0.0
    %3106 = vmatpush1.msra.mxu0 0.0
    %3107 = vmatprep.subr.mxu0 0.0
    %3108 = vmatpush1.msra.mxu0 0.0
    %3109 = vmatprep.mubr.f32.mxu0 0.0
    %3110 = vmatmul.mubr.f32.gmra.mrb[0].mxu0 %v3041
    %v3111 = vpop.f32.mrb[0].mxu0
    %v3112 = vadd.f32 0.0, %v3111
    %v3113 = vpop.f32.mrb[0].mxu0
    %3114 = vmatprep.mubr.f32.mxu0 0.0
    %3115 = vmatmul.mubr.f32.gmra.mrb[0].mxu0 %v3043
    %v3116 = vpop.f32.mrb[0].mxu0
    %v3117 = vadd.f32 0.0, %v3116
    %v3118 = vpop.f32.mrb[0].mxu0
    %3119 = vdwg.mxu0
    %v3120 = vsel %vm1233, %v2153, 0
    %v3122 = vsel %vm1233, %v2155, 0
    %3124 = vmatprep.subr.mxu0 0.0
    %3125 = vmatpush1.msra.mxu0 %v2269
    %3126 = vmatprep.subr.mxu0 0.0
    %3127 = vmatpush1.msra.mxu0 %v2274
    %3128 = vmatprep.subr.mxu0 0.0
    %3129 = vmatpush1.msra.mxu0 %v2279
    %3130 = vmatprep.subr.mxu0 0.0
    %3131 = vmatpush1.msra.mxu0 %v2284
    %3132 = vmatprep.subr.mxu0 0.0
    %3133 = vmatpush1.msra.mxu0 0.0
    %3134 = vmatprep.subr.mxu0 0.0
    %3135 = vmatpush1.msra.mxu0 0.0
    %3136 = vmatprep.subr.mxu0 0.0
    %3137 = vmatpush1.msra.mxu0 0.0
    %3138 = vmatprep.subr.mxu0 0.0
    %3139 = vmatpush1.msra.mxu0 0.0
    %3140 = vmatprep.subr.mxu0 0.0
    %3141 = vmatpush1.msra.mxu0 0.0
    %3142 = vmatprep.subr.mxu0 0.0
    %3143 = vmatpush1.msra.mxu0 0.0
    %3144 = vmatprep.subr.mxu0 0.0
    %3145 = vmatpush1.msra.mxu0 0.0
    %3146 = vmatprep.subr.mxu0 0.0
    %3147 = vmatpush1.msra.mxu0 0.0
    %3148 = vmatprep.subr.mxu0 0.0
    %3149 = vmatpush1.msra.mxu0 0.0
    %3150 = vmatprep.subr.mxu0 0.0
    %3151 = vmatpush1.msra.mxu0 0.0
    %3152 = vmatprep.subr.mxu0 0.0
    %3153 = vmatpush1.msra.mxu0 0.0
    %3154 = vmatprep.subr.mxu0 0.0
    %3155 = vmatpush1.msra.mxu0 0.0
    %3156 = vmatprep.subr.mxu0 0.0
    %3157 = vmatpush1.msra.mxu0 0.0
    %3158 = vmatprep.subr.mxu0 0.0
    %3159 = vmatpush1.msra.mxu0 0.0
    %3160 = vmatprep.subr.mxu0 0.0
    %3161 = vmatpush1.msra.mxu0 0.0
    %3162 = vmatprep.subr.mxu0 0.0
    %3163 = vmatpush1.msra.mxu0 0.0
    %3164 = vmatprep.subr.mxu0 0.0
    %3165 = vmatpush1.msra.mxu0 0.0
    %3166 = vmatprep.subr.mxu0 0.0
    %3167 = vmatpush1.msra.mxu0 0.0
    %3168 = vmatprep.subr.mxu0 0.0
    %3169 = vmatpush1.msra.mxu0 0.0
    %3170 = vmatprep.subr.mxu0 0.0
    %3171 = vmatpush1.msra.mxu0 0.0
    %3172 = vmatprep.subr.mxu0 0.0
    %3173 = vmatpush1.msra.mxu0 0.0
    %3174 = vmatprep.subr.mxu0 0.0
    %3175 = vmatpush1.msra.mxu0 0.0
    %3176 = vmatprep.subr.mxu0 0.0
    %3177 = vmatpush1.msra.mxu0 0.0
    %3178 = vmatprep.subr.mxu0 0.0
    %3179 = vmatpush1.msra.mxu0 0.0
    %3180 = vmatprep.subr.mxu0 0.0
    %3181 = vmatpush1.msra.mxu0 0.0
    %3182 = vmatprep.subr.mxu0 0.0
    %3183 = vmatpush1.msra.mxu0 0.0
    %3184 = vmatprep.subr.mxu0 0.0
    %3185 = vmatpush1.msra.mxu0 0.0
    %3186 = vmatprep.subr.mxu0 0.0
    %3187 = vmatpush1.msra.mxu0 0.0
    %3188 = vmatprep.mubr.f32.mxu0 0.0
    %3189 = vmatmul.mubr.f32.gmra.mrb[0].mxu0 %v3120
    %v3190 = vpop.f32.mrb[0].mxu0
    %v3191 = vadd.f32 0.0, %v3190
    %v3192 = vpop.f32.mrb[0].mxu0
    %3193 = vmatprep.mubr.f32.mxu0 0.0
    %3194 = vmatmul.mubr.f32.gmra.mrb[0].mxu0 %v3122
    %v3195 = vpop.f32.mrb[0].mxu0
    %v3196 = vadd.f32 0.0, %v3195
    %v3197 = vpop.f32.mrb[0].mxu0
    %3198 = vdwg.mxu0
    %v3199 = vsel %vm1233, %v2288, 0
    %v3201 = vsel %vm1233, %v2290, 0
    %3203 = vmatprep.subr.mxu0 0.0
    %3204 = vmatpush1.msra.mxu0 %v2404
    %3205 = vmatprep.subr.mxu0 0.0
    %3206 = vmatpush1.msra.mxu0 %v2409
    %3207 = vmatprep.subr.mxu0 0.0
    %3208 = vmatpush1.msra.mxu0 %v2414
    %3209 = vmatprep.subr.mxu0 0.0
    %3210 = vmatpush1.msra.mxu0 %v2419
    %3211 = vmatprep.subr.mxu0 0.0
    %3212 = vmatpush1.msra.mxu0 0.0
    %3213 = vmatprep.subr.mxu0 0.0
    %3214 = vmatpush1.msra.mxu0 0.0
    %3215 = vmatprep.subr.mxu0 0.0
    %3216 = vmatpush1.msra.mxu0 0.0
    %3217 = vmatprep.subr.mxu0 0.0
    %3218 = vmatpush1.msra.mxu0 0.0
    %3219 = vmatprep.subr.mxu0 0.0
    %3220 = vmatpush1.msra.mxu0 0.0
    %3221 = vmatprep.subr.mxu0 0.0
    %3222 = vmatpush1.msra.mxu0 0.0
    %3223 = vmatprep.subr.mxu0 0.0
    %3224 = vmatpush1.msra.mxu0 0.0
    %3225 = vmatprep.subr.mxu0 0.0
    %3226 = vmatpush1.msra.mxu0 0.0
    %3227 = vmatprep.subr.mxu0 0.0
    %3228 = vmatpush1.msra.mxu0 0.0
    %3229 = vmatprep.subr.mxu0 0.0
    %3230 = vmatpush1.msra.mxu0 0.0
    %3231 = vmatprep.subr.mxu0 0.0
    %3232 = vmatpush1.msra.mxu0 0.0
    %3233 = vmatprep.subr.mxu0 0.0
    %3234 = vmatpush1.msra.mxu0 0.0
    %3235 = vmatprep.subr.mxu0 0.0
    %3236 = vmatpush1.msra.mxu0 0.0
    %3237 = vmatprep.subr.mxu0 0.0
    %3238 = vmatpush1.msra.mxu0 0.0
    %3239 = vmatprep.subr.mxu0 0.0
    %3240 = vmatpush1.msra.mxu0 0.0
    %3241 = vmatprep.subr.mxu0 0.0
    %3242 = vmatpush1.msra.mxu0 0.0
    %3243 = vmatprep.subr.mxu0 0.0
    %3244 = vmatpush1.msra.mxu0 0.0
    %3245 = vmatprep.subr.mxu0 0.0
    %3246 = vmatpush1.msra.mxu0 0.0
    %3247 = vmatprep.subr.mxu0 0.0
    %3248 = vmatpush1.msra.mxu0 0.0
    %3249 = vmatprep.subr.mxu0 0.0
    %3250 = vmatpush1.msra.mxu0 0.0
    %3251 = vmatprep.subr.mxu0 0.0
    %3252 = vmatpush1.msra.mxu0 0.0
    %3253 = vmatprep.subr.mxu0 0.0
    %3254 = vmatpush1.msra.mxu0 0.0
    %3255 = vmatprep.subr.mxu0 0.0
    %3256 = vmatpush1.msra.mxu0 0.0
    %3257 = vmatprep.subr.mxu0 0.0
    %3258 = vmatpush1.msra.mxu0 0.0
    %3259 = vmatprep.subr.mxu0 0.0
    %3260 = vmatpush1.msra.mxu0 0.0
    %3261 = vmatprep.subr.mxu0 0.0
    %3262 = vmatpush1.msra.mxu0 0.0
    %3263 = vmatprep.subr.mxu0 0.0
    %3264 = vmatpush1.msra.mxu0 0.0
    %3265 = vmatprep.subr.mxu0 0.0
    %3266 = vmatpush1.msra.mxu0 0.0
    %3267 = vmatprep.mubr.f32.mxu0 0.0
    %3268 = vmatmul.mubr.f32.gmra.mrb[0].mxu0 %v3199
    %v3269 = vpop.f32.mrb[0].mxu0
    %v3270 = vadd.f32 0.0, %v3269
    %v3271 = vpop.f32.mrb[0].mxu0
    %3272 = vmatprep.mubr.f32.mxu0 0.0
    %3273 = vmatmul.mubr.f32.gmra.mrb[0].mxu0 %v3201
    %v3274 = vpop.f32.mrb[0].mxu0
    %v3275 = vadd.f32 0.0, %v3274
    %v3276 = vpop.f32.mrb[0].mxu0
    %3277 = vdwg.mxu0
    %v3278 = vsel %vm1233, %v2423, 0
    %v3280 = vsel %vm1233, %v2425, 0
    %3282 = vmatprep.subr.mxu0 0.0
    %3283 = vmatpush1.msra.mxu0 %v2539
    %3284 = vmatprep.subr.mxu0 0.0
    %3285 = vmatpush1.msra.mxu0 %v2544
    %3286 = vmatprep.subr.mxu0 0.0
    %3287 = vmatpush1.msra.mxu0 %v2549
    %3288 = vmatprep.subr.mxu0 0.0
    %3289 = vmatpush1.msra.mxu0 %v2554
    %3290 = vmatprep.subr.mxu0 0.0
    %3291 = vmatpush1.msra.mxu0 0.0
    %3292 = vmatprep.subr.mxu0 0.0
    %3293 = vmatpush1.msra.mxu0 0.0
    %3294 = vmatprep.subr.mxu0 0.0
    %3295 = vmatpush1.msra.mxu0 0.0
    %3296 = vmatprep.subr.mxu0 0.0
    %3297 = vmatpush1.msra.mxu0 0.0
    %3298 = vmatprep.subr.mxu0 0.0
    %3299 = vmatpush1.msra.mxu0 0.0
    %3300 = vmatprep.subr.mxu0 0.0
    %3301 = vmatpush1.msra.mxu0 0.0
    %3302 = vmatprep.subr.mxu0 0.0
    %3303 = vmatpush1.msra.mxu0 0.0
    %3304 = vmatprep.subr.mxu0 0.0
    %3305 = vmatpush1.msra.mxu0 0.0
    %3306 = vmatprep.subr.mxu0 0.0
    %3307 = vmatpush1.msra.mxu0 0.0
    %3308 = vmatprep.subr.mxu0 0.0
    %3309 = vmatpush1.msra.mxu0 0.0
    %3310 = vmatprep.subr.mxu0 0.0
    %3311 = vmatpush1.msra.mxu0 0.0
    %3312 = vmatprep.subr.mxu0 0.0
    %3313 = vmatpush1.msra.mxu0 0.0
    %3314 = vmatprep.subr.mxu0 0.0
    %3315 = vmatpush1.msra.mxu0 0.0
    %3316 = vmatprep.subr.mxu0 0.0
    %3317 = vmatpush1.msra.mxu0 0.0
    %3318 = vmatprep.subr.mxu0 0.0
    %3319 = vmatpush1.msra.mxu0 0.0
    %3320 = vmatprep.subr.mxu0 0.0
    %3321 = vmatpush1.msra.mxu0 0.0
    %3322 = vmatprep.subr.mxu0 0.0
    %3323 = vmatpush1.msra.mxu0 0.0
    %3324 = vmatprep.subr.mxu0 0.0
    %3325 = vmatpush1.msra.mxu0 0.0
    %3326 = vmatprep.subr.mxu0 0.0
    %3327 = vmatpush1.msra.mxu0 0.0
    %3328 = vmatprep.subr.mxu0 0.0
    %3329 = vmatpush1.msra.mxu0 0.0
    %3330 = vmatprep.subr.mxu0 0.0
    %3331 = vmatpush1.msra.mxu0 0.0
    %3332 = vmatprep.subr.mxu0 0.0
    %3333 = vmatpush1.msra.mxu0 0.0
    %3334 = vmatprep.subr.mxu0 0.0
    %3335 = vmatpush1.msra.mxu0 0.0
    %3336 = vmatprep.subr.mxu0 0.0
    %3337 = vmatpush1.msra.mxu0 0.0
    %3338 = vmatprep.subr.mxu0 0.0
    %3339 = vmatpush1.msra.mxu0 0.0
    %3340 = vmatprep.subr.mxu0 0.0
    %3341 = vmatpush1.msra.mxu0 0.0
    %3342 = vmatprep.subr.mxu0 0.0
    %3343 = vmatpush1.msra.mxu0 0.0
    %3344 = vmatprep.subr.mxu0 0.0
    %3345 = vmatpush1.msra.mxu0 0.0
    %3346 = vmatprep.mubr.f32.mxu0 0.0
    %3347 = vmatmul.mubr.f32.gmra.mrb[0].mxu0 %v3278
    %v3348 = vpop.f32.mrb[0].mxu0
    %v3349 = vadd.f32 0.0, %v3348
    %v3350 = vpop.f32.mrb[0].mxu0
    %3351 = vmatprep.mubr.f32.mxu0 0.0
    %3352 = vmatmul.mubr.f32.gmra.mrb[0].mxu0 %v3280
    %v3353 = vpop.f32.mrb[0].mxu0
    %v3354 = vadd.f32 0.0, %v3353
    %v3355 = vpop.f32.mrb[0].mxu0
    %3356 = vdwg.mxu0
    %v3357 = vsel %vm1233, %v2558, 0
    %v3359 = vsel %vm1233, %v2560, 0
    %3361 = vmatprep.subr.mxu0 0.0
    %3362 = vmatpush1.msra.mxu0 %v2674
    %3363 = vmatprep.subr.mxu0 0.0
    %3364 = vmatpush1.msra.mxu0 %v2679
    %3365 = vmatprep.subr.mxu0 0.0
    %3366 = vmatpush1.msra.mxu0 %v2684
    %3367 = vmatprep.subr.mxu0 0.0
    %3368 = vmatpush1.msra.mxu0 %v2689
    %3369 = vmatprep.subr.mxu0 0.0
    %3370 = vmatpush1.msra.mxu0 0.0
    %3371 = vmatprep.subr.mxu0 0.0
    %3372 = vmatpush1.msra.mxu0 0.0
    %3373 = vmatprep.subr.mxu0 0.0
    %3374 = vmatpush1.msra.mxu0 0.0
    %3375 = vmatprep.subr.mxu0 0.0
    %3376 = vmatpush1.msra.mxu0 0.0
    %3377 = vmatprep.subr.mxu0 0.0
    %3378 = vmatpush1.msra.mxu0 0.0
    %3379 = vmatprep.subr.mxu0 0.0
    %3380 = vmatpush1.msra.mxu0 0.0
    %3381 = vmatprep.subr.mxu0 0.0
    %3382 = vmatpush1.msra.mxu0 0.0
    %3383 = vmatprep.subr.mxu0 0.0
    %3384 = vmatpush1.msra.mxu0 0.0
    %3385 = vmatprep.subr.mxu0 0.0
    %3386 = vmatpush1.msra.mxu0 0.0
    %3387 = vmatprep.subr.mxu0 0.0
    %3388 = vmatpush1.msra.mxu0 0.0
    %3389 = vmatprep.subr.mxu0 0.0
    %3390 = vmatpush1.msra.mxu0 0.0
    %3391 = vmatprep.subr.mxu0 0.0
    %3392 = vmatpush1.msra.mxu0 0.0
    %3393 = vmatprep.subr.mxu0 0.0
    %3394 = vmatpush1.msra.mxu0 0.0
    %3395 = vmatprep.subr.mxu0 0.0
    %3396 = vmatpush1.msra.mxu0 0.0
    %3397 = vmatprep.subr.mxu0 0.0
    %3398 = vmatpush1.msra.mxu0 0.0
    %3399 = vmatprep.subr.mxu0 0.0
    %3400 = vmatpush1.msra.mxu0 0.0
    %3401 = vmatprep.subr.mxu0 0.0
    %3402 = vmatpush1.msra.mxu0 0.0
    %3403 = vmatprep.subr.mxu0 0.0
    %3404 = vmatpush1.msra.mxu0 0.0
    %3405 = vmatprep.subr.mxu0 0.0
    %3406 = vmatpush1.msra.mxu0 0.0
    %3407 = vmatprep.subr.mxu0 0.0
    %3408 = vmatpush1.msra.mxu0 0.0
    %3409 = vmatprep.subr.mxu0 0.0
    %3410 = vmatpush1.msra.mxu0 0.0
    %3411 = vmatprep.subr.mxu0 0.0
    %3412 = vmatpush1.msra.mxu0 0.0
    %3413 = vmatprep.subr.mxu0 0.0
    %3414 = vmatpush1.msra.mxu0 0.0
    %3415 = vmatprep.subr.mxu0 0.0
    %3416 = vmatpush1.msra.mxu0 0.0
    %3417 = vmatprep.subr.mxu0 0.0
    %3418 = vmatpush1.msra.mxu0 0.0
    %3419 = vmatprep.subr.mxu0 0.0
    %3420 = vmatpush1.msra.mxu0 0.0
    %3421 = vmatprep.subr.mxu0 0.0
    %3422 = vmatpush1.msra.mxu0 0.0
    %3423 = vmatprep.subr.mxu0 0.0
    %3424 = vmatpush1.msra.mxu0 0.0
    %3425 = vmatprep.mubr.f32.mxu0 0.0
    %3426 = vmatmul.mubr.f32.gmra.mrb[0].mxu0 %v3357
    %v3427 = vpop.f32.mrb[0].mxu0
    %v3428 = vadd.f32 0.0, %v3427
    %v3429 = vpop.f32.mrb[0].mxu0
    %3430 = vmatprep.mubr.f32.mxu0 0.0
    %3431 = vmatmul.mubr.f32.gmra.mrb[0].mxu0 %v3359
    %v3432 = vpop.f32.mrb[0].mxu0
    %v3433 = vadd.f32 0.0, %v3432
    %v3434 = vpop.f32.mrb[0].mxu0
    %3435 = vdwg.mxu0
    %v3436 = vsel %vm1233, %v2693, 0
    %v3438 = vsel %vm1233, %v2695, 0
    %3440 = vmatprep.subr.mxu0 0.0
    %3441 = vmatpush1.msra.mxu0 %v2809
    %3442 = vmatprep.subr.mxu0 0.0
    %3443 = vmatpush1.msra.mxu0 %v2814
    %3444 = vmatprep.subr.mxu0 0.0
    %3445 = vmatpush1.msra.mxu0 %v2819
    %3446 = vmatprep.subr.mxu0 0.0
    %3447 = vmatpush1.msra.mxu0 %v2824
    %3448 = vmatprep.subr.mxu0 0.0
    %3449 = vmatpush1.msra.mxu0 0.0
    %3450 = vmatprep.subr.mxu0 0.0
    %3451 = vmatpush1.msra.mxu0 0.0
    %3452 = vmatprep.subr.mxu0 0.0
    %3453 = vmatpush1.msra.mxu0 0.0
    %3454 = vmatprep.subr.mxu0 0.0
    %3455 = vmatpush1.msra.mxu0 0.0
    %3456 = vmatprep.subr.mxu0 0.0
    %3457 = vmatpush1.msra.mxu0 0.0
    %3458 = vmatprep.subr.mxu0 0.0
    %3459 = vmatpush1.msra.mxu0 0.0
    %3460 = vmatprep.subr.mxu0 0.0
    %3461 = vmatpush1.msra.mxu0 0.0
    %3462 = vmatprep.subr.mxu0 0.0
    %3463 = vmatpush1.msra.mxu0 0.0
    %3464 = vmatprep.subr.mxu0 0.0
    %3465 = vmatpush1.msra.mxu0 0.0
    %3466 = vmatprep.subr.mxu0 0.0
    %3467 = vmatpush1.msra.mxu0 0.0
    %3468 = vmatprep.subr.mxu0 0.0
    %3469 = vmatpush1.msra.mxu0 0.0
    %3470 = vmatprep.subr.mxu0 0.0
    %3471 = vmatpush1.msra.mxu0 0.0
    %3472 = vmatprep.subr.mxu0 0.0
    %3473 = vmatpush1.msra.mxu0 0.0
    %3474 = vmatprep.subr.mxu0 0.0
    %3475 = vmatpush1.msra.mxu0 0.0
    %3476 = vmatprep.subr.mxu0 0.0
    %3477 = vmatpush1.msra.mxu0 0.0
    %3478 = vmatprep.subr.mxu0 0.0
    %3479 = vmatpush1.msra.mxu0 0.0
    %3480 = vmatprep.subr.mxu0 0.0
    %3481 = vmatpush1.msra.mxu0 0.0
    %3482 = vmatprep.subr.mxu0 0.0
    %3483 = vmatpush1.msra.mxu0 0.0
    %3484 = vmatprep.subr.mxu0 0.0
    %3485 = vmatpush1.msra.mxu0 0.0
    %3486 = vmatprep.subr.mxu0 0.0
    %3487 = vmatpush1.msra.mxu0 0.0
    %3488 = vmatprep.subr.mxu0 0.0
    %3489 = vmatpush1.msra.mxu0 0.0
    %3490 = vmatprep.subr.mxu0 0.0
    %3491 = vmatpush1.msra.mxu0 0.0
    %3492 = vmatprep.subr.mxu0 0.0
    %3493 = vmatpush1.msra.mxu0 0.0
    %3494 = vmatprep.subr.mxu0 0.0
    %3495 = vmatpush1.msra.mxu0 0.0
    %3496 = vmatprep.subr.mxu0 0.0
    %3497 = vmatpush1.msra.mxu0 0.0
    %3498 = vmatprep.subr.mxu0 0.0
    %3499 = vmatpush1.msra.mxu0 0.0
    %3500 = vmatprep.subr.mxu0 0.0
    %3501 = vmatpush1.msra.mxu0 0.0
    %3502 = vmatprep.subr.mxu0 0.0
    %3503 = vmatpush1.msra.mxu0 0.0
    %3504 = vmatprep.mubr.f32.mxu0 0.0
    %3505 = vmatmul.mubr.f32.gmra.mrb[0].mxu0 %v3436
    %v3506 = vpop.f32.mrb[0].mxu0
    %v3507 = vadd.f32 0.0, %v3506
    %v3508 = vpop.f32.mrb[0].mxu0
    %3509 = vmatprep.mubr.f32.mxu0 0.0
    %3510 = vmatmul.mubr.f32.gmra.mrb[0].mxu0 %v3438
    %v3511 = vpop.f32.mrb[0].mxu0
    %v3512 = vadd.f32 0.0, %v3511
    %v3513 = vpop.f32.mrb[0].mxu0
    %3514 = vdwg.mxu0
    %v3515 = vsel %vm1233, %v2828, 0
    %v3517 = vsel %vm1233, %v2830, 0
    %3519 = vmatprep.subr.mxu0 0.0
    %3520 = vmatpush1.msra.mxu0 %v2944
    %3521 = vmatprep.subr.mxu0 0.0
    %3522 = vmatpush1.msra.mxu0 %v2949
    %3523 = vmatprep.subr.mxu0 0.0
    %3524 = vmatpush1.msra.mxu0 %v2954
    %3525 = vmatprep.subr.mxu0 0.0
    %3526 = vmatpush1.msra.mxu0 %v2959
    %3527 = vmatprep.subr.mxu0 0.0
    %3528 = vmatpush1.msra.mxu0 0.0
    %3529 = vmatprep.subr.mxu0 0.0
    %3530 = vmatpush1.msra.mxu0 0.0
    %3531 = vmatprep.subr.mxu0 0.0
    %3532 = vmatpush1.msra.mxu0 0.0
    %3533 = vmatprep.subr.mxu0 0.0
    %3534 = vmatpush1.msra.mxu0 0.0
    %3535 = vmatprep.subr.mxu0 0.0
    %3536 = vmatpush1.msra.mxu0 0.0
    %3537 = vmatprep.subr.mxu0 0.0
    %3538 = vmatpush1.msra.mxu0 0.0
    %3539 = vmatprep.subr.mxu0 0.0
    %3540 = vmatpush1.msra.mxu0 0.0
    %3541 = vmatprep.subr.mxu0 0.0
    %3542 = vmatpush1.msra.mxu0 0.0
    %3543 = vmatprep.subr.mxu0 0.0
    %3544 = vmatpush1.msra.mxu0 0.0
    %3545 = vmatprep.subr.mxu0 0.0
    %3546 = vmatpush1.msra.mxu0 0.0
    %3547 = vmatprep.subr.mxu0 0.0
    %3548 = vmatpush1.msra.mxu0 0.0
    %3549 = vmatprep.subr.mxu0 0.0
    %3550 = vmatpush1.msra.mxu0 0.0
    %3551 = vmatprep.subr.mxu0 0.0
    %3552 = vmatpush1.msra.mxu0 0.0
    %3553 = vmatprep.subr.mxu0 0.0
    %3554 = vmatpush1.msra.mxu0 0.0
    %3555 = vmatprep.subr.mxu0 0.0
    %3556 = vmatpush1.msra.mxu0 0.0
    %3557 = vmatprep.subr.mxu0 0.0
    %3558 = vmatpush1.msra.mxu0 0.0
    %3559 = vmatprep.subr.mxu0 0.0
    %3560 = vmatpush1.msra.mxu0 0.0
    %3561 = vmatprep.subr.mxu0 0.0
    %3562 = vmatpush1.msra.mxu0 0.0
    %3563 = vmatprep.subr.mxu0 0.0
    %3564 = vmatpush1.msra.mxu0 0.0
    %3565 = vmatprep.subr.mxu0 0.0
    %3566 = vmatpush1.msra.mxu0 0.0
    %3567 = vmatprep.subr.mxu0 0.0
    %3568 = vmatpush1.msra.mxu0 0.0
    %3569 = vmatprep.subr.mxu0 0.0
    %3570 = vmatpush1.msra.mxu0 0.0
    %3571 = vmatprep.subr.mxu0 0.0
    %3572 = vmatpush1.msra.mxu0 0.0
    %3573 = vmatprep.subr.mxu0 0.0
    %3574 = vmatpush1.msra.mxu0 0.0
    %3575 = vmatprep.subr.mxu0 0.0
    %3576 = vmatpush1.msra.mxu0 0.0
    %3577 = vmatprep.subr.mxu0 0.0
    %3578 = vmatpush1.msra.mxu0 0.0
    %3579 = vmatprep.subr.mxu0 0.0
    %3580 = vmatpush1.msra.mxu0 0.0
    %3581 = vmatprep.subr.mxu0 0.0
    %3582 = vmatpush1.msra.mxu0 0.0
    %3583 = vmatprep.mubr.f32.mxu0 0.0
    %3584 = vmatmul.mubr.f32.gmra.mrb[0].mxu0 %v3515
    %v3585 = vpop.f32.mrb[0].mxu0
    %v3586 = vadd.f32 0.0, %v3585
    %v3587 = vpop.f32.mrb[0].mxu0
    %3588 = vmatprep.mubr.f32.mxu0 0.0
    %3589 = vmatmul.mubr.f32.gmra.mrb[0].mxu0 %v3517
    %v3590 = vpop.f32.mrb[0].mxu0
    %v3591 = vadd.f32 0.0, %v3590
    %v3592 = vpop.f32.mrb[0].mxu0
    %3593 = vdwg.mxu0
    %3610 = vrot.lane.b32.xlu0 %v3033, 32
    %v3611 = vpop.permute.xlu0 %3610
    %3612 = vrot.lane.b32.xlu0 %v3038, 32
    %v3613 = vpop.permute.xlu0 %3612
    %3614 = vrot.lane.b32.xlu0 %v3112, 32
    %v3615 = vpop.permute.xlu0 %3614
    %3616 = vrot.lane.b32.xlu0 %v3117, 32
    %v3617 = vpop.permute.xlu0 %3616
    %3618 = vrot.lane.b32.xlu0 %v3191, 32
    %v3619 = vpop.permute.xlu0 %3618
    %3620 = vrot.lane.b32.xlu0 %v3196, 32
    %v3621 = vpop.permute.xlu0 %3620
    %3622 = vrot.lane.b32.xlu0 %v3270, 32
    %v3623 = vpop.permute.xlu0 %3622
    %3624 = vrot.lane.b32.xlu0 %v3275, 32
    %v3625 = vpop.permute.xlu0 %3624
    %3626 = vrot.lane.b32.xlu0 %v3349, 32
    %v3627 = vpop.permute.xlu0 %3626
    %3628 = vrot.lane.b32.xlu0 %v3354, 32
    %v3629 = vpop.permute.xlu0 %3628
    %3630 = vrot.lane.b32.xlu0 %v3428, 32
    %v3631 = vpop.permute.xlu0 %3630
    %3632 = vrot.lane.b32.xlu0 %v3433, 32
    %v3633 = vpop.permute.xlu0 %3632
    %3634 = vrot.lane.b32.xlu0 %v3507, 32
    %v3635 = vpop.permute.xlu0 %3634
    %3636 = vrot.lane.b32.xlu0 %v3512, 32
    %v3637 = vpop.permute.xlu0 %3636
    %3638 = vrot.lane.b32.xlu0 %v3586, 32
    %v3639 = vpop.permute.xlu0 %3638
    %3640 = vrot.lane.b32.xlu0 %v3591, 32
    %v3641 = vpop.permute.xlu0 %3640
    %v3658 = vsel %vm1233, %v1307, %v3611
    %v3659 = vsel %vm1233, %v1312, %v3613
    %v3660 = vsel %vm1233, %v1388, %v3615
    %v3661 = vsel %vm1233, %v1393, %v3617
    %v3662 = vsel %vm1233, %v1469, %v3619
    %v3663 = vsel %vm1233, %v1474, %v3621
    %v3664 = vsel %vm1233, %v1550, %v3623
    %v3665 = vsel %vm1233, %v1555, %v3625
    %v3666 = vsel %vm1233, %v1631, %v3627
    %v3667 = vsel %vm1233, %v1636, %v3629
    %v3668 = vsel %vm1233, %v1712, %v3631
    %v3669 = vsel %vm1233, %v1717, %v3633
    %v3670 = vsel %vm1233, %v1793, %v3635
    %v3671 = vsel %vm1233, %v1798, %v3637
    %v3672 = vsel %vm1233, %v1874, %v3639
    %v3673 = vsel %vm1233, %v1879, %v3641
    %vm3674 = vcmask 523264
    %v3676 = vsel %vm3674, %v3658, 0
    %v3679 = vsel %vm3674, %v3659, 0
    %v3682 = vsel %vm3674, %v3660, 0
    %v3685 = vsel %vm3674, %v3661, 0
    %v3688 = vsel %vm3674, %v3662, 0
    %v3691 = vsel %vm3674, %v3663, 0
    %v3694 = vsel %vm3674, %v3664, 0
    %v3697 = vsel %vm3674, %v3665, 0
    %v3700 = vsel %vm3674, %v3666, 0
    %v3703 = vsel %vm3674, %v3667, 0
    %v3706 = vsel %vm3674, %v3668, 0
    %v3709 = vsel %vm3674, %v3669, 0
    %v3712 = vsel %vm3674, %v3670, 0
    %v3715 = vsel %vm3674, %v3671, 0
    %v3718 = vsel %vm3674, %v3672, 0
    %v3721 = vsel %vm3674, %v3673, 0
    %3723 = vmatprep.subr.mxu0 0.0
    %3724 = vmatpush1.msra.mxu0 %v31
    %3725 = vmatprep.subr.mxu0 0.0
    %3726 = vmatpush1.msra.mxu0 %v32
    %3727 = vmatprep.subr.mxu0 0.0
    %3728 = vmatpush1.msra.mxu0 %v33
    %3729 = vmatprep.subr.mxu0 0.0
    %3730 = vmatpush1.msra.mxu0 %v34
    %3731 = vmatprep.subr.mxu0 0.0
    %3732 = vmatpush1.msra.mxu0 %v35
    %3733 = vmatprep.subr.mxu0 0.0
    %3734 = vmatpush1.msra.mxu0 %v36
    %3735 = vmatprep.subr.mxu0 0.0
    %3736 = vmatpush1.msra.mxu0 %v37
    %3737 = vmatprep.subr.mxu0 0.0
    %3738 = vmatpush1.msra.mxu0 %v38
    %3739 = vmatprep.subr.mxu0 0.0
    %3740 = vmatpush1.msra.mxu0 0.0
    %3741 = vmatprep.subr.mxu0 0.0
    %3742 = vmatpush1.msra.mxu0 0.0
    %3743 = vmatprep.subr.mxu0 0.0
    %3744 = vmatpush1.msra.mxu0 0.0
    %3745 = vmatprep.subr.mxu0 0.0
    %3746 = vmatpush1.msra.mxu0 0.0
    %3747 = vmatprep.subr.mxu0 0.0
    %3748 = vmatpush1.msra.mxu0 0.0
    %3749 = vmatprep.subr.mxu0 0.0
    %3750 = vmatpush1.msra.mxu0 0.0
    %3751 = vmatprep.subr.mxu0 0.0
    %3752 = vmatpush1.msra.mxu0 0.0
    %3753 = vmatprep.subr.mxu0 0.0
    %3754 = vmatpush1.msra.mxu0 0.0
    %3755 = vmatprep.subr.mxu0 0.0
    %3756 = vmatpush1.msra.mxu0 0.0
    %3757 = vmatprep.subr.mxu0 0.0
    %3758 = vmatpush1.msra.mxu0 0.0
    %3759 = vmatprep.subr.mxu0 0.0
    %3760 = vmatpush1.msra.mxu0 0.0
    %3761 = vmatprep.subr.mxu0 0.0
    %3762 = vmatpush1.msra.mxu0 0.0
    %3763 = vmatprep.subr.mxu0 0.0
    %3764 = vmatpush1.msra.mxu0 0.0
    %3765 = vmatprep.subr.mxu0 0.0
    %3766 = vmatpush1.msra.mxu0 0.0
    %3767 = vmatprep.subr.mxu0 0.0
    %3768 = vmatpush1.msra.mxu0 0.0
    %3769 = vmatprep.subr.mxu0 0.0
    %3770 = vmatpush1.msra.mxu0 0.0
    %3771 = vmatprep.subr.mxu0 0.0
    %3772 = vmatpush1.msra.mxu0 0.0
    %3773 = vmatprep.subr.mxu0 0.0
    %3774 = vmatpush1.msra.mxu0 0.0
    %3775 = vmatprep.subr.mxu0 0.0
    %3776 = vmatpush1.msra.mxu0 0.0
    %3777 = vmatprep.subr.mxu0 0.0
    %3778 = vmatpush1.msra.mxu0 0.0
    %3779 = vmatprep.subr.mxu0 0.0
    %3780 = vmatpush1.msra.mxu0 0.0
    %3781 = vmatprep.subr.mxu0 0.0
    %3782 = vmatpush1.msra.mxu0 0.0
    %3783 = vmatprep.subr.mxu0 0.0
    %3784 = vmatpush1.msra.mxu0 0.0
    %3785 = vmatprep.subr.mxu0 0.0
    %3786 = vmatpush1.msra.mxu0 0.0
    %3787 = vmatprep.mubr.f32.mxu0 0.0
    %3788 = vmatmul.mubr.f32.gmra.mrb[0].mxu0 %v3676
    %v3789 = vpop.f32.mrb[0].mxu0
    %v3790 = vadd.f32 0.0, %v3789
    %v3791 = vpop.f32.mrb[0].mxu0
    %3792 = vmatprep.mubr.f32.mxu0 0.0
    %3793 = vmatmul.mubr.f32.gmra.mrb[0].mxu0 %v3679
    %v3794 = vpop.f32.mrb[0].mxu0
    %v3795 = vadd.f32 0.0, %v3794
    %v3796 = vpop.f32.mrb[0].mxu0
    %3797 = vmatprep.mubr.f32.mxu0 0.0
    %3798 = vmatmul.mubr.f32.gmra.mrb[0].mxu0 %v3682
    %v3799 = vpop.f32.mrb[0].mxu0
    %v3800 = vadd.f32 0.0, %v3799
    %v3801 = vpop.f32.mrb[0].mxu0
    %3802 = vmatprep.mubr.f32.mxu0 0.0
    %3803 = vmatmul.mubr.f32.gmra.mrb[0].mxu0 %v3685
    %v3804 = vpop.f32.mrb[0].mxu0
    %v3805 = vadd.f32 0.0, %v3804
    %v3806 = vpop.f32.mrb[0].mxu0
    %3807 = vmatprep.mubr.f32.mxu0 0.0
    %3808 = vmatmul.mubr.f32.gmra.mrb[0].mxu0 %v3688
    %v3809 = vpop.f32.mrb[0].mxu0
    %v3810 = vadd.f32 0.0, %v3809
    %v3811 = vpop.f32.mrb[0].mxu0
    %3812 = vmatprep.mubr.f32.mxu0 0.0
    %3813 = vmatmul.mubr.f32.gmra.mrb[0].mxu0 %v3691
    %v3814 = vpop.f32.mrb[0].mxu0
    %v3815 = vadd.f32 0.0, %v3814
    %v3816 = vpop.f32.mrb[0].mxu0
    %3817 = vmatprep.mubr.f32.mxu0 0.0
    %3818 = vmatmul.mubr.f32.gmra.mrb[0].mxu0 %v3694
    %v3819 = vpop.f32.mrb[0].mxu0
    %v3820 = vadd.f32 0.0, %v3819
    %v3821 = vpop.f32.mrb[0].mxu0
    %3822 = vmatprep.mubr.f32.mxu0 0.0
    %3823 = vmatmul.mubr.f32.gmra.mrb[0].mxu0 %v3697
    %v3824 = vpop.f32.mrb[0].mxu0
    %v3825 = vadd.f32 0.0, %v3824
    %v3826 = vpop.f32.mrb[0].mxu0
    %3827 = vmatprep.mubr.f32.mxu0 0.0
    %3828 = vmatmul.mubr.f32.gmra.mrb[0].mxu0 %v3700
    %v3829 = vpop.f32.mrb[0].mxu0
    %v3830 = vadd.f32 0.0, %v3829
    %v3831 = vpop.f32.mrb[0].mxu0
    %3832 = vmatprep.mubr.f32.mxu0 0.0
    %3833 = vmatmul.mubr.f32.gmra.mrb[0].mxu0 %v3703
    %v3834 = vpop.f32.mrb[0].mxu0
    %v3835 = vadd.f32 0.0, %v3834
    %v3836 = vpop.f32.mrb[0].mxu0
    %3837 = vmatprep.mubr.f32.mxu0 0.0
    %3838 = vmatmul.mubr.f32.gmra.mrb[0].mxu0 %v3706
    %v3839 = vpop.f32.mrb[0].mxu0
    %v3840 = vadd.f32 0.0, %v3839
    %v3841 = vpop.f32.mrb[0].mxu0
    %3842 = vmatprep.mubr.f32.mxu0 0.0
    %3843 = vmatmul.mubr.f32.gmra.mrb[0].mxu0 %v3709
    %v3844 = vpop.f32.mrb[0].mxu0
    %v3845 = vadd.f32 0.0, %v3844
    %v3846 = vpop.f32.mrb[0].mxu0
    %3847 = vmatprep.mubr.f32.mxu0 0.0
    %3848 = vmatmul.mubr.f32.gmra.mrb[0].mxu0 %v3712
    %v3849 = vpop.f32.mrb[0].mxu0
    %v3850 = vadd.f32 0.0, %v3849
    %v3851 = vpop.f32.mrb[0].mxu0
    %3852 = vmatprep.mubr.f32.mxu0 0.0
    %3853 = vmatmul.mubr.f32.gmra.mrb[0].mxu0 %v3715
    %v3854 = vpop.f32.mrb[0].mxu0
    %v3855 = vadd.f32 0.0, %v3854
    %v3856 = vpop.f32.mrb[0].mxu0
    %3857 = vmatprep.mubr.f32.mxu0 0.0
    %3858 = vmatmul.mubr.f32.gmra.mrb[0].mxu0 %v3718
    %v3859 = vpop.f32.mrb[0].mxu0
    %v3860 = vadd.f32 0.0, %v3859
    %v3861 = vpop.f32.mrb[0].mxu0
    %3862 = vmatprep.mubr.f32.mxu0 0.0
    %3863 = vmatmul.mubr.f32.gmra.mrb[0].mxu0 %v3721
    %v3864 = vpop.f32.mrb[0].mxu0
    %v3865 = vadd.f32 0.0, %v3864
    %v3866 = vpop.f32.mrb[0].mxu0
    %3867 = vdwg.mxu0
    %3868 = vst [vmem:[#allocation2] sm:$0xff] %v3790
    %3869 = vst [vmem:[#allocation2 + $0x8] sm:$0xff] %v3795
    %3870 = vst [vmem:[#allocation2 + $0x10] sm:$0xff] %v3800
    %3871 = vst [vmem:[#allocation2 + $0x18] sm:$0xff] %v3805
    %3872 = vst [vmem:[#allocation2 + $0x20] sm:$0xff] %v3810
    %3873 = vst [vmem:[#allocation2 + $0x28] sm:$0xff] %v3815
    %3874 = vst [vmem:[#allocation2 + $0x30] sm:$0xff] %v3820
    %3875 = vst [vmem:[#allocation2 + $0x38] sm:$0xff] %v3825
    %3876 = vst [vmem:[#allocation2 + $0x40] sm:$0xff] %v3830
    %3877 = vst [vmem:[#allocation2 + $0x48] sm:$0xff] %v3835
    %3878 = vst [vmem:[#allocation2 + $0x50] sm:$0xff] %v3840
    %3879 = vst [vmem:[#allocation2 + $0x58] sm:$0xff] %v3845
    %3880 = vst [vmem:[#allocation2 + $0x60] sm:$0xff] %v3850
    %3881 = vst [vmem:[#allocation2 + $0x68] sm:$0xff] %v3855
    %3882 = vst [vmem:[#allocation2 + $0x70] sm:$0xff] %v3860
    %3883 = vst [vmem:[#allocation2 + $0x78] sm:$0xff] %v3865
    // Predicated region
    $region14: #{tpu_custom_call.1} parent=1 // pred_check
      _
    $region15: #{tpu_custom_call.1} parent=1 // pred_check_branch
      %3885 = sbr.rel (0) target = $region17
    $region16: #{tpu_custom_call.1} parent=1 // pred_region
      %s3887 = ssub.s32 2048, 2048
      %3888 = vsyncadd [#allocation3], %s3887
      %s3889 = sshll.u32 [#allocation2], 4
      %s3890 = int_to_ptr.vmem [resolvable:$true] %s3889
      %3895 = dma.vmem_to_hbm [thread:$0]  %s3890, 2048, %s3, [#allocation3], 128, 128, 8
    $region17: #{tpu_custom_call.1} parent=1 // pred_fallthru
      _
    // Predicated region
    $region18: #{tpu_custom_call.1} parent=1 // pred_check
      _
    $region19: #{tpu_custom_call.1} parent=1 // pred_check_branch
      %3897 = sbr.rel (0) target = $region21
    $region20: #{tpu_custom_call.1} parent=1 // pred_region
      %3898 = dma.done [#allocation3], 2048
    $region21: #{tpu_custom_call.1} parent=1 // pred_fallthru
      _
    %3899 = vsyncpa [#allocation3], 1

</llo_original>
